<compile_context>
chip_gen: v6e
topology: v6e:2x2x1
jax: 0.10.0
libtpu: 0.0.40
codegen_flags: <defaults>
</compile_context>

<pallas_src>
import numpy as np

import jax
import jax.numpy as jnp
from jax import lax
from jax.experimental import pallas as pl
from jax.experimental.pallas import tpu as pltpu

_NUM_CLASSES = 10
_OUT_LANES = 128          # pad the 10-way output to a full lane tile for a dense store


# ------------------------------ Pallas kernel -------------------------------

def _conv_block(read_rows, te_ref, to_ref, b_ref, rh_ref):
    """conv(valid, stride 1) + 2x2/2 max-pool + bias + ReLU for one image, all in VMEM.

    read_rows(kh, OH) -> (OH, W*Cin) slab of the layer input (rows kh..kh+OH-1).
    te_ref: (KH, W*Cin, PW*Cout) bf16 lowered weights producing the EVEN output columns.
    to_ref: (KH, W*Cin, PW*Cout) bf16 lowered weights producing the ODD  output columns.
    b_ref : (1, PW*Cout) f32 bias row (bias tiled across the PW lane blocks).
    rh_ref: (2, PH, OH)  f32 exact 0/1 row selectors (even / odd rows of the conv output).
    Returns the pooled, biased, ReLU'd activation (PH, PW*Cout) in f32.
    """
    f32 = jnp.float32
    KH = te_ref.shape[0]
    OH = rh_ref.shape[2]

    # conv as a sum over kernel rows of MXU matmuls (bf16 inputs, f32 accumulate),
    # split into even / odd output columns so the horizontal pool is a free VPU max.
    rows = read_rows(0, OH).astype(jnp.bfloat16)
    acc_e = jnp.dot(rows, te_ref[0], preferred_element_type=f32)
    acc_o = jnp.dot(rows, to_ref[0], preferred_element_type=f32)
    for kh in range(1, KH):
        rows = read_rows(kh, OH).astype(jnp.bfloat16)
        acc_e = acc_e + jnp.dot(rows, te_ref[kh], preferred_element_type=f32)
        acc_o = acc_o + jnp.dot(rows, to_ref[kh], preferred_element_type=f32)
    cm = jnp.maximum(acc_e, acc_o)                           # (OH, PW*Cout): column pool done

    # vertical half of the 2x2 pool: exact 0/1 row gathers (tiny matmuls) + elementwise max.
    r_even = jnp.dot(rh_ref[0], cm, preferred_element_type=f32)   # (PH, PW*Cout)
    r_odd = jnp.dot(rh_ref[1], cm, preferred_element_type=f32)
    pooled = jnp.maximum(r_even, r_odd)

    # bias + ReLU commute exactly with the max-pool selection -> applied on the small tensor.
    return jnp.maximum(pooled + b_ref[...], 0.0)


def _toy_fused_kernel(x_ref,
                      te1, to1, b1, rh1,
                      te2, to2, b2, rh2,
                      te3, to3, b3, rh3,
                      gwc_ref, bc_ref, wo_ref, bo_ref,
                      o_ref, s2_ref, s3_ref):
    """Whole ToyNetwork forward for one image (one grid step)."""
    f32 = jnp.float32

    # conv1 reads its rows directly from the (1, H, W*C) bf16 input block.
    p1 = _conv_block(lambda kh, oh: x_ref[0, kh:kh + oh, :], te1, to1, b1, rh1)
    s2_ref[...] = p1                       # pooled conv1 activation (PH1, PW1*C1)

    p2 = _conv_block(lambda kh, oh: s2_ref[kh:kh + oh, :], te2, to2, b2, rh2)
    s3_ref[...] = p2                       # pooled conv2 activation (PH2, PW2*C2)

    p3 = _conv_block(lambda kh, oh: s3_ref[kh:kh + oh, :], te3, to3, b3, rh3)

    # global average pool (adaptive_avg_pool2d -> 1x1): row-sum; the column averaging /
    # channel fold (identity here, since the pooled grid is already 1x1) is pre-multiplied
    # into fc_code's weight host-side, so the head is just two small matmuls.
    gap = jnp.sum(p3, axis=0, keepdims=True)                       # (1, PW3*C3)
    code = jnp.dot(gap, gwc_ref[...], preferred_element_type=f32) + bc_ref[...]
    out = jnp.dot(code, wo_ref[...], preferred_element_type=f32) + bo_ref[...]
    o_ref[0] = out                                                 # (1, 128) lane-dense


# --------------------------- weight preprocessing ----------------------------

def prepare_params(params, image_hw=(32, 32)):
    """One-time host-side conversion of the module weights into the kernel layout.

    * Te/To : block-Toeplitz lowering of each HWIO conv weight, split into even / odd output
              columns so the conv becomes sums of (OH, W*Cin) @ (W*Cin, PW*Cout) matmuls and
              the horizontal max-pool is a single elementwise max (stored bf16).
    * brow  : bias tiled across the PW lane blocks (f32).
    * rh    : exact 0/1 row-selector matrices for the vertical max-pool (f32).
    * gwc   : (GAP averaging matrix) @ fc_code weight, pre-folded (f32).
    * fc    : fc_code bias as a row; fc_output padded to 128 output lanes.
    """
    def lower_conv(w, b, h_in, w_in):
        KH, KW, Cin, Cout = w.shape
        OH, OW = h_in - KH + 1, w_in - KW + 1
        PH, PW = OH // 2, OW // 2
        w_np = np.asarray(w, np.float32).reshape(KH, KW * Cin, Cout)
        Te = np.zeros((KH, w_in * Cin, PW * Cout), np.float32)
        To = np.zeros((KH, w_in * Cin, PW * Cout), np.float32)
        for p in range(PW):
            oe, oo = 2 * p, 2 * p + 1
            Te[:, oe * Cin:(oe + KW) * Cin, p * Cout:(p + 1) * Cout] = w_np
            To[:, oo * Cin:(oo + KW) * Cin, p * Cout:(p + 1) * Cout] = w_np
        brow = np.tile(np.asarray(b, np.float32), PW).reshape(1, PW * Cout)
        rh = np.zeros((2, PH, OH), np.float32)
        rh[0, np.arange(PH), 2 * np.arange(PH)] = 1.0
        rh[1, np.arange(PH), 2 * np.arange(PH) + 1] = 1.0
        arrs = (jnp.asarray(Te, jnp.bfloat16), jnp.asarray(To, jnp.bfloat16),
                jnp.asarray(brow), jnp.asarray(rh))
        return arrs, (PH, PW, Cout)

    h, w = image_hw
    prep = []
    cout = None
    for name in ("conv1", "conv2", "conv3"):
        arrs, (h, w, cout) = lower_conv(params[f"{name}_w"], params[f"{name}_b"], h, w)
        prep.extend(arrs)

    # GAP averaging over the (h, w) pooled grid, folded into fc_code's weight:
    # code = (row_sum(p3) @ G) @ Wc + bc  ==  row_sum(p3) @ (G @ Wc) + bc.
    cols = np.arange(w * cout)
    G = np.zeros((w * cout, cout), np.float32)
    G[cols, cols % cout] = 1.0 / float(h * w)
    gwc = G @ np.asarray(params["fc_code_w"], np.float32)

    # FC head; fc_output padded to 128 lanes for a lane-dense kernel output store.
    wo = np.asarray(params["fc_output_w"], np.float32)
    bo = np.asarray(params["fc_output_b"], np.float32)
    wo_p = np.zeros((wo.shape[0], _OUT_LANES), np.float32)
    wo_p[:, :wo.shape[1]] = wo
    bo_p = np.zeros((1, _OUT_LANES), np.float32)
    bo_p[0, :bo.shape[0]] = bo
    prep.extend([jnp.asarray(gwc),
                 jnp.asarray(params["fc_code_b"], jnp.float32).reshape(1, -1),
                 jnp.asarray(wo_p), jnp.asarray(bo_p)])
    return tuple(prep)


# --------------------------------- forward -----------------------------------

def _const_spec(arr):
    """Full-array VMEM block whose index does not depend on the batch grid step."""
    nd = arr.ndim

    def imap(n, _nd=nd):
        return (0,) * _nd

    return pl.BlockSpec(arr.shape, imap)


@jax.jit
def toy_network_forward(x_nchw, prep):
    (te1, to1, b1, rh1, te2, to2, b2, rh2, te3, to3, b3, rh3,
     gwc, bc, wo, bo) = prep
    N, C, H, W = x_nchw.shape
    # NCHW -> row-flattened NHWC:  A[n, h, w*C + c]; cast to bf16 (MXU input dtype).
    x = jnp.transpose(x_nchw, (0, 2, 3, 1)).reshape(N, H, W * C).astype(jnp.bfloat16)

    weights = (te1, to1, b1, rh1, te2, to2, b2, rh2, te3, to3, b3, rh3,
               gwc, bc, wo, bo)
    s2_shape = (rh1.shape[1], b1.shape[1])      # pooled conv1 activation per image
    s3_shape = (rh2.shape[1], b2.shape[1])      # pooled conv2 activation per image

    out = pl.pallas_call(
        _toy_fused_kernel,
        out_shape=jax.ShapeDtypeStruct((N, 1, _OUT_LANES), jnp.float32),
        grid=(N,),
        in_specs=[pl.BlockSpec((1, H, W * C), lambda n: (n, 0, 0))]
                 + [_const_spec(a) for a in weights],
        out_specs=pl.BlockSpec((1, 1, _OUT_LANES), lambda n: (n, 0, 0)),
        scratch_shapes=[pltpu.VMEM(s2_shape, jnp.float32),
                        pltpu.VMEM(s3_shape, jnp.float32)],
        compiler_params=pltpu.CompilerParams(
            dimension_semantics=("parallel",),          # shard batch across v7x's 2 TCs
            vmem_limit_bytes=32 * 1024 * 1024),
    )(x, *weights)
    return out.reshape(N, _OUT_LANES)[:, :_NUM_CLASSES]


# --------------------------- parameters / reference ---------------------------

def init_params(key):
    ks = jax.random.split(key, 10)

    def conv_w(k, kh, kw, ic, oc):
        # kaiming_normal_(mode='fan_out'): std = sqrt(2 / (oc * kh * kw)), HWIO layout
        std = (2.0 / (oc * kh * kw)) ** 0.5
        return jax.random.normal(k, (kh, kw, ic, oc), jnp.float32) * std

    def conv_b(k, ic, kh, kw, oc):
        bound = 1.0 / (ic * kh * kw) ** 0.5
        return jax.random.uniform(k, (oc,), jnp.float32, -bound, bound)

    def lin_w(k, fin, fout):
        bound = 1.0 / fin ** 0.5
        return jax.random.uniform(k, (fin, fout), jnp.float32, -bound, bound)

    return {
        "conv1_w": conv_w(ks[0], 7, 7, 3, 32),
        "conv1_b": conv_b(ks[1], 3, 7, 7, 32),
        "conv2_w": conv_w(ks[2], 3, 3, 32, 64),
        "conv2_b": conv_b(ks[3], 32, 3, 3, 64),
        "conv3_w": conv_w(ks[4], 3, 3, 64, 128),
        "conv3_b": conv_b(ks[5], 64, 3, 3, 128),
        "fc_code_w": lin_w(ks[6], 128, 128),
        "fc_code_b": jnp.zeros((128,), jnp.float32),     # Linear bias zeroed in init
        "fc_output_w": lin_w(ks[7], 128, 10),
        "fc_output_b": jnp.zeros((10,), jnp.float32),    # Linear bias zeroed in init
    }


def _ref_forward(x_nchw, params):
    x = jnp.transpose(x_nchw, (0, 2, 3, 1))

    def conv(a, w, b):
        y = lax.conv_general_dilated(a, w, (1, 1), "VALID",
                                     dimension_numbers=("NHWC", "HWIO", "NHWC"))
        return jax.nn.relu(y + b)

    def pool(a):
        N, H, W, C = a.shape
        a = a[:, : (H // 2) * 2, : (W // 2) * 2, :]
        a = a.reshape(N, H // 2, 2, W // 2, 2, C)
        return a.max(axis=(2, 4))

    x = pool(conv(x, params["conv1_w"], params["conv1_b"]))
    x = pool(conv(x, params["conv2_w"], params["conv2_b"]))
    x = pool(conv(x, params["conv3_w"], params["conv3_b"]))
    x = x.mean(axis=(1, 2))
    code = x @ params["fc_code_w"] + params["fc_code_b"]
    return code @ params["fc_output_w"] + params["fc_output_b"]


if __name__ == "__main__":
    key = jax.random.PRNGKey(0)
    k_x, k_p = jax.random.split(key)
    x = jax.random.normal(k_x, (2, 3, 32, 32), jnp.float32)   # NCHW like PyTorch
    params = init_params(k_p)
    prep = prepare_params(params, image_hw=(32, 32))           # one-time weight layout

    out = toy_network_forward(x, prep)
    out = jax.block_until_ready(out)

    assert out.shape == (2, 10), out.shape
    assert bool(jnp.all(jnp.isfinite(out)))

    ref = _ref_forward(x, params)
    assert bool(jnp.allclose(out, ref, rtol=2e-2, atol=2e-2)), (out, ref)

    print("KERNEL_OK")
</pallas_src>

<mosaic_0001>
module attributes {stable_mosaic.version = 11 : i64} {
  func.func @_toy_fused_kernel(%arg0: i32, %arg1: memref<1x32x96xbf16, #tpu.memory_space<vmem>>, %arg2: memref<7x96x416xbf16, #tpu.memory_space<vmem>>, %arg3: memref<7x96x416xbf16, #tpu.memory_space<vmem>>, %arg4: memref<1x416xf32, #tpu.memory_space<vmem>>, %arg5: memref<2x13x26xf32, #tpu.memory_space<vmem>>, %arg6: memref<3x416x320xbf16, #tpu.memory_space<vmem>>, %arg7: memref<3x416x320xbf16, #tpu.memory_space<vmem>>, %arg8: memref<1x320xf32, #tpu.memory_space<vmem>>, %arg9: memref<2x5x11xf32, #tpu.memory_space<vmem>>, %arg10: memref<3x320x128xbf16, #tpu.memory_space<vmem>>, %arg11: memref<3x320x128xbf16, #tpu.memory_space<vmem>>, %arg12: memref<1x128xf32, #tpu.memory_space<vmem>>, %arg13: memref<2x1x3xf32, #tpu.memory_space<vmem>>, %arg14: memref<128x128xf32, #tpu.memory_space<vmem>>, %arg15: memref<1x128xf32, #tpu.memory_space<vmem>>, %arg16: memref<128x128xf32, #tpu.memory_space<vmem>>, %arg17: memref<1x128xf32, #tpu.memory_space<vmem>>, %arg18: memref<1x1x128xf32, #tpu.memory_space<vmem>>, %arg19: memref<13x416xf32, #tpu.memory_space<vmem>>, %arg20: memref<5x320xf32, #tpu.memory_space<vmem>>) attributes {dimension_semantics = [#tpu.dimension_semantics<parallel>], iteration_bounds = array<i64: 2>, scalar_prefetch = 0 : i64, scratch_operands = 2 : i64, tpu.core_type = #tpu.core_type<tc>, window_params = [{transform_indices = @transform_0, window_bounds = array<i64: 1, 32, 96>}, {pipeline_mode = #tpu.pipeline_mode<synchronous>, transform_indices = @transform_1, window_bounds = array<i64: 7, 96, 416>}, {pipeline_mode = #tpu.pipeline_mode<synchronous>, transform_indices = @transform_2, window_bounds = array<i64: 7, 96, 416>}, {pipeline_mode = #tpu.pipeline_mode<synchronous>, transform_indices = @transform_3, window_bounds = array<i64: 1, 416>}, {pipeline_mode = #tpu.pipeline_mode<synchronous>, transform_indices = @transform_4, window_bounds = array<i64: 2, 13, 26>}, {pipeline_mode = #tpu.pipeline_mode<synchronous>, transform_indices = @transform_5, window_bounds = array<i64: 3, 416, 320>}, {pipeline_mode = #tpu.pipeline_mode<synchronous>, transform_indices = @transform_6, window_bounds = array<i64: 3, 416, 320>}, {pipeline_mode = #tpu.pipeline_mode<synchronous>, transform_indices = @transform_7, window_bounds = array<i64: 1, 320>}, {pipeline_mode = #tpu.pipeline_mode<synchronous>, transform_indices = @transform_8, window_bounds = array<i64: 2, 5, 11>}, {pipeline_mode = #tpu.pipeline_mode<synchronous>, transform_indices = @transform_9, window_bounds = array<i64: 3, 320, 128>}, {pipeline_mode = #tpu.pipeline_mode<synchronous>, transform_indices = @transform_10, window_bounds = array<i64: 3, 320, 128>}, {pipeline_mode = #tpu.pipeline_mode<synchronous>, transform_indices = @transform_11, window_bounds = array<i64: 1, 128>}, {pipeline_mode = #tpu.pipeline_mode<synchronous>, transform_indices = @transform_12, window_bounds = array<i64: 2, 1, 3>}, {pipeline_mode = #tpu.pipeline_mode<synchronous>, transform_indices = @transform_13, window_bounds = array<i64: 128, 128>}, {pipeline_mode = #tpu.pipeline_mode<synchronous>, transform_indices = @transform_14, window_bounds = array<i64: 1, 128>}, {pipeline_mode = #tpu.pipeline_mode<synchronous>, transform_indices = @transform_15, window_bounds = array<i64: 128, 128>}, {pipeline_mode = #tpu.pipeline_mode<synchronous>, transform_indices = @transform_16, window_bounds = array<i64: 1, 128>}, {transform_indices = @transform_17, window_bounds = array<i64: 1, 1, 128>}]} {
    %c0 = arith.constant 0 : index
    %c0_0 = arith.constant 0 : index
    %c0_1 = arith.constant 0 : index
    %0 = vector.load %arg1[%c0, %c0_0, %c0_1] : memref<1x32x96xbf16, #tpu.memory_space<vmem>>, vector<1x26x96xbf16>
    %1 = vector.shape_cast %0 : vector<1x26x96xbf16> to vector<26x96xbf16>
    %c0_2 = arith.constant 0 : index
    %c0_3 = arith.constant 0 : index
    %c0_4 = arith.constant 0 : index
    %2 = vector.load %arg2[%c0_2, %c0_3, %c0_4] : memref<7x96x416xbf16, #tpu.memory_space<vmem>>, vector<1x96x416xbf16>
    %3 = vector.shape_cast %2 : vector<1x96x416xbf16> to vector<96x416xbf16>
    %cst = arith.constant dense<0.000000e+00> : vector<26x416xf32>
    %4 = tpu.matmul %1, %3, %cst {dimension_numbers = #tpu.dot_dimension_numbers<[1], [0], [0], [1], [0, 0, 1, 1], [], []>} : vector<26x96xbf16>, vector<96x416xbf16>, vector<26x416xf32> -> vector<26x416xf32>
    %c0_5 = arith.constant 0 : index
    %c0_6 = arith.constant 0 : index
    %c0_7 = arith.constant 0 : index
    %5 = vector.load %arg3[%c0_5, %c0_6, %c0_7] : memref<7x96x416xbf16, #tpu.memory_space<vmem>>, vector<1x96x416xbf16>
    %6 = vector.shape_cast %5 : vector<1x96x416xbf16> to vector<96x416xbf16>
    %cst_8 = arith.constant dense<0.000000e+00> : vector<26x416xf32>
    %7 = tpu.matmul %1, %6, %cst_8 {dimension_numbers = #tpu.dot_dimension_numbers<[1], [0], [0], [1], [0, 0, 1, 1], [], []>} : vector<26x96xbf16>, vector<96x416xbf16>, vector<26x416xf32> -> vector<26x416xf32>
    %c0_9 = arith.constant 0 : index
    %c1 = arith.constant 1 : index
    %c0_10 = arith.constant 0 : index
    %8 = vector.load %arg1[%c0_9, %c1, %c0_10] : memref<1x32x96xbf16, #tpu.memory_space<vmem>>, vector<1x26x96xbf16>
    %9 = vector.shape_cast %8 : vector<1x26x96xbf16> to vector<26x96xbf16>
    %c1_11 = arith.constant 1 : index
    %c0_12 = arith.constant 0 : index
    %c0_13 = arith.constant 0 : index
    %10 = vector.load %arg2[%c1_11, %c0_12, %c0_13] : memref<7x96x416xbf16, #tpu.memory_space<vmem>>, vector<1x96x416xbf16>
    %11 = vector.shape_cast %10 : vector<1x96x416xbf16> to vector<96x416xbf16>
    %cst_14 = arith.constant dense<0.000000e+00> : vector<26x416xf32>
    %12 = tpu.matmul %9, %11, %cst_14 {dimension_numbers = #tpu.dot_dimension_numbers<[1], [0], [0], [1], [0, 0, 1, 1], [], []>} : vector<26x96xbf16>, vector<96x416xbf16>, vector<26x416xf32> -> vector<26x416xf32>
    %13 = arith.addf %4, %12 : vector<26x416xf32>
    %c1_15 = arith.constant 1 : index
    %c0_16 = arith.constant 0 : index
    %c0_17 = arith.constant 0 : index
    %14 = vector.load %arg3[%c1_15, %c0_16, %c0_17] : memref<7x96x416xbf16, #tpu.memory_space<vmem>>, vector<1x96x416xbf16>
    %15 = vector.shape_cast %14 : vector<1x96x416xbf16> to vector<96x416xbf16>
    %cst_18 = arith.constant dense<0.000000e+00> : vector<26x416xf32>
    %16 = tpu.matmul %9, %15, %cst_18 {dimension_numbers = #tpu.dot_dimension_numbers<[1], [0], [0], [1], [0, 0, 1, 1], [], []>} : vector<26x96xbf16>, vector<96x416xbf16>, vector<26x416xf32> -> vector<26x416xf32>
    %17 = arith.addf %7, %16 : vector<26x416xf32>
    %c0_19 = arith.constant 0 : index
    %c2 = arith.constant 2 : index
    %c0_20 = arith.constant 0 : index
    %18 = vector.load %arg1[%c0_19, %c2, %c0_20] : memref<1x32x96xbf16, #tpu.memory_space<vmem>>, vector<1x26x96xbf16>
    %19 = vector.shape_cast %18 : vector<1x26x96xbf16> to vector<26x96xbf16>
    %c2_21 = arith.constant 2 : index
    %c0_22 = arith.constant 0 : index
    %c0_23 = arith.constant 0 : index
    %20 = vector.load %arg2[%c2_21, %c0_22, %c0_23] : memref<7x96x416xbf16, #tpu.memory_space<vmem>>, vector<1x96x416xbf16>
    %21 = vector.shape_cast %20 : vector<1x96x416xbf16> to vector<96x416xbf16>
    %cst_24 = arith.constant dense<0.000000e+00> : vector<26x416xf32>
    %22 = tpu.matmul %19, %21, %cst_24 {dimension_numbers = #tpu.dot_dimension_numbers<[1], [0], [0], [1], [0, 0, 1, 1], [], []>} : vector<26x96xbf16>, vector<96x416xbf16>, vector<26x416xf32> -> vector<26x416xf32>
    %23 = arith.addf %13, %22 : vector<26x416xf32>
    %c2_25 = arith.constant 2 : index
    %c0_26 = arith.constant 0 : index
    %c0_27 = arith.constant 0 : index
    %24 = vector.load %arg3[%c2_25, %c0_26, %c0_27] : memref<7x96x416xbf16, #tpu.memory_space<vmem>>, vector<1x96x416xbf16>
    %25 = vector.shape_cast %24 : vector<1x96x416xbf16> to vector<96x416xbf16>
    %cst_28 = arith.constant dense<0.000000e+00> : vector<26x416xf32>
    %26 = tpu.matmul %19, %25, %cst_28 {dimension_numbers = #tpu.dot_dimension_numbers<[1], [0], [0], [1], [0, 0, 1, 1], [], []>} : vector<26x96xbf16>, vector<96x416xbf16>, vector<26x416xf32> -> vector<26x416xf32>
    %27 = arith.addf %17, %26 : vector<26x416xf32>
    %c0_29 = arith.constant 0 : index
    %c3 = arith.constant 3 : index
    %c0_30 = arith.constant 0 : index
    %28 = vector.load %arg1[%c0_29, %c3, %c0_30] : memref<1x32x96xbf16, #tpu.memory_space<vmem>>, vector<1x26x96xbf16>
    %29 = vector.shape_cast %28 : vector<1x26x96xbf16> to vector<26x96xbf16>
    %c3_31 = arith.constant 3 : index
    %c0_32 = arith.constant 0 : index
    %c0_33 = arith.constant 0 : index
    %30 = vector.load %arg2[%c3_31, %c0_32, %c0_33] : memref<7x96x416xbf16, #tpu.memory_space<vmem>>, vector<1x96x416xbf16>
    %31 = vector.shape_cast %30 : vector<1x96x416xbf16> to vector<96x416xbf16>
    %cst_34 = arith.constant dense<0.000000e+00> : vector<26x416xf32>
    %32 = tpu.matmul %29, %31, %cst_34 {dimension_numbers = #tpu.dot_dimension_numbers<[1], [0], [0], [1], [0, 0, 1, 1], [], []>} : vector<26x96xbf16>, vector<96x416xbf16>, vector<26x416xf32> -> vector<26x416xf32>
    %33 = arith.addf %23, %32 : vector<26x416xf32>
    %c3_35 = arith.constant 3 : index
    %c0_36 = arith.constant 0 : index
    %c0_37 = arith.constant 0 : index
    %34 = vector.load %arg3[%c3_35, %c0_36, %c0_37] : memref<7x96x416xbf16, #tpu.memory_space<vmem>>, vector<1x96x416xbf16>
    %35 = vector.shape_cast %34 : vector<1x96x416xbf16> to vector<96x416xbf16>
    %cst_38 = arith.constant dense<0.000000e+00> : vector<26x416xf32>
    %36 = tpu.matmul %29, %35, %cst_38 {dimension_numbers = #tpu.dot_dimension_numbers<[1], [0], [0], [1], [0, 0, 1, 1], [], []>} : vector<26x96xbf16>, vector<96x416xbf16>, vector<26x416xf32> -> vector<26x416xf32>
    %37 = arith.addf %27, %36 : vector<26x416xf32>
    %c0_39 = arith.constant 0 : index
    %c4 = arith.constant 4 : index
    %c0_40 = arith.constant 0 : index
    %38 = vector.load %arg1[%c0_39, %c4, %c0_40] : memref<1x32x96xbf16, #tpu.memory_space<vmem>>, vector<1x26x96xbf16>
    %39 = vector.shape_cast %38 : vector<1x26x96xbf16> to vector<26x96xbf16>
    %c4_41 = arith.constant 4 : index
    %c0_42 = arith.constant 0 : index
    %c0_43 = arith.constant 0 : index
    %40 = vector.load %arg2[%c4_41, %c0_42, %c0_43] : memref<7x96x416xbf16, #tpu.memory_space<vmem>>, vector<1x96x416xbf16>
    %41 = vector.shape_cast %40 : vector<1x96x416xbf16> to vector<96x416xbf16>
    %cst_44 = arith.constant dense<0.000000e+00> : vector<26x416xf32>
    %42 = tpu.matmul %39, %41, %cst_44 {dimension_numbers = #tpu.dot_dimension_numbers<[1], [0], [0], [1], [0, 0, 1, 1], [], []>} : vector<26x96xbf16>, vector<96x416xbf16>, vector<26x416xf32> -> vector<26x416xf32>
    %43 = arith.addf %33, %42 : vector<26x416xf32>
    %c4_45 = arith.constant 4 : index
    %c0_46 = arith.constant 0 : index
    %c0_47 = arith.constant 0 : index
    %44 = vector.load %arg3[%c4_45, %c0_46, %c0_47] : memref<7x96x416xbf16, #tpu.memory_space<vmem>>, vector<1x96x416xbf16>
    %45 = vector.shape_cast %44 : vector<1x96x416xbf16> to vector<96x416xbf16>
    %cst_48 = arith.constant dense<0.000000e+00> : vector<26x416xf32>
    %46 = tpu.matmul %39, %45, %cst_48 {dimension_numbers = #tpu.dot_dimension_numbers<[1], [0], [0], [1], [0, 0, 1, 1], [], []>} : vector<26x96xbf16>, vector<96x416xbf16>, vector<26x416xf32> -> vector<26x416xf32>
    %47 = arith.addf %37, %46 : vector<26x416xf32>
    %c0_49 = arith.constant 0 : index
    %c5 = arith.constant 5 : index
    %c0_50 = arith.constant 0 : index
    %48 = vector.load %arg1[%c0_49, %c5, %c0_50] : memref<1x32x96xbf16, #tpu.memory_space<vmem>>, vector<1x26x96xbf16>
    %49 = vector.shape_cast %48 : vector<1x26x96xbf16> to vector<26x96xbf16>
    %c5_51 = arith.constant 5 : index
    %c0_52 = arith.constant 0 : index
    %c0_53 = arith.constant 0 : index
    %50 = vector.load %arg2[%c5_51, %c0_52, %c0_53] : memref<7x96x416xbf16, #tpu.memory_space<vmem>>, vector<1x96x416xbf16>
    %51 = vector.shape_cast %50 : vector<1x96x416xbf16> to vector<96x416xbf16>
    %cst_54 = arith.constant dense<0.000000e+00> : vector<26x416xf32>
    %52 = tpu.matmul %49, %51, %cst_54 {dimension_numbers = #tpu.dot_dimension_numbers<[1], [0], [0], [1], [0, 0, 1, 1], [], []>} : vector<26x96xbf16>, vector<96x416xbf16>, vector<26x416xf32> -> vector<26x416xf32>
    %53 = arith.addf %43, %52 : vector<26x416xf32>
    %c5_55 = arith.constant 5 : index
    %c0_56 = arith.constant 0 : index
    %c0_57 = arith.constant 0 : index
    %54 = vector.load %arg3[%c5_55, %c0_56, %c0_57] : memref<7x96x416xbf16, #tpu.memory_space<vmem>>, vector<1x96x416xbf16>
    %55 = vector.shape_cast %54 : vector<1x96x416xbf16> to vector<96x416xbf16>
    %cst_58 = arith.constant dense<0.000000e+00> : vector<26x416xf32>
    %56 = tpu.matmul %49, %55, %cst_58 {dimension_numbers = #tpu.dot_dimension_numbers<[1], [0], [0], [1], [0, 0, 1, 1], [], []>} : vector<26x96xbf16>, vector<96x416xbf16>, vector<26x416xf32> -> vector<26x416xf32>
    %57 = arith.addf %47, %56 : vector<26x416xf32>
    %c0_59 = arith.constant 0 : index
    %c6 = arith.constant 6 : index
    %c0_60 = arith.constant 0 : index
    %58 = vector.load %arg1[%c0_59, %c6, %c0_60] : memref<1x32x96xbf16, #tpu.memory_space<vmem>>, vector<1x26x96xbf16>
    %59 = vector.shape_cast %58 : vector<1x26x96xbf16> to vector<26x96xbf16>
    %c6_61 = arith.constant 6 : index
    %c0_62 = arith.constant 0 : index
    %c0_63 = arith.constant 0 : index
    %60 = vector.load %arg2[%c6_61, %c0_62, %c0_63] : memref<7x96x416xbf16, #tpu.memory_space<vmem>>, vector<1x96x416xbf16>
    %61 = vector.shape_cast %60 : vector<1x96x416xbf16> to vector<96x416xbf16>
    %cst_64 = arith.constant dense<0.000000e+00> : vector<26x416xf32>
    %62 = tpu.matmul %59, %61, %cst_64 {dimension_numbers = #tpu.dot_dimension_numbers<[1], [0], [0], [1], [0, 0, 1, 1], [], []>} : vector<26x96xbf16>, vector<96x416xbf16>, vector<26x416xf32> -> vector<26x416xf32>
    %63 = arith.addf %53, %62 : vector<26x416xf32>
    %c6_65 = arith.constant 6 : index
    %c0_66 = arith.constant 0 : index
    %c0_67 = arith.constant 0 : index
    %64 = vector.load %arg3[%c6_65, %c0_66, %c0_67] : memref<7x96x416xbf16, #tpu.memory_space<vmem>>, vector<1x96x416xbf16>
    %65 = vector.shape_cast %64 : vector<1x96x416xbf16> to vector<96x416xbf16>
    %cst_68 = arith.constant dense<0.000000e+00> : vector<26x416xf32>
    %66 = tpu.matmul %59, %65, %cst_68 {dimension_numbers = #tpu.dot_dimension_numbers<[1], [0], [0], [1], [0, 0, 1, 1], [], []>} : vector<26x96xbf16>, vector<96x416xbf16>, vector<26x416xf32> -> vector<26x416xf32>
    %67 = arith.addf %57, %66 : vector<26x416xf32>
    %68 = arith.maximumf %63, %67 : vector<26x416xf32>
    %c0_69 = arith.constant 0 : index
    %c0_70 = arith.constant 0 : index
    %c0_71 = arith.constant 0 : index
    %69 = vector.load %arg5[%c0_69, %c0_70, %c0_71] : memref<2x13x26xf32, #tpu.memory_space<vmem>>, vector<1x13x26xf32>
    %70 = vector.shape_cast %69 : vector<1x13x26xf32> to vector<13x26xf32>
    %cst_72 = arith.constant dense<0.000000e+00> : vector<13x416xf32>
    %71 = tpu.matmul %70, %68, %cst_72 {dimension_numbers = #tpu.dot_dimension_numbers<[1], [0], [0], [1], [0, 0, 1, 1], [], []>} : vector<13x26xf32>, vector<26x416xf32>, vector<13x416xf32> -> vector<13x416xf32>
    %c1_73 = arith.constant 1 : index
    %c0_74 = arith.constant 0 : index
    %c0_75 = arith.constant 0 : index
    %72 = vector.load %arg5[%c1_73, %c0_74, %c0_75] : memref<2x13x26xf32, #tpu.memory_space<vmem>>, vector<1x13x26xf32>
    %73 = vector.shape_cast %72 : vector<1x13x26xf32> to vector<13x26xf32>
    %cst_76 = arith.constant dense<0.000000e+00> : vector<13x416xf32>
    %74 = tpu.matmul %73, %68, %cst_76 {dimension_numbers = #tpu.dot_dimension_numbers<[1], [0], [0], [1], [0, 0, 1, 1], [], []>} : vector<13x26xf32>, vector<26x416xf32>, vector<13x416xf32> -> vector<13x416xf32>
    %75 = arith.maximumf %71, %74 : vector<13x416xf32>
    %c0_77 = arith.constant 0 : index
    %c0_78 = arith.constant 0 : index
    %76 = vector.load %arg4[%c0_77, %c0_78] : memref<1x416xf32, #tpu.memory_space<vmem>>, vector<1x416xf32>
    %77 = vector.broadcast %76 : vector<1x416xf32> to vector<13x416xf32>
    %78 = arith.addf %75, %77 : vector<13x416xf32>
    %cst_79 = arith.constant 0.000000e+00 : f32
    %79 = vector.broadcast %cst_79 : f32 to vector<13x416xf32>
    %80 = arith.maximumf %78, %79 : vector<13x416xf32>
    %c0_80 = arith.constant 0 : index
    %c0_81 = arith.constant 0 : index
    %81 = vector.load %arg19[%c0_80, %c0_81] : memref<13x416xf32, #tpu.memory_space<vmem>>, vector<13x416xf32>
    tpu.vector_store %arg19[%c0_80, %c0_81], %80 {strides = array<i32>} : memref<13x416xf32, #tpu.memory_space<vmem>>, vector<13x416xf32>,
    %c0_82 = arith.constant 0 : index
    %c0_83 = arith.constant 0 : index
    %82 = vector.load %arg19[%c0_82, %c0_83] : memref<13x416xf32, #tpu.memory_space<vmem>>, vector<11x416xf32>
    %83 = arith.truncf %82 : vector<11x416xf32> to vector<11x416xbf16>
    %c0_84 = arith.constant 0 : index
    %c0_85 = arith.constant 0 : index
    %c0_86 = arith.constant 0 : index
    %84 = vector.load %arg6[%c0_84, %c0_85, %c0_86] : memref<3x416x320xbf16, #tpu.memory_space<vmem>>, vector<1x416x320xbf16>
    %85 = vector.shape_cast %84 : vector<1x416x320xbf16> to vector<416x320xbf16>
    %cst_87 = arith.constant dense<0.000000e+00> : vector<11x320xf32>
    %86 = tpu.matmul %83, %85, %cst_87 {dimension_numbers = #tpu.dot_dimension_numbers<[1], [0], [0], [1], [0, 0, 1, 1], [], []>} : vector<11x416xbf16>, vector<416x320xbf16>, vector<11x320xf32> -> vector<11x320xf32>
    %c0_88 = arith.constant 0 : index
    %c0_89 = arith.constant 0 : index
    %c0_90 = arith.constant 0 : index
    %87 = vector.load %arg7[%c0_88, %c0_89, %c0_90] : memref<3x416x320xbf16, #tpu.memory_space<vmem>>, vector<1x416x320xbf16>
    %88 = vector.shape_cast %87 : vector<1x416x320xbf16> to vector<416x320xbf16>
    %cst_91 = arith.constant dense<0.000000e+00> : vector<11x320xf32>
    %89 = tpu.matmul %83, %88, %cst_91 {dimension_numbers = #tpu.dot_dimension_numbers<[1], [0], [0], [1], [0, 0, 1, 1], [], []>} : vector<11x416xbf16>, vector<416x320xbf16>, vector<11x320xf32> -> vector<11x320xf32>
    %c1_92 = arith.constant 1 : index
    %c0_93 = arith.constant 0 : index
    %90 = vector.load %arg19[%c1_92, %c0_93] : memref<13x416xf32, #tpu.memory_space<vmem>>, vector<11x416xf32>
    %91 = arith.truncf %90 : vector<11x416xf32> to vector<11x416xbf16>
    %c1_94 = arith.constant 1 : index
    %c0_95 = arith.constant 0 : index
    %c0_96 = arith.constant 0 : index
    %92 = vector.load %arg6[%c1_94, %c0_95, %c0_96] : memref<3x416x320xbf16, #tpu.memory_space<vmem>>, vector<1x416x320xbf16>
    %93 = vector.shape_cast %92 : vector<1x416x320xbf16> to vector<416x320xbf16>
    %cst_97 = arith.constant dense<0.000000e+00> : vector<11x320xf32>
    %94 = tpu.matmul %91, %93, %cst_97 {dimension_numbers = #tpu.dot_dimension_numbers<[1], [0], [0], [1], [0, 0, 1, 1], [], []>} : vector<11x416xbf16>, vector<416x320xbf16>, vector<11x320xf32> -> vector<11x320xf32>
    %95 = arith.addf %86, %94 : vector<11x320xf32>
    %c1_98 = arith.constant 1 : index
    %c0_99 = arith.constant 0 : index
    %c0_100 = arith.constant 0 : index
    %96 = vector.load %arg7[%c1_98, %c0_99, %c0_100] : memref<3x416x320xbf16, #tpu.memory_space<vmem>>, vector<1x416x320xbf16>
    %97 = vector.shape_cast %96 : vector<1x416x320xbf16> to vector<416x320xbf16>
    %cst_101 = arith.constant dense<0.000000e+00> : vector<11x320xf32>
    %98 = tpu.matmul %91, %97, %cst_101 {dimension_numbers = #tpu.dot_dimension_numbers<[1], [0], [0], [1], [0, 0, 1, 1], [], []>} : vector<11x416xbf16>, vector<416x320xbf16>, vector<11x320xf32> -> vector<11x320xf32>
    %99 = arith.addf %89, %98 : vector<11x320xf32>
    %c2_102 = arith.constant 2 : index
    %c0_103 = arith.constant 0 : index
    %100 = vector.load %arg19[%c2_102, %c0_103] : memref<13x416xf32, #tpu.memory_space<vmem>>, vector<11x416xf32>
    %101 = arith.truncf %100 : vector<11x416xf32> to vector<11x416xbf16>
    %c2_104 = arith.constant 2 : index
    %c0_105 = arith.constant 0 : index
    %c0_106 = arith.constant 0 : index
    %102 = vector.load %arg6[%c2_104, %c0_105, %c0_106] : memref<3x416x320xbf16, #tpu.memory_space<vmem>>, vector<1x416x320xbf16>
    %103 = vector.shape_cast %102 : vector<1x416x320xbf16> to vector<416x320xbf16>
    %cst_107 = arith.constant dense<0.000000e+00> : vector<11x320xf32>
    %104 = tpu.matmul %101, %103, %cst_107 {dimension_numbers = #tpu.dot_dimension_numbers<[1], [0], [0], [1], [0, 0, 1, 1], [], []>} : vector<11x416xbf16>, vector<416x320xbf16>, vector<11x320xf32> -> vector<11x320xf32>
    %105 = arith.addf %95, %104 : vector<11x320xf32>
    %c2_108 = arith.constant 2 : index
    %c0_109 = arith.constant 0 : index
    %c0_110 = arith.constant 0 : index
    %106 = vector.load %arg7[%c2_108, %c0_109, %c0_110] : memref<3x416x320xbf16, #tpu.memory_space<vmem>>, vector<1x416x320xbf16>
    %107 = vector.shape_cast %106 : vector<1x416x320xbf16> to vector<416x320xbf16>
    %cst_111 = arith.constant dense<0.000000e+00> : vector<11x320xf32>
    %108 = tpu.matmul %101, %107, %cst_111 {dimension_numbers = #tpu.dot_dimension_numbers<[1], [0], [0], [1], [0, 0, 1, 1], [], []>} : vector<11x416xbf16>, vector<416x320xbf16>, vector<11x320xf32> -> vector<11x320xf32>
    %109 = arith.addf %99, %108 : vector<11x320xf32>
    %110 = arith.maximumf %105, %109 : vector<11x320xf32>
    %c0_112 = arith.constant 0 : index
    %c0_113 = arith.constant 0 : index
    %c0_114 = arith.constant 0 : index
    %111 = vector.load %arg9[%c0_112, %c0_113, %c0_114] : memref<2x5x11xf32, #tpu.memory_space<vmem>>, vector<1x5x11xf32>
    %112 = vector.shape_cast %111 : vector<1x5x11xf32> to vector<5x11xf32>
    %cst_115 = arith.constant dense<0.000000e+00> : vector<5x320xf32>
    %113 = tpu.matmul %112, %110, %cst_115 {dimension_numbers = #tpu.dot_dimension_numbers<[1], [0], [0], [1], [0, 0, 1, 1], [], []>} : vector<5x11xf32>, vector<11x320xf32>, vector<5x320xf32> -> vector<5x320xf32>
    %c1_116 = arith.constant 1 : index
    %c0_117 = arith.constant 0 : index
    %c0_118 = arith.constant 0 : index
    %114 = vector.load %arg9[%c1_116, %c0_117, %c0_118] : memref<2x5x11xf32, #tpu.memory_space<vmem>>, vector<1x5x11xf32>
    %115 = vector.shape_cast %114 : vector<1x5x11xf32> to vector<5x11xf32>
    %cst_119 = arith.constant dense<0.000000e+00> : vector<5x320xf32>
    %116 = tpu.matmul %115, %110, %cst_119 {dimension_numbers = #tpu.dot_dimension_numbers<[1], [0], [0], [1], [0, 0, 1, 1], [], []>} : vector<5x11xf32>, vector<11x320xf32>, vector<5x320xf32> -> vector<5x320xf32>
    %117 = arith.maximumf %113, %116 : vector<5x320xf32>
    %c0_120 = arith.constant 0 : index
    %c0_121 = arith.constant 0 : index
    %118 = vector.load %arg8[%c0_120, %c0_121] : memref<1x320xf32, #tpu.memory_space<vmem>>, vector<1x320xf32>
    %119 = vector.broadcast %118 : vector<1x320xf32> to vector<5x320xf32>
    %120 = arith.addf %117, %119 : vector<5x320xf32>
    %cst_122 = arith.constant 0.000000e+00 : f32
    %121 = vector.broadcast %cst_122 : f32 to vector<5x320xf32>
    %122 = arith.maximumf %120, %121 : vector<5x320xf32>
    %c0_123 = arith.constant 0 : index
    %c0_124 = arith.constant 0 : index
    %123 = vector.load %arg20[%c0_123, %c0_124] : memref<5x320xf32, #tpu.memory_space<vmem>>, vector<5x320xf32>
    tpu.vector_store %arg20[%c0_123, %c0_124], %122 {strides = array<i32>} : memref<5x320xf32, #tpu.memory_space<vmem>>, vector<5x320xf32>,
    %c0_125 = arith.constant 0 : index
    %c0_126 = arith.constant 0 : index
    %124 = vector.load %arg20[%c0_125, %c0_126] : memref<5x320xf32, #tpu.memory_space<vmem>>, vector<3x320xf32>
    %125 = arith.truncf %124 : vector<3x320xf32> to vector<3x320xbf16>
    %c0_127 = arith.constant 0 : index
    %c0_128 = arith.constant 0 : index
    %c0_129 = arith.constant 0 : index
    %126 = vector.load %arg10[%c0_127, %c0_128, %c0_129] : memref<3x320x128xbf16, #tpu.memory_space<vmem>>, vector<1x320x128xbf16>
    %127 = vector.shape_cast %126 : vector<1x320x128xbf16> to vector<320x128xbf16>
    %cst_130 = arith.constant dense<0.000000e+00> : vector<3x128xf32>
    %128 = tpu.matmul %125, %127, %cst_130 {dimension_numbers = #tpu.dot_dimension_numbers<[1], [0], [0], [1], [0, 0, 1, 1], [], []>} : vector<3x320xbf16>, vector<320x128xbf16>, vector<3x128xf32> -> vector<3x128xf32>
    %c0_131 = arith.constant 0 : index
    %c0_132 = arith.constant 0 : index
    %c0_133 = arith.constant 0 : index
    %129 = vector.load %arg11[%c0_131, %c0_132, %c0_133] : memref<3x320x128xbf16, #tpu.memory_space<vmem>>, vector<1x320x128xbf16>
    %130 = vector.shape_cast %129 : vector<1x320x128xbf16> to vector<320x128xbf16>
    %cst_134 = arith.constant dense<0.000000e+00> : vector<3x128xf32>
    %131 = tpu.matmul %125, %130, %cst_134 {dimension_numbers = #tpu.dot_dimension_numbers<[1], [0], [0], [1], [0, 0, 1, 1], [], []>} : vector<3x320xbf16>, vector<320x128xbf16>, vector<3x128xf32> -> vector<3x128xf32>
    %c1_135 = arith.constant 1 : index
    %c0_136 = arith.constant 0 : index
    %132 = vector.load %arg20[%c1_135, %c0_136] : memref<5x320xf32, #tpu.memory_space<vmem>>, vector<3x320xf32>
    %133 = arith.truncf %132 : vector<3x320xf32> to vector<3x320xbf16>
    %c1_137 = arith.constant 1 : index
    %c0_138 = arith.constant 0 : index
    %c0_139 = arith.constant 0 : index
    %134 = vector.load %arg10[%c1_137, %c0_138, %c0_139] : memref<3x320x128xbf16, #tpu.memory_space<vmem>>, vector<1x320x128xbf16>
    %135 = vector.shape_cast %134 : vector<1x320x128xbf16> to vector<320x128xbf16>
    %cst_140 = arith.constant dense<0.000000e+00> : vector<3x128xf32>
    %136 = tpu.matmul %133, %135, %cst_140 {dimension_numbers = #tpu.dot_dimension_numbers<[1], [0], [0], [1], [0, 0, 1, 1], [], []>} : vector<3x320xbf16>, vector<320x128xbf16>, vector<3x128xf32> -> vector<3x128xf32>
    %137 = arith.addf %128, %136 : vector<3x128xf32>
    %c1_141 = arith.constant 1 : index
    %c0_142 = arith.constant 0 : index
    %c0_143 = arith.constant 0 : index
    %138 = vector.load %arg11[%c1_141, %c0_142, %c0_143] : memref<3x320x128xbf16, #tpu.memory_space<vmem>>, vector<1x320x128xbf16>
    %139 = vector.shape_cast %138 : vector<1x320x128xbf16> to vector<320x128xbf16>
    %cst_144 = arith.constant dense<0.000000e+00> : vector<3x128xf32>
    %140 = tpu.matmul %133, %139, %cst_144 {dimension_numbers = #tpu.dot_dimension_numbers<[1], [0], [0], [1], [0, 0, 1, 1], [], []>} : vector<3x320xbf16>, vector<320x128xbf16>, vector<3x128xf32> -> vector<3x128xf32>
    %141 = arith.addf %131, %140 : vector<3x128xf32>
    %c2_145 = arith.constant 2 : index
    %c0_146 = arith.constant 0 : index
    %142 = vector.load %arg20[%c2_145, %c0_146] : memref<5x320xf32, #tpu.memory_space<vmem>>, vector<3x320xf32>
    %143 = arith.truncf %142 : vector<3x320xf32> to vector<3x320xbf16>
    %c2_147 = arith.constant 2 : index
    %c0_148 = arith.constant 0 : index
    %c0_149 = arith.constant 0 : index
    %144 = vector.load %arg10[%c2_147, %c0_148, %c0_149] : memref<3x320x128xbf16, #tpu.memory_space<vmem>>, vector<1x320x128xbf16>
    %145 = vector.shape_cast %144 : vector<1x320x128xbf16> to vector<320x128xbf16>
    %cst_150 = arith.constant dense<0.000000e+00> : vector<3x128xf32>
    %146 = tpu.matmul %143, %145, %cst_150 {dimension_numbers = #tpu.dot_dimension_numbers<[1], [0], [0], [1], [0, 0, 1, 1], [], []>} : vector<3x320xbf16>, vector<320x128xbf16>, vector<3x128xf32> -> vector<3x128xf32>
    %147 = arith.addf %137, %146 : vector<3x128xf32>
    %c2_151 = arith.constant 2 : index
    %c0_152 = arith.constant 0 : index
    %c0_153 = arith.constant 0 : index
    %148 = vector.load %arg11[%c2_151, %c0_152, %c0_153] : memref<3x320x128xbf16, #tpu.memory_space<vmem>>, vector<1x320x128xbf16>
    %149 = vector.shape_cast %148 : vector<1x320x128xbf16> to vector<320x128xbf16>
    %cst_154 = arith.constant dense<0.000000e+00> : vector<3x128xf32>
    %150 = tpu.matmul %143, %149, %cst_154 {dimension_numbers = #tpu.dot_dimension_numbers<[1], [0], [0], [1], [0, 0, 1, 1], [], []>} : vector<3x320xbf16>, vector<320x128xbf16>, vector<3x128xf32> -> vector<3x128xf32>
    %151 = arith.addf %141, %150 : vector<3x128xf32>
    %152 = arith.maximumf %147, %151 : vector<3x128xf32>
    %c0_155 = arith.constant 0 : index
    %c0_156 = arith.constant 0 : index
    %c0_157 = arith.constant 0 : index
    %153 = vector.load %arg13[%c0_155, %c0_156, %c0_157] : memref<2x1x3xf32, #tpu.memory_space<vmem>>, vector<1x1x3xf32>
    %154 = vector.shape_cast %153 : vector<1x1x3xf32> to vector<1x3xf32>
    %cst_158 = arith.constant dense<0.000000e+00> : vector<1x128xf32>
    %155 = tpu.matmul %154, %152, %cst_158 {dimension_numbers = #tpu.dot_dimension_numbers<[1], [0], [0], [1], [0, 0, 1, 1], [], []>} : vector<1x3xf32>, vector<3x128xf32>, vector<1x128xf32> -> vector<1x128xf32>
    %c1_159 = arith.constant 1 : index
    %c0_160 = arith.constant 0 : index
    %c0_161 = arith.constant 0 : index
    %156 = vector.load %arg13[%c1_159, %c0_160, %c0_161] : memref<2x1x3xf32, #tpu.memory_space<vmem>>, vector<1x1x3xf32>
    %157 = vector.shape_cast %156 : vector<1x1x3xf32> to vector<1x3xf32>
    %cst_162 = arith.constant dense<0.000000e+00> : vector<1x128xf32>
    %158 = tpu.matmul %157, %152, %cst_162 {dimension_numbers = #tpu.dot_dimension_numbers<[1], [0], [0], [1], [0, 0, 1, 1], [], []>} : vector<1x3xf32>, vector<3x128xf32>, vector<1x128xf32> -> vector<1x128xf32>
    %159 = arith.maximumf %155, %158 : vector<1x128xf32>
    %c0_163 = arith.constant 0 : index
    %c0_164 = arith.constant 0 : index
    %160 = vector.load %arg12[%c0_163, %c0_164] : memref<1x128xf32, #tpu.memory_space<vmem>>, vector<1x128xf32>
    %161 = arith.addf %159, %160 : vector<1x128xf32>
    %cst_165 = arith.constant 0.000000e+00 : f32
    %162 = vector.broadcast %cst_165 : f32 to vector<1x128xf32>
    %163 = arith.maximumf %161, %162 : vector<1x128xf32>
    %cst_166 = arith.constant dense<0.000000e+00> : vector<128xf32>
    %164 = vector.multi_reduction <add>, %163, %cst_166 [0] : vector<1x128xf32> to vector<128xf32>
    %165 = vector.shape_cast %164 : vector<128xf32> to vector<1x128xf32>
    %c0_167 = arith.constant 0 : index
    %c0_168 = arith.constant 0 : index
    %166 = vector.load %arg14[%c0_167, %c0_168] : memref<128x128xf32, #tpu.memory_space<vmem>>, vector<128x128xf32>
    %cst_169 = arith.constant dense<0.000000e+00> : vector<1x128xf32>
    %167 = tpu.matmul %165, %166, %cst_169 {dimension_numbers = #tpu.dot_dimension_numbers<[1], [0], [0], [1], [0, 0, 1, 1], [], []>} : vector<1x128xf32>, vector<128x128xf32>, vector<1x128xf32> -> vector<1x128xf32>
    %c0_170 = arith.constant 0 : index
    %c0_171 = arith.constant 0 : index
    %168 = vector.load %arg15[%c0_170, %c0_171] : memref<1x128xf32, #tpu.memory_space<vmem>>, vector<1x128xf32>
    %169 = arith.addf %167, %168 : vector<1x128xf32>
    %c0_172 = arith.constant 0 : index
    %c0_173 = arith.constant 0 : index
    %170 = vector.load %arg16[%c0_172, %c0_173] : memref<128x128xf32, #tpu.memory_space<vmem>>, vector<128x128xf32>
    %cst_174 = arith.constant dense<0.000000e+00> : vector<1x128xf32>
    %171 = tpu.matmul %169, %170, %cst_174 {dimension_numbers = #tpu.dot_dimension_numbers<[1], [0], [0], [1], [0, 0, 1, 1], [], []>} : vector<1x128xf32>, vector<128x128xf32>, vector<1x128xf32> -> vector<1x128xf32>
    %c0_175 = arith.constant 0 : index
    %c0_176 = arith.constant 0 : index
    %172 = vector.load %arg17[%c0_175, %c0_176] : memref<1x128xf32, #tpu.memory_space<vmem>>, vector<1x128xf32>
    %173 = arith.addf %171, %172 : vector<1x128xf32>
    %c0_177 = arith.constant 0 : index
    %c0_178 = arith.constant 0 : index
    %c0_179 = arith.constant 0 : index
    %174 = vector.load %arg18[%c0_177, %c0_178, %c0_179] : memref<1x1x128xf32, #tpu.memory_space<vmem>>, vector<1x1x128xf32>
    %175 = vector.shape_cast %174 : vector<1x1x128xf32> to vector<1x128xf32>
    %176 = vector.shape_cast %173 : vector<1x128xf32> to vector<1x1x128xf32>
    tpu.vector_store %arg18[%c0_177, %c0_178, %c0_179], %176 {strides = array<i32>} : memref<1x1x128xf32, #tpu.memory_space<vmem>>, vector<1x1x128xf32>,
    return
  }
  func.func @transform_0(%arg0: i32) -> (i32, i32, i32) {
    %c0_i32 = arith.constant 0 : i32
    %c0_i32_0 = arith.constant 0 : i32
    %c0_i32_1 = arith.constant 0 : i32
    return %arg0, %c0_i32, %c0_i32_0 : i32, i32, i32
  }
  func.func @transform_1(%arg0: i32) -> (i32, i32, i32) {
    %c0_i32 = arith.constant 0 : i32
    %c0_i32_0 = arith.constant 0 : i32
    %c0_i32_1 = arith.constant 0 : i32
    %c0_i32_2 = arith.constant 0 : i32
    return %c0_i32, %c0_i32_0, %c0_i32_1 : i32, i32, i32
  }
  func.func @transform_2(%arg0: i32) -> (i32, i32, i32) {
    %c0_i32 = arith.constant 0 : i32
    %c0_i32_0 = arith.constant 0 : i32
    %c0_i32_1 = arith.constant 0 : i32
    %c0_i32_2 = arith.constant 0 : i32
    return %c0_i32, %c0_i32_0, %c0_i32_1 : i32, i32, i32
  }
  func.func @transform_3(%arg0: i32) -> (i32, i32) {
    %c0_i32 = arith.constant 0 : i32
    %c0_i32_0 = arith.constant 0 : i32
    %c0_i32_1 = arith.constant 0 : i32
    return %c0_i32, %c0_i32_0 : i32, i32
  }
  func.func @transform_4(%arg0: i32) -> (i32, i32, i32) {
    %c0_i32 = arith.constant 0 : i32
    %c0_i32_0 = arith.constant 0 : i32
    %c0_i32_1 = arith.constant 0 : i32
    %c0_i32_2 = arith.constant 0 : i32
    return %c0_i32, %c0_i32_0, %c0_i32_1 : i32, i32, i32
  }
  func.func @transform_5(%arg0: i32) -> (i32, i32, i32) {
    %c0_i32 = arith.constant 0 : i32
    %c0_i32_0 = arith.constant 0 : i32
    %c0_i32_1 = arith.constant 0 : i32
    %c0_i32_2 = arith.constant 0 : i32
    return %c0_i32, %c0_i32_0, %c0_i32_1 : i32, i32, i32
  }
  func.func @transform_6(%arg0: i32) -> (i32, i32, i32) {
    %c0_i32 = arith.constant 0 : i32
    %c0_i32_0 = arith.constant 0 : i32
    %c0_i32_1 = arith.constant 0 : i32
    %c0_i32_2 = arith.constant 0 : i32
    return %c0_i32, %c0_i32_0, %c0_i32_1 : i32, i32, i32
  }
  func.func @transform_7(%arg0: i32) -> (i32, i32) {
    %c0_i32 = arith.constant 0 : i32
    %c0_i32_0 = arith.constant 0 : i32
    %c0_i32_1 = arith.constant 0 : i32
    return %c0_i32, %c0_i32_0 : i32, i32
  }
  func.func @transform_8(%arg0: i32) -> (i32, i32, i32) {
    %c0_i32 = arith.constant 0 : i32
    %c0_i32_0 = arith.constant 0 : i32
    %c0_i32_1 = arith.constant 0 : i32
    %c0_i32_2 = arith.constant 0 : i32
    return %c0_i32, %c0_i32_0, %c0_i32_1 : i32, i32, i32
  }
  func.func @transform_9(%arg0: i32) -> (i32, i32, i32) {
    %c0_i32 = arith.constant 0 : i32
    %c0_i32_0 = arith.constant 0 : i32
    %c0_i32_1 = arith.constant 0 : i32
    %c0_i32_2 = arith.constant 0 : i32
    return %c0_i32, %c0_i32_0, %c0_i32_1 : i32, i32, i32
  }
  func.func @transform_10(%arg0: i32) -> (i32, i32, i32) {
    %c0_i32 = arith.constant 0 : i32
    %c0_i32_0 = arith.constant 0 : i32
    %c0_i32_1 = arith.constant 0 : i32
    %c0_i32_2 = arith.constant 0 : i32
    return %c0_i32, %c0_i32_0, %c0_i32_1 : i32, i32, i32
  }
  func.func @transform_11(%arg0: i32) -> (i32, i32) {
    %c0_i32 = arith.constant 0 : i32
    %c0_i32_0 = arith.constant 0 : i32
    %c0_i32_1 = arith.constant 0 : i32
    return %c0_i32, %c0_i32_0 : i32, i32
  }
  func.func @transform_12(%arg0: i32) -> (i32, i32, i32) {
    %c0_i32 = arith.constant 0 : i32
    %c0_i32_0 = arith.constant 0 : i32
    %c0_i32_1 = arith.constant 0 : i32
    %c0_i32_2 = arith.constant 0 : i32
    return %c0_i32, %c0_i32_0, %c0_i32_1 : i32, i32, i32
  }
  func.func @transform_13(%arg0: i32) -> (i32, i32) {
    %c0_i32 = arith.constant 0 : i32
    %c0_i32_0 = arith.constant 0 : i32
    %c0_i32_1 = arith.constant 0 : i32
    return %c0_i32, %c0_i32_0 : i32, i32
  }
  func.func @transform_14(%arg0: i32) -> (i32, i32) {
    %c0_i32 = arith.constant 0 : i32
    %c0_i32_0 = arith.constant 0 : i32
    %c0_i32_1 = arith.constant 0 : i32
    return %c0_i32, %c0_i32_0 : i32, i32
  }
  func.func @transform_15(%arg0: i32) -> (i32, i32) {
    %c0_i32 = arith.constant 0 : i32
    %c0_i32_0 = arith.constant 0 : i32
    %c0_i32_1 = arith.constant 0 : i32
    return %c0_i32, %c0_i32_0 : i32, i32
  }
  func.func @transform_16(%arg0: i32) -> (i32, i32) {
    %c0_i32 = arith.constant 0 : i32
    %c0_i32_0 = arith.constant 0 : i32
    %c0_i32_1 = arith.constant 0 : i32
    return %c0_i32, %c0_i32_0 : i32, i32
  }
  func.func @transform_17(%arg0: i32) -> (i32, i32, i32) {
    %c0_i32 = arith.constant 0 : i32
    %c0_i32_0 = arith.constant 0 : i32
    %c0_i32_1 = arith.constant 0 : i32
    return %arg0, %c0_i32, %c0_i32_0 : i32, i32, i32
  }
}

</mosaic_0001>

<llo_original>
// kernel: toy_network_forward.1
$region0: #{toy_network_forward.1}
  #allocation0 [shape = 'u32[]', space=smem, size = 0x4, offset = 0x4, fixed_abs, tag = 'smem constant byte address 0x4 - core index']
  #allocation1 [shape = 'u32[144,128]{1,0:T(1,128)}', space=vmem, size = 0x12000, scoped, tag = 'internal scratch']
  #allocation2 [shape = 'f32[13,416]{1,0:T(8,128)}', space=vmem, size = 0x8000, scoped, tag = 'scratch operand']
  #allocation3 [shape = 'f32[5,320]{1,0:T(8,128)}', space=vmem, size = 0x3000, scoped, tag = 'scratch operand']
  %s0 = inlined_call_operand.vmem [shape: bf16[2,32,96], index: 0, kind: input, shape index: {}]
  %s1 = inlined_call_operand.hbm [shape: bf16[7,96,416], index: 1, kind: input, shape index: {}]
  %s2 = inlined_call_operand.hbm [shape: bf16[7,96,416], index: 2, kind: input, shape index: {}]
  %s3 = inlined_call_operand.vmem [shape: f32[1,416], index: 3, kind: input, shape index: {}]
  %s4 = inlined_call_operand.vmem [shape: f32[2,13,26], index: 4, kind: input, shape index: {}]
  %s5 = inlined_call_operand.hbm [shape: bf16[3,416,320], index: 5, kind: input, shape index: {}]
  %s6 = inlined_call_operand.hbm [shape: bf16[3,416,320], index: 6, kind: input, shape index: {}]
  %s7 = inlined_call_operand.vmem [shape: f32[1,320], index: 7, kind: input, shape index: {}]
  %s8 = inlined_call_operand.vmem [shape: f32[2,5,11], index: 8, kind: input, shape index: {}]
  %s9 = inlined_call_operand.vmem [shape: bf16[3,320,128], index: 9, kind: input, shape index: {}]
  %s10 = inlined_call_operand.hbm [shape: bf16[3,320,128], index: 10, kind: input, shape index: {}]
  %s11 = inlined_call_operand.vmem [shape: f32[1,128], index: 11, kind: input, shape index: {}]
  %s12 = inlined_call_operand.vmem [shape: f32[2,1,3], index: 12, kind: input, shape index: {}]
  %s13 = inlined_call_operand.vmem [shape: f32[128,128], index: 13, kind: input, shape index: {}]
  %s14 = inlined_call_operand.vmem [shape: f32[1,128], index: 14, kind: input, shape index: {}]
  %s15 = inlined_call_operand.hbm [shape: f32[128,128], index: 15, kind: input, shape index: {}]
  %s16 = inlined_call_operand.vmem [shape: f32[1,128], index: 16, kind: input, shape index: {}]
  %s17 = inlined_call_operand.hbm [shape: f32[2,1,128], index: 17, kind: output, shape index: {}]
  %s18 = sld [smem:[#allocation0]]
  $region125: #{toy_network_forward.1} parent=0
    _
  %s20 = ssub.s32 1, %s18
  %s21 = scalar_select 0, %s20, %s18
  $region1: #{toy_network_forward.1} parent=0
    #allocation4 [shape = 'u8[688128]{0}', space=vmem, size = 0xa8000, scoped, tag = 'input window, operand 1, single buffered']
    #allocation5 [shape = 's32[2]{0}', space=sflag, size = 0x8, scoped, tag = 'scoped memory for toy_network_forward.1']
    #allocation6 [shape = 's32[2]{0}', space=sflag, size = 0x8, scoped, tag = 'scoped memory for toy_network_forward.1']
    #allocation7 [shape = 'u8[688128]{0}', space=vmem, size = 0xa8000, scoped, tag = 'input window, operand 2, single buffered']
    #allocation8 [shape = 's32[1]{0}', space=sflag, size = 0x4, scoped, tag = 'scoped memory for toy_network_forward.1']
    #allocation9 [shape = 'u8[958464]{0}', space=vmem, size = 0xea000, scoped, tag = 'input window, operand 5, single buffered']
    #allocation10 [shape = 'u8[958464]{0}', space=vmem, size = 0xea000, scoped, tag = 'input window, operand 6, single buffered']
    #allocation11 [shape = 's32[1]{0}', space=sflag, size = 0x4, scoped, tag = 'scoped memory for toy_network_forward.1']
    #allocation12 [shape = 'u8[245760]{0}', space=vmem, size = 0x3c000, scoped, tag = 'input window, operand 10, single buffered']
    #allocation13 [shape = 'u8[65536]{0}', space=vmem, size = 0x10000, scoped, tag = 'input window, operand 15, single buffered']
    #allocation14 [shape = 's32[1]{0}', space=sflag, size = 0x4, scoped, tag = 'scoped memory for toy_network_forward.1']
    #allocation15 [shape = 'u8[1024]{0}', space=vmem, size = 0x400, scoped, tag = 'output window, operand 0']
    %22 = vsyncpa [#allocation5], 0
    %23 = vsyncpa [#allocation8], 0
    %24 = vsyncpa [#allocation11], 0
    %25 = vsyncpa [#allocation14], 0
    %26 = vsyncpa [#allocation6], 0
    %s27 = scalar_lea.sflag [#allocation6], 1
    %28 = vsyncpa %s27, 0
    loop: start=0, step=1, limit=4
    $region2: #{toy_network_forward.1} parent=1 // loop_pre_header
      _
    $region3: #{toy_network_forward.1} parent=1 // loop_header
      %s30 = sphi 0, %s34
      %p31 = scmp.ge.s32.totalorder %s30, 4
      %s40 = sphi 0, %s42
      %s43 = sphi 0, %s40
      %s44 = sphi 0, %s43
      %s60 = sphi 0, %s44
      %s64 = sphi 0, %s64
      %s66 = sphi 0, %s64
      %s67 = sphi 0, %s66
      %s81 = sphi 0, %s67
      %s85 = sphi 0, %s85
      %s87 = sphi 0, %s85
      %s88 = sphi 0, %s87
      %s102 = sphi 0, %s88
      %s106 = sphi 0, %s106
      %s108 = sphi 0, %s106
      %s109 = sphi 0, %s108
      %s123 = sphi 0, %s109
      %s127 = sphi 0, %s127
      %s129 = sphi 0, %s127
      %s130 = sphi 0, %s129
      %s144 = sphi 0, %s130
      %s148 = sphi 0, %s148
      %s150 = sphi 0, %s148
      %s151 = sphi 0, %s150
      %s165 = sphi 0, %s151
      %s169 = sphi 0, %s169
      %s171 = sphi 0, %s169
      %s172 = sphi 0, %s171
      %s186 = sphi 0, %s172
      %s190 = sphi 0, %s190
      %s192 = sphi 0, %s190
      %s193 = sphi 0, %s192
      %s207 = sphi 0, %s193
      %s211 = sphi 0, %s211
      %s213 = sphi 0, %s211
      %s214 = sphi 0, %s213
      %s228 = sphi 0, %s214
      %s232 = sphi 0, %s232
      %s234 = sphi 0, %s232
      %s235 = sphi 0, %s234
      %s249 = sphi 0, %s235
      %s253 = sphi 0, %s253
      %s255 = sphi 0, %s253
      %s256 = sphi 0, %s255
      %s270 = sphi 0, %s256
      %s274 = sphi 0, %s274
      %s276 = sphi 0, %s274
      %s277 = sphi 0, %s276
      %s291 = sphi 0, %s277
      %s295 = sphi 0, %s295
      %s297 = sphi 0, %s295
      %s298 = sphi 0, %s297
      %s312 = sphi 0, %s298
      %s316 = sphi 0, %s316
      %s318 = sphi 0, %s316
      %s319 = sphi 0, %s318
      %s333 = sphi 0, %s319
      %s337 = sphi 0, %s337
      %s339 = sphi 0, %s337
      %s340 = sphi 0, %s339
      %s354 = sphi 0, %s340
      %s358 = sphi 0, %s358
      %s360 = sphi 0, %s358
      %s361 = sphi 0, %s360
      %s375 = sphi 0, %s361
      %s379 = sphi 0, %s379
      %s381 = sphi 0, %s379
      %s382 = sphi 0, %s381
      %s396 = sphi 0, %s382
      %s402 = sphi 0, %s404
      %s405 = sphi 0, %s402
      %s406 = sphi 0, %s405
      %s422 = sphi 0, %s406
    $region4: #{toy_network_forward.1} parent=1 // loop_header_branch
      %33 = sbr.rel (%p31) target = $region8
    $region5: #{toy_network_forward.1} parent=1 // loop_body
      %s35 = ssub.s32 %s30, 1
      %s36 = ssub.s32 %s30, 2
      %s37 = sadd.s32 %s30, 1
      %s38 = ssub.s32 %s30, %s37
      %p39 = scmp.eq.s32.totalorder %s38, 0
      %s41 = sadd.s32 %s40, 1
      %s42 = scalar_select %p39, %s40, %s41
      %p45 = pneg %p39
      %p46 = scmp.eq.s32.totalorder %s30, 1
      %p47 = por %p45, %p46
      %p48 = scmp.ne.s32.totalorder %s40, %s43
      %p49 = scmp.eq.s32.totalorder %s30, 0
      %p50 = por %p48, %p49
      %p51 = scmp.ne.s32.totalorder %s40, %s43
      %p52 = scmp.eq.s32.totalorder %s35, 1
      %p53 = por %p51, %p52
      %p54 = scmp.ne.s32.totalorder %s43, %s44
      %p55 = scmp.eq.s32.totalorder %s35, 0
      %p56 = por %p54, %p55
      %p57 = scmp.ne.s32.totalorder %s43, %s44
      %p58 = scmp.eq.s32.totalorder %s36, 1
      %p59 = por %p57, %p58
      %p61 = scmp.ne.s32.totalorder %s44, %s60
      %p62 = scmp.eq.s32.totalorder %s36, 0
      %p63 = por %p61, %p62
      %s65 = sadd.s32 %s64, 1
      %p68 = scmp.eq.s32.totalorder %s30, 1
      %p69 = scmp.ne.s32.totalorder %s64, %s66
      %p70 = scmp.eq.s32.totalorder %s30, 0
      %p71 = por %p69, %p70
      %p72 = scmp.ne.s32.totalorder %s64, %s66
      %p73 = scmp.eq.s32.totalorder %s35, 1
      %p74 = por %p72, %p73
      %p75 = scmp.ne.s32.totalorder %s66, %s67
      %p76 = scmp.eq.s32.totalorder %s35, 0
      %p77 = por %p75, %p76
      %p78 = scmp.ne.s32.totalorder %s66, %s67
      %p79 = scmp.eq.s32.totalorder %s36, 1
      %p80 = por %p78, %p79
      %p82 = scmp.ne.s32.totalorder %s67, %s81
      %p83 = scmp.eq.s32.totalorder %s36, 0
      %p84 = por %p82, %p83
      %s86 = sadd.s32 %s85, 1
      %p89 = scmp.eq.s32.totalorder %s30, 1
      %p90 = scmp.ne.s32.totalorder %s85, %s87
      %p91 = scmp.eq.s32.totalorder %s30, 0
      %p92 = por %p90, %p91
      %p93 = scmp.ne.s32.totalorder %s85, %s87
      %p94 = scmp.eq.s32.totalorder %s35, 1
      %p95 = por %p93, %p94
      %p96 = scmp.ne.s32.totalorder %s87, %s88
      %p97 = scmp.eq.s32.totalorder %s35, 0
      %p98 = por %p96, %p97
      %p99 = scmp.ne.s32.totalorder %s87, %s88
      %p100 = scmp.eq.s32.totalorder %s36, 1
      %p101 = por %p99, %p100
      %p103 = scmp.ne.s32.totalorder %s88, %s102
      %p104 = scmp.eq.s32.totalorder %s36, 0
      %p105 = por %p103, %p104
      %s107 = sadd.s32 %s106, 1
      %p110 = scmp.eq.s32.totalorder %s30, 1
      %p111 = scmp.ne.s32.totalorder %s106, %s108
      %p112 = scmp.eq.s32.totalorder %s30, 0
      %p113 = por %p111, %p112
      %p114 = scmp.ne.s32.totalorder %s106, %s108
      %p115 = scmp.eq.s32.totalorder %s35, 1
      %p116 = por %p114, %p115
      %p117 = scmp.ne.s32.totalorder %s108, %s109
      %p118 = scmp.eq.s32.totalorder %s35, 0
      %p119 = por %p117, %p118
      %p120 = scmp.ne.s32.totalorder %s108, %s109
      %p121 = scmp.eq.s32.totalorder %s36, 1
      %p122 = por %p120, %p121
      %p124 = scmp.ne.s32.totalorder %s109, %s123
      %p125 = scmp.eq.s32.totalorder %s36, 0
      %p126 = por %p124, %p125
      %s128 = sadd.s32 %s127, 1
      %p131 = scmp.eq.s32.totalorder %s30, 1
      %p132 = scmp.ne.s32.totalorder %s127, %s129
      %p133 = scmp.eq.s32.totalorder %s30, 0
      %p134 = por %p132, %p133
      %p135 = scmp.ne.s32.totalorder %s127, %s129
      %p136 = scmp.eq.s32.totalorder %s35, 1
      %p137 = por %p135, %p136
      %p138 = scmp.ne.s32.totalorder %s129, %s130
      %p139 = scmp.eq.s32.totalorder %s35, 0
      %p140 = por %p138, %p139
      %p141 = scmp.ne.s32.totalorder %s129, %s130
      %p142 = scmp.eq.s32.totalorder %s36, 1
      %p143 = por %p141, %p142
      %p145 = scmp.ne.s32.totalorder %s130, %s144
      %p146 = scmp.eq.s32.totalorder %s36, 0
      %p147 = por %p145, %p146
      %s149 = sadd.s32 %s148, 1
      %p152 = scmp.eq.s32.totalorder %s30, 1
      %p153 = scmp.ne.s32.totalorder %s148, %s150
      %p154 = scmp.eq.s32.totalorder %s30, 0
      %p155 = por %p153, %p154
      %p156 = scmp.ne.s32.totalorder %s148, %s150
      %p157 = scmp.eq.s32.totalorder %s35, 1
      %p158 = por %p156, %p157
      %p159 = scmp.ne.s32.totalorder %s150, %s151
      %p160 = scmp.eq.s32.totalorder %s35, 0
      %p161 = por %p159, %p160
      %p162 = scmp.ne.s32.totalorder %s150, %s151
      %p163 = scmp.eq.s32.totalorder %s36, 1
      %p164 = por %p162, %p163
      %p166 = scmp.ne.s32.totalorder %s151, %s165
      %p167 = scmp.eq.s32.totalorder %s36, 0
      %p168 = por %p166, %p167
      %s170 = sadd.s32 %s169, 1
      %p173 = scmp.eq.s32.totalorder %s30, 1
      %p174 = scmp.ne.s32.totalorder %s169, %s171
      %p175 = scmp.eq.s32.totalorder %s30, 0
      %p176 = por %p174, %p175
      %p177 = scmp.ne.s32.totalorder %s169, %s171
      %p178 = scmp.eq.s32.totalorder %s35, 1
      %p179 = por %p177, %p178
      %p180 = scmp.ne.s32.totalorder %s171, %s172
      %p181 = scmp.eq.s32.totalorder %s35, 0
      %p182 = por %p180, %p181
      %p183 = scmp.ne.s32.totalorder %s171, %s172
      %p184 = scmp.eq.s32.totalorder %s36, 1
      %p185 = por %p183, %p184
      %p187 = scmp.ne.s32.totalorder %s172, %s186
      %p188 = scmp.eq.s32.totalorder %s36, 0
      %p189 = por %p187, %p188
      %s191 = sadd.s32 %s190, 1
      %p194 = scmp.eq.s32.totalorder %s30, 1
      %p195 = scmp.ne.s32.totalorder %s190, %s192
      %p196 = scmp.eq.s32.totalorder %s30, 0
      %p197 = por %p195, %p196
      %p198 = scmp.ne.s32.totalorder %s190, %s192
      %p199 = scmp.eq.s32.totalorder %s35, 1
      %p200 = por %p198, %p199
      %p201 = scmp.ne.s32.totalorder %s192, %s193
      %p202 = scmp.eq.s32.totalorder %s35, 0
      %p203 = por %p201, %p202
      %p204 = scmp.ne.s32.totalorder %s192, %s193
      %p205 = scmp.eq.s32.totalorder %s36, 1
      %p206 = por %p204, %p205
      %p208 = scmp.ne.s32.totalorder %s193, %s207
      %p209 = scmp.eq.s32.totalorder %s36, 0
      %p210 = por %p208, %p209
      %s212 = sadd.s32 %s211, 1
      %p215 = scmp.eq.s32.totalorder %s30, 1
      %p216 = scmp.ne.s32.totalorder %s211, %s213
      %p217 = scmp.eq.s32.totalorder %s30, 0
      %p218 = por %p216, %p217
      %p219 = scmp.ne.s32.totalorder %s211, %s213
      %p220 = scmp.eq.s32.totalorder %s35, 1
      %p221 = por %p219, %p220
      %p222 = scmp.ne.s32.totalorder %s213, %s214
      %p223 = scmp.eq.s32.totalorder %s35, 0
      %p224 = por %p222, %p223
      %p225 = scmp.ne.s32.totalorder %s213, %s214
      %p226 = scmp.eq.s32.totalorder %s36, 1
      %p227 = por %p225, %p226
      %p229 = scmp.ne.s32.totalorder %s214, %s228
      %p230 = scmp.eq.s32.totalorder %s36, 0
      %p231 = por %p229, %p230
      %s233 = sadd.s32 %s232, 1
      %p236 = scmp.eq.s32.totalorder %s30, 1
      %p237 = scmp.ne.s32.totalorder %s232, %s234
      %p238 = scmp.eq.s32.totalorder %s30, 0
      %p239 = por %p237, %p238
      %p240 = scmp.ne.s32.totalorder %s232, %s234
      %p241 = scmp.eq.s32.totalorder %s35, 1
      %p242 = por %p240, %p241
      %p243 = scmp.ne.s32.totalorder %s234, %s235
      %p244 = scmp.eq.s32.totalorder %s35, 0
      %p245 = por %p243, %p244
      %p246 = scmp.ne.s32.totalorder %s234, %s235
      %p247 = scmp.eq.s32.totalorder %s36, 1
      %p248 = por %p246, %p247
      %p250 = scmp.ne.s32.totalorder %s235, %s249
      %p251 = scmp.eq.s32.totalorder %s36, 0
      %p252 = por %p250, %p251
      %s254 = sadd.s32 %s253, 1
      %p257 = scmp.eq.s32.totalorder %s30, 1
      %p258 = scmp.ne.s32.totalorder %s253, %s255
      %p259 = scmp.eq.s32.totalorder %s30, 0
      %p260 = por %p258, %p259
      %p261 = scmp.ne.s32.totalorder %s253, %s255
      %p262 = scmp.eq.s32.totalorder %s35, 1
      %p263 = por %p261, %p262
      %p264 = scmp.ne.s32.totalorder %s255, %s256
      %p265 = scmp.eq.s32.totalorder %s35, 0
      %p266 = por %p264, %p265
      %p267 = scmp.ne.s32.totalorder %s255, %s256
      %p268 = scmp.eq.s32.totalorder %s36, 1
      %p269 = por %p267, %p268
      %p271 = scmp.ne.s32.totalorder %s256, %s270
      %p272 = scmp.eq.s32.totalorder %s36, 0
      %p273 = por %p271, %p272
      %s275 = sadd.s32 %s274, 1
      %p278 = scmp.eq.s32.totalorder %s30, 1
      %p279 = scmp.ne.s32.totalorder %s274, %s276
      %p280 = scmp.eq.s32.totalorder %s30, 0
      %p281 = por %p279, %p280
      %p282 = scmp.ne.s32.totalorder %s274, %s276
      %p283 = scmp.eq.s32.totalorder %s35, 1
      %p284 = por %p282, %p283
      %p285 = scmp.ne.s32.totalorder %s276, %s277
      %p286 = scmp.eq.s32.totalorder %s35, 0
      %p287 = por %p285, %p286
      %p288 = scmp.ne.s32.totalorder %s276, %s277
      %p289 = scmp.eq.s32.totalorder %s36, 1
      %p290 = por %p288, %p289
      %p292 = scmp.ne.s32.totalorder %s277, %s291
      %p293 = scmp.eq.s32.totalorder %s36, 0
      %p294 = por %p292, %p293
      %s296 = sadd.s32 %s295, 1
      %p299 = scmp.eq.s32.totalorder %s30, 1
      %p300 = scmp.ne.s32.totalorder %s295, %s297
      %p301 = scmp.eq.s32.totalorder %s30, 0
      %p302 = por %p300, %p301
      %p303 = scmp.ne.s32.totalorder %s295, %s297
      %p304 = scmp.eq.s32.totalorder %s35, 1
      %p305 = por %p303, %p304
      %p306 = scmp.ne.s32.totalorder %s297, %s298
      %p307 = scmp.eq.s32.totalorder %s35, 0
      %p308 = por %p306, %p307
      %p309 = scmp.ne.s32.totalorder %s297, %s298
      %p310 = scmp.eq.s32.totalorder %s36, 1
      %p311 = por %p309, %p310
      %p313 = scmp.ne.s32.totalorder %s298, %s312
      %p314 = scmp.eq.s32.totalorder %s36, 0
      %p315 = por %p313, %p314
      %s317 = sadd.s32 %s316, 1
      %p320 = scmp.eq.s32.totalorder %s30, 1
      %p321 = scmp.ne.s32.totalorder %s316, %s318
      %p322 = scmp.eq.s32.totalorder %s30, 0
      %p323 = por %p321, %p322
      %p324 = scmp.ne.s32.totalorder %s316, %s318
      %p325 = scmp.eq.s32.totalorder %s35, 1
      %p326 = por %p324, %p325
      %p327 = scmp.ne.s32.totalorder %s318, %s319
      %p328 = scmp.eq.s32.totalorder %s35, 0
      %p329 = por %p327, %p328
      %p330 = scmp.ne.s32.totalorder %s318, %s319
      %p331 = scmp.eq.s32.totalorder %s36, 1
      %p332 = por %p330, %p331
      %p334 = scmp.ne.s32.totalorder %s319, %s333
      %p335 = scmp.eq.s32.totalorder %s36, 0
      %p336 = por %p334, %p335
      %s338 = sadd.s32 %s337, 1
      %p341 = scmp.eq.s32.totalorder %s30, 1
      %p342 = scmp.ne.s32.totalorder %s337, %s339
      %p343 = scmp.eq.s32.totalorder %s30, 0
      %p344 = por %p342, %p343
      %p345 = scmp.ne.s32.totalorder %s337, %s339
      %p346 = scmp.eq.s32.totalorder %s35, 1
      %p347 = por %p345, %p346
      %p348 = scmp.ne.s32.totalorder %s339, %s340
      %p349 = scmp.eq.s32.totalorder %s35, 0
      %p350 = por %p348, %p349
      %p351 = scmp.ne.s32.totalorder %s339, %s340
      %p352 = scmp.eq.s32.totalorder %s36, 1
      %p353 = por %p351, %p352
      %p355 = scmp.ne.s32.totalorder %s340, %s354
      %p356 = scmp.eq.s32.totalorder %s36, 0
      %p357 = por %p355, %p356
      %s359 = sadd.s32 %s358, 1
      %p362 = scmp.eq.s32.totalorder %s30, 1
      %p363 = scmp.ne.s32.totalorder %s358, %s360
      %p364 = scmp.eq.s32.totalorder %s30, 0
      %p365 = por %p363, %p364
      %p366 = scmp.ne.s32.totalorder %s358, %s360
      %p367 = scmp.eq.s32.totalorder %s35, 1
      %p368 = por %p366, %p367
      %p369 = scmp.ne.s32.totalorder %s360, %s361
      %p370 = scmp.eq.s32.totalorder %s35, 0
      %p371 = por %p369, %p370
      %p372 = scmp.ne.s32.totalorder %s360, %s361
      %p373 = scmp.eq.s32.totalorder %s36, 1
      %p374 = por %p372, %p373
      %p376 = scmp.ne.s32.totalorder %s361, %s375
      %p377 = scmp.eq.s32.totalorder %s36, 0
      %p378 = por %p376, %p377
      %s380 = sadd.s32 %s379, 1
      %p383 = scmp.eq.s32.totalorder %s30, 1
      %p384 = scmp.ne.s32.totalorder %s379, %s381
      %p385 = scmp.eq.s32.totalorder %s30, 0
      %p386 = por %p384, %p385
      %p387 = scmp.ne.s32.totalorder %s379, %s381
      %p388 = scmp.eq.s32.totalorder %s35, 1
      %p389 = por %p387, %p388
      %p390 = scmp.ne.s32.totalorder %s381, %s382
      %p391 = scmp.eq.s32.totalorder %s35, 0
      %p392 = por %p390, %p391
      %p393 = scmp.ne.s32.totalorder %s381, %s382
      %p394 = scmp.eq.s32.totalorder %s36, 1
      %p395 = por %p393, %p394
      %p397 = scmp.ne.s32.totalorder %s382, %s396
      %p398 = scmp.eq.s32.totalorder %s36, 0
      %p399 = por %p397, %p398
      %s400 = ssub.s32 %s30, %s37
      %p401 = scmp.eq.s32.totalorder %s400, 0
      %s403 = sadd.s32 %s402, 1
      %s404 = scalar_select %p401, %s402, %s403
      %p407 = pneg %p401
      %p408 = scmp.eq.s32.totalorder %s30, 1
      %p409 = por %p407, %p408
      %p410 = scmp.ne.s32.totalorder %s402, %s405
      %p411 = scmp.eq.s32.totalorder %s30, 0
      %p412 = por %p410, %p411
      %p413 = scmp.ne.s32.totalorder %s402, %s405
      %p414 = scmp.eq.s32.totalorder %s35, 1
      %p415 = por %p413, %p414
      %p416 = scmp.ne.s32.totalorder %s405, %s406
      %p417 = scmp.eq.s32.totalorder %s35, 0
      %p418 = por %p416, %p417
      %p419 = scmp.ne.s32.totalorder %s405, %s406
      %p420 = scmp.eq.s32.totalorder %s36, 1
      %p421 = por %p419, %p420
      %p423 = scmp.ne.s32.totalorder %s406, %s422
      %p424 = scmp.eq.s32.totalorder %s36, 0
      %p425 = por %p423, %p424
      %p426 = scmp.le.s32.totalorder 1, %s30
      %p427 = scmp.lt.s32.totalorder %s30, 3
      %p428 = pnand %p426, %p427
      %p429 = pneg %p428
      // Predicated region
      $region9: #{toy_network_forward.1} parent=5 // pred_check
        _
      $region10: #{toy_network_forward.1} parent=5 // pred_check_branch
        %431 = sbr.rel (%p428) target = $region12
      $region11: #{toy_network_forward.1} parent=5 // pred_region
        %s432 = ssub.s32 %s30, 1
        // Predicated region
        $region13: #{toy_network_forward.1} parent=11 // pred_check
          %p433 = pneg %p77
        $region14: #{toy_network_forward.1} parent=11 // pred_check_branch
          %435 = sbr.rel (%p433) target = $region16
        $region15: #{toy_network_forward.1} parent=11 // pred_region
          %s437 = ssub.s32 21504, 21504
          %438 = vsyncadd [#allocation5], %s437
          %s439 = sshll.u32 [#allocation4], 4
          %s440 = int_to_ptr.vmem [resolvable:$true] %s439
          %445 = dma.hbm_to_vmem [thread:$0]  %s1, 21504, %s440, [#allocation5], 256, 256, 16
        $region16: #{toy_network_forward.1} parent=11 // pred_fallthru
          _
        // Predicated region
        $region17: #{toy_network_forward.1} parent=11 // pred_check
          %p446 = pneg %p98
        $region18: #{toy_network_forward.1} parent=11 // pred_check_branch
          %448 = sbr.rel (%p446) target = $region20
        $region19: #{toy_network_forward.1} parent=11 // pred_region
          %s450 = ssub.s32 21504, 21504
          %451 = vsyncadd [#allocation8], %s450
          %s452 = sshll.u32 [#allocation7], 4
          %s453 = int_to_ptr.vmem [resolvable:$true] %s452
          %458 = dma.hbm_to_vmem [thread:$0]  %s2, 21504, %s453, [#allocation8], 256, 256, 16
        $region20: #{toy_network_forward.1} parent=11 // pred_fallthru
          _
        // Predicated region
        $region21: #{toy_network_forward.1} parent=11 // pred_check
          %p459 = pneg %p119
        $region22: #{toy_network_forward.1} parent=11 // pred_check_branch
          %461 = sbr.rel (%p459) target = $region24
        $region23: #{toy_network_forward.1} parent=11 // pred_region
          _
        $region24: #{toy_network_forward.1} parent=11 // pred_fallthru
          _
        // Predicated region
        $region25: #{toy_network_forward.1} parent=11 // pred_check
          %p462 = pneg %p140
        $region26: #{toy_network_forward.1} parent=11 // pred_check_branch
          %464 = sbr.rel (%p462) target = $region28
        $region27: #{toy_network_forward.1} parent=11 // pred_region
          _
        $region28: #{toy_network_forward.1} parent=11 // pred_fallthru
          _
        // Predicated region
        $region29: #{toy_network_forward.1} parent=11 // pred_check
          %p465 = pneg %p161
        $region30: #{toy_network_forward.1} parent=11 // pred_check_branch
          %467 = sbr.rel (%p465) target = $region32
        $region31: #{toy_network_forward.1} parent=11 // pred_region
          %s469 = ssub.s32 29952, 29952
          %470 = vsyncadd [#allocation8], %s469
          %s471 = sshll.u32 [#allocation9], 4
          %s472 = int_to_ptr.vmem [resolvable:$true] %s471
          %477 = dma.hbm_to_vmem [thread:$0]  %s5, 29952, %s472, [#allocation8], 192, 192, 12
        $region32: #{toy_network_forward.1} parent=11 // pred_fallthru
          _
        // Predicated region
        $region33: #{toy_network_forward.1} parent=11 // pred_check
          %p478 = pneg %p182
        $region34: #{toy_network_forward.1} parent=11 // pred_check_branch
          %480 = sbr.rel (%p478) target = $region36
        $region35: #{toy_network_forward.1} parent=11 // pred_region
          %s482 = ssub.s32 29952, 29952
          %483 = vsyncadd [#allocation11], %s482
          %s484 = sshll.u32 [#allocation10], 4
          %s485 = int_to_ptr.vmem [resolvable:$true] %s484
          %490 = dma.hbm_to_vmem [thread:$0]  %s6, 29952, %s485, [#allocation11], 192, 192, 12
        $region36: #{toy_network_forward.1} parent=11 // pred_fallthru
          _
        // Predicated region
        $region37: #{toy_network_forward.1} parent=11 // pred_check
          %p491 = pneg %p203
        $region38: #{toy_network_forward.1} parent=11 // pred_check_branch
          %493 = sbr.rel (%p491) target = $region40
        $region39: #{toy_network_forward.1} parent=11 // pred_region
          _
        $region40: #{toy_network_forward.1} parent=11 // pred_fallthru
          _
        // Predicated region
        $region41: #{toy_network_forward.1} parent=11 // pred_check
          %p494 = pneg %p224
        $region42: #{toy_network_forward.1} parent=11 // pred_check_branch
          %496 = sbr.rel (%p494) target = $region44
        $region43: #{toy_network_forward.1} parent=11 // pred_region
          _
        $region44: #{toy_network_forward.1} parent=11 // pred_fallthru
          _
        // Predicated region
        $region45: #{toy_network_forward.1} parent=11 // pred_check
          %p497 = pneg %p245
        $region46: #{toy_network_forward.1} parent=11 // pred_check_branch
          %499 = sbr.rel (%p497) target = $region48
        $region47: #{toy_network_forward.1} parent=11 // pred_region
          _
        $region48: #{toy_network_forward.1} parent=11 // pred_fallthru
          _
        // Predicated region
        $region49: #{toy_network_forward.1} parent=11 // pred_check
          %p500 = pneg %p266
        $region50: #{toy_network_forward.1} parent=11 // pred_check_branch
          %502 = sbr.rel (%p500) target = $region52
        $region51: #{toy_network_forward.1} parent=11 // pred_region
          %s504 = ssub.s32 7680, 7680
          %505 = vsyncadd [#allocation11], %s504
          %s506 = sshll.u32 [#allocation12], 4
          %s507 = int_to_ptr.vmem [resolvable:$true] %s506
          %512 = dma.hbm_to_vmem [thread:$0]  %s10, 7680, %s507, [#allocation11], 64, 64, 4
        $region52: #{toy_network_forward.1} parent=11 // pred_fallthru
          _
        // Predicated region
        $region53: #{toy_network_forward.1} parent=11 // pred_check
          %p513 = pneg %p287
        $region54: #{toy_network_forward.1} parent=11 // pred_check_branch
          %515 = sbr.rel (%p513) target = $region56
        $region55: #{toy_network_forward.1} parent=11 // pred_region
          _
        $region56: #{toy_network_forward.1} parent=11 // pred_fallthru
          _
        // Predicated region
        $region57: #{toy_network_forward.1} parent=11 // pred_check
          %p516 = pneg %p308
        $region58: #{toy_network_forward.1} parent=11 // pred_check_branch
          %518 = sbr.rel (%p516) target = $region60
        $region59: #{toy_network_forward.1} parent=11 // pred_region
          _
        $region60: #{toy_network_forward.1} parent=11 // pred_fallthru
          _
        // Predicated region
        $region61: #{toy_network_forward.1} parent=11 // pred_check
          %p519 = pneg %p329
        $region62: #{toy_network_forward.1} parent=11 // pred_check_branch
          %521 = sbr.rel (%p519) target = $region64
        $region63: #{toy_network_forward.1} parent=11 // pred_region
          _
        $region64: #{toy_network_forward.1} parent=11 // pred_fallthru
          _
        // Predicated region
        $region65: #{toy_network_forward.1} parent=11 // pred_check
          %p522 = pneg %p350
        $region66: #{toy_network_forward.1} parent=11 // pred_check_branch
          %524 = sbr.rel (%p522) target = $region68
        $region67: #{toy_network_forward.1} parent=11 // pred_region
          _
        $region68: #{toy_network_forward.1} parent=11 // pred_fallthru
          _
        // Predicated region
        $region69: #{toy_network_forward.1} parent=11 // pred_check
          %p525 = pneg %p371
        $region70: #{toy_network_forward.1} parent=11 // pred_check_branch
          %527 = sbr.rel (%p525) target = $region72
        $region71: #{toy_network_forward.1} parent=11 // pred_region
          %s529 = ssub.s32 2048, 2048
          %530 = vsyncadd [#allocation14], %s529
          %s531 = sshll.u32 [#allocation13], 4
          %s532 = int_to_ptr.vmem [resolvable:$true] %s531
          %537 = dma.hbm_to_vmem [thread:$0]  %s15, 2048, %s532, [#allocation14], 128, 128, 8
        $region72: #{toy_network_forward.1} parent=11 // pred_fallthru
          _
        // Predicated region
        $region73: #{toy_network_forward.1} parent=11 // pred_check
          %p538 = pneg %p392
        $region74: #{toy_network_forward.1} parent=11 // pred_check_branch
          %540 = sbr.rel (%p538) target = $region76
        $region75: #{toy_network_forward.1} parent=11 // pred_region
          _
        $region76: #{toy_network_forward.1} parent=11 // pred_fallthru
          _
      $region12: #{toy_network_forward.1} parent=5 // pred_fallthru
        _
      %p541 = scmp.lt.s32.totalorder %s30, 2
      // Predicated region
      $region77: #{toy_network_forward.1} parent=5 // pred_check
        %p542 = pneg %p541
      $region78: #{toy_network_forward.1} parent=5 // pred_check_branch
        %544 = sbr.rel (%p542) target = $region80
      $region79: #{toy_network_forward.1} parent=5 // pred_region
        // Predicated region
        $region81: #{toy_network_forward.1} parent=79 // pred_check
          %p545 = pneg %p50
        $region82: #{toy_network_forward.1} parent=79 // pred_check_branch
          %547 = sbr.rel (%p545) target = $region84
        $region83: #{toy_network_forward.1} parent=79 // pred_region
          %p548 = scmp.lt.s32.totalorder %s30, 1
          %s549 = scalar_select %p548, %s30, 1
          %s550 = smul.addr %s549, 4
          %s551 = smul.addr %s550, 4
          %s552 = scalar_lea.vmem %s0, %s551
        $region84: #{toy_network_forward.1} parent=79 // pred_fallthru
          _
      $region80: #{toy_network_forward.1} parent=5 // pred_fallthru
        _
      %p553 = scmp.le.s32.totalorder 1, %s30
      %p554 = scmp.lt.s32.totalorder %s30, 3
      %p555 = pnand %p553, %p554
      %p556 = pneg %p555
      // Predicated region
      $region85: #{toy_network_forward.1} parent=5 // pred_check
        _
      $region86: #{toy_network_forward.1} parent=5 // pred_check_branch
        %558 = sbr.rel (%p555) target = $region88
      $region87: #{toy_network_forward.1} parent=5 // pred_region
        %s559 = ssub.s32 %s30, 1
        // Predicated region
        $region89: #{toy_network_forward.1} parent=87 // pred_check
          %p560 = pneg %p77
        $region90: #{toy_network_forward.1} parent=87 // pred_check_branch
          %562 = sbr.rel (%p560) target = $region92
        $region91: #{toy_network_forward.1} parent=87 // pred_region
          %563 = dma.done [#allocation5], 21504
        $region92: #{toy_network_forward.1} parent=87 // pred_fallthru
          _
        // Predicated region
        $region93: #{toy_network_forward.1} parent=87 // pred_check
          %p564 = pneg %p98
        $region94: #{toy_network_forward.1} parent=87 // pred_check_branch
          %566 = sbr.rel (%p564) target = $region96
        $region95: #{toy_network_forward.1} parent=87 // pred_region
          %567 = dma.done [#allocation8], 21504
        $region96: #{toy_network_forward.1} parent=87 // pred_fallthru
          _
        // Predicated region
        $region97: #{toy_network_forward.1} parent=87 // pred_check
          %p568 = pneg %p161
        $region98: #{toy_network_forward.1} parent=87 // pred_check_branch
          %570 = sbr.rel (%p568) target = $region100
        $region99: #{toy_network_forward.1} parent=87 // pred_region
          %571 = dma.done [#allocation8], 29952
        $region100: #{toy_network_forward.1} parent=87 // pred_fallthru
          _
        // Predicated region
        $region101: #{toy_network_forward.1} parent=87 // pred_check
          %p572 = pneg %p182
        $region102: #{toy_network_forward.1} parent=87 // pred_check_branch
          %574 = sbr.rel (%p572) target = $region104
        $region103: #{toy_network_forward.1} parent=87 // pred_region
          %575 = dma.done [#allocation11], 29952
        $region104: #{toy_network_forward.1} parent=87 // pred_fallthru
          _
        // Predicated region
        $region105: #{toy_network_forward.1} parent=87 // pred_check
          %p576 = pneg %p266
        $region106: #{toy_network_forward.1} parent=87 // pred_check_branch
          %578 = sbr.rel (%p576) target = $region108
        $region107: #{toy_network_forward.1} parent=87 // pred_region
          %579 = dma.done [#allocation11], 7680
        $region108: #{toy_network_forward.1} parent=87 // pred_fallthru
          _
        // Predicated region
        $region109: #{toy_network_forward.1} parent=87 // pred_check
          %p580 = pneg %p371
        $region110: #{toy_network_forward.1} parent=87 // pred_check_branch
          %582 = sbr.rel (%p580) target = $region112
        $region111: #{toy_network_forward.1} parent=87 // pred_region
          %583 = dma.done [#allocation14], 2048
        $region112: #{toy_network_forward.1} parent=87 // pred_fallthru
          _
        %p584 = scmp.lt.s32.totalorder %s35, 1
        %s585 = scalar_select %p584, %s35, 1
        %s586 = smul.addr %s585, 4
        %s587 = smul.addr %s586, 4
        %s588 = scalar_lea.vmem %s0, %s587
        %p589 = pneg %p56
        %p590 = pneg %p53
        %p591 = pneg %p77
        %p592 = pneg %p74
        %p593 = pneg %p98
        %p594 = pneg %p95
        %p595 = pneg %p119
        %p596 = pneg %p116
        %p597 = pneg %p140
        %p598 = pneg %p137
        %p599 = pneg %p161
        %p600 = pneg %p158
        %p601 = pneg %p182
        %p602 = pneg %p179
        %p603 = pneg %p203
        %p604 = pneg %p200
        %p605 = pneg %p224
        %p606 = pneg %p221
        %p607 = pneg %p245
        %p608 = pneg %p242
        %p609 = pneg %p266
        %p610 = pneg %p263
        %p611 = pneg %p287
        %p612 = pneg %p284
        %p613 = pneg %p308
        %p614 = pneg %p305
        %p615 = pneg %p329
        %p616 = pneg %p326
        %p617 = pneg %p350
        %p618 = pneg %p347
        %p619 = pneg %p371
        %p620 = pneg %p368
        %p621 = pneg %p392
        %p622 = pneg %p389
        %p623 = pneg %p418
        %p624 = pneg %p415
        %s625 = sand.u32 %s405, 1
        %s626 = scalar_lea.sflag [#allocation6], %s625
        %s627 = sand.u32 %s405, 1
        %s628 = scalar_lea.vmem [#allocation15], %s627
        %p629 = scmp.lt.s32.totalorder %s35, 1
        %s630 = scalar_select %p629, %s35, 1
        %s631 = smul.addr %s630, 4
        %s632 = smul.addr %s631, 4
        %s633 = scalar_lea.vmem %s0, %s632
        %v635 = vld [vmem:[%s633] sm:$0xf]
        %v636 = vld [vmem:[%s633 + $0x4] sm:$0xf]
        %v637 = vld [vmem:[%s633 + $0x8] sm:$0xf]
        %v638 = vld [vmem:[%s633 + $0xc] sm:$0x1]
        %v639 = vld [vmem:[#allocation4] sm:$0xff]
        %v640 = vld [vmem:[#allocation4 + $0x8] sm:$0xff]
        %v641 = vld [vmem:[#allocation4 + $0x10] sm:$0xff]
        %v642 = vld [vmem:[#allocation4 + $0x18] sm:$0xff]
        %v643 = vld [vmem:[#allocation4 + $0x20] sm:$0xff]
        %v644 = vld [vmem:[#allocation4 + $0x28] sm:$0xff]
        %v645 = vld [vmem:[#allocation4 + $0x30] sm:$0xff]
        %v646 = vld [vmem:[#allocation4 + $0x38] sm:$0xff]
        %v647 = vld [vmem:[#allocation4 + $0x40] sm:$0xff]
        %v648 = vld [vmem:[#allocation4 + $0x48] sm:$0xff]
        %v649 = vld [vmem:[#allocation4 + $0x50] sm:$0xff]
        %v650 = vld [vmem:[#allocation4 + $0x58] sm:$0xff]
        %v651 = vld [vmem:[#allocation4 + $0x60] sm:$0xff]
        %v652 = vld [vmem:[#allocation4 + $0x68] sm:$0xff]
        %v653 = vld [vmem:[#allocation4 + $0x70] sm:$0xff]
        %v654 = vld [vmem:[#allocation4 + $0x78] sm:$0xff]
        %v655 = vld [vmem:[#allocation4 + $0x80] sm:$0xff]
        %v656 = vld [vmem:[#allocation4 + $0x88] sm:$0xff]
        %v657 = vld [vmem:[#allocation4 + $0x90] sm:$0xff]
        %v658 = vld [vmem:[#allocation4 + $0x98] sm:$0xff]
        %v659 = vld [vmem:[#allocation4 + $0xa0] sm:$0xff]
        %v660 = vld [vmem:[#allocation4 + $0xa8] sm:$0xff]
        %v661 = vld [vmem:[#allocation4 + $0xb0] sm:$0xff]
        %v662 = vld [vmem:[#allocation4 + $0xb8] sm:$0xff]
        %v663 = vld [vmem:[#allocation7] sm:$0xff]
        %v664 = vld [vmem:[#allocation7 + $0x8] sm:$0xff]
        %v665 = vld [vmem:[#allocation7 + $0x10] sm:$0xff]
        %v666 = vld [vmem:[#allocation7 + $0x18] sm:$0xff]
        %v667 = vld [vmem:[#allocation7 + $0x20] sm:$0xff]
        %v668 = vld [vmem:[#allocation7 + $0x28] sm:$0xff]
        %v669 = vld [vmem:[#allocation7 + $0x30] sm:$0xff]
        %v670 = vld [vmem:[#allocation7 + $0x38] sm:$0xff]
        %v671 = vld [vmem:[#allocation7 + $0x40] sm:$0xff]
        %v672 = vld [vmem:[#allocation7 + $0x48] sm:$0xff]
        %v673 = vld [vmem:[#allocation7 + $0x50] sm:$0xff]
        %v674 = vld [vmem:[#allocation7 + $0x58] sm:$0xff]
        %v675 = vld [vmem:[#allocation7 + $0x60] sm:$0xff]
        %v676 = vld [vmem:[#allocation7 + $0x68] sm:$0xff]
        %v677 = vld [vmem:[#allocation7 + $0x70] sm:$0xff]
        %v678 = vld [vmem:[#allocation7 + $0x78] sm:$0xff]
        %v679 = vld [vmem:[#allocation7 + $0x80] sm:$0xff]
        %v680 = vld [vmem:[#allocation7 + $0x88] sm:$0xff]
        %v681 = vld [vmem:[#allocation7 + $0x90] sm:$0xff]
        %v682 = vld [vmem:[#allocation7 + $0x98] sm:$0xff]
        %v683 = vld [vmem:[#allocation7 + $0xa0] sm:$0xff]
        %v684 = vld [vmem:[#allocation7 + $0xa8] sm:$0xff]
        %v685 = vld [vmem:[#allocation7 + $0xb0] sm:$0xff]
        %v686 = vld [vmem:[#allocation7 + $0xb8] sm:$0xff]
        %v687 = vld [vmem:[%s633 + $0xc] sm:$0x3]
        %s688 = scalar_lea.vmem [#allocation4], 192
        %v689 = vld [vmem:[%s688] sm:$0xff]
        %v690 = vld [vmem:[%s688 + $0x8] sm:$0xff]
        %v691 = vld [vmem:[%s688 + $0x10] sm:$0xff]
        %v692 = vld [vmem:[%s688 + $0x18] sm:$0xff]
        %v693 = vld [vmem:[%s688 + $0x20] sm:$0xff]
        %v694 = vld [vmem:[%s688 + $0x28] sm:$0xff]
        %v695 = vld [vmem:[%s688 + $0x30] sm:$0xff]
        %v696 = vld [vmem:[%s688 + $0x38] sm:$0xff]
        %v697 = vld [vmem:[%s688 + $0x40] sm:$0xff]
        %v698 = vld [vmem:[%s688 + $0x48] sm:$0xff]
        %v699 = vld [vmem:[%s688 + $0x50] sm:$0xff]
        %v700 = vld [vmem:[%s688 + $0x58] sm:$0xff]
        %v701 = vld [vmem:[%s688 + $0x60] sm:$0xff]
        %v702 = vld [vmem:[%s688 + $0x68] sm:$0xff]
        %v703 = vld [vmem:[%s688 + $0x70] sm:$0xff]
        %v704 = vld [vmem:[%s688 + $0x78] sm:$0xff]
        %v705 = vld [vmem:[%s688 + $0x80] sm:$0xff]
        %v706 = vld [vmem:[%s688 + $0x88] sm:$0xff]
        %v707 = vld [vmem:[%s688 + $0x90] sm:$0xff]
        %v708 = vld [vmem:[%s688 + $0x98] sm:$0xff]
        %v709 = vld [vmem:[%s688 + $0xa0] sm:$0xff]
        %v710 = vld [vmem:[%s688 + $0xa8] sm:$0xff]
        %v711 = vld [vmem:[%s688 + $0xb0] sm:$0xff]
        %v712 = vld [vmem:[%s688 + $0xb8] sm:$0xff]
        %v717 = vunpack.c.l.b16 %v635
        %v718 = vunpack.c.l.b16 %v636
        %v719 = vunpack.c.l.b16 %v637
        %v720 = vunpack.c.l.b16 %v687
        %v721 = vpack.c.b16 %v718, %v717
        %v722 = vpack.c.b16 %v720, %v719
        %vm723 = vsmask.f32 7424
        %v725 = vshrl.u32 %v721, 16
        %v727 = vshll.u32 %v721, 16
        %v729 = vrot.slane %v727, 1
        %v730 = vor.u32 %v725, %v729
        %v732 = vshll.u32 %v722, 16
        %v734 = vrot.slane %v732, 1
        %v735 = vsel %vm723, %v730, %v734
        %v736 = vshrl.u32 %v722, 16
        %v738 = vor.u32 %v736, %v734
        %v763 = vunpack.c.l.b16 %v689
        %v764 = vunpack.c.h.b16 %v689
        %v765 = vunpack.c.l.b16 %v690
        %v766 = vunpack.c.h.b16 %v690
        %v767 = vunpack.c.l.b16 %v691
        %v768 = vunpack.c.h.b16 %v691
        %v769 = vunpack.c.l.b16 %v692
        %v770 = vunpack.c.h.b16 %v692
        %v771 = vunpack.c.l.b16 %v693
        %v772 = vunpack.c.h.b16 %v693
        %v773 = vunpack.c.l.b16 %v694
        %v774 = vunpack.c.h.b16 %v694
        %v775 = vunpack.c.l.b16 %v695
        %v776 = vunpack.c.h.b16 %v695
        %v777 = vunpack.c.l.b16 %v696
        %v778 = vunpack.c.h.b16 %v696
        %v779 = vunpack.c.l.b16 %v697
        %v780 = vunpack.c.h.b16 %v697
        %v781 = vunpack.c.l.b16 %v698
        %v782 = vunpack.c.h.b16 %v698
        %v783 = vunpack.c.l.b16 %v699
        %v784 = vunpack.c.h.b16 %v699
        %v785 = vunpack.c.l.b16 %v700
        %v786 = vunpack.c.h.b16 %v700
        %v787 = vunpack.c.l.b16 %v701
        %v788 = vunpack.c.h.b16 %v701
        %v789 = vunpack.c.l.b16 %v702
        %v790 = vunpack.c.h.b16 %v702
        %v791 = vunpack.c.l.b16 %v703
        %v792 = vunpack.c.h.b16 %v703
        %v793 = vunpack.c.l.b16 %v704
        %v794 = vunpack.c.h.b16 %v704
        %v795 = vunpack.c.l.b16 %v705
        %v796 = vunpack.c.h.b16 %v705
        %v797 = vunpack.c.l.b16 %v706
        %v798 = vunpack.c.h.b16 %v706
        %v799 = vunpack.c.l.b16 %v707
        %v800 = vunpack.c.h.b16 %v707
        %v801 = vunpack.c.l.b16 %v708
        %v802 = vunpack.c.h.b16 %v708
        %v803 = vunpack.c.l.b16 %v709
        %v804 = vunpack.c.h.b16 %v709
        %v805 = vunpack.c.l.b16 %v710
        %v806 = vunpack.c.h.b16 %v710
        %v807 = vunpack.c.l.b16 %v711
        %v808 = vunpack.c.h.b16 %v711
        %v809 = vunpack.c.l.b16 %v712
        %v810 = vunpack.c.h.b16 %v712
        %v811 = vpack.c.b16 %v767, %v763
        %v812 = vpack.c.b16 %v768, %v764
        %v813 = vpack.c.b16 %v769, %v765
        %v814 = vpack.c.b16 %v770, %v766
        %v815 = vpack.c.b16 %v775, %v771
        %v816 = vpack.c.b16 %v776, %v772
        %v817 = vpack.c.b16 %v777, %v773
        %v818 = vpack.c.b16 %v778, %v774
        %v819 = vpack.c.b16 %v783, %v779
        %v820 = vpack.c.b16 %v784, %v780
        %v821 = vpack.c.b16 %v785, %v781
        %v822 = vpack.c.b16 %v786, %v782
        %v823 = vpack.c.b16 %v791, %v787
        %v824 = vpack.c.b16 %v792, %v788
        %v825 = vpack.c.b16 %v793, %v789
        %v826 = vpack.c.b16 %v794, %v790
        %v827 = vpack.c.b16 %v799, %v795
        %v828 = vpack.c.b16 %v800, %v796
        %v829 = vpack.c.b16 %v801, %v797
        %v830 = vpack.c.b16 %v802, %v798
        %v831 = vpack.c.b16 %v807, %v803
        %v832 = vpack.c.b16 %v808, %v804
        %v833 = vpack.c.b16 %v809, %v805
        %v834 = vpack.c.b16 %v810, %v806
        %vm859 = vcmask 785408
        %v861 = vsel %vm859, %v735, 0
        %v864 = vsel %vm859, %v738, 0
        %866 = vmatprep.subr.bf16.mxu0 0
        %867 = vmatpush1.bf16.msra.mxu0 0
        %868 = vmatprep.subr.bf16.mxu0 0
        %869 = vmatpush1.bf16.msra.mxu0 0
        %870 = vmatprep.subr.bf16.mxu0 %v832
        %871 = vmatpush1.bf16.msra.mxu0 %v831
        %872 = vmatprep.subr.bf16.mxu0 %v828
        %873 = vmatpush1.bf16.msra.mxu0 %v827
        %874 = vmatprep.subr.bf16.mxu0 %v824
        %875 = vmatpush1.bf16.msra.mxu0 %v823
        %876 = vmatprep.subr.bf16.mxu0 %v820
        %877 = vmatpush1.bf16.msra.mxu0 %v819
        %878 = vmatprep.subr.bf16.mxu0 %v816
        %879 = vmatpush1.bf16.msra.mxu0 %v815
        %880 = vmatprep.subr.bf16.mxu0 %v812
        %881 = vmatpush1.bf16.msra.mxu0 %v811
        %882 = vmatprep.subr.bf16.mxu0 0
        %883 = vmatpush2.bf16.msra.mxu0 0
        %884 = vmatprep.subr.bf16.mxu0 0
        %885 = vmatpush2.bf16.msra.mxu0 0
        %886 = vmatprep.subr.bf16.mxu0 0
        %887 = vmatpush2.bf16.msra.mxu0 0
        %888 = vmatprep.subr.bf16.mxu0 0
        %889 = vmatpush2.bf16.msra.mxu0 0
        %890 = vmatprep.subr.bf16.mxu0 0
        %891 = vmatpush2.bf16.msra.mxu0 0
        %892 = vmatprep.subr.bf16.mxu0 0
        %893 = vmatpush2.bf16.msra.mxu0 0
        %894 = vmatprep.subr.bf16.mxu0 0
        %895 = vmatpush2.bf16.msra.mxu0 0
        %896 = vmatprep.subr.bf16.mxu0 0
        %897 = vmatpush2.bf16.msra.mxu0 0
        %898 = vmatprep.mubr.bf16.mxu0 0
        %899 = vmatmul.mubr.bf16.gmra.mxu0 %v861
        %v900 = vpop.f32.mrf.mxu0
        %v901 = vadd.f32 0.0, %v900
        %v902 = vpop.f32.mrf.mxu0
        %v903 = vadd.f32 0.0, %v902
        %v904 = vpop.f32.mrf.mxu0
        %v905 = vadd.f32 0.0, %v904
        %v906 = vpop.f32.mrf.mxu0
        %v907 = vadd.f32 0.0, %v906
        %908 = vmatprep.mubr.bf16.mxu0 0
        %909 = vmatmul.mubr.bf16.gmra.mxu0 %v864
        %v910 = vpop.f32.mrf.mxu0
        %v911 = vadd.f32 0.0, %v910
        %v912 = vpop.f32.mrf.mxu0
        %v913 = vadd.f32 0.0, %v912
        %v914 = vpop.f32.mrf.mxu0
        %v915 = vadd.f32 0.0, %v914
        %v916 = vpop.f32.mrf.mxu0
        %v917 = vadd.f32 0.0, %v916
        %918 = vdwg.mxu0
        %919 = vmatprep.subr.bf16.mxu0 0
        %920 = vmatpush1.bf16.msra.mxu0 0
        %921 = vmatprep.subr.bf16.mxu0 0
        %922 = vmatpush1.bf16.msra.mxu0 0
        %923 = vmatprep.subr.bf16.mxu0 %v834
        %924 = vmatpush1.bf16.msra.mxu0 %v833
        %925 = vmatprep.subr.bf16.mxu0 %v830
        %926 = vmatpush1.bf16.msra.mxu0 %v829
        %927 = vmatprep.subr.bf16.mxu0 %v826
        %928 = vmatpush1.bf16.msra.mxu0 %v825
        %929 = vmatprep.subr.bf16.mxu0 %v822
        %930 = vmatpush1.bf16.msra.mxu0 %v821
        %931 = vmatprep.subr.bf16.mxu0 %v818
        %932 = vmatpush1.bf16.msra.mxu0 %v817
        %933 = vmatprep.subr.bf16.mxu0 %v814
        %934 = vmatpush1.bf16.msra.mxu0 %v813
        %935 = vmatprep.subr.bf16.mxu0 0
        %936 = vmatpush2.bf16.msra.mxu0 0
        %937 = vmatprep.subr.bf16.mxu0 0
        %938 = vmatpush2.bf16.msra.mxu0 0
        %939 = vmatprep.subr.bf16.mxu0 0
        %940 = vmatpush2.bf16.msra.mxu0 0
        %941 = vmatprep.subr.bf16.mxu0 0
        %942 = vmatpush2.bf16.msra.mxu0 0
        %943 = vmatprep.subr.bf16.mxu0 0
        %944 = vmatpush2.bf16.msra.mxu0 0
        %945 = vmatprep.subr.bf16.mxu0 0
        %946 = vmatpush2.bf16.msra.mxu0 0
        %947 = vmatprep.subr.bf16.mxu0 0
        %948 = vmatpush2.bf16.msra.mxu0 0
        %949 = vmatprep.subr.bf16.mxu0 0
        %950 = vmatpush2.bf16.msra.mxu0 0
        %951 = vmatprep.mubr.bf16.mxu0 0
        %952 = vmatmul.mubr.bf16.gmra.mxu0 %v861
        %v953 = vpop.f32.mrf.mxu0
        %v954 = vadd.f32 0.0, %v953
        %v955 = vpop.f32.mrf.mxu0
        %v956 = vadd.f32 0.0, %v955
        %v957 = vpop.f32.mrf.mxu0
        %v958 = vadd.f32 0.0, %v957
        %v959 = vpop.f32.mrf.mxu0
        %v960 = vadd.f32 0.0, %v959
        %961 = vmatprep.mubr.bf16.mxu0 0
        %962 = vmatmul.mubr.bf16.gmra.mxu0 %v864
        %v963 = vpop.f32.mrf.mxu0
        %v964 = vadd.f32 0.0, %v963
        %v965 = vpop.f32.mrf.mxu0
        %v966 = vadd.f32 0.0, %v965
        %v967 = vpop.f32.mrf.mxu0
        %v968 = vadd.f32 0.0, %v967
        %v969 = vpop.f32.mrf.mxu0
        %v970 = vadd.f32 0.0, %v969
        %971 = vdwg.mxu0
        %v973 = vunpack.c.l.b16 %v638
        %v974 = vpack.c.b16 %v973, %v719
        %v999 = vunpack.c.l.b16 %v639
        %v1000 = vunpack.c.h.b16 %v639
        %v1001 = vunpack.c.l.b16 %v640
        %v1002 = vunpack.c.h.b16 %v640
        %v1003 = vunpack.c.l.b16 %v641
        %v1004 = vunpack.c.h.b16 %v641
        %v1005 = vunpack.c.l.b16 %v642
        %v1006 = vunpack.c.h.b16 %v642
        %v1007 = vunpack.c.l.b16 %v643
        %v1008 = vunpack.c.h.b16 %v643
        %v1009 = vunpack.c.l.b16 %v644
        %v1010 = vunpack.c.h.b16 %v644
        %v1011 = vunpack.c.l.b16 %v645
        %v1012 = vunpack.c.h.b16 %v645
        %v1013 = vunpack.c.l.b16 %v646
        %v1014 = vunpack.c.h.b16 %v646
        %v1015 = vunpack.c.l.b16 %v647
        %v1016 = vunpack.c.h.b16 %v647
        %v1017 = vunpack.c.l.b16 %v648
        %v1018 = vunpack.c.h.b16 %v648
        %v1019 = vunpack.c.l.b16 %v649
        %v1020 = vunpack.c.h.b16 %v649
        %v1021 = vunpack.c.l.b16 %v650
        %v1022 = vunpack.c.h.b16 %v650
        %v1023 = vunpack.c.l.b16 %v651
        %v1024 = vunpack.c.h.b16 %v651
        %v1025 = vunpack.c.l.b16 %v652
        %v1026 = vunpack.c.h.b16 %v652
        %v1027 = vunpack.c.l.b16 %v653
        %v1028 = vunpack.c.h.b16 %v653
        %v1029 = vunpack.c.l.b16 %v654
        %v1030 = vunpack.c.h.b16 %v654
        %v1031 = vunpack.c.l.b16 %v655
        %v1032 = vunpack.c.h.b16 %v655
        %v1033 = vunpack.c.l.b16 %v656
        %v1034 = vunpack.c.h.b16 %v656
        %v1035 = vunpack.c.l.b16 %v657
        %v1036 = vunpack.c.h.b16 %v657
        %v1037 = vunpack.c.l.b16 %v658
        %v1038 = vunpack.c.h.b16 %v658
        %v1039 = vunpack.c.l.b16 %v659
        %v1040 = vunpack.c.h.b16 %v659
        %v1041 = vunpack.c.l.b16 %v660
        %v1042 = vunpack.c.h.b16 %v660
        %v1043 = vunpack.c.l.b16 %v661
        %v1044 = vunpack.c.h.b16 %v661
        %v1045 = vunpack.c.l.b16 %v662
        %v1046 = vunpack.c.h.b16 %v662
        %v1047 = vpack.c.b16 %v1003, %v999
        %v1048 = vpack.c.b16 %v1004, %v1000
        %v1049 = vpack.c.b16 %v1005, %v1001
        %v1050 = vpack.c.b16 %v1006, %v1002
        %v1051 = vpack.c.b16 %v1011, %v1007
        %v1052 = vpack.c.b16 %v1012, %v1008
        %v1053 = vpack.c.b16 %v1013, %v1009
        %v1054 = vpack.c.b16 %v1014, %v1010
        %v1055 = vpack.c.b16 %v1019, %v1015
        %v1056 = vpack.c.b16 %v1020, %v1016
        %v1057 = vpack.c.b16 %v1021, %v1017
        %v1058 = vpack.c.b16 %v1022, %v1018
        %v1059 = vpack.c.b16 %v1027, %v1023
        %v1060 = vpack.c.b16 %v1028, %v1024
        %v1061 = vpack.c.b16 %v1029, %v1025
        %v1062 = vpack.c.b16 %v1030, %v1026
        %v1063 = vpack.c.b16 %v1035, %v1031
        %v1064 = vpack.c.b16 %v1036, %v1032
        %v1065 = vpack.c.b16 %v1037, %v1033
        %v1066 = vpack.c.b16 %v1038, %v1034
        %v1067 = vpack.c.b16 %v1043, %v1039
        %v1068 = vpack.c.b16 %v1044, %v1040
        %v1069 = vpack.c.b16 %v1045, %v1041
        %v1070 = vpack.c.b16 %v1046, %v1042
        %v1095 = vsel %vm859, %v721, 0
        %v1098 = vsel %vm859, %v974, 0
        %1100 = vmatprep.subr.bf16.mxu0 0
        %1101 = vmatpush1.bf16.msra.mxu0 0
        %1102 = vmatprep.subr.bf16.mxu0 0
        %1103 = vmatpush1.bf16.msra.mxu0 0
        %1104 = vmatprep.subr.bf16.mxu0 %v1068
        %1105 = vmatpush1.bf16.msra.mxu0 %v1067
        %1106 = vmatprep.subr.bf16.mxu0 %v1064
        %1107 = vmatpush1.bf16.msra.mxu0 %v1063
        %1108 = vmatprep.subr.bf16.mxu0 %v1060
        %1109 = vmatpush1.bf16.msra.mxu0 %v1059
        %1110 = vmatprep.subr.bf16.mxu0 %v1056
        %1111 = vmatpush1.bf16.msra.mxu0 %v1055
        %1112 = vmatprep.subr.bf16.mxu0 %v1052
        %1113 = vmatpush1.bf16.msra.mxu0 %v1051
        %1114 = vmatprep.subr.bf16.mxu0 %v1048
        %1115 = vmatpush1.bf16.msra.mxu0 %v1047
        %1116 = vmatprep.subr.bf16.mxu0 0
        %1117 = vmatpush2.bf16.msra.mxu0 0
        %1118 = vmatprep.subr.bf16.mxu0 0
        %1119 = vmatpush2.bf16.msra.mxu0 0
        %1120 = vmatprep.subr.bf16.mxu0 0
        %1121 = vmatpush2.bf16.msra.mxu0 0
        %1122 = vmatprep.subr.bf16.mxu0 0
        %1123 = vmatpush2.bf16.msra.mxu0 0
        %1124 = vmatprep.subr.bf16.mxu0 0
        %1125 = vmatpush2.bf16.msra.mxu0 0
        %1126 = vmatprep.subr.bf16.mxu0 0
        %1127 = vmatpush2.bf16.msra.mxu0 0
        %1128 = vmatprep.subr.bf16.mxu0 0
        %1129 = vmatpush2.bf16.msra.mxu0 0
        %1130 = vmatprep.subr.bf16.mxu0 0
        %1131 = vmatpush2.bf16.msra.mxu0 0
        %1132 = vmatprep.mubr.bf16.mxu0 0
        %1133 = vmatmul.mubr.bf16.gmra.mxu0 %v1095
        %v1134 = vpop.f32.mrf.mxu0
        %v1135 = vadd.f32 %v901, %v1134
        %v1136 = vpop.f32.mrf.mxu0
        %v1137 = vadd.f32 %v903, %v1136
        %v1138 = vpop.f32.mrf.mxu0
        %v1139 = vadd.f32 %v905, %v1138
        %v1140 = vpop.f32.mrf.mxu0
        %v1141 = vadd.f32 %v907, %v1140
        %1142 = vmatprep.mubr.bf16.mxu0 0
        %1143 = vmatmul.mubr.bf16.gmra.mxu0 %v1098
        %v1144 = vpop.f32.mrf.mxu0
        %v1145 = vadd.f32 %v911, %v1144
        %v1146 = vpop.f32.mrf.mxu0
        %v1147 = vadd.f32 %v913, %v1146
        %v1148 = vpop.f32.mrf.mxu0
        %v1149 = vadd.f32 %v915, %v1148
        %v1150 = vpop.f32.mrf.mxu0
        %v1151 = vadd.f32 %v917, %v1150
        %1152 = vdwg.mxu0
        %1153 = vmatprep.subr.bf16.mxu0 0
        %1154 = vmatpush1.bf16.msra.mxu0 0
        %1155 = vmatprep.subr.bf16.mxu0 0
        %1156 = vmatpush1.bf16.msra.mxu0 0
        %1157 = vmatprep.subr.bf16.mxu0 %v1070
        %1158 = vmatpush1.bf16.msra.mxu0 %v1069
        %1159 = vmatprep.subr.bf16.mxu0 %v1066
        %1160 = vmatpush1.bf16.msra.mxu0 %v1065
        %1161 = vmatprep.subr.bf16.mxu0 %v1062
        %1162 = vmatpush1.bf16.msra.mxu0 %v1061
        %1163 = vmatprep.subr.bf16.mxu0 %v1058
        %1164 = vmatpush1.bf16.msra.mxu0 %v1057
        %1165 = vmatprep.subr.bf16.mxu0 %v1054
        %1166 = vmatpush1.bf16.msra.mxu0 %v1053
        %1167 = vmatprep.subr.bf16.mxu0 %v1050
        %1168 = vmatpush1.bf16.msra.mxu0 %v1049
        %1169 = vmatprep.subr.bf16.mxu0 0
        %1170 = vmatpush2.bf16.msra.mxu0 0
        %1171 = vmatprep.subr.bf16.mxu0 0
        %1172 = vmatpush2.bf16.msra.mxu0 0
        %1173 = vmatprep.subr.bf16.mxu0 0
        %1174 = vmatpush2.bf16.msra.mxu0 0
        %1175 = vmatprep.subr.bf16.mxu0 0
        %1176 = vmatpush2.bf16.msra.mxu0 0
        %1177 = vmatprep.subr.bf16.mxu0 0
        %1178 = vmatpush2.bf16.msra.mxu0 0
        %1179 = vmatprep.subr.bf16.mxu0 0
        %1180 = vmatpush2.bf16.msra.mxu0 0
        %1181 = vmatprep.subr.bf16.mxu0 0
        %1182 = vmatpush2.bf16.msra.mxu0 0
        %1183 = vmatprep.subr.bf16.mxu0 0
        %1184 = vmatpush2.bf16.msra.mxu0 0
        %1185 = vmatprep.mubr.bf16.mxu0 0
        %1186 = vmatmul.mubr.bf16.gmra.mxu0 %v1095
        %v1187 = vpop.f32.mrf.mxu0
        %v1188 = vadd.f32 %v954, %v1187
        %v1189 = vpop.f32.mrf.mxu0
        %v1190 = vadd.f32 %v956, %v1189
        %v1191 = vpop.f32.mrf.mxu0
        %v1192 = vadd.f32 %v958, %v1191
        %v1193 = vpop.f32.mrf.mxu0
        %v1194 = vadd.f32 %v960, %v1193
        %1195 = vmatprep.mubr.bf16.mxu0 0
        %1196 = vmatmul.mubr.bf16.gmra.mxu0 %v1098
        %v1197 = vpop.f32.mrf.mxu0
        %v1198 = vadd.f32 %v964, %v1197
        %v1199 = vpop.f32.mrf.mxu0
        %v1200 = vadd.f32 %v966, %v1199
        %v1201 = vpop.f32.mrf.mxu0
        %v1202 = vadd.f32 %v968, %v1201
        %v1203 = vpop.f32.mrf.mxu0
        %v1204 = vadd.f32 %v970, %v1203
        %1205 = vdwg.mxu0
        %s1206 = scalar_lea.vmem [#allocation7], 192
        %v1207 = vld [vmem:[%s1206] sm:$0xff]
        %v1208 = vld [vmem:[%s1206 + $0x8] sm:$0xff]
        %v1209 = vld [vmem:[%s1206 + $0x10] sm:$0xff]
        %v1210 = vld [vmem:[%s1206 + $0x18] sm:$0xff]
        %v1211 = vld [vmem:[%s1206 + $0x20] sm:$0xff]
        %v1212 = vld [vmem:[%s1206 + $0x28] sm:$0xff]
        %v1213 = vld [vmem:[%s1206 + $0x30] sm:$0xff]
        %v1214 = vld [vmem:[%s1206 + $0x38] sm:$0xff]
        %v1215 = vld [vmem:[%s1206 + $0x40] sm:$0xff]
        %v1216 = vld [vmem:[%s1206 + $0x48] sm:$0xff]
        %v1217 = vld [vmem:[%s1206 + $0x50] sm:$0xff]
        %v1218 = vld [vmem:[%s1206 + $0x58] sm:$0xff]
        %v1219 = vld [vmem:[%s1206 + $0x60] sm:$0xff]
        %v1220 = vld [vmem:[%s1206 + $0x68] sm:$0xff]
        %v1221 = vld [vmem:[%s1206 + $0x70] sm:$0xff]
        %v1222 = vld [vmem:[%s1206 + $0x78] sm:$0xff]
        %v1223 = vld [vmem:[%s1206 + $0x80] sm:$0xff]
        %v1224 = vld [vmem:[%s1206 + $0x88] sm:$0xff]
        %v1225 = vld [vmem:[%s1206 + $0x90] sm:$0xff]
        %v1226 = vld [vmem:[%s1206 + $0x98] sm:$0xff]
        %v1227 = vld [vmem:[%s1206 + $0xa0] sm:$0xff]
        %v1228 = vld [vmem:[%s1206 + $0xa8] sm:$0xff]
        %v1229 = vld [vmem:[%s1206 + $0xb0] sm:$0xff]
        %v1230 = vld [vmem:[%s1206 + $0xb8] sm:$0xff]
        %v1255 = vunpack.c.l.b16 %v1207
        %v1256 = vunpack.c.h.b16 %v1207
        %v1257 = vunpack.c.l.b16 %v1208
        %v1258 = vunpack.c.h.b16 %v1208
        %v1259 = vunpack.c.l.b16 %v1209
        %v1260 = vunpack.c.h.b16 %v1209
        %v1261 = vunpack.c.l.b16 %v1210
        %v1262 = vunpack.c.h.b16 %v1210
        %v1263 = vunpack.c.l.b16 %v1211
        %v1264 = vunpack.c.h.b16 %v1211
        %v1265 = vunpack.c.l.b16 %v1212
        %v1266 = vunpack.c.h.b16 %v1212
        %v1267 = vunpack.c.l.b16 %v1213
        %v1268 = vunpack.c.h.b16 %v1213
        %v1269 = vunpack.c.l.b16 %v1214
        %v1270 = vunpack.c.h.b16 %v1214
        %v1271 = vunpack.c.l.b16 %v1215
        %v1272 = vunpack.c.h.b16 %v1215
        %v1273 = vunpack.c.l.b16 %v1216
        %v1274 = vunpack.c.h.b16 %v1216
        %v1275 = vunpack.c.l.b16 %v1217
        %v1276 = vunpack.c.h.b16 %v1217
        %v1277 = vunpack.c.l.b16 %v1218
        %v1278 = vunpack.c.h.b16 %v1218
        %v1279 = vunpack.c.l.b16 %v1219
        %v1280 = vunpack.c.h.b16 %v1219
        %v1281 = vunpack.c.l.b16 %v1220
        %v1282 = vunpack.c.h.b16 %v1220
        %v1283 = vunpack.c.l.b16 %v1221
        %v1284 = vunpack.c.h.b16 %v1221
        %v1285 = vunpack.c.l.b16 %v1222
        %v1286 = vunpack.c.h.b16 %v1222
        %v1287 = vunpack.c.l.b16 %v1223
        %v1288 = vunpack.c.h.b16 %v1223
        %v1289 = vunpack.c.l.b16 %v1224
        %v1290 = vunpack.c.h.b16 %v1224
        %v1291 = vunpack.c.l.b16 %v1225
        %v1292 = vunpack.c.h.b16 %v1225
        %v1293 = vunpack.c.l.b16 %v1226
        %v1294 = vunpack.c.h.b16 %v1226
        %v1295 = vunpack.c.l.b16 %v1227
        %v1296 = vunpack.c.h.b16 %v1227
        %v1297 = vunpack.c.l.b16 %v1228
        %v1298 = vunpack.c.h.b16 %v1228
        %v1299 = vunpack.c.l.b16 %v1229
        %v1300 = vunpack.c.h.b16 %v1229
        %v1301 = vunpack.c.l.b16 %v1230
        %v1302 = vunpack.c.h.b16 %v1230
        %v1303 = vpack.c.b16 %v1259, %v1255
        %v1304 = vpack.c.b16 %v1260, %v1256
        %v1305 = vpack.c.b16 %v1261, %v1257
        %v1306 = vpack.c.b16 %v1262, %v1258
        %v1307 = vpack.c.b16 %v1267, %v1263
        %v1308 = vpack.c.b16 %v1268, %v1264
        %v1309 = vpack.c.b16 %v1269, %v1265
        %v1310 = vpack.c.b16 %v1270, %v1266
        %v1311 = vpack.c.b16 %v1275, %v1271
        %v1312 = vpack.c.b16 %v1276, %v1272
        %v1313 = vpack.c.b16 %v1277, %v1273
        %v1314 = vpack.c.b16 %v1278, %v1274
        %v1315 = vpack.c.b16 %v1283, %v1279
        %v1316 = vpack.c.b16 %v1284, %v1280
        %v1317 = vpack.c.b16 %v1285, %v1281
        %v1318 = vpack.c.b16 %v1286, %v1282
        %v1319 = vpack.c.b16 %v1291, %v1287
        %v1320 = vpack.c.b16 %v1292, %v1288
        %v1321 = vpack.c.b16 %v1293, %v1289
        %v1322 = vpack.c.b16 %v1294, %v1290
        %v1323 = vpack.c.b16 %v1299, %v1295
        %v1324 = vpack.c.b16 %v1300, %v1296
        %v1325 = vpack.c.b16 %v1301, %v1297
        %v1326 = vpack.c.b16 %v1302, %v1298
        %1351 = vmatprep.subr.bf16.mxu0 0
        %1352 = vmatpush1.bf16.msra.mxu0 0
        %1353 = vmatprep.subr.bf16.mxu0 0
        %1354 = vmatpush1.bf16.msra.mxu0 0
        %1355 = vmatprep.subr.bf16.mxu0 %v1324
        %1356 = vmatpush1.bf16.msra.mxu0 %v1323
        %1357 = vmatprep.subr.bf16.mxu0 %v1320
        %1358 = vmatpush1.bf16.msra.mxu0 %v1319
        %1359 = vmatprep.subr.bf16.mxu0 %v1316
        %1360 = vmatpush1.bf16.msra.mxu0 %v1315
        %1361 = vmatprep.subr.bf16.mxu0 %v1312
        %1362 = vmatpush1.bf16.msra.mxu0 %v1311
        %1363 = vmatprep.subr.bf16.mxu0 %v1308
        %1364 = vmatpush1.bf16.msra.mxu0 %v1307
        %1365 = vmatprep.subr.bf16.mxu0 %v1304
        %1366 = vmatpush1.bf16.msra.mxu0 %v1303
        %1367 = vmatprep.subr.bf16.mxu0 0
        %1368 = vmatpush2.bf16.msra.mxu0 0
        %1369 = vmatprep.subr.bf16.mxu0 0
        %1370 = vmatpush2.bf16.msra.mxu0 0
        %1371 = vmatprep.subr.bf16.mxu0 0
        %1372 = vmatpush2.bf16.msra.mxu0 0
        %1373 = vmatprep.subr.bf16.mxu0 0
        %1374 = vmatpush2.bf16.msra.mxu0 0
        %1375 = vmatprep.subr.bf16.mxu0 0
        %1376 = vmatpush2.bf16.msra.mxu0 0
        %1377 = vmatprep.subr.bf16.mxu0 0
        %1378 = vmatpush2.bf16.msra.mxu0 0
        %1379 = vmatprep.subr.bf16.mxu0 0
        %1380 = vmatpush2.bf16.msra.mxu0 0
        %1381 = vmatprep.subr.bf16.mxu0 0
        %1382 = vmatpush2.bf16.msra.mxu0 0
        %1383 = vmatprep.mubr.bf16.mxu0 0
        %1384 = vmatmul.mubr.bf16.gmra.mxu0 %v861
        %v1385 = vpop.f32.mrf.mxu0
        %v1386 = vadd.f32 0.0, %v1385
        %v1387 = vpop.f32.mrf.mxu0
        %v1388 = vadd.f32 0.0, %v1387
        %v1389 = vpop.f32.mrf.mxu0
        %v1390 = vadd.f32 0.0, %v1389
        %v1391 = vpop.f32.mrf.mxu0
        %v1392 = vadd.f32 0.0, %v1391
        %1393 = vmatprep.mubr.bf16.mxu0 0
        %1394 = vmatmul.mubr.bf16.gmra.mxu0 %v864
        %v1395 = vpop.f32.mrf.mxu0
        %v1396 = vadd.f32 0.0, %v1395
        %v1397 = vpop.f32.mrf.mxu0
        %v1398 = vadd.f32 0.0, %v1397
        %v1399 = vpop.f32.mrf.mxu0
        %v1400 = vadd.f32 0.0, %v1399
        %v1401 = vpop.f32.mrf.mxu0
        %v1402 = vadd.f32 0.0, %v1401
        %1403 = vdwg.mxu0
        %1404 = vmatprep.subr.bf16.mxu0 0
        %1405 = vmatpush1.bf16.msra.mxu0 0
        %1406 = vmatprep.subr.bf16.mxu0 0
        %1407 = vmatpush1.bf16.msra.mxu0 0
        %1408 = vmatprep.subr.bf16.mxu0 %v1326
        %1409 = vmatpush1.bf16.msra.mxu0 %v1325
        %1410 = vmatprep.subr.bf16.mxu0 %v1322
        %1411 = vmatpush1.bf16.msra.mxu0 %v1321
        %1412 = vmatprep.subr.bf16.mxu0 %v1318
        %1413 = vmatpush1.bf16.msra.mxu0 %v1317
        %1414 = vmatprep.subr.bf16.mxu0 %v1314
        %1415 = vmatpush1.bf16.msra.mxu0 %v1313
        %1416 = vmatprep.subr.bf16.mxu0 %v1310
        %1417 = vmatpush1.bf16.msra.mxu0 %v1309
        %1418 = vmatprep.subr.bf16.mxu0 %v1306
        %1419 = vmatpush1.bf16.msra.mxu0 %v1305
        %1420 = vmatprep.subr.bf16.mxu0 0
        %1421 = vmatpush2.bf16.msra.mxu0 0
        %1422 = vmatprep.subr.bf16.mxu0 0
        %1423 = vmatpush2.bf16.msra.mxu0 0
        %1424 = vmatprep.subr.bf16.mxu0 0
        %1425 = vmatpush2.bf16.msra.mxu0 0
        %1426 = vmatprep.subr.bf16.mxu0 0
        %1427 = vmatpush2.bf16.msra.mxu0 0
        %1428 = vmatprep.subr.bf16.mxu0 0
        %1429 = vmatpush2.bf16.msra.mxu0 0
        %1430 = vmatprep.subr.bf16.mxu0 0
        %1431 = vmatpush2.bf16.msra.mxu0 0
        %1432 = vmatprep.subr.bf16.mxu0 0
        %1433 = vmatpush2.bf16.msra.mxu0 0
        %1434 = vmatprep.subr.bf16.mxu0 0
        %1435 = vmatpush2.bf16.msra.mxu0 0
        %1436 = vmatprep.mubr.bf16.mxu0 0
        %1437 = vmatmul.mubr.bf16.gmra.mxu0 %v861
        %v1438 = vpop.f32.mrf.mxu0
        %v1439 = vadd.f32 0.0, %v1438
        %v1440 = vpop.f32.mrf.mxu0
        %v1441 = vadd.f32 0.0, %v1440
        %v1442 = vpop.f32.mrf.mxu0
        %v1443 = vadd.f32 0.0, %v1442
        %v1444 = vpop.f32.mrf.mxu0
        %v1445 = vadd.f32 0.0, %v1444
        %1446 = vmatprep.mubr.bf16.mxu0 0
        %1447 = vmatmul.mubr.bf16.gmra.mxu0 %v864
        %v1448 = vpop.f32.mrf.mxu0
        %v1449 = vadd.f32 0.0, %v1448
        %v1450 = vpop.f32.mrf.mxu0
        %v1451 = vadd.f32 0.0, %v1450
        %v1452 = vpop.f32.mrf.mxu0
        %v1453 = vadd.f32 0.0, %v1452
        %v1454 = vpop.f32.mrf.mxu0
        %v1455 = vadd.f32 0.0, %v1454
        %1456 = vdwg.mxu0
        %v1481 = vunpack.c.l.b16 %v663
        %v1482 = vunpack.c.h.b16 %v663
        %v1483 = vunpack.c.l.b16 %v664
        %v1484 = vunpack.c.h.b16 %v664
        %v1485 = vunpack.c.l.b16 %v665
        %v1486 = vunpack.c.h.b16 %v665
        %v1487 = vunpack.c.l.b16 %v666
        %v1488 = vunpack.c.h.b16 %v666
        %v1489 = vunpack.c.l.b16 %v667
        %v1490 = vunpack.c.h.b16 %v667
        %v1491 = vunpack.c.l.b16 %v668
        %v1492 = vunpack.c.h.b16 %v668
        %v1493 = vunpack.c.l.b16 %v669
        %v1494 = vunpack.c.h.b16 %v669
        %v1495 = vunpack.c.l.b16 %v670
        %v1496 = vunpack.c.h.b16 %v670
        %v1497 = vunpack.c.l.b16 %v671
        %v1498 = vunpack.c.h.b16 %v671
        %v1499 = vunpack.c.l.b16 %v672
        %v1500 = vunpack.c.h.b16 %v672
        %v1501 = vunpack.c.l.b16 %v673
        %v1502 = vunpack.c.h.b16 %v673
        %v1503 = vunpack.c.l.b16 %v674
        %v1504 = vunpack.c.h.b16 %v674
        %v1505 = vunpack.c.l.b16 %v675
        %v1506 = vunpack.c.h.b16 %v675
        %v1507 = vunpack.c.l.b16 %v676
        %v1508 = vunpack.c.h.b16 %v676
        %v1509 = vunpack.c.l.b16 %v677
        %v1510 = vunpack.c.h.b16 %v677
        %v1511 = vunpack.c.l.b16 %v678
        %v1512 = vunpack.c.h.b16 %v678
        %v1513 = vunpack.c.l.b16 %v679
        %v1514 = vunpack.c.h.b16 %v679
        %v1515 = vunpack.c.l.b16 %v680
        %v1516 = vunpack.c.h.b16 %v680
        %v1517 = vunpack.c.l.b16 %v681
        %v1518 = vunpack.c.h.b16 %v681
        %v1519 = vunpack.c.l.b16 %v682
        %v1520 = vunpack.c.h.b16 %v682
        %v1521 = vunpack.c.l.b16 %v683
        %v1522 = vunpack.c.h.b16 %v683
        %v1523 = vunpack.c.l.b16 %v684
        %v1524 = vunpack.c.h.b16 %v684
        %v1525 = vunpack.c.l.b16 %v685
        %v1526 = vunpack.c.h.b16 %v685
        %v1527 = vunpack.c.l.b16 %v686
        %v1528 = vunpack.c.h.b16 %v686
        %v1529 = vpack.c.b16 %v1485, %v1481
        %v1530 = vpack.c.b16 %v1486, %v1482
        %v1531 = vpack.c.b16 %v1487, %v1483
        %v1532 = vpack.c.b16 %v1488, %v1484
        %v1533 = vpack.c.b16 %v1493, %v1489
        %v1534 = vpack.c.b16 %v1494, %v1490
        %v1535 = vpack.c.b16 %v1495, %v1491
        %v1536 = vpack.c.b16 %v1496, %v1492
        %v1537 = vpack.c.b16 %v1501, %v1497
        %v1538 = vpack.c.b16 %v1502, %v1498
        %v1539 = vpack.c.b16 %v1503, %v1499
        %v1540 = vpack.c.b16 %v1504, %v1500
        %v1541 = vpack.c.b16 %v1509, %v1505
        %v1542 = vpack.c.b16 %v1510, %v1506
        %v1543 = vpack.c.b16 %v1511, %v1507
        %v1544 = vpack.c.b16 %v1512, %v1508
        %v1545 = vpack.c.b16 %v1517, %v1513
        %v1546 = vpack.c.b16 %v1518, %v1514
        %v1547 = vpack.c.b16 %v1519, %v1515
        %v1548 = vpack.c.b16 %v1520, %v1516
        %v1549 = vpack.c.b16 %v1525, %v1521
        %v1550 = vpack.c.b16 %v1526, %v1522
        %v1551 = vpack.c.b16 %v1527, %v1523
        %v1552 = vpack.c.b16 %v1528, %v1524
        %1577 = vmatprep.subr.bf16.mxu0 0
        %1578 = vmatpush1.bf16.msra.mxu0 0
        %1579 = vmatprep.subr.bf16.mxu0 0
        %1580 = vmatpush1.bf16.msra.mxu0 0
        %1581 = vmatprep.subr.bf16.mxu0 %v1550
        %1582 = vmatpush1.bf16.msra.mxu0 %v1549
        %1583 = vmatprep.subr.bf16.mxu0 %v1546
        %1584 = vmatpush1.bf16.msra.mxu0 %v1545
        %1585 = vmatprep.subr.bf16.mxu0 %v1542
        %1586 = vmatpush1.bf16.msra.mxu0 %v1541
        %1587 = vmatprep.subr.bf16.mxu0 %v1538
        %1588 = vmatpush1.bf16.msra.mxu0 %v1537
        %1589 = vmatprep.subr.bf16.mxu0 %v1534
        %1590 = vmatpush1.bf16.msra.mxu0 %v1533
        %1591 = vmatprep.subr.bf16.mxu0 %v1530
        %1592 = vmatpush1.bf16.msra.mxu0 %v1529
        %1593 = vmatprep.subr.bf16.mxu0 0
        %1594 = vmatpush2.bf16.msra.mxu0 0
        %1595 = vmatprep.subr.bf16.mxu0 0
        %1596 = vmatpush2.bf16.msra.mxu0 0
        %1597 = vmatprep.subr.bf16.mxu0 0
        %1598 = vmatpush2.bf16.msra.mxu0 0
        %1599 = vmatprep.subr.bf16.mxu0 0
        %1600 = vmatpush2.bf16.msra.mxu0 0
        %1601 = vmatprep.subr.bf16.mxu0 0
        %1602 = vmatpush2.bf16.msra.mxu0 0
        %1603 = vmatprep.subr.bf16.mxu0 0
        %1604 = vmatpush2.bf16.msra.mxu0 0
        %1605 = vmatprep.subr.bf16.mxu0 0
        %1606 = vmatpush2.bf16.msra.mxu0 0
        %1607 = vmatprep.subr.bf16.mxu0 0
        %1608 = vmatpush2.bf16.msra.mxu0 0
        %1609 = vmatprep.mubr.bf16.mxu0 0
        %1610 = vmatmul.mubr.bf16.gmra.mxu0 %v1095
        %v1611 = vpop.f32.mrf.mxu0
        %v1612 = vadd.f32 %v1386, %v1611
        %v1613 = vpop.f32.mrf.mxu0
        %v1614 = vadd.f32 %v1388, %v1613
        %v1615 = vpop.f32.mrf.mxu0
        %v1616 = vadd.f32 %v1390, %v1615
        %v1617 = vpop.f32.mrf.mxu0
        %v1618 = vadd.f32 %v1392, %v1617
        %1619 = vmatprep.mubr.bf16.mxu0 0
        %1620 = vmatmul.mubr.bf16.gmra.mxu0 %v1098
        %v1621 = vpop.f32.mrf.mxu0
        %v1622 = vadd.f32 %v1396, %v1621
        %v1623 = vpop.f32.mrf.mxu0
        %v1624 = vadd.f32 %v1398, %v1623
        %v1625 = vpop.f32.mrf.mxu0
        %v1626 = vadd.f32 %v1400, %v1625
        %v1627 = vpop.f32.mrf.mxu0
        %v1628 = vadd.f32 %v1402, %v1627
        %1629 = vdwg.mxu0
        %1630 = vmatprep.subr.bf16.mxu0 0
        %1631 = vmatpush1.bf16.msra.mxu0 0
        %1632 = vmatprep.subr.bf16.mxu0 0
        %1633 = vmatpush1.bf16.msra.mxu0 0
        %1634 = vmatprep.subr.bf16.mxu0 %v1552
        %1635 = vmatpush1.bf16.msra.mxu0 %v1551
        %1636 = vmatprep.subr.bf16.mxu0 %v1548
        %1637 = vmatpush1.bf16.msra.mxu0 %v1547
        %1638 = vmatprep.subr.bf16.mxu0 %v1544
        %1639 = vmatpush1.bf16.msra.mxu0 %v1543
        %1640 = vmatprep.subr.bf16.mxu0 %v1540
        %1641 = vmatpush1.bf16.msra.mxu0 %v1539
        %1642 = vmatprep.subr.bf16.mxu0 %v1536
        %1643 = vmatpush1.bf16.msra.mxu0 %v1535
        %1644 = vmatprep.subr.bf16.mxu0 %v1532
        %1645 = vmatpush1.bf16.msra.mxu0 %v1531
        %1646 = vmatprep.subr.bf16.mxu0 0
        %1647 = vmatpush2.bf16.msra.mxu0 0
        %1648 = vmatprep.subr.bf16.mxu0 0
        %1649 = vmatpush2.bf16.msra.mxu0 0
        %1650 = vmatprep.subr.bf16.mxu0 0
        %1651 = vmatpush2.bf16.msra.mxu0 0
        %1652 = vmatprep.subr.bf16.mxu0 0
        %1653 = vmatpush2.bf16.msra.mxu0 0
        %1654 = vmatprep.subr.bf16.mxu0 0
        %1655 = vmatpush2.bf16.msra.mxu0 0
        %1656 = vmatprep.subr.bf16.mxu0 0
        %1657 = vmatpush2.bf16.msra.mxu0 0
        %1658 = vmatprep.subr.bf16.mxu0 0
        %1659 = vmatpush2.bf16.msra.mxu0 0
        %1660 = vmatprep.subr.bf16.mxu0 0
        %1661 = vmatpush2.bf16.msra.mxu0 0
        %1662 = vmatprep.mubr.bf16.mxu0 0
        %1663 = vmatmul.mubr.bf16.gmra.mxu0 %v1095
        %v1664 = vpop.f32.mrf.mxu0
        %v1665 = vadd.f32 %v1439, %v1664
        %v1666 = vpop.f32.mrf.mxu0
        %v1667 = vadd.f32 %v1441, %v1666
        %v1668 = vpop.f32.mrf.mxu0
        %v1669 = vadd.f32 %v1443, %v1668
        %v1670 = vpop.f32.mrf.mxu0
        %v1671 = vadd.f32 %v1445, %v1670
        %1672 = vmatprep.mubr.bf16.mxu0 0
        %1673 = vmatmul.mubr.bf16.gmra.mxu0 %v1098
        %v1674 = vpop.f32.mrf.mxu0
        %v1675 = vadd.f32 %v1449, %v1674
        %v1676 = vpop.f32.mrf.mxu0
        %v1677 = vadd.f32 %v1451, %v1676
        %v1678 = vpop.f32.mrf.mxu0
        %v1679 = vadd.f32 %v1453, %v1678
        %v1680 = vpop.f32.mrf.mxu0
        %v1681 = vadd.f32 %v1455, %v1680
        %1682 = vdwg.mxu0
        %v1683 = vld [vmem:[%s633] sm:$0xe]
        %s1684 = scalar_lea.vmem [#allocation4], 384
        %v1685 = vld [vmem:[%s1684] sm:$0xff]
        %v1686 = vld [vmem:[%s1684 + $0x8] sm:$0xff]
        %v1687 = vld [vmem:[%s1684 + $0x10] sm:$0xff]
        %v1688 = vld [vmem:[%s1684 + $0x18] sm:$0xff]
        %v1689 = vld [vmem:[%s1684 + $0x20] sm:$0xff]
        %v1690 = vld [vmem:[%s1684 + $0x28] sm:$0xff]
        %v1691 = vld [vmem:[%s1684 + $0x30] sm:$0xff]
        %v1692 = vld [vmem:[%s1684 + $0x38] sm:$0xff]
        %v1693 = vld [vmem:[%s1684 + $0x40] sm:$0xff]
        %v1694 = vld [vmem:[%s1684 + $0x48] sm:$0xff]
        %v1695 = vld [vmem:[%s1684 + $0x50] sm:$0xff]
        %v1696 = vld [vmem:[%s1684 + $0x58] sm:$0xff]
        %v1697 = vld [vmem:[%s1684 + $0x60] sm:$0xff]
        %v1698 = vld [vmem:[%s1684 + $0x68] sm:$0xff]
        %v1699 = vld [vmem:[%s1684 + $0x70] sm:$0xff]
        %v1700 = vld [vmem:[%s1684 + $0x78] sm:$0xff]
        %v1701 = vld [vmem:[%s1684 + $0x80] sm:$0xff]
        %v1702 = vld [vmem:[%s1684 + $0x88] sm:$0xff]
        %v1703 = vld [vmem:[%s1684 + $0x90] sm:$0xff]
        %v1704 = vld [vmem:[%s1684 + $0x98] sm:$0xff]
        %v1705 = vld [vmem:[%s1684 + $0xa0] sm:$0xff]
        %v1706 = vld [vmem:[%s1684 + $0xa8] sm:$0xff]
        %v1707 = vld [vmem:[%s1684 + $0xb0] sm:$0xff]
        %v1708 = vld [vmem:[%s1684 + $0xb8] sm:$0xff]
        %v1710 = vunpack.c.l.b16 %v1683
        %v1711 = vpack.c.b16 %v718, %v1710
        %vm1712 = vcmask 1046528
        %v1713 = vrot.slane %v1711, 1
        %v1714 = vrot.slane %v722, 1
        %v1715 = vsel %vm1712, %v1713, %v1714
        %v1740 = vunpack.c.l.b16 %v1685
        %v1741 = vunpack.c.h.b16 %v1685
        %v1742 = vunpack.c.l.b16 %v1686
        %v1743 = vunpack.c.h.b16 %v1686
        %v1744 = vunpack.c.l.b16 %v1687
        %v1745 = vunpack.c.h.b16 %v1687
        %v1746 = vunpack.c.l.b16 %v1688
        %v1747 = vunpack.c.h.b16 %v1688
        %v1748 = vunpack.c.l.b16 %v1689
        %v1749 = vunpack.c.h.b16 %v1689
        %v1750 = vunpack.c.l.b16 %v1690
        %v1751 = vunpack.c.h.b16 %v1690
        %v1752 = vunpack.c.l.b16 %v1691
        %v1753 = vunpack.c.h.b16 %v1691
        %v1754 = vunpack.c.l.b16 %v1692
        %v1755 = vunpack.c.h.b16 %v1692
        %v1756 = vunpack.c.l.b16 %v1693
        %v1757 = vunpack.c.h.b16 %v1693
        %v1758 = vunpack.c.l.b16 %v1694
        %v1759 = vunpack.c.h.b16 %v1694
        %v1760 = vunpack.c.l.b16 %v1695
        %v1761 = vunpack.c.h.b16 %v1695
        %v1762 = vunpack.c.l.b16 %v1696
        %v1763 = vunpack.c.h.b16 %v1696
        %v1764 = vunpack.c.l.b16 %v1697
        %v1765 = vunpack.c.h.b16 %v1697
        %v1766 = vunpack.c.l.b16 %v1698
        %v1767 = vunpack.c.h.b16 %v1698
        %v1768 = vunpack.c.l.b16 %v1699
        %v1769 = vunpack.c.h.b16 %v1699
        %v1770 = vunpack.c.l.b16 %v1700
        %v1771 = vunpack.c.h.b16 %v1700
        %v1772 = vunpack.c.l.b16 %v1701
        %v1773 = vunpack.c.h.b16 %v1701
        %v1774 = vunpack.c.l.b16 %v1702
        %v1775 = vunpack.c.h.b16 %v1702
        %v1776 = vunpack.c.l.b16 %v1703
        %v1777 = vunpack.c.h.b16 %v1703
        %v1778 = vunpack.c.l.b16 %v1704
        %v1779 = vunpack.c.h.b16 %v1704
        %v1780 = vunpack.c.l.b16 %v1705
        %v1781 = vunpack.c.h.b16 %v1705
        %v1782 = vunpack.c.l.b16 %v1706
        %v1783 = vunpack.c.h.b16 %v1706
        %v1784 = vunpack.c.l.b16 %v1707
        %v1785 = vunpack.c.h.b16 %v1707
        %v1786 = vunpack.c.l.b16 %v1708
        %v1787 = vunpack.c.h.b16 %v1708
        %v1788 = vpack.c.b16 %v1744, %v1740
        %v1789 = vpack.c.b16 %v1745, %v1741
        %v1790 = vpack.c.b16 %v1746, %v1742
        %v1791 = vpack.c.b16 %v1747, %v1743
        %v1792 = vpack.c.b16 %v1752, %v1748
        %v1793 = vpack.c.b16 %v1753, %v1749
        %v1794 = vpack.c.b16 %v1754, %v1750
        %v1795 = vpack.c.b16 %v1755, %v1751
        %v1796 = vpack.c.b16 %v1760, %v1756
        %v1797 = vpack.c.b16 %v1761, %v1757
        %v1798 = vpack.c.b16 %v1762, %v1758
        %v1799 = vpack.c.b16 %v1763, %v1759
        %v1800 = vpack.c.b16 %v1768, %v1764
        %v1801 = vpack.c.b16 %v1769, %v1765
        %v1802 = vpack.c.b16 %v1770, %v1766
        %v1803 = vpack.c.b16 %v1771, %v1767
        %v1804 = vpack.c.b16 %v1776, %v1772
        %v1805 = vpack.c.b16 %v1777, %v1773
        %v1806 = vpack.c.b16 %v1778, %v1774
        %v1807 = vpack.c.b16 %v1779, %v1775
        %v1808 = vpack.c.b16 %v1784, %v1780
        %v1809 = vpack.c.b16 %v1785, %v1781
        %v1810 = vpack.c.b16 %v1786, %v1782
        %v1811 = vpack.c.b16 %v1787, %v1783
        %v1837 = vsel %vm859, %v1715, 0
        %v1840 = vsel %vm859, %v1714, 0
        %1842 = vmatprep.subr.bf16.mxu0 0
        %1843 = vmatpush1.bf16.msra.mxu0 0
        %1844 = vmatprep.subr.bf16.mxu0 0
        %1845 = vmatpush1.bf16.msra.mxu0 0
        %1846 = vmatprep.subr.bf16.mxu0 %v1809
        %1847 = vmatpush1.bf16.msra.mxu0 %v1808
        %1848 = vmatprep.subr.bf16.mxu0 %v1805
        %1849 = vmatpush1.bf16.msra.mxu0 %v1804
        %1850 = vmatprep.subr.bf16.mxu0 %v1801
        %1851 = vmatpush1.bf16.msra.mxu0 %v1800
        %1852 = vmatprep.subr.bf16.mxu0 %v1797
        %1853 = vmatpush1.bf16.msra.mxu0 %v1796
        %1854 = vmatprep.subr.bf16.mxu0 %v1793
        %1855 = vmatpush1.bf16.msra.mxu0 %v1792
        %1856 = vmatprep.subr.bf16.mxu0 %v1789
        %1857 = vmatpush1.bf16.msra.mxu0 %v1788
        %1858 = vmatprep.subr.bf16.mxu0 0
        %1859 = vmatpush2.bf16.msra.mxu0 0
        %1860 = vmatprep.subr.bf16.mxu0 0
        %1861 = vmatpush2.bf16.msra.mxu0 0
        %1862 = vmatprep.subr.bf16.mxu0 0
        %1863 = vmatpush2.bf16.msra.mxu0 0
        %1864 = vmatprep.subr.bf16.mxu0 0
        %1865 = vmatpush2.bf16.msra.mxu0 0
        %1866 = vmatprep.subr.bf16.mxu0 0
        %1867 = vmatpush2.bf16.msra.mxu0 0
        %1868 = vmatprep.subr.bf16.mxu0 0
        %1869 = vmatpush2.bf16.msra.mxu0 0
        %1870 = vmatprep.subr.bf16.mxu0 0
        %1871 = vmatpush2.bf16.msra.mxu0 0
        %1872 = vmatprep.subr.bf16.mxu0 0
        %1873 = vmatpush2.bf16.msra.mxu0 0
        %1874 = vmatprep.mubr.bf16.mxu0 0
        %1875 = vmatmul.mubr.bf16.gmra.mxu0 %v1837
        %v1876 = vpop.f32.mrf.mxu0
        %v1877 = vadd.f32 0.0, %v1876
        %v1878 = vpop.f32.mrf.mxu0
        %v1879 = vadd.f32 0.0, %v1878
        %v1880 = vpop.f32.mrf.mxu0
        %v1881 = vadd.f32 0.0, %v1880
        %v1882 = vpop.f32.mrf.mxu0
        %v1883 = vadd.f32 0.0, %v1882
        %1884 = vmatprep.mubr.bf16.mxu0 0
        %1885 = vmatmul.mubr.bf16.gmra.mxu0 %v1840
        %v1886 = vpop.f32.mrf.mxu0
        %v1887 = vadd.f32 0.0, %v1886
        %v1888 = vpop.f32.mrf.mxu0
        %v1889 = vadd.f32 0.0, %v1888
        %v1890 = vpop.f32.mrf.mxu0
        %v1891 = vadd.f32 0.0, %v1890
        %v1892 = vpop.f32.mrf.mxu0
        %v1893 = vadd.f32 0.0, %v1892
        %1894 = vdwg.mxu0
        %1895 = vmatprep.subr.bf16.mxu0 0
        %1896 = vmatpush1.bf16.msra.mxu0 0
        %1897 = vmatprep.subr.bf16.mxu0 0
        %1898 = vmatpush1.bf16.msra.mxu0 0
        %1899 = vmatprep.subr.bf16.mxu0 %v1811
        %1900 = vmatpush1.bf16.msra.mxu0 %v1810
        %1901 = vmatprep.subr.bf16.mxu0 %v1807
        %1902 = vmatpush1.bf16.msra.mxu0 %v1806
        %1903 = vmatprep.subr.bf16.mxu0 %v1803
        %1904 = vmatpush1.bf16.msra.mxu0 %v1802
        %1905 = vmatprep.subr.bf16.mxu0 %v1799
        %1906 = vmatpush1.bf16.msra.mxu0 %v1798
        %1907 = vmatprep.subr.bf16.mxu0 %v1795
        %1908 = vmatpush1.bf16.msra.mxu0 %v1794
        %1909 = vmatprep.subr.bf16.mxu0 %v1791
        %1910 = vmatpush1.bf16.msra.mxu0 %v1790
        %1911 = vmatprep.subr.bf16.mxu0 0
        %1912 = vmatpush2.bf16.msra.mxu0 0
        %1913 = vmatprep.subr.bf16.mxu0 0
        %1914 = vmatpush2.bf16.msra.mxu0 0
        %1915 = vmatprep.subr.bf16.mxu0 0
        %1916 = vmatpush2.bf16.msra.mxu0 0
        %1917 = vmatprep.subr.bf16.mxu0 0
        %1918 = vmatpush2.bf16.msra.mxu0 0
        %1919 = vmatprep.subr.bf16.mxu0 0
        %1920 = vmatpush2.bf16.msra.mxu0 0
        %1921 = vmatprep.subr.bf16.mxu0 0
        %1922 = vmatpush2.bf16.msra.mxu0 0
        %1923 = vmatprep.subr.bf16.mxu0 0
        %1924 = vmatpush2.bf16.msra.mxu0 0
        %1925 = vmatprep.subr.bf16.mxu0 0
        %1926 = vmatpush2.bf16.msra.mxu0 0
        %1927 = vmatprep.mubr.bf16.mxu0 0
        %1928 = vmatmul.mubr.bf16.gmra.mxu0 %v1837
        %v1929 = vpop.f32.mrf.mxu0
        %v1930 = vadd.f32 0.0, %v1929
        %v1931 = vpop.f32.mrf.mxu0
        %v1932 = vadd.f32 0.0, %v1931
        %v1933 = vpop.f32.mrf.mxu0
        %v1934 = vadd.f32 0.0, %v1933
        %v1935 = vpop.f32.mrf.mxu0
        %v1936 = vadd.f32 0.0, %v1935
        %1937 = vmatprep.mubr.bf16.mxu0 0
        %1938 = vmatmul.mubr.bf16.gmra.mxu0 %v1840
        %v1939 = vpop.f32.mrf.mxu0
        %v1940 = vadd.f32 0.0, %v1939
        %v1941 = vpop.f32.mrf.mxu0
        %v1942 = vadd.f32 0.0, %v1941
        %v1943 = vpop.f32.mrf.mxu0
        %v1944 = vadd.f32 0.0, %v1943
        %v1945 = vpop.f32.mrf.mxu0
        %v1946 = vadd.f32 0.0, %v1945
        %1947 = vdwg.mxu0
        %v1948 = vadd.f32 %v1135, %v1877
        %v1949 = vadd.f32 %v1137, %v1879
        %v1950 = vadd.f32 %v1188, %v1930
        %v1951 = vadd.f32 %v1190, %v1932
        %v1952 = vadd.f32 %v1139, %v1881
        %v1953 = vadd.f32 %v1141, %v1883
        %v1954 = vadd.f32 %v1192, %v1934
        %v1955 = vadd.f32 %v1194, %v1936
        %v1956 = vadd.f32 %v1145, %v1887
        %v1957 = vadd.f32 %v1147, %v1889
        %v1958 = vadd.f32 %v1198, %v1940
        %v1959 = vadd.f32 %v1200, %v1942
        %v1960 = vadd.f32 %v1149, %v1891
        %v1961 = vadd.f32 %v1151, %v1893
        %v1962 = vadd.f32 %v1202, %v1944
        %v1963 = vadd.f32 %v1204, %v1946
        %s1964 = scalar_lea.vmem [#allocation7], 384
        %v1965 = vld [vmem:[%s1964] sm:$0xff]
        %v1966 = vld [vmem:[%s1964 + $0x8] sm:$0xff]
        %v1967 = vld [vmem:[%s1964 + $0x10] sm:$0xff]
        %v1968 = vld [vmem:[%s1964 + $0x18] sm:$0xff]
        %v1969 = vld [vmem:[%s1964 + $0x20] sm:$0xff]
        %v1970 = vld [vmem:[%s1964 + $0x28] sm:$0xff]
        %v1971 = vld [vmem:[%s1964 + $0x30] sm:$0xff]
        %v1972 = vld [vmem:[%s1964 + $0x38] sm:$0xff]
        %v1973 = vld [vmem:[%s1964 + $0x40] sm:$0xff]
        %v1974 = vld [vmem:[%s1964 + $0x48] sm:$0xff]
        %v1975 = vld [vmem:[%s1964 + $0x50] sm:$0xff]
        %v1976 = vld [vmem:[%s1964 + $0x58] sm:$0xff]
        %v1977 = vld [vmem:[%s1964 + $0x60] sm:$0xff]
        %v1978 = vld [vmem:[%s1964 + $0x68] sm:$0xff]
        %v1979 = vld [vmem:[%s1964 + $0x70] sm:$0xff]
        %v1980 = vld [vmem:[%s1964 + $0x78] sm:$0xff]
        %v1981 = vld [vmem:[%s1964 + $0x80] sm:$0xff]
        %v1982 = vld [vmem:[%s1964 + $0x88] sm:$0xff]
        %v1983 = vld [vmem:[%s1964 + $0x90] sm:$0xff]
        %v1984 = vld [vmem:[%s1964 + $0x98] sm:$0xff]
        %v1985 = vld [vmem:[%s1964 + $0xa0] sm:$0xff]
        %v1986 = vld [vmem:[%s1964 + $0xa8] sm:$0xff]
        %v1987 = vld [vmem:[%s1964 + $0xb0] sm:$0xff]
        %v1988 = vld [vmem:[%s1964 + $0xb8] sm:$0xff]
        %v2013 = vunpack.c.l.b16 %v1965
        %v2014 = vunpack.c.h.b16 %v1965
        %v2015 = vunpack.c.l.b16 %v1966
        %v2016 = vunpack.c.h.b16 %v1966
        %v2017 = vunpack.c.l.b16 %v1967
        %v2018 = vunpack.c.h.b16 %v1967
        %v2019 = vunpack.c.l.b16 %v1968
        %v2020 = vunpack.c.h.b16 %v1968
        %v2021 = vunpack.c.l.b16 %v1969
        %v2022 = vunpack.c.h.b16 %v1969
        %v2023 = vunpack.c.l.b16 %v1970
        %v2024 = vunpack.c.h.b16 %v1970
        %v2025 = vunpack.c.l.b16 %v1971
        %v2026 = vunpack.c.h.b16 %v1971
        %v2027 = vunpack.c.l.b16 %v1972
        %v2028 = vunpack.c.h.b16 %v1972
        %v2029 = vunpack.c.l.b16 %v1973
        %v2030 = vunpack.c.h.b16 %v1973
        %v2031 = vunpack.c.l.b16 %v1974
        %v2032 = vunpack.c.h.b16 %v1974
        %v2033 = vunpack.c.l.b16 %v1975
        %v2034 = vunpack.c.h.b16 %v1975
        %v2035 = vunpack.c.l.b16 %v1976
        %v2036 = vunpack.c.h.b16 %v1976
        %v2037 = vunpack.c.l.b16 %v1977
        %v2038 = vunpack.c.h.b16 %v1977
        %v2039 = vunpack.c.l.b16 %v1978
        %v2040 = vunpack.c.h.b16 %v1978
        %v2041 = vunpack.c.l.b16 %v1979
        %v2042 = vunpack.c.h.b16 %v1979
        %v2043 = vunpack.c.l.b16 %v1980
        %v2044 = vunpack.c.h.b16 %v1980
        %v2045 = vunpack.c.l.b16 %v1981
        %v2046 = vunpack.c.h.b16 %v1981
        %v2047 = vunpack.c.l.b16 %v1982
        %v2048 = vunpack.c.h.b16 %v1982
        %v2049 = vunpack.c.l.b16 %v1983
        %v2050 = vunpack.c.h.b16 %v1983
        %v2051 = vunpack.c.l.b16 %v1984
        %v2052 = vunpack.c.h.b16 %v1984
        %v2053 = vunpack.c.l.b16 %v1985
        %v2054 = vunpack.c.h.b16 %v1985
        %v2055 = vunpack.c.l.b16 %v1986
        %v2056 = vunpack.c.h.b16 %v1986
        %v2057 = vunpack.c.l.b16 %v1987
        %v2058 = vunpack.c.h.b16 %v1987
        %v2059 = vunpack.c.l.b16 %v1988
        %v2060 = vunpack.c.h.b16 %v1988
        %v2061 = vpack.c.b16 %v2017, %v2013
        %v2062 = vpack.c.b16 %v2018, %v2014
        %v2063 = vpack.c.b16 %v2019, %v2015
        %v2064 = vpack.c.b16 %v2020, %v2016
        %v2065 = vpack.c.b16 %v2025, %v2021
        %v2066 = vpack.c.b16 %v2026, %v2022
        %v2067 = vpack.c.b16 %v2027, %v2023
        %v2068 = vpack.c.b16 %v2028, %v2024
        %v2069 = vpack.c.b16 %v2033, %v2029
        %v2070 = vpack.c.b16 %v2034, %v2030
        %v2071 = vpack.c.b16 %v2035, %v2031
        %v2072 = vpack.c.b16 %v2036, %v2032
        %v2073 = vpack.c.b16 %v2041, %v2037
        %v2074 = vpack.c.b16 %v2042, %v2038
        %v2075 = vpack.c.b16 %v2043, %v2039
        %v2076 = vpack.c.b16 %v2044, %v2040
        %v2077 = vpack.c.b16 %v2049, %v2045
        %v2078 = vpack.c.b16 %v2050, %v2046
        %v2079 = vpack.c.b16 %v2051, %v2047
        %v2080 = vpack.c.b16 %v2052, %v2048
        %v2081 = vpack.c.b16 %v2057, %v2053
        %v2082 = vpack.c.b16 %v2058, %v2054
        %v2083 = vpack.c.b16 %v2059, %v2055
        %v2084 = vpack.c.b16 %v2060, %v2056
        %2109 = vmatprep.subr.bf16.mxu0 0
        %2110 = vmatpush1.bf16.msra.mxu0 0
        %2111 = vmatprep.subr.bf16.mxu0 0
        %2112 = vmatpush1.bf16.msra.mxu0 0
        %2113 = vmatprep.subr.bf16.mxu0 %v2082
        %2114 = vmatpush1.bf16.msra.mxu0 %v2081
        %2115 = vmatprep.subr.bf16.mxu0 %v2078
        %2116 = vmatpush1.bf16.msra.mxu0 %v2077
        %2117 = vmatprep.subr.bf16.mxu0 %v2074
        %2118 = vmatpush1.bf16.msra.mxu0 %v2073
        %2119 = vmatprep.subr.bf16.mxu0 %v2070
        %2120 = vmatpush1.bf16.msra.mxu0 %v2069
        %2121 = vmatprep.subr.bf16.mxu0 %v2066
        %2122 = vmatpush1.bf16.msra.mxu0 %v2065
        %2123 = vmatprep.subr.bf16.mxu0 %v2062
        %2124 = vmatpush1.bf16.msra.mxu0 %v2061
        %2125 = vmatprep.subr.bf16.mxu0 0
        %2126 = vmatpush2.bf16.msra.mxu0 0
        %2127 = vmatprep.subr.bf16.mxu0 0
        %2128 = vmatpush2.bf16.msra.mxu0 0
        %2129 = vmatprep.subr.bf16.mxu0 0
        %2130 = vmatpush2.bf16.msra.mxu0 0
        %2131 = vmatprep.subr.bf16.mxu0 0
        %2132 = vmatpush2.bf16.msra.mxu0 0
        %2133 = vmatprep.subr.bf16.mxu0 0
        %2134 = vmatpush2.bf16.msra.mxu0 0
        %2135 = vmatprep.subr.bf16.mxu0 0
        %2136 = vmatpush2.bf16.msra.mxu0 0
        %2137 = vmatprep.subr.bf16.mxu0 0
        %2138 = vmatpush2.bf16.msra.mxu0 0
        %2139 = vmatprep.subr.bf16.mxu0 0
        %2140 = vmatpush2.bf16.msra.mxu0 0
        %2141 = vmatprep.mubr.bf16.mxu0 0
        %2142 = vmatmul.mubr.bf16.gmra.mxu0 %v1837
        %v2143 = vpop.f32.mrf.mxu0
        %v2144 = vadd.f32 0.0, %v2143
        %v2145 = vpop.f32.mrf.mxu0
        %v2146 = vadd.f32 0.0, %v2145
        %v2147 = vpop.f32.mrf.mxu0
        %v2148 = vadd.f32 0.0, %v2147
        %v2149 = vpop.f32.mrf.mxu0
        %v2150 = vadd.f32 0.0, %v2149
        %2151 = vmatprep.mubr.bf16.mxu0 0
        %2152 = vmatmul.mubr.bf16.gmra.mxu0 %v1840
        %v2153 = vpop.f32.mrf.mxu0
        %v2154 = vadd.f32 0.0, %v2153
        %v2155 = vpop.f32.mrf.mxu0
        %v2156 = vadd.f32 0.0, %v2155
        %v2157 = vpop.f32.mrf.mxu0
        %v2158 = vadd.f32 0.0, %v2157
        %v2159 = vpop.f32.mrf.mxu0
        %v2160 = vadd.f32 0.0, %v2159
        %2161 = vdwg.mxu0
        %2162 = vmatprep.subr.bf16.mxu0 0
        %2163 = vmatpush1.bf16.msra.mxu0 0
        %2164 = vmatprep.subr.bf16.mxu0 0
        %2165 = vmatpush1.bf16.msra.mxu0 0
        %2166 = vmatprep.subr.bf16.mxu0 %v2084
        %2167 = vmatpush1.bf16.msra.mxu0 %v2083
        %2168 = vmatprep.subr.bf16.mxu0 %v2080
        %2169 = vmatpush1.bf16.msra.mxu0 %v2079
        %2170 = vmatprep.subr.bf16.mxu0 %v2076
        %2171 = vmatpush1.bf16.msra.mxu0 %v2075
        %2172 = vmatprep.subr.bf16.mxu0 %v2072
        %2173 = vmatpush1.bf16.msra.mxu0 %v2071
        %2174 = vmatprep.subr.bf16.mxu0 %v2068
        %2175 = vmatpush1.bf16.msra.mxu0 %v2067
        %2176 = vmatprep.subr.bf16.mxu0 %v2064
        %2177 = vmatpush1.bf16.msra.mxu0 %v2063
        %2178 = vmatprep.subr.bf16.mxu0 0
        %2179 = vmatpush2.bf16.msra.mxu0 0
        %2180 = vmatprep.subr.bf16.mxu0 0
        %2181 = vmatpush2.bf16.msra.mxu0 0
        %2182 = vmatprep.subr.bf16.mxu0 0
        %2183 = vmatpush2.bf16.msra.mxu0 0
        %2184 = vmatprep.subr.bf16.mxu0 0
        %2185 = vmatpush2.bf16.msra.mxu0 0
        %2186 = vmatprep.subr.bf16.mxu0 0
        %2187 = vmatpush2.bf16.msra.mxu0 0
        %2188 = vmatprep.subr.bf16.mxu0 0
        %2189 = vmatpush2.bf16.msra.mxu0 0
        %2190 = vmatprep.subr.bf16.mxu0 0
        %2191 = vmatpush2.bf16.msra.mxu0 0
        %2192 = vmatprep.subr.bf16.mxu0 0
        %2193 = vmatpush2.bf16.msra.mxu0 0
        %2194 = vmatprep.mubr.bf16.mxu0 0
        %2195 = vmatmul.mubr.bf16.gmra.mxu0 %v1837
        %v2196 = vpop.f32.mrf.mxu0
        %v2197 = vadd.f32 0.0, %v2196
        %v2198 = vpop.f32.mrf.mxu0
        %v2199 = vadd.f32 0.0, %v2198
        %v2200 = vpop.f32.mrf.mxu0
        %v2201 = vadd.f32 0.0, %v2200
        %v2202 = vpop.f32.mrf.mxu0
        %v2203 = vadd.f32 0.0, %v2202
        %2204 = vmatprep.mubr.bf16.mxu0 0
        %2205 = vmatmul.mubr.bf16.gmra.mxu0 %v1840
        %v2206 = vpop.f32.mrf.mxu0
        %v2207 = vadd.f32 0.0, %v2206
        %v2208 = vpop.f32.mrf.mxu0
        %v2209 = vadd.f32 0.0, %v2208
        %v2210 = vpop.f32.mrf.mxu0
        %v2211 = vadd.f32 0.0, %v2210
        %v2212 = vpop.f32.mrf.mxu0
        %v2213 = vadd.f32 0.0, %v2212
        %2214 = vdwg.mxu0
        %v2215 = vadd.f32 %v1612, %v2144
        %v2216 = vadd.f32 %v1614, %v2146
        %v2217 = vadd.f32 %v1665, %v2197
        %v2218 = vadd.f32 %v1667, %v2199
        %v2219 = vadd.f32 %v1616, %v2148
        %v2220 = vadd.f32 %v1618, %v2150
        %v2221 = vadd.f32 %v1669, %v2201
        %v2222 = vadd.f32 %v1671, %v2203
        %v2223 = vadd.f32 %v1622, %v2154
        %v2224 = vadd.f32 %v1624, %v2156
        %v2225 = vadd.f32 %v1675, %v2207
        %v2226 = vadd.f32 %v1677, %v2209
        %v2227 = vadd.f32 %v1626, %v2158
        %v2228 = vadd.f32 %v1628, %v2160
        %v2229 = vadd.f32 %v1679, %v2211
        %v2230 = vadd.f32 %v1681, %v2213
        %v2231 = vld [vmem:[%s633 + $0xc] sm:$0x7]
        %s2232 = scalar_lea.vmem [#allocation4], 576
        %v2233 = vld [vmem:[%s2232] sm:$0xff]
        %v2234 = vld [vmem:[%s2232 + $0x8] sm:$0xff]
        %v2235 = vld [vmem:[%s2232 + $0x10] sm:$0xff]
        %v2236 = vld [vmem:[%s2232 + $0x18] sm:$0xff]
        %v2237 = vld [vmem:[%s2232 + $0x20] sm:$0xff]
        %v2238 = vld [vmem:[%s2232 + $0x28] sm:$0xff]
        %v2239 = vld [vmem:[%s2232 + $0x30] sm:$0xff]
        %v2240 = vld [vmem:[%s2232 + $0x38] sm:$0xff]
        %v2241 = vld [vmem:[%s2232 + $0x40] sm:$0xff]
        %v2242 = vld [vmem:[%s2232 + $0x48] sm:$0xff]
        %v2243 = vld [vmem:[%s2232 + $0x50] sm:$0xff]
        %v2244 = vld [vmem:[%s2232 + $0x58] sm:$0xff]
        %v2245 = vld [vmem:[%s2232 + $0x60] sm:$0xff]
        %v2246 = vld [vmem:[%s2232 + $0x68] sm:$0xff]
        %v2247 = vld [vmem:[%s2232 + $0x70] sm:$0xff]
        %v2248 = vld [vmem:[%s2232 + $0x78] sm:$0xff]
        %v2249 = vld [vmem:[%s2232 + $0x80] sm:$0xff]
        %v2250 = vld [vmem:[%s2232 + $0x88] sm:$0xff]
        %v2251 = vld [vmem:[%s2232 + $0x90] sm:$0xff]
        %v2252 = vld [vmem:[%s2232 + $0x98] sm:$0xff]
        %v2253 = vld [vmem:[%s2232 + $0xa0] sm:$0xff]
        %v2254 = vld [vmem:[%s2232 + $0xa8] sm:$0xff]
        %v2255 = vld [vmem:[%s2232 + $0xb0] sm:$0xff]
        %v2256 = vld [vmem:[%s2232 + $0xb8] sm:$0xff]
        %v2258 = vunpack.c.l.b16 %v2231
        %v2259 = vpack.c.b16 %v2258, %v719
        %vm2260 = vsmask.f32 6400
        %v2262 = vshrl.u32 %v1711, 16
        %v2264 = vrot.slane %v2262, 1
        %v2265 = vshll.u32 %v1711, 16
        %v2267 = vrot.slane %v2265, 2
        %v2268 = vor.u32 %v2264, %v2267
        %v2270 = vshrl.u32 %v2259, 16
        %v2272 = vrot.slane %v2270, 1
        %v2273 = vshll.u32 %v2259, 16
        %v2275 = vrot.slane %v2273, 2
        %v2276 = vor.u32 %v2272, %v2275
        %v2277 = vsel %vm2260, %v2268, %v2276
        %v2302 = vunpack.c.l.b16 %v2233
        %v2303 = vunpack.c.h.b16 %v2233
        %v2304 = vunpack.c.l.b16 %v2234
        %v2305 = vunpack.c.h.b16 %v2234
        %v2306 = vunpack.c.l.b16 %v2235
        %v2307 = vunpack.c.h.b16 %v2235
        %v2308 = vunpack.c.l.b16 %v2236
        %v2309 = vunpack.c.h.b16 %v2236
        %v2310 = vunpack.c.l.b16 %v2237
        %v2311 = vunpack.c.h.b16 %v2237
        %v2312 = vunpack.c.l.b16 %v2238
        %v2313 = vunpack.c.h.b16 %v2238
        %v2314 = vunpack.c.l.b16 %v2239
        %v2315 = vunpack.c.h.b16 %v2239
        %v2316 = vunpack.c.l.b16 %v2240
        %v2317 = vunpack.c.h.b16 %v2240
        %v2318 = vunpack.c.l.b16 %v2241
        %v2319 = vunpack.c.h.b16 %v2241
        %v2320 = vunpack.c.l.b16 %v2242
        %v2321 = vunpack.c.h.b16 %v2242
        %v2322 = vunpack.c.l.b16 %v2243
        %v2323 = vunpack.c.h.b16 %v2243
        %v2324 = vunpack.c.l.b16 %v2244
        %v2325 = vunpack.c.h.b16 %v2244
        %v2326 = vunpack.c.l.b16 %v2245
        %v2327 = vunpack.c.h.b16 %v2245
        %v2328 = vunpack.c.l.b16 %v2246
        %v2329 = vunpack.c.h.b16 %v2246
        %v2330 = vunpack.c.l.b16 %v2247
        %v2331 = vunpack.c.h.b16 %v2247
        %v2332 = vunpack.c.l.b16 %v2248
        %v2333 = vunpack.c.h.b16 %v2248
        %v2334 = vunpack.c.l.b16 %v2249
        %v2335 = vunpack.c.h.b16 %v2249
        %v2336 = vunpack.c.l.b16 %v2250
        %v2337 = vunpack.c.h.b16 %v2250
        %v2338 = vunpack.c.l.b16 %v2251
        %v2339 = vunpack.c.h.b16 %v2251
        %v2340 = vunpack.c.l.b16 %v2252
        %v2341 = vunpack.c.h.b16 %v2252
        %v2342 = vunpack.c.l.b16 %v2253
        %v2343 = vunpack.c.h.b16 %v2253
        %v2344 = vunpack.c.l.b16 %v2254
        %v2345 = vunpack.c.h.b16 %v2254
        %v2346 = vunpack.c.l.b16 %v2255
        %v2347 = vunpack.c.h.b16 %v2255
        %v2348 = vunpack.c.l.b16 %v2256
        %v2349 = vunpack.c.h.b16 %v2256
        %v2350 = vpack.c.b16 %v2306, %v2302
        %v2351 = vpack.c.b16 %v2307, %v2303
        %v2352 = vpack.c.b16 %v2308, %v2304
        %v2353 = vpack.c.b16 %v2309, %v2305
        %v2354 = vpack.c.b16 %v2314, %v2310
        %v2355 = vpack.c.b16 %v2315, %v2311
        %v2356 = vpack.c.b16 %v2316, %v2312
        %v2357 = vpack.c.b16 %v2317, %v2313
        %v2358 = vpack.c.b16 %v2322, %v2318
        %v2359 = vpack.c.b16 %v2323, %v2319
        %v2360 = vpack.c.b16 %v2324, %v2320
        %v2361 = vpack.c.b16 %v2325, %v2321
        %v2362 = vpack.c.b16 %v2330, %v2326
        %v2363 = vpack.c.b16 %v2331, %v2327
        %v2364 = vpack.c.b16 %v2332, %v2328
        %v2365 = vpack.c.b16 %v2333, %v2329
        %v2366 = vpack.c.b16 %v2338, %v2334
        %v2367 = vpack.c.b16 %v2339, %v2335
        %v2368 = vpack.c.b16 %v2340, %v2336
        %v2369 = vpack.c.b16 %v2341, %v2337
        %v2370 = vpack.c.b16 %v2346, %v2342
        %v2371 = vpack.c.b16 %v2347, %v2343
        %v2372 = vpack.c.b16 %v2348, %v2344
        %v2373 = vpack.c.b16 %v2349, %v2345
        %v2399 = vsel %vm859, %v2277, 0
        %v2402 = vsel %vm859, %v2276, 0
        %2404 = vmatprep.subr.bf16.mxu0 0
        %2405 = vmatpush1.bf16.msra.mxu0 0
        %2406 = vmatprep.subr.bf16.mxu0 0
        %2407 = vmatpush1.bf16.msra.mxu0 0
        %2408 = vmatprep.subr.bf16.mxu0 %v2371
        %2409 = vmatpush1.bf16.msra.mxu0 %v2370
        %2410 = vmatprep.subr.bf16.mxu0 %v2367
        %2411 = vmatpush1.bf16.msra.mxu0 %v2366
        %2412 = vmatprep.subr.bf16.mxu0 %v2363
        %2413 = vmatpush1.bf16.msra.mxu0 %v2362
        %2414 = vmatprep.subr.bf16.mxu0 %v2359
        %2415 = vmatpush1.bf16.msra.mxu0 %v2358
        %2416 = vmatprep.subr.bf16.mxu0 %v2355
        %2417 = vmatpush1.bf16.msra.mxu0 %v2354
        %2418 = vmatprep.subr.bf16.mxu0 %v2351
        %2419 = vmatpush1.bf16.msra.mxu0 %v2350
        %2420 = vmatprep.subr.bf16.mxu0 0
        %2421 = vmatpush2.bf16.msra.mxu0 0
        %2422 = vmatprep.subr.bf16.mxu0 0
        %2423 = vmatpush2.bf16.msra.mxu0 0
        %2424 = vmatprep.subr.bf16.mxu0 0
        %2425 = vmatpush2.bf16.msra.mxu0 0
        %2426 = vmatprep.subr.bf16.mxu0 0
        %2427 = vmatpush2.bf16.msra.mxu0 0
        %2428 = vmatprep.subr.bf16.mxu0 0
        %2429 = vmatpush2.bf16.msra.mxu0 0
        %2430 = vmatprep.subr.bf16.mxu0 0
        %2431 = vmatpush2.bf16.msra.mxu0 0
        %2432 = vmatprep.subr.bf16.mxu0 0
        %2433 = vmatpush2.bf16.msra.mxu0 0
        %2434 = vmatprep.subr.bf16.mxu0 0
        %2435 = vmatpush2.bf16.msra.mxu0 0
        %2436 = vmatprep.mubr.bf16.mxu0 0
        %2437 = vmatmul.mubr.bf16.gmra.mxu0 %v2399
        %v2438 = vpop.f32.mrf.mxu0
        %v2439 = vadd.f32 0.0, %v2438
        %v2440 = vpop.f32.mrf.mxu0
        %v2441 = vadd.f32 0.0, %v2440
        %v2442 = vpop.f32.mrf.mxu0
        %v2443 = vadd.f32 0.0, %v2442
        %v2444 = vpop.f32.mrf.mxu0
        %v2445 = vadd.f32 0.0, %v2444
        %2446 = vmatprep.mubr.bf16.mxu0 0
        %2447 = vmatmul.mubr.bf16.gmra.mxu0 %v2402
        %v2448 = vpop.f32.mrf.mxu0
        %v2449 = vadd.f32 0.0, %v2448
        %v2450 = vpop.f32.mrf.mxu0
        %v2451 = vadd.f32 0.0, %v2450
        %v2452 = vpop.f32.mrf.mxu0
        %v2453 = vadd.f32 0.0, %v2452
        %v2454 = vpop.f32.mrf.mxu0
        %v2455 = vadd.f32 0.0, %v2454
        %2456 = vdwg.mxu0
        %2457 = vmatprep.subr.bf16.mxu0 0
        %2458 = vmatpush1.bf16.msra.mxu0 0
        %2459 = vmatprep.subr.bf16.mxu0 0
        %2460 = vmatpush1.bf16.msra.mxu0 0
        %2461 = vmatprep.subr.bf16.mxu0 %v2373
        %2462 = vmatpush1.bf16.msra.mxu0 %v2372
        %2463 = vmatprep.subr.bf16.mxu0 %v2369
        %2464 = vmatpush1.bf16.msra.mxu0 %v2368
        %2465 = vmatprep.subr.bf16.mxu0 %v2365
        %2466 = vmatpush1.bf16.msra.mxu0 %v2364
        %2467 = vmatprep.subr.bf16.mxu0 %v2361
        %2468 = vmatpush1.bf16.msra.mxu0 %v2360
        %2469 = vmatprep.subr.bf16.mxu0 %v2357
        %2470 = vmatpush1.bf16.msra.mxu0 %v2356
        %2471 = vmatprep.subr.bf16.mxu0 %v2353
        %2472 = vmatpush1.bf16.msra.mxu0 %v2352
        %2473 = vmatprep.subr.bf16.mxu0 0
        %2474 = vmatpush2.bf16.msra.mxu0 0
        %2475 = vmatprep.subr.bf16.mxu0 0
        %2476 = vmatpush2.bf16.msra.mxu0 0
        %2477 = vmatprep.subr.bf16.mxu0 0
        %2478 = vmatpush2.bf16.msra.mxu0 0
        %2479 = vmatprep.subr.bf16.mxu0 0
        %2480 = vmatpush2.bf16.msra.mxu0 0
        %2481 = vmatprep.subr.bf16.mxu0 0
        %2482 = vmatpush2.bf16.msra.mxu0 0
        %2483 = vmatprep.subr.bf16.mxu0 0
        %2484 = vmatpush2.bf16.msra.mxu0 0
        %2485 = vmatprep.subr.bf16.mxu0 0
        %2486 = vmatpush2.bf16.msra.mxu0 0
        %2487 = vmatprep.subr.bf16.mxu0 0
        %2488 = vmatpush2.bf16.msra.mxu0 0
        %2489 = vmatprep.mubr.bf16.mxu0 0
        %2490 = vmatmul.mubr.bf16.gmra.mxu0 %v2399
        %v2491 = vpop.f32.mrf.mxu0
        %v2492 = vadd.f32 0.0, %v2491
        %v2493 = vpop.f32.mrf.mxu0
        %v2494 = vadd.f32 0.0, %v2493
        %v2495 = vpop.f32.mrf.mxu0
        %v2496 = vadd.f32 0.0, %v2495
        %v2497 = vpop.f32.mrf.mxu0
        %v2498 = vadd.f32 0.0, %v2497
        %2499 = vmatprep.mubr.bf16.mxu0 0
        %2500 = vmatmul.mubr.bf16.gmra.mxu0 %v2402
        %v2501 = vpop.f32.mrf.mxu0
        %v2502 = vadd.f32 0.0, %v2501
        %v2503 = vpop.f32.mrf.mxu0
        %v2504 = vadd.f32 0.0, %v2503
        %v2505 = vpop.f32.mrf.mxu0
        %v2506 = vadd.f32 0.0, %v2505
        %v2507 = vpop.f32.mrf.mxu0
        %v2508 = vadd.f32 0.0, %v2507
        %2509 = vdwg.mxu0
        %v2510 = vadd.f32 %v1948, %v2439
        %v2511 = vadd.f32 %v1949, %v2441
        %v2512 = vadd.f32 %v1950, %v2492
        %v2513 = vadd.f32 %v1951, %v2494
        %v2514 = vadd.f32 %v1952, %v2443
        %v2515 = vadd.f32 %v1953, %v2445
        %v2516 = vadd.f32 %v1954, %v2496
        %v2517 = vadd.f32 %v1955, %v2498
        %v2518 = vadd.f32 %v1956, %v2449
        %v2519 = vadd.f32 %v1957, %v2451
        %v2520 = vadd.f32 %v1958, %v2502
        %v2521 = vadd.f32 %v1959, %v2504
        %v2522 = vadd.f32 %v1960, %v2453
        %v2523 = vadd.f32 %v1961, %v2455
        %v2524 = vadd.f32 %v1962, %v2506
        %v2525 = vadd.f32 %v1963, %v2508
        %s2526 = scalar_lea.vmem [#allocation7], 576
        %v2527 = vld [vmem:[%s2526] sm:$0xff]
        %v2528 = vld [vmem:[%s2526 + $0x8] sm:$0xff]
        %v2529 = vld [vmem:[%s2526 + $0x10] sm:$0xff]
        %v2530 = vld [vmem:[%s2526 + $0x18] sm:$0xff]
        %v2531 = vld [vmem:[%s2526 + $0x20] sm:$0xff]
        %v2532 = vld [vmem:[%s2526 + $0x28] sm:$0xff]
        %v2533 = vld [vmem:[%s2526 + $0x30] sm:$0xff]
        %v2534 = vld [vmem:[%s2526 + $0x38] sm:$0xff]
        %v2535 = vld [vmem:[%s2526 + $0x40] sm:$0xff]
        %v2536 = vld [vmem:[%s2526 + $0x48] sm:$0xff]
        %v2537 = vld [vmem:[%s2526 + $0x50] sm:$0xff]
        %v2538 = vld [vmem:[%s2526 + $0x58] sm:$0xff]
        %v2539 = vld [vmem:[%s2526 + $0x60] sm:$0xff]
        %v2540 = vld [vmem:[%s2526 + $0x68] sm:$0xff]
        %v2541 = vld [vmem:[%s2526 + $0x70] sm:$0xff]
        %v2542 = vld [vmem:[%s2526 + $0x78] sm:$0xff]
        %v2543 = vld [vmem:[%s2526 + $0x80] sm:$0xff]
        %v2544 = vld [vmem:[%s2526 + $0x88] sm:$0xff]
        %v2545 = vld [vmem:[%s2526 + $0x90] sm:$0xff]
        %v2546 = vld [vmem:[%s2526 + $0x98] sm:$0xff]
        %v2547 = vld [vmem:[%s2526 + $0xa0] sm:$0xff]
        %v2548 = vld [vmem:[%s2526 + $0xa8] sm:$0xff]
        %v2549 = vld [vmem:[%s2526 + $0xb0] sm:$0xff]
        %v2550 = vld [vmem:[%s2526 + $0xb8] sm:$0xff]
        %v2575 = vunpack.c.l.b16 %v2527
        %v2576 = vunpack.c.h.b16 %v2527
        %v2577 = vunpack.c.l.b16 %v2528
        %v2578 = vunpack.c.h.b16 %v2528
        %v2579 = vunpack.c.l.b16 %v2529
        %v2580 = vunpack.c.h.b16 %v2529
        %v2581 = vunpack.c.l.b16 %v2530
        %v2582 = vunpack.c.h.b16 %v2530
        %v2583 = vunpack.c.l.b16 %v2531
        %v2584 = vunpack.c.h.b16 %v2531
        %v2585 = vunpack.c.l.b16 %v2532
        %v2586 = vunpack.c.h.b16 %v2532
        %v2587 = vunpack.c.l.b16 %v2533
        %v2588 = vunpack.c.h.b16 %v2533
        %v2589 = vunpack.c.l.b16 %v2534
        %v2590 = vunpack.c.h.b16 %v2534
        %v2591 = vunpack.c.l.b16 %v2535
        %v2592 = vunpack.c.h.b16 %v2535
        %v2593 = vunpack.c.l.b16 %v2536
        %v2594 = vunpack.c.h.b16 %v2536
        %v2595 = vunpack.c.l.b16 %v2537
        %v2596 = vunpack.c.h.b16 %v2537
        %v2597 = vunpack.c.l.b16 %v2538
        %v2598 = vunpack.c.h.b16 %v2538
        %v2599 = vunpack.c.l.b16 %v2539
        %v2600 = vunpack.c.h.b16 %v2539
        %v2601 = vunpack.c.l.b16 %v2540
        %v2602 = vunpack.c.h.b16 %v2540
        %v2603 = vunpack.c.l.b16 %v2541
        %v2604 = vunpack.c.h.b16 %v2541
        %v2605 = vunpack.c.l.b16 %v2542
        %v2606 = vunpack.c.h.b16 %v2542
        %v2607 = vunpack.c.l.b16 %v2543
        %v2608 = vunpack.c.h.b16 %v2543
        %v2609 = vunpack.c.l.b16 %v2544
        %v2610 = vunpack.c.h.b16 %v2544
        %v2611 = vunpack.c.l.b16 %v2545
        %v2612 = vunpack.c.h.b16 %v2545
        %v2613 = vunpack.c.l.b16 %v2546
        %v2614 = vunpack.c.h.b16 %v2546
        %v2615 = vunpack.c.l.b16 %v2547
        %v2616 = vunpack.c.h.b16 %v2547
        %v2617 = vunpack.c.l.b16 %v2548
        %v2618 = vunpack.c.h.b16 %v2548
        %v2619 = vunpack.c.l.b16 %v2549
        %v2620 = vunpack.c.h.b16 %v2549
        %v2621 = vunpack.c.l.b16 %v2550
        %v2622 = vunpack.c.h.b16 %v2550
        %v2623 = vpack.c.b16 %v2579, %v2575
        %v2624 = vpack.c.b16 %v2580, %v2576
        %v2625 = vpack.c.b16 %v2581, %v2577
        %v2626 = vpack.c.b16 %v2582, %v2578
        %v2627 = vpack.c.b16 %v2587, %v2583
        %v2628 = vpack.c.b16 %v2588, %v2584
        %v2629 = vpack.c.b16 %v2589, %v2585
        %v2630 = vpack.c.b16 %v2590, %v2586
        %v2631 = vpack.c.b16 %v2595, %v2591
        %v2632 = vpack.c.b16 %v2596, %v2592
        %v2633 = vpack.c.b16 %v2597, %v2593
        %v2634 = vpack.c.b16 %v2598, %v2594
        %v2635 = vpack.c.b16 %v2603, %v2599
        %v2636 = vpack.c.b16 %v2604, %v2600
        %v2637 = vpack.c.b16 %v2605, %v2601
        %v2638 = vpack.c.b16 %v2606, %v2602
        %v2639 = vpack.c.b16 %v2611, %v2607
        %v2640 = vpack.c.b16 %v2612, %v2608
        %v2641 = vpack.c.b16 %v2613, %v2609
        %v2642 = vpack.c.b16 %v2614, %v2610
        %v2643 = vpack.c.b16 %v2619, %v2615
        %v2644 = vpack.c.b16 %v2620, %v2616
        %v2645 = vpack.c.b16 %v2621, %v2617
        %v2646 = vpack.c.b16 %v2622, %v2618
        %2671 = vmatprep.subr.bf16.mxu0 0
        %2672 = vmatpush1.bf16.msra.mxu0 0
        %2673 = vmatprep.subr.bf16.mxu0 0
        %2674 = vmatpush1.bf16.msra.mxu0 0
        %2675 = vmatprep.subr.bf16.mxu0 %v2644
        %2676 = vmatpush1.bf16.msra.mxu0 %v2643
        %2677 = vmatprep.subr.bf16.mxu0 %v2640
        %2678 = vmatpush1.bf16.msra.mxu0 %v2639
        %2679 = vmatprep.subr.bf16.mxu0 %v2636
        %2680 = vmatpush1.bf16.msra.mxu0 %v2635
        %2681 = vmatprep.subr.bf16.mxu0 %v2632
        %2682 = vmatpush1.bf16.msra.mxu0 %v2631
        %2683 = vmatprep.subr.bf16.mxu0 %v2628
        %2684 = vmatpush1.bf16.msra.mxu0 %v2627
        %2685 = vmatprep.subr.bf16.mxu0 %v2624
        %2686 = vmatpush1.bf16.msra.mxu0 %v2623
        %2687 = vmatprep.subr.bf16.mxu0 0
        %2688 = vmatpush2.bf16.msra.mxu0 0
        %2689 = vmatprep.subr.bf16.mxu0 0
        %2690 = vmatpush2.bf16.msra.mxu0 0
        %2691 = vmatprep.subr.bf16.mxu0 0
        %2692 = vmatpush2.bf16.msra.mxu0 0
        %2693 = vmatprep.subr.bf16.mxu0 0
        %2694 = vmatpush2.bf16.msra.mxu0 0
        %2695 = vmatprep.subr.bf16.mxu0 0
        %2696 = vmatpush2.bf16.msra.mxu0 0
        %2697 = vmatprep.subr.bf16.mxu0 0
        %2698 = vmatpush2.bf16.msra.mxu0 0
        %2699 = vmatprep.subr.bf16.mxu0 0
        %2700 = vmatpush2.bf16.msra.mxu0 0
        %2701 = vmatprep.subr.bf16.mxu0 0
        %2702 = vmatpush2.bf16.msra.mxu0 0
        %2703 = vmatprep.mubr.bf16.mxu0 0
        %2704 = vmatmul.mubr.bf16.gmra.mxu0 %v2399
        %v2705 = vpop.f32.mrf.mxu0
        %v2706 = vadd.f32 0.0, %v2705
        %v2707 = vpop.f32.mrf.mxu0
        %v2708 = vadd.f32 0.0, %v2707
        %v2709 = vpop.f32.mrf.mxu0
        %v2710 = vadd.f32 0.0, %v2709
        %v2711 = vpop.f32.mrf.mxu0
        %v2712 = vadd.f32 0.0, %v2711
        %2713 = vmatprep.mubr.bf16.mxu0 0
        %2714 = vmatmul.mubr.bf16.gmra.mxu0 %v2402
        %v2715 = vpop.f32.mrf.mxu0
        %v2716 = vadd.f32 0.0, %v2715
        %v2717 = vpop.f32.mrf.mxu0
        %v2718 = vadd.f32 0.0, %v2717
        %v2719 = vpop.f32.mrf.mxu0
        %v2720 = vadd.f32 0.0, %v2719
        %v2721 = vpop.f32.mrf.mxu0
        %v2722 = vadd.f32 0.0, %v2721
        %2723 = vdwg.mxu0
        %2724 = vmatprep.subr.bf16.mxu0 0
        %2725 = vmatpush1.bf16.msra.mxu0 0
        %2726 = vmatprep.subr.bf16.mxu0 0
        %2727 = vmatpush1.bf16.msra.mxu0 0
        %2728 = vmatprep.subr.bf16.mxu0 %v2646
        %2729 = vmatpush1.bf16.msra.mxu0 %v2645
        %2730 = vmatprep.subr.bf16.mxu0 %v2642
        %2731 = vmatpush1.bf16.msra.mxu0 %v2641
        %2732 = vmatprep.subr.bf16.mxu0 %v2638
        %2733 = vmatpush1.bf16.msra.mxu0 %v2637
        %2734 = vmatprep.subr.bf16.mxu0 %v2634
        %2735 = vmatpush1.bf16.msra.mxu0 %v2633
        %2736 = vmatprep.subr.bf16.mxu0 %v2630
        %2737 = vmatpush1.bf16.msra.mxu0 %v2629
        %2738 = vmatprep.subr.bf16.mxu0 %v2626
        %2739 = vmatpush1.bf16.msra.mxu0 %v2625
        %2740 = vmatprep.subr.bf16.mxu0 0
        %2741 = vmatpush2.bf16.msra.mxu0 0
        %2742 = vmatprep.subr.bf16.mxu0 0
        %2743 = vmatpush2.bf16.msra.mxu0 0
        %2744 = vmatprep.subr.bf16.mxu0 0
        %2745 = vmatpush2.bf16.msra.mxu0 0
        %2746 = vmatprep.subr.bf16.mxu0 0
        %2747 = vmatpush2.bf16.msra.mxu0 0
        %2748 = vmatprep.subr.bf16.mxu0 0
        %2749 = vmatpush2.bf16.msra.mxu0 0
        %2750 = vmatprep.subr.bf16.mxu0 0
        %2751 = vmatpush2.bf16.msra.mxu0 0
        %2752 = vmatprep.subr.bf16.mxu0 0
        %2753 = vmatpush2.bf16.msra.mxu0 0
        %2754 = vmatprep.subr.bf16.mxu0 0
        %2755 = vmatpush2.bf16.msra.mxu0 0
        %2756 = vmatprep.mubr.bf16.mxu0 0
        %2757 = vmatmul.mubr.bf16.gmra.mxu0 %v2399
        %v2758 = vpop.f32.mrf.mxu0
        %v2759 = vadd.f32 0.0, %v2758
        %v2760 = vpop.f32.mrf.mxu0
        %v2761 = vadd.f32 0.0, %v2760
        %v2762 = vpop.f32.mrf.mxu0
        %v2763 = vadd.f32 0.0, %v2762
        %v2764 = vpop.f32.mrf.mxu0
        %v2765 = vadd.f32 0.0, %v2764
        %2766 = vmatprep.mubr.bf16.mxu0 0
        %2767 = vmatmul.mubr.bf16.gmra.mxu0 %v2402
        %v2768 = vpop.f32.mrf.mxu0
        %v2769 = vadd.f32 0.0, %v2768
        %v2770 = vpop.f32.mrf.mxu0
        %v2771 = vadd.f32 0.0, %v2770
        %v2772 = vpop.f32.mrf.mxu0
        %v2773 = vadd.f32 0.0, %v2772
        %v2774 = vpop.f32.mrf.mxu0
        %v2775 = vadd.f32 0.0, %v2774
        %2776 = vdwg.mxu0
        %v2777 = vadd.f32 %v2215, %v2706
        %v2778 = vadd.f32 %v2216, %v2708
        %v2779 = vadd.f32 %v2217, %v2759
        %v2780 = vadd.f32 %v2218, %v2761
        %v2781 = vadd.f32 %v2219, %v2710
        %v2782 = vadd.f32 %v2220, %v2712
        %v2783 = vadd.f32 %v2221, %v2763
        %v2784 = vadd.f32 %v2222, %v2765
        %v2785 = vadd.f32 %v2223, %v2716
        %v2786 = vadd.f32 %v2224, %v2718
        %v2787 = vadd.f32 %v2225, %v2769
        %v2788 = vadd.f32 %v2226, %v2771
        %v2789 = vadd.f32 %v2227, %v2720
        %v2790 = vadd.f32 %v2228, %v2722
        %v2791 = vadd.f32 %v2229, %v2773
        %v2792 = vadd.f32 %v2230, %v2775
        %v2793 = vld [vmem:[%s633] sm:$0xc]
        %s2794 = scalar_lea.vmem [#allocation4], 768
        %v2795 = vld [vmem:[%s2794] sm:$0xff]
        %v2796 = vld [vmem:[%s2794 + $0x8] sm:$0xff]
        %v2797 = vld [vmem:[%s2794 + $0x10] sm:$0xff]
        %v2798 = vld [vmem:[%s2794 + $0x18] sm:$0xff]
        %v2799 = vld [vmem:[%s2794 + $0x20] sm:$0xff]
        %v2800 = vld [vmem:[%s2794 + $0x28] sm:$0xff]
        %v2801 = vld [vmem:[%s2794 + $0x30] sm:$0xff]
        %v2802 = vld [vmem:[%s2794 + $0x38] sm:$0xff]
        %v2803 = vld [vmem:[%s2794 + $0x40] sm:$0xff]
        %v2804 = vld [vmem:[%s2794 + $0x48] sm:$0xff]
        %v2805 = vld [vmem:[%s2794 + $0x50] sm:$0xff]
        %v2806 = vld [vmem:[%s2794 + $0x58] sm:$0xff]
        %v2807 = vld [vmem:[%s2794 + $0x60] sm:$0xff]
        %v2808 = vld [vmem:[%s2794 + $0x68] sm:$0xff]
        %v2809 = vld [vmem:[%s2794 + $0x70] sm:$0xff]
        %v2810 = vld [vmem:[%s2794 + $0x78] sm:$0xff]
        %v2811 = vld [vmem:[%s2794 + $0x80] sm:$0xff]
        %v2812 = vld [vmem:[%s2794 + $0x88] sm:$0xff]
        %v2813 = vld [vmem:[%s2794 + $0x90] sm:$0xff]
        %v2814 = vld [vmem:[%s2794 + $0x98] sm:$0xff]
        %v2815 = vld [vmem:[%s2794 + $0xa0] sm:$0xff]
        %v2816 = vld [vmem:[%s2794 + $0xa8] sm:$0xff]
        %v2817 = vld [vmem:[%s2794 + $0xb0] sm:$0xff]
        %v2818 = vld [vmem:[%s2794 + $0xb8] sm:$0xff]
        %v2820 = vunpack.c.l.b16 %v2793
        %v2821 = vpack.c.b16 %v718, %v2820
        %vm2822 = vcmask 1045504
        %v2823 = vrot.slane %v2821, 2
        %v2824 = vrot.slane %v2259, 2
        %v2825 = vsel %vm2822, %v2823, %v2824
        %v2850 = vunpack.c.l.b16 %v2795
        %v2851 = vunpack.c.h.b16 %v2795
        %v2852 = vunpack.c.l.b16 %v2796
        %v2853 = vunpack.c.h.b16 %v2796
        %v2854 = vunpack.c.l.b16 %v2797
        %v2855 = vunpack.c.h.b16 %v2797
        %v2856 = vunpack.c.l.b16 %v2798
        %v2857 = vunpack.c.h.b16 %v2798
        %v2858 = vunpack.c.l.b16 %v2799
        %v2859 = vunpack.c.h.b16 %v2799
        %v2860 = vunpack.c.l.b16 %v2800
        %v2861 = vunpack.c.h.b16 %v2800
        %v2862 = vunpack.c.l.b16 %v2801
        %v2863 = vunpack.c.h.b16 %v2801
        %v2864 = vunpack.c.l.b16 %v2802
        %v2865 = vunpack.c.h.b16 %v2802
        %v2866 = vunpack.c.l.b16 %v2803
        %v2867 = vunpack.c.h.b16 %v2803
        %v2868 = vunpack.c.l.b16 %v2804
        %v2869 = vunpack.c.h.b16 %v2804
        %v2870 = vunpack.c.l.b16 %v2805
        %v2871 = vunpack.c.h.b16 %v2805
        %v2872 = vunpack.c.l.b16 %v2806
        %v2873 = vunpack.c.h.b16 %v2806
        %v2874 = vunpack.c.l.b16 %v2807
        %v2875 = vunpack.c.h.b16 %v2807
        %v2876 = vunpack.c.l.b16 %v2808
        %v2877 = vunpack.c.h.b16 %v2808
        %v2878 = vunpack.c.l.b16 %v2809
        %v2879 = vunpack.c.h.b16 %v2809
        %v2880 = vunpack.c.l.b16 %v2810
        %v2881 = vunpack.c.h.b16 %v2810
        %v2882 = vunpack.c.l.b16 %v2811
        %v2883 = vunpack.c.h.b16 %v2811
        %v2884 = vunpack.c.l.b16 %v2812
        %v2885 = vunpack.c.h.b16 %v2812
        %v2886 = vunpack.c.l.b16 %v2813
        %v2887 = vunpack.c.h.b16 %v2813
        %v2888 = vunpack.c.l.b16 %v2814
        %v2889 = vunpack.c.h.b16 %v2814
        %v2890 = vunpack.c.l.b16 %v2815
        %v2891 = vunpack.c.h.b16 %v2815
        %v2892 = vunpack.c.l.b16 %v2816
        %v2893 = vunpack.c.h.b16 %v2816
        %v2894 = vunpack.c.l.b16 %v2817
        %v2895 = vunpack.c.h.b16 %v2817
        %v2896 = vunpack.c.l.b16 %v2818
        %v2897 = vunpack.c.h.b16 %v2818
        %v2898 = vpack.c.b16 %v2854, %v2850
        %v2899 = vpack.c.b16 %v2855, %v2851
        %v2900 = vpack.c.b16 %v2856, %v2852
        %v2901 = vpack.c.b16 %v2857, %v2853
        %v2902 = vpack.c.b16 %v2862, %v2858
        %v2903 = vpack.c.b16 %v2863, %v2859
        %v2904 = vpack.c.b16 %v2864, %v2860
        %v2905 = vpack.c.b16 %v2865, %v2861
        %v2906 = vpack.c.b16 %v2870, %v2866
        %v2907 = vpack.c.b16 %v2871, %v2867
        %v2908 = vpack.c.b16 %v2872, %v2868
        %v2909 = vpack.c.b16 %v2873, %v2869
        %v2910 = vpack.c.b16 %v2878, %v2874
        %v2911 = vpack.c.b16 %v2879, %v2875
        %v2912 = vpack.c.b16 %v2880, %v2876
        %v2913 = vpack.c.b16 %v2881, %v2877
        %v2914 = vpack.c.b16 %v2886, %v2882
        %v2915 = vpack.c.b16 %v2887, %v2883
        %v2916 = vpack.c.b16 %v2888, %v2884
        %v2917 = vpack.c.b16 %v2889, %v2885
        %v2918 = vpack.c.b16 %v2894, %v2890
        %v2919 = vpack.c.b16 %v2895, %v2891
        %v2920 = vpack.c.b16 %v2896, %v2892
        %v2921 = vpack.c.b16 %v2897, %v2893
        %v2947 = vsel %vm859, %v2825, 0
        %v2950 = vsel %vm859, %v2824, 0
        %2952 = vmatprep.subr.bf16.mxu0 0
        %2953 = vmatpush1.bf16.msra.mxu0 0
        %2954 = vmatprep.subr.bf16.mxu0 0
        %2955 = vmatpush1.bf16.msra.mxu0 0
        %2956 = vmatprep.subr.bf16.mxu0 %v2919
        %2957 = vmatpush1.bf16.msra.mxu0 %v2918
        %2958 = vmatprep.subr.bf16.mxu0 %v2915
        %2959 = vmatpush1.bf16.msra.mxu0 %v2914
        %2960 = vmatprep.subr.bf16.mxu0 %v2911
        %2961 = vmatpush1.bf16.msra.mxu0 %v2910
        %2962 = vmatprep.subr.bf16.mxu0 %v2907
        %2963 = vmatpush1.bf16.msra.mxu0 %v2906
        %2964 = vmatprep.subr.bf16.mxu0 %v2903
        %2965 = vmatpush1.bf16.msra.mxu0 %v2902
        %2966 = vmatprep.subr.bf16.mxu0 %v2899
        %2967 = vmatpush1.bf16.msra.mxu0 %v2898
        %2968 = vmatprep.subr.bf16.mxu0 0
        %2969 = vmatpush2.bf16.msra.mxu0 0
        %2970 = vmatprep.subr.bf16.mxu0 0
        %2971 = vmatpush2.bf16.msra.mxu0 0
        %2972 = vmatprep.subr.bf16.mxu0 0
        %2973 = vmatpush2.bf16.msra.mxu0 0
        %2974 = vmatprep.subr.bf16.mxu0 0
        %2975 = vmatpush2.bf16.msra.mxu0 0
        %2976 = vmatprep.subr.bf16.mxu0 0
        %2977 = vmatpush2.bf16.msra.mxu0 0
        %2978 = vmatprep.subr.bf16.mxu0 0
        %2979 = vmatpush2.bf16.msra.mxu0 0
        %2980 = vmatprep.subr.bf16.mxu0 0
        %2981 = vmatpush2.bf16.msra.mxu0 0
        %2982 = vmatprep.subr.bf16.mxu0 0
        %2983 = vmatpush2.bf16.msra.mxu0 0
        %2984 = vmatprep.mubr.bf16.mxu0 0
        %2985 = vmatmul.mubr.bf16.gmra.mxu0 %v2947
        %v2986 = vpop.f32.mrf.mxu0
        %v2987 = vadd.f32 0.0, %v2986
        %v2988 = vpop.f32.mrf.mxu0
        %v2989 = vadd.f32 0.0, %v2988
        %v2990 = vpop.f32.mrf.mxu0
        %v2991 = vadd.f32 0.0, %v2990
        %v2992 = vpop.f32.mrf.mxu0
        %v2993 = vadd.f32 0.0, %v2992
        %2994 = vmatprep.mubr.bf16.mxu0 0
        %2995 = vmatmul.mubr.bf16.gmra.mxu0 %v2950
        %v2996 = vpop.f32.mrf.mxu0
        %v2997 = vadd.f32 0.0, %v2996
        %v2998 = vpop.f32.mrf.mxu0
        %v2999 = vadd.f32 0.0, %v2998
        %v3000 = vpop.f32.mrf.mxu0
        %v3001 = vadd.f32 0.0, %v3000
        %v3002 = vpop.f32.mrf.mxu0
        %v3003 = vadd.f32 0.0, %v3002
        %3004 = vdwg.mxu0
        %3005 = vmatprep.subr.bf16.mxu0 0
        %3006 = vmatpush1.bf16.msra.mxu0 0
        %3007 = vmatprep.subr.bf16.mxu0 0
        %3008 = vmatpush1.bf16.msra.mxu0 0
        %3009 = vmatprep.subr.bf16.mxu0 %v2921
        %3010 = vmatpush1.bf16.msra.mxu0 %v2920
        %3011 = vmatprep.subr.bf16.mxu0 %v2917
        %3012 = vmatpush1.bf16.msra.mxu0 %v2916
        %3013 = vmatprep.subr.bf16.mxu0 %v2913
        %3014 = vmatpush1.bf16.msra.mxu0 %v2912
        %3015 = vmatprep.subr.bf16.mxu0 %v2909
        %3016 = vmatpush1.bf16.msra.mxu0 %v2908
        %3017 = vmatprep.subr.bf16.mxu0 %v2905
        %3018 = vmatpush1.bf16.msra.mxu0 %v2904
        %3019 = vmatprep.subr.bf16.mxu0 %v2901
        %3020 = vmatpush1.bf16.msra.mxu0 %v2900
        %3021 = vmatprep.subr.bf16.mxu0 0
        %3022 = vmatpush2.bf16.msra.mxu0 0
        %3023 = vmatprep.subr.bf16.mxu0 0
        %3024 = vmatpush2.bf16.msra.mxu0 0
        %3025 = vmatprep.subr.bf16.mxu0 0
        %3026 = vmatpush2.bf16.msra.mxu0 0
        %3027 = vmatprep.subr.bf16.mxu0 0
        %3028 = vmatpush2.bf16.msra.mxu0 0
        %3029 = vmatprep.subr.bf16.mxu0 0
        %3030 = vmatpush2.bf16.msra.mxu0 0
        %3031 = vmatprep.subr.bf16.mxu0 0
        %3032 = vmatpush2.bf16.msra.mxu0 0
        %3033 = vmatprep.subr.bf16.mxu0 0
        %3034 = vmatpush2.bf16.msra.mxu0 0
        %3035 = vmatprep.subr.bf16.mxu0 0
        %3036 = vmatpush2.bf16.msra.mxu0 0
        %3037 = vmatprep.mubr.bf16.mxu0 0
        %3038 = vmatmul.mubr.bf16.gmra.mxu0 %v2947
        %v3039 = vpop.f32.mrf.mxu0
        %v3040 = vadd.f32 0.0, %v3039
        %v3041 = vpop.f32.mrf.mxu0
        %v3042 = vadd.f32 0.0, %v3041
        %v3043 = vpop.f32.mrf.mxu0
        %v3044 = vadd.f32 0.0, %v3043
        %v3045 = vpop.f32.mrf.mxu0
        %v3046 = vadd.f32 0.0, %v3045
        %3047 = vmatprep.mubr.bf16.mxu0 0
        %3048 = vmatmul.mubr.bf16.gmra.mxu0 %v2950
        %v3049 = vpop.f32.mrf.mxu0
        %v3050 = vadd.f32 0.0, %v3049
        %v3051 = vpop.f32.mrf.mxu0
        %v3052 = vadd.f32 0.0, %v3051
        %v3053 = vpop.f32.mrf.mxu0
        %v3054 = vadd.f32 0.0, %v3053
        %v3055 = vpop.f32.mrf.mxu0
        %v3056 = vadd.f32 0.0, %v3055
        %3057 = vdwg.mxu0
        %v3058 = vadd.f32 %v2510, %v2987
        %v3059 = vadd.f32 %v2511, %v2989
        %v3060 = vadd.f32 %v2512, %v3040
        %v3061 = vadd.f32 %v2513, %v3042
        %v3062 = vadd.f32 %v2514, %v2991
        %v3063 = vadd.f32 %v2515, %v2993
        %v3064 = vadd.f32 %v2516, %v3044
        %v3065 = vadd.f32 %v2517, %v3046
        %v3066 = vadd.f32 %v2518, %v2997
        %v3067 = vadd.f32 %v2519, %v2999
        %v3068 = vadd.f32 %v2520, %v3050
        %v3069 = vadd.f32 %v2521, %v3052
        %v3070 = vadd.f32 %v2522, %v3001
        %v3071 = vadd.f32 %v2523, %v3003
        %v3072 = vadd.f32 %v2524, %v3054
        %v3073 = vadd.f32 %v2525, %v3056
        %s3074 = scalar_lea.vmem [#allocation7], 768
        %v3075 = vld [vmem:[%s3074] sm:$0xff]
        %v3076 = vld [vmem:[%s3074 + $0x8] sm:$0xff]
        %v3077 = vld [vmem:[%s3074 + $0x10] sm:$0xff]
        %v3078 = vld [vmem:[%s3074 + $0x18] sm:$0xff]
        %v3079 = vld [vmem:[%s3074 + $0x20] sm:$0xff]
        %v3080 = vld [vmem:[%s3074 + $0x28] sm:$0xff]
        %v3081 = vld [vmem:[%s3074 + $0x30] sm:$0xff]
        %v3082 = vld [vmem:[%s3074 + $0x38] sm:$0xff]
        %v3083 = vld [vmem:[%s3074 + $0x40] sm:$0xff]
        %v3084 = vld [vmem:[%s3074 + $0x48] sm:$0xff]
        %v3085 = vld [vmem:[%s3074 + $0x50] sm:$0xff]
        %v3086 = vld [vmem:[%s3074 + $0x58] sm:$0xff]
        %v3087 = vld [vmem:[%s3074 + $0x60] sm:$0xff]
        %v3088 = vld [vmem:[%s3074 + $0x68] sm:$0xff]
        %v3089 = vld [vmem:[%s3074 + $0x70] sm:$0xff]
        %v3090 = vld [vmem:[%s3074 + $0x78] sm:$0xff]
        %v3091 = vld [vmem:[%s3074 + $0x80] sm:$0xff]
        %v3092 = vld [vmem:[%s3074 + $0x88] sm:$0xff]
        %v3093 = vld [vmem:[%s3074 + $0x90] sm:$0xff]
        %v3094 = vld [vmem:[%s3074 + $0x98] sm:$0xff]
        %v3095 = vld [vmem:[%s3074 + $0xa0] sm:$0xff]
        %v3096 = vld [vmem:[%s3074 + $0xa8] sm:$0xff]
        %v3097 = vld [vmem:[%s3074 + $0xb0] sm:$0xff]
        %v3098 = vld [vmem:[%s3074 + $0xb8] sm:$0xff]
        %v3123 = vunpack.c.l.b16 %v3075
        %v3124 = vunpack.c.h.b16 %v3075
        %v3125 = vunpack.c.l.b16 %v3076
        %v3126 = vunpack.c.h.b16 %v3076
        %v3127 = vunpack.c.l.b16 %v3077
        %v3128 = vunpack.c.h.b16 %v3077
        %v3129 = vunpack.c.l.b16 %v3078
        %v3130 = vunpack.c.h.b16 %v3078
        %v3131 = vunpack.c.l.b16 %v3079
        %v3132 = vunpack.c.h.b16 %v3079
        %v3133 = vunpack.c.l.b16 %v3080
        %v3134 = vunpack.c.h.b16 %v3080
        %v3135 = vunpack.c.l.b16 %v3081
        %v3136 = vunpack.c.h.b16 %v3081
        %v3137 = vunpack.c.l.b16 %v3082
        %v3138 = vunpack.c.h.b16 %v3082
        %v3139 = vunpack.c.l.b16 %v3083
        %v3140 = vunpack.c.h.b16 %v3083
        %v3141 = vunpack.c.l.b16 %v3084
        %v3142 = vunpack.c.h.b16 %v3084
        %v3143 = vunpack.c.l.b16 %v3085
        %v3144 = vunpack.c.h.b16 %v3085
        %v3145 = vunpack.c.l.b16 %v3086
        %v3146 = vunpack.c.h.b16 %v3086
        %v3147 = vunpack.c.l.b16 %v3087
        %v3148 = vunpack.c.h.b16 %v3087
        %v3149 = vunpack.c.l.b16 %v3088
        %v3150 = vunpack.c.h.b16 %v3088
        %v3151 = vunpack.c.l.b16 %v3089
        %v3152 = vunpack.c.h.b16 %v3089
        %v3153 = vunpack.c.l.b16 %v3090
        %v3154 = vunpack.c.h.b16 %v3090
        %v3155 = vunpack.c.l.b16 %v3091
        %v3156 = vunpack.c.h.b16 %v3091
        %v3157 = vunpack.c.l.b16 %v3092
        %v3158 = vunpack.c.h.b16 %v3092
        %v3159 = vunpack.c.l.b16 %v3093
        %v3160 = vunpack.c.h.b16 %v3093
        %v3161 = vunpack.c.l.b16 %v3094
        %v3162 = vunpack.c.h.b16 %v3094
        %v3163 = vunpack.c.l.b16 %v3095
        %v3164 = vunpack.c.h.b16 %v3095
        %v3165 = vunpack.c.l.b16 %v3096
        %v3166 = vunpack.c.h.b16 %v3096
        %v3167 = vunpack.c.l.b16 %v3097
        %v3168 = vunpack.c.h.b16 %v3097
        %v3169 = vunpack.c.l.b16 %v3098
        %v3170 = vunpack.c.h.b16 %v3098
        %v3171 = vpack.c.b16 %v3127, %v3123
        %v3172 = vpack.c.b16 %v3128, %v3124
        %v3173 = vpack.c.b16 %v3129, %v3125
        %v3174 = vpack.c.b16 %v3130, %v3126
        %v3175 = vpack.c.b16 %v3135, %v3131
        %v3176 = vpack.c.b16 %v3136, %v3132
        %v3177 = vpack.c.b16 %v3137, %v3133
        %v3178 = vpack.c.b16 %v3138, %v3134
        %v3179 = vpack.c.b16 %v3143, %v3139
        %v3180 = vpack.c.b16 %v3144, %v3140
        %v3181 = vpack.c.b16 %v3145, %v3141
        %v3182 = vpack.c.b16 %v3146, %v3142
        %v3183 = vpack.c.b16 %v3151, %v3147
        %v3184 = vpack.c.b16 %v3152, %v3148
        %v3185 = vpack.c.b16 %v3153, %v3149
        %v3186 = vpack.c.b16 %v3154, %v3150
        %v3187 = vpack.c.b16 %v3159, %v3155
        %v3188 = vpack.c.b16 %v3160, %v3156
        %v3189 = vpack.c.b16 %v3161, %v3157
        %v3190 = vpack.c.b16 %v3162, %v3158
        %v3191 = vpack.c.b16 %v3167, %v3163
        %v3192 = vpack.c.b16 %v3168, %v3164
        %v3193 = vpack.c.b16 %v3169, %v3165
        %v3194 = vpack.c.b16 %v3170, %v3166
        %3219 = vmatprep.subr.bf16.mxu0 0
        %3220 = vmatpush1.bf16.msra.mxu0 0
        %3221 = vmatprep.subr.bf16.mxu0 0
        %3222 = vmatpush1.bf16.msra.mxu0 0
        %3223 = vmatprep.subr.bf16.mxu0 %v3192
        %3224 = vmatpush1.bf16.msra.mxu0 %v3191
        %3225 = vmatprep.subr.bf16.mxu0 %v3188
        %3226 = vmatpush1.bf16.msra.mxu0 %v3187
        %3227 = vmatprep.subr.bf16.mxu0 %v3184
        %3228 = vmatpush1.bf16.msra.mxu0 %v3183
        %3229 = vmatprep.subr.bf16.mxu0 %v3180
        %3230 = vmatpush1.bf16.msra.mxu0 %v3179
        %3231 = vmatprep.subr.bf16.mxu0 %v3176
        %3232 = vmatpush1.bf16.msra.mxu0 %v3175
        %3233 = vmatprep.subr.bf16.mxu0 %v3172
        %3234 = vmatpush1.bf16.msra.mxu0 %v3171
        %3235 = vmatprep.subr.bf16.mxu0 0
        %3236 = vmatpush2.bf16.msra.mxu0 0
        %3237 = vmatprep.subr.bf16.mxu0 0
        %3238 = vmatpush2.bf16.msra.mxu0 0
        %3239 = vmatprep.subr.bf16.mxu0 0
        %3240 = vmatpush2.bf16.msra.mxu0 0
        %3241 = vmatprep.subr.bf16.mxu0 0
        %3242 = vmatpush2.bf16.msra.mxu0 0
        %3243 = vmatprep.subr.bf16.mxu0 0
        %3244 = vmatpush2.bf16.msra.mxu0 0
        %3245 = vmatprep.subr.bf16.mxu0 0
        %3246 = vmatpush2.bf16.msra.mxu0 0
        %3247 = vmatprep.subr.bf16.mxu0 0
        %3248 = vmatpush2.bf16.msra.mxu0 0
        %3249 = vmatprep.subr.bf16.mxu0 0
        %3250 = vmatpush2.bf16.msra.mxu0 0
        %3251 = vmatprep.mubr.bf16.mxu0 0
        %3252 = vmatmul.mubr.bf16.gmra.mxu0 %v2947
        %v3253 = vpop.f32.mrf.mxu0
        %v3254 = vadd.f32 0.0, %v3253
        %v3255 = vpop.f32.mrf.mxu0
        %v3256 = vadd.f32 0.0, %v3255
        %v3257 = vpop.f32.mrf.mxu0
        %v3258 = vadd.f32 0.0, %v3257
        %v3259 = vpop.f32.mrf.mxu0
        %v3260 = vadd.f32 0.0, %v3259
        %3261 = vmatprep.mubr.bf16.mxu0 0
        %3262 = vmatmul.mubr.bf16.gmra.mxu0 %v2950
        %v3263 = vpop.f32.mrf.mxu0
        %v3264 = vadd.f32 0.0, %v3263
        %v3265 = vpop.f32.mrf.mxu0
        %v3266 = vadd.f32 0.0, %v3265
        %v3267 = vpop.f32.mrf.mxu0
        %v3268 = vadd.f32 0.0, %v3267
        %v3269 = vpop.f32.mrf.mxu0
        %v3270 = vadd.f32 0.0, %v3269
        %3271 = vdwg.mxu0
        %3272 = vmatprep.subr.bf16.mxu0 0
        %3273 = vmatpush1.bf16.msra.mxu0 0
        %3274 = vmatprep.subr.bf16.mxu0 0
        %3275 = vmatpush1.bf16.msra.mxu0 0
        %3276 = vmatprep.subr.bf16.mxu0 %v3194
        %3277 = vmatpush1.bf16.msra.mxu0 %v3193
        %3278 = vmatprep.subr.bf16.mxu0 %v3190
        %3279 = vmatpush1.bf16.msra.mxu0 %v3189
        %3280 = vmatprep.subr.bf16.mxu0 %v3186
        %3281 = vmatpush1.bf16.msra.mxu0 %v3185
        %3282 = vmatprep.subr.bf16.mxu0 %v3182
        %3283 = vmatpush1.bf16.msra.mxu0 %v3181
        %3284 = vmatprep.subr.bf16.mxu0 %v3178
        %3285 = vmatpush1.bf16.msra.mxu0 %v3177
        %3286 = vmatprep.subr.bf16.mxu0 %v3174
        %3287 = vmatpush1.bf16.msra.mxu0 %v3173
        %3288 = vmatprep.subr.bf16.mxu0 0
        %3289 = vmatpush2.bf16.msra.mxu0 0
        %3290 = vmatprep.subr.bf16.mxu0 0
        %3291 = vmatpush2.bf16.msra.mxu0 0
        %3292 = vmatprep.subr.bf16.mxu0 0
        %3293 = vmatpush2.bf16.msra.mxu0 0
        %3294 = vmatprep.subr.bf16.mxu0 0
        %3295 = vmatpush2.bf16.msra.mxu0 0
        %3296 = vmatprep.subr.bf16.mxu0 0
        %3297 = vmatpush2.bf16.msra.mxu0 0
        %3298 = vmatprep.subr.bf16.mxu0 0
        %3299 = vmatpush2.bf16.msra.mxu0 0
        %3300 = vmatprep.subr.bf16.mxu0 0
        %3301 = vmatpush2.bf16.msra.mxu0 0
        %3302 = vmatprep.subr.bf16.mxu0 0
        %3303 = vmatpush2.bf16.msra.mxu0 0
        %3304 = vmatprep.mubr.bf16.mxu0 0
        %3305 = vmatmul.mubr.bf16.gmra.mxu0 %v2947
        %v3306 = vpop.f32.mrf.mxu0
        %v3307 = vadd.f32 0.0, %v3306
        %v3308 = vpop.f32.mrf.mxu0
        %v3309 = vadd.f32 0.0, %v3308
        %v3310 = vpop.f32.mrf.mxu0
        %v3311 = vadd.f32 0.0, %v3310
        %v3312 = vpop.f32.mrf.mxu0
        %v3313 = vadd.f32 0.0, %v3312
        %3314 = vmatprep.mubr.bf16.mxu0 0
        %3315 = vmatmul.mubr.bf16.gmra.mxu0 %v2950
        %v3316 = vpop.f32.mrf.mxu0
        %v3317 = vadd.f32 0.0, %v3316
        %v3318 = vpop.f32.mrf.mxu0
        %v3319 = vadd.f32 0.0, %v3318
        %v3320 = vpop.f32.mrf.mxu0
        %v3321 = vadd.f32 0.0, %v3320
        %v3322 = vpop.f32.mrf.mxu0
        %v3323 = vadd.f32 0.0, %v3322
        %3324 = vdwg.mxu0
        %v3325 = vadd.f32 %v2777, %v3254
        %v3326 = vadd.f32 %v2778, %v3256
        %v3327 = vadd.f32 %v2779, %v3307
        %v3328 = vadd.f32 %v2780, %v3309
        %v3329 = vadd.f32 %v2781, %v3258
        %v3330 = vadd.f32 %v2782, %v3260
        %v3331 = vadd.f32 %v2783, %v3311
        %v3332 = vadd.f32 %v2784, %v3313
        %v3333 = vadd.f32 %v2785, %v3264
        %v3334 = vadd.f32 %v2786, %v3266
        %v3335 = vadd.f32 %v2787, %v3317
        %v3336 = vadd.f32 %v2788, %v3319
        %v3337 = vadd.f32 %v2789, %v3268
        %v3338 = vadd.f32 %v2790, %v3270
        %v3339 = vadd.f32 %v2791, %v3321
        %v3340 = vadd.f32 %v2792, %v3323
        %v3341 = vld [vmem:[%s633 + $0xc] sm:$0xf]
        %s3342 = scalar_lea.vmem [#allocation4], 960
        %v3343 = vld [vmem:[%s3342] sm:$0xff]
        %v3344 = vld [vmem:[%s3342 + $0x8] sm:$0xff]
        %v3345 = vld [vmem:[%s3342 + $0x10] sm:$0xff]
        %v3346 = vld [vmem:[%s3342 + $0x18] sm:$0xff]
        %v3347 = vld [vmem:[%s3342 + $0x20] sm:$0xff]
        %v3348 = vld [vmem:[%s3342 + $0x28] sm:$0xff]
        %v3349 = vld [vmem:[%s3342 + $0x30] sm:$0xff]
        %v3350 = vld [vmem:[%s3342 + $0x38] sm:$0xff]
        %v3351 = vld [vmem:[%s3342 + $0x40] sm:$0xff]
        %v3352 = vld [vmem:[%s3342 + $0x48] sm:$0xff]
        %v3353 = vld [vmem:[%s3342 + $0x50] sm:$0xff]
        %v3354 = vld [vmem:[%s3342 + $0x58] sm:$0xff]
        %v3355 = vld [vmem:[%s3342 + $0x60] sm:$0xff]
        %v3356 = vld [vmem:[%s3342 + $0x68] sm:$0xff]
        %v3357 = vld [vmem:[%s3342 + $0x70] sm:$0xff]
        %v3358 = vld [vmem:[%s3342 + $0x78] sm:$0xff]
        %v3359 = vld [vmem:[%s3342 + $0x80] sm:$0xff]
        %v3360 = vld [vmem:[%s3342 + $0x88] sm:$0xff]
        %v3361 = vld [vmem:[%s3342 + $0x90] sm:$0xff]
        %v3362 = vld [vmem:[%s3342 + $0x98] sm:$0xff]
        %v3363 = vld [vmem:[%s3342 + $0xa0] sm:$0xff]
        %v3364 = vld [vmem:[%s3342 + $0xa8] sm:$0xff]
        %v3365 = vld [vmem:[%s3342 + $0xb0] sm:$0xff]
        %v3366 = vld [vmem:[%s3342 + $0xb8] sm:$0xff]
        %v3368 = vunpack.c.l.b16 %v3341
        %v3369 = vpack.c.b16 %v3368, %v719
        %vm3370 = vsmask.f32 5376
        %v3372 = vshrl.u32 %v2821, 16
        %v3374 = vrot.slane %v3372, 2
        %v3375 = vshll.u32 %v2821, 16
        %v3377 = vrot.slane %v3375, 3
        %v3378 = vor.u32 %v3374, %v3377
        %v3380 = vshrl.u32 %v3369, 16
        %v3382 = vrot.slane %v3380, 2
        %v3383 = vshll.u32 %v3369, 16
        %v3385 = vrot.slane %v3383, 3
        %v3386 = vor.u32 %v3382, %v3385
        %v3387 = vsel %vm3370, %v3378, %v3386
        %v3412 = vunpack.c.l.b16 %v3343
        %v3413 = vunpack.c.h.b16 %v3343
        %v3414 = vunpack.c.l.b16 %v3344
        %v3415 = vunpack.c.h.b16 %v3344
        %v3416 = vunpack.c.l.b16 %v3345
        %v3417 = vunpack.c.h.b16 %v3345
        %v3418 = vunpack.c.l.b16 %v3346
        %v3419 = vunpack.c.h.b16 %v3346
        %v3420 = vunpack.c.l.b16 %v3347
        %v3421 = vunpack.c.h.b16 %v3347
        %v3422 = vunpack.c.l.b16 %v3348
        %v3423 = vunpack.c.h.b16 %v3348
        %v3424 = vunpack.c.l.b16 %v3349
        %v3425 = vunpack.c.h.b16 %v3349
        %v3426 = vunpack.c.l.b16 %v3350
        %v3427 = vunpack.c.h.b16 %v3350
        %v3428 = vunpack.c.l.b16 %v3351
        %v3429 = vunpack.c.h.b16 %v3351
        %v3430 = vunpack.c.l.b16 %v3352
        %v3431 = vunpack.c.h.b16 %v3352
        %v3432 = vunpack.c.l.b16 %v3353
        %v3433 = vunpack.c.h.b16 %v3353
        %v3434 = vunpack.c.l.b16 %v3354
        %v3435 = vunpack.c.h.b16 %v3354
        %v3436 = vunpack.c.l.b16 %v3355
        %v3437 = vunpack.c.h.b16 %v3355
        %v3438 = vunpack.c.l.b16 %v3356
        %v3439 = vunpack.c.h.b16 %v3356
        %v3440 = vunpack.c.l.b16 %v3357
        %v3441 = vunpack.c.h.b16 %v3357
        %v3442 = vunpack.c.l.b16 %v3358
        %v3443 = vunpack.c.h.b16 %v3358
        %v3444 = vunpack.c.l.b16 %v3359
        %v3445 = vunpack.c.h.b16 %v3359
        %v3446 = vunpack.c.l.b16 %v3360
        %v3447 = vunpack.c.h.b16 %v3360
        %v3448 = vunpack.c.l.b16 %v3361
        %v3449 = vunpack.c.h.b16 %v3361
        %v3450 = vunpack.c.l.b16 %v3362
        %v3451 = vunpack.c.h.b16 %v3362
        %v3452 = vunpack.c.l.b16 %v3363
        %v3453 = vunpack.c.h.b16 %v3363
        %v3454 = vunpack.c.l.b16 %v3364
        %v3455 = vunpack.c.h.b16 %v3364
        %v3456 = vunpack.c.l.b16 %v3365
        %v3457 = vunpack.c.h.b16 %v3365
        %v3458 = vunpack.c.l.b16 %v3366
        %v3459 = vunpack.c.h.b16 %v3366
        %v3460 = vpack.c.b16 %v3416, %v3412
        %v3461 = vpack.c.b16 %v3417, %v3413
        %v3462 = vpack.c.b16 %v3418, %v3414
        %v3463 = vpack.c.b16 %v3419, %v3415
        %v3464 = vpack.c.b16 %v3424, %v3420
        %v3465 = vpack.c.b16 %v3425, %v3421
        %v3466 = vpack.c.b16 %v3426, %v3422
        %v3467 = vpack.c.b16 %v3427, %v3423
        %v3468 = vpack.c.b16 %v3432, %v3428
        %v3469 = vpack.c.b16 %v3433, %v3429
        %v3470 = vpack.c.b16 %v3434, %v3430
        %v3471 = vpack.c.b16 %v3435, %v3431
        %v3472 = vpack.c.b16 %v3440, %v3436
        %v3473 = vpack.c.b16 %v3441, %v3437
        %v3474 = vpack.c.b16 %v3442, %v3438
        %v3475 = vpack.c.b16 %v3443, %v3439
        %v3476 = vpack.c.b16 %v3448, %v3444
        %v3477 = vpack.c.b16 %v3449, %v3445
        %v3478 = vpack.c.b16 %v3450, %v3446
        %v3479 = vpack.c.b16 %v3451, %v3447
        %v3480 = vpack.c.b16 %v3456, %v3452
        %v3481 = vpack.c.b16 %v3457, %v3453
        %v3482 = vpack.c.b16 %v3458, %v3454
        %v3483 = vpack.c.b16 %v3459, %v3455
        %v3509 = vsel %vm859, %v3387, 0
        %v3512 = vsel %vm859, %v3386, 0
        %3514 = vmatprep.subr.bf16.mxu0 0
        %3515 = vmatpush1.bf16.msra.mxu0 0
        %3516 = vmatprep.subr.bf16.mxu0 0
        %3517 = vmatpush1.bf16.msra.mxu0 0
        %3518 = vmatprep.subr.bf16.mxu0 %v3481
        %3519 = vmatpush1.bf16.msra.mxu0 %v3480
        %3520 = vmatprep.subr.bf16.mxu0 %v3477
        %3521 = vmatpush1.bf16.msra.mxu0 %v3476
        %3522 = vmatprep.subr.bf16.mxu0 %v3473
        %3523 = vmatpush1.bf16.msra.mxu0 %v3472
        %3524 = vmatprep.subr.bf16.mxu0 %v3469
        %3525 = vmatpush1.bf16.msra.mxu0 %v3468
        %3526 = vmatprep.subr.bf16.mxu0 %v3465
        %3527 = vmatpush1.bf16.msra.mxu0 %v3464
        %3528 = vmatprep.subr.bf16.mxu0 %v3461
        %3529 = vmatpush1.bf16.msra.mxu0 %v3460
        %3530 = vmatprep.subr.bf16.mxu0 0
        %3531 = vmatpush2.bf16.msra.mxu0 0
        %3532 = vmatprep.subr.bf16.mxu0 0
        %3533 = vmatpush2.bf16.msra.mxu0 0
        %3534 = vmatprep.subr.bf16.mxu0 0
        %3535 = vmatpush2.bf16.msra.mxu0 0
        %3536 = vmatprep.subr.bf16.mxu0 0
        %3537 = vmatpush2.bf16.msra.mxu0 0
        %3538 = vmatprep.subr.bf16.mxu0 0
        %3539 = vmatpush2.bf16.msra.mxu0 0
        %3540 = vmatprep.subr.bf16.mxu0 0
        %3541 = vmatpush2.bf16.msra.mxu0 0
        %3542 = vmatprep.subr.bf16.mxu0 0
        %3543 = vmatpush2.bf16.msra.mxu0 0
        %3544 = vmatprep.subr.bf16.mxu0 0
        %3545 = vmatpush2.bf16.msra.mxu0 0
        %3546 = vmatprep.mubr.bf16.mxu0 0
        %3547 = vmatmul.mubr.bf16.gmra.mxu0 %v3509
        %v3548 = vpop.f32.mrf.mxu0
        %v3549 = vadd.f32 0.0, %v3548
        %v3550 = vpop.f32.mrf.mxu0
        %v3551 = vadd.f32 0.0, %v3550
        %v3552 = vpop.f32.mrf.mxu0
        %v3553 = vadd.f32 0.0, %v3552
        %v3554 = vpop.f32.mrf.mxu0
        %v3555 = vadd.f32 0.0, %v3554
        %3556 = vmatprep.mubr.bf16.mxu0 0
        %3557 = vmatmul.mubr.bf16.gmra.mxu0 %v3512
        %v3558 = vpop.f32.mrf.mxu0
        %v3559 = vadd.f32 0.0, %v3558
        %v3560 = vpop.f32.mrf.mxu0
        %v3561 = vadd.f32 0.0, %v3560
        %v3562 = vpop.f32.mrf.mxu0
        %v3563 = vadd.f32 0.0, %v3562
        %v3564 = vpop.f32.mrf.mxu0
        %v3565 = vadd.f32 0.0, %v3564
        %3566 = vdwg.mxu0
        %3567 = vmatprep.subr.bf16.mxu0 0
        %3568 = vmatpush1.bf16.msra.mxu0 0
        %3569 = vmatprep.subr.bf16.mxu0 0
        %3570 = vmatpush1.bf16.msra.mxu0 0
        %3571 = vmatprep.subr.bf16.mxu0 %v3483
        %3572 = vmatpush1.bf16.msra.mxu0 %v3482
        %3573 = vmatprep.subr.bf16.mxu0 %v3479
        %3574 = vmatpush1.bf16.msra.mxu0 %v3478
        %3575 = vmatprep.subr.bf16.mxu0 %v3475
        %3576 = vmatpush1.bf16.msra.mxu0 %v3474
        %3577 = vmatprep.subr.bf16.mxu0 %v3471
        %3578 = vmatpush1.bf16.msra.mxu0 %v3470
        %3579 = vmatprep.subr.bf16.mxu0 %v3467
        %3580 = vmatpush1.bf16.msra.mxu0 %v3466
        %3581 = vmatprep.subr.bf16.mxu0 %v3463
        %3582 = vmatpush1.bf16.msra.mxu0 %v3462
        %3583 = vmatprep.subr.bf16.mxu0 0
        %3584 = vmatpush2.bf16.msra.mxu0 0
        %3585 = vmatprep.subr.bf16.mxu0 0
        %3586 = vmatpush2.bf16.msra.mxu0 0
        %3587 = vmatprep.subr.bf16.mxu0 0
        %3588 = vmatpush2.bf16.msra.mxu0 0
        %3589 = vmatprep.subr.bf16.mxu0 0
        %3590 = vmatpush2.bf16.msra.mxu0 0
        %3591 = vmatprep.subr.bf16.mxu0 0
        %3592 = vmatpush2.bf16.msra.mxu0 0
        %3593 = vmatprep.subr.bf16.mxu0 0
        %3594 = vmatpush2.bf16.msra.mxu0 0
        %3595 = vmatprep.subr.bf16.mxu0 0
        %3596 = vmatpush2.bf16.msra.mxu0 0
        %3597 = vmatprep.subr.bf16.mxu0 0
        %3598 = vmatpush2.bf16.msra.mxu0 0
        %3599 = vmatprep.mubr.bf16.mxu0 0
        %3600 = vmatmul.mubr.bf16.gmra.mxu0 %v3509
        %v3601 = vpop.f32.mrf.mxu0
        %v3602 = vadd.f32 0.0, %v3601
        %v3603 = vpop.f32.mrf.mxu0
        %v3604 = vadd.f32 0.0, %v3603
        %v3605 = vpop.f32.mrf.mxu0
        %v3606 = vadd.f32 0.0, %v3605
        %v3607 = vpop.f32.mrf.mxu0
        %v3608 = vadd.f32 0.0, %v3607
        %3609 = vmatprep.mubr.bf16.mxu0 0
        %3610 = vmatmul.mubr.bf16.gmra.mxu0 %v3512
        %v3611 = vpop.f32.mrf.mxu0
        %v3612 = vadd.f32 0.0, %v3611
        %v3613 = vpop.f32.mrf.mxu0
        %v3614 = vadd.f32 0.0, %v3613
        %v3615 = vpop.f32.mrf.mxu0
        %v3616 = vadd.f32 0.0, %v3615
        %v3617 = vpop.f32.mrf.mxu0
        %v3618 = vadd.f32 0.0, %v3617
        %3619 = vdwg.mxu0
        %v3620 = vadd.f32 %v3058, %v3549
        %v3621 = vadd.f32 %v3059, %v3551
        %v3622 = vadd.f32 %v3060, %v3602
        %v3623 = vadd.f32 %v3061, %v3604
        %v3624 = vadd.f32 %v3062, %v3553
        %v3625 = vadd.f32 %v3063, %v3555
        %v3626 = vadd.f32 %v3064, %v3606
        %v3627 = vadd.f32 %v3065, %v3608
        %v3628 = vadd.f32 %v3066, %v3559
        %v3629 = vadd.f32 %v3067, %v3561
        %v3630 = vadd.f32 %v3068, %v3612
        %v3631 = vadd.f32 %v3069, %v3614
        %v3632 = vadd.f32 %v3070, %v3563
        %v3633 = vadd.f32 %v3071, %v3565
        %v3634 = vadd.f32 %v3072, %v3616
        %v3635 = vadd.f32 %v3073, %v3618
        %s3636 = scalar_lea.vmem [#allocation7], 960
        %v3637 = vld [vmem:[%s3636] sm:$0xff]
        %v3638 = vld [vmem:[%s3636 + $0x8] sm:$0xff]
        %v3639 = vld [vmem:[%s3636 + $0x10] sm:$0xff]
        %v3640 = vld [vmem:[%s3636 + $0x18] sm:$0xff]
        %v3641 = vld [vmem:[%s3636 + $0x20] sm:$0xff]
        %v3642 = vld [vmem:[%s3636 + $0x28] sm:$0xff]
        %v3643 = vld [vmem:[%s3636 + $0x30] sm:$0xff]
        %v3644 = vld [vmem:[%s3636 + $0x38] sm:$0xff]
        %v3645 = vld [vmem:[%s3636 + $0x40] sm:$0xff]
        %v3646 = vld [vmem:[%s3636 + $0x48] sm:$0xff]
        %v3647 = vld [vmem:[%s3636 + $0x50] sm:$0xff]
        %v3648 = vld [vmem:[%s3636 + $0x58] sm:$0xff]
        %v3649 = vld [vmem:[%s3636 + $0x60] sm:$0xff]
        %v3650 = vld [vmem:[%s3636 + $0x68] sm:$0xff]
        %v3651 = vld [vmem:[%s3636 + $0x70] sm:$0xff]
        %v3652 = vld [vmem:[%s3636 + $0x78] sm:$0xff]
        %v3653 = vld [vmem:[%s3636 + $0x80] sm:$0xff]
        %v3654 = vld [vmem:[%s3636 + $0x88] sm:$0xff]
        %v3655 = vld [vmem:[%s3636 + $0x90] sm:$0xff]
        %v3656 = vld [vmem:[%s3636 + $0x98] sm:$0xff]
        %v3657 = vld [vmem:[%s3636 + $0xa0] sm:$0xff]
        %v3658 = vld [vmem:[%s3636 + $0xa8] sm:$0xff]
        %v3659 = vld [vmem:[%s3636 + $0xb0] sm:$0xff]
        %v3660 = vld [vmem:[%s3636 + $0xb8] sm:$0xff]
        %v3685 = vunpack.c.l.b16 %v3637
        %v3686 = vunpack.c.h.b16 %v3637
        %v3687 = vunpack.c.l.b16 %v3638
        %v3688 = vunpack.c.h.b16 %v3638
        %v3689 = vunpack.c.l.b16 %v3639
        %v3690 = vunpack.c.h.b16 %v3639
        %v3691 = vunpack.c.l.b16 %v3640
        %v3692 = vunpack.c.h.b16 %v3640
        %v3693 = vunpack.c.l.b16 %v3641
        %v3694 = vunpack.c.h.b16 %v3641
        %v3695 = vunpack.c.l.b16 %v3642
        %v3696 = vunpack.c.h.b16 %v3642
        %v3697 = vunpack.c.l.b16 %v3643
        %v3698 = vunpack.c.h.b16 %v3643
        %v3699 = vunpack.c.l.b16 %v3644
        %v3700 = vunpack.c.h.b16 %v3644
        %v3701 = vunpack.c.l.b16 %v3645
        %v3702 = vunpack.c.h.b16 %v3645
        %v3703 = vunpack.c.l.b16 %v3646
        %v3704 = vunpack.c.h.b16 %v3646
        %v3705 = vunpack.c.l.b16 %v3647
        %v3706 = vunpack.c.h.b16 %v3647
        %v3707 = vunpack.c.l.b16 %v3648
        %v3708 = vunpack.c.h.b16 %v3648
        %v3709 = vunpack.c.l.b16 %v3649
        %v3710 = vunpack.c.h.b16 %v3649
        %v3711 = vunpack.c.l.b16 %v3650
        %v3712 = vunpack.c.h.b16 %v3650
        %v3713 = vunpack.c.l.b16 %v3651
        %v3714 = vunpack.c.h.b16 %v3651
        %v3715 = vunpack.c.l.b16 %v3652
        %v3716 = vunpack.c.h.b16 %v3652
        %v3717 = vunpack.c.l.b16 %v3653
        %v3718 = vunpack.c.h.b16 %v3653
        %v3719 = vunpack.c.l.b16 %v3654
        %v3720 = vunpack.c.h.b16 %v3654
        %v3721 = vunpack.c.l.b16 %v3655
        %v3722 = vunpack.c.h.b16 %v3655
        %v3723 = vunpack.c.l.b16 %v3656
        %v3724 = vunpack.c.h.b16 %v3656
        %v3725 = vunpack.c.l.b16 %v3657
        %v3726 = vunpack.c.h.b16 %v3657
        %v3727 = vunpack.c.l.b16 %v3658
        %v3728 = vunpack.c.h.b16 %v3658
        %v3729 = vunpack.c.l.b16 %v3659
        %v3730 = vunpack.c.h.b16 %v3659
        %v3731 = vunpack.c.l.b16 %v3660
        %v3732 = vunpack.c.h.b16 %v3660
        %v3733 = vpack.c.b16 %v3689, %v3685
        %v3734 = vpack.c.b16 %v3690, %v3686
        %v3735 = vpack.c.b16 %v3691, %v3687
        %v3736 = vpack.c.b16 %v3692, %v3688
        %v3737 = vpack.c.b16 %v3697, %v3693
        %v3738 = vpack.c.b16 %v3698, %v3694
        %v3739 = vpack.c.b16 %v3699, %v3695
        %v3740 = vpack.c.b16 %v3700, %v3696
        %v3741 = vpack.c.b16 %v3705, %v3701
        %v3742 = vpack.c.b16 %v3706, %v3702
        %v3743 = vpack.c.b16 %v3707, %v3703
        %v3744 = vpack.c.b16 %v3708, %v3704
        %v3745 = vpack.c.b16 %v3713, %v3709
        %v3746 = vpack.c.b16 %v3714, %v3710
        %v3747 = vpack.c.b16 %v3715, %v3711
        %v3748 = vpack.c.b16 %v3716, %v3712
        %v3749 = vpack.c.b16 %v3721, %v3717
        %v3750 = vpack.c.b16 %v3722, %v3718
        %v3751 = vpack.c.b16 %v3723, %v3719
        %v3752 = vpack.c.b16 %v3724, %v3720
        %v3753 = vpack.c.b16 %v3729, %v3725
        %v3754 = vpack.c.b16 %v3730, %v3726
        %v3755 = vpack.c.b16 %v3731, %v3727
        %v3756 = vpack.c.b16 %v3732, %v3728
        %3781 = vmatprep.subr.bf16.mxu0 0
        %3782 = vmatpush1.bf16.msra.mxu0 0
        %3783 = vmatprep.subr.bf16.mxu0 0
        %3784 = vmatpush1.bf16.msra.mxu0 0
        %3785 = vmatprep.subr.bf16.mxu0 %v3754
        %3786 = vmatpush1.bf16.msra.mxu0 %v3753
        %3787 = vmatprep.subr.bf16.mxu0 %v3750
        %3788 = vmatpush1.bf16.msra.mxu0 %v3749
        %3789 = vmatprep.subr.bf16.mxu0 %v3746
        %3790 = vmatpush1.bf16.msra.mxu0 %v3745
        %3791 = vmatprep.subr.bf16.mxu0 %v3742
        %3792 = vmatpush1.bf16.msra.mxu0 %v3741
        %3793 = vmatprep.subr.bf16.mxu0 %v3738
        %3794 = vmatpush1.bf16.msra.mxu0 %v3737
        %3795 = vmatprep.subr.bf16.mxu0 %v3734
        %3796 = vmatpush1.bf16.msra.mxu0 %v3733
        %3797 = vmatprep.subr.bf16.mxu0 0
        %3798 = vmatpush2.bf16.msra.mxu0 0
        %3799 = vmatprep.subr.bf16.mxu0 0
        %3800 = vmatpush2.bf16.msra.mxu0 0
        %3801 = vmatprep.subr.bf16.mxu0 0
        %3802 = vmatpush2.bf16.msra.mxu0 0
        %3803 = vmatprep.subr.bf16.mxu0 0
        %3804 = vmatpush2.bf16.msra.mxu0 0
        %3805 = vmatprep.subr.bf16.mxu0 0
        %3806 = vmatpush2.bf16.msra.mxu0 0
        %3807 = vmatprep.subr.bf16.mxu0 0
        %3808 = vmatpush2.bf16.msra.mxu0 0
        %3809 = vmatprep.subr.bf16.mxu0 0
        %3810 = vmatpush2.bf16.msra.mxu0 0
        %3811 = vmatprep.subr.bf16.mxu0 0
        %3812 = vmatpush2.bf16.msra.mxu0 0
        %3813 = vmatprep.mubr.bf16.mxu0 0
        %3814 = vmatmul.mubr.bf16.gmra.mxu0 %v3509
        %v3815 = vpop.f32.mrf.mxu0
        %v3816 = vadd.f32 0.0, %v3815
        %v3817 = vpop.f32.mrf.mxu0
        %v3818 = vadd.f32 0.0, %v3817
        %v3819 = vpop.f32.mrf.mxu0
        %v3820 = vadd.f32 0.0, %v3819
        %v3821 = vpop.f32.mrf.mxu0
        %v3822 = vadd.f32 0.0, %v3821
        %3823 = vmatprep.mubr.bf16.mxu0 0
        %3824 = vmatmul.mubr.bf16.gmra.mxu0 %v3512
        %v3825 = vpop.f32.mrf.mxu0
        %v3826 = vadd.f32 0.0, %v3825
        %v3827 = vpop.f32.mrf.mxu0
        %v3828 = vadd.f32 0.0, %v3827
        %v3829 = vpop.f32.mrf.mxu0
        %v3830 = vadd.f32 0.0, %v3829
        %v3831 = vpop.f32.mrf.mxu0
        %v3832 = vadd.f32 0.0, %v3831
        %3833 = vdwg.mxu0
        %3834 = vmatprep.subr.bf16.mxu0 0
        %3835 = vmatpush1.bf16.msra.mxu0 0
        %3836 = vmatprep.subr.bf16.mxu0 0
        %3837 = vmatpush1.bf16.msra.mxu0 0
        %3838 = vmatprep.subr.bf16.mxu0 %v3756
        %3839 = vmatpush1.bf16.msra.mxu0 %v3755
        %3840 = vmatprep.subr.bf16.mxu0 %v3752
        %3841 = vmatpush1.bf16.msra.mxu0 %v3751
        %3842 = vmatprep.subr.bf16.mxu0 %v3748
        %3843 = vmatpush1.bf16.msra.mxu0 %v3747
        %3844 = vmatprep.subr.bf16.mxu0 %v3744
        %3845 = vmatpush1.bf16.msra.mxu0 %v3743
        %3846 = vmatprep.subr.bf16.mxu0 %v3740
        %3847 = vmatpush1.bf16.msra.mxu0 %v3739
        %3848 = vmatprep.subr.bf16.mxu0 %v3736
        %3849 = vmatpush1.bf16.msra.mxu0 %v3735
        %3850 = vmatprep.subr.bf16.mxu0 0
        %3851 = vmatpush2.bf16.msra.mxu0 0
        %3852 = vmatprep.subr.bf16.mxu0 0
        %3853 = vmatpush2.bf16.msra.mxu0 0
        %3854 = vmatprep.subr.bf16.mxu0 0
        %3855 = vmatpush2.bf16.msra.mxu0 0
        %3856 = vmatprep.subr.bf16.mxu0 0
        %3857 = vmatpush2.bf16.msra.mxu0 0
        %3858 = vmatprep.subr.bf16.mxu0 0
        %3859 = vmatpush2.bf16.msra.mxu0 0
        %3860 = vmatprep.subr.bf16.mxu0 0
        %3861 = vmatpush2.bf16.msra.mxu0 0
        %3862 = vmatprep.subr.bf16.mxu0 0
        %3863 = vmatpush2.bf16.msra.mxu0 0
        %3864 = vmatprep.subr.bf16.mxu0 0
        %3865 = vmatpush2.bf16.msra.mxu0 0
        %3866 = vmatprep.mubr.bf16.mxu0 0
        %3867 = vmatmul.mubr.bf16.gmra.mxu0 %v3509
        %v3868 = vpop.f32.mrf.mxu0
        %v3869 = vadd.f32 0.0, %v3868
        %v3870 = vpop.f32.mrf.mxu0
        %v3871 = vadd.f32 0.0, %v3870
        %v3872 = vpop.f32.mrf.mxu0
        %v3873 = vadd.f32 0.0, %v3872
        %v3874 = vpop.f32.mrf.mxu0
        %v3875 = vadd.f32 0.0, %v3874
        %3876 = vmatprep.mubr.bf16.mxu0 0
        %3877 = vmatmul.mubr.bf16.gmra.mxu0 %v3512
        %v3878 = vpop.f32.mrf.mxu0
        %v3879 = vadd.f32 0.0, %v3878
        %v3880 = vpop.f32.mrf.mxu0
        %v3881 = vadd.f32 0.0, %v3880
        %v3882 = vpop.f32.mrf.mxu0
        %v3883 = vadd.f32 0.0, %v3882
        %v3884 = vpop.f32.mrf.mxu0
        %v3885 = vadd.f32 0.0, %v3884
        %3886 = vdwg.mxu0
        %v3887 = vadd.f32 %v3325, %v3816
        %v3888 = vadd.f32 %v3326, %v3818
        %v3889 = vadd.f32 %v3327, %v3869
        %v3890 = vadd.f32 %v3328, %v3871
        %v3891 = vadd.f32 %v3329, %v3820
        %v3892 = vadd.f32 %v3330, %v3822
        %v3893 = vadd.f32 %v3331, %v3873
        %v3894 = vadd.f32 %v3332, %v3875
        %v3895 = vadd.f32 %v3333, %v3826
        %v3896 = vadd.f32 %v3334, %v3828
        %v3897 = vadd.f32 %v3335, %v3879
        %v3898 = vadd.f32 %v3336, %v3881
        %v3899 = vadd.f32 %v3337, %v3830
        %v3900 = vadd.f32 %v3338, %v3832
        %v3901 = vadd.f32 %v3339, %v3883
        %v3902 = vadd.f32 %v3340, %v3885
        %v3903 = vld [vmem:[%s633] sm:$0x8]
        %s3904 = scalar_lea.vmem [#allocation4], 1152
        %v3905 = vld [vmem:[%s3904] sm:$0xff]
        %v3906 = vld [vmem:[%s3904 + $0x8] sm:$0xff]
        %v3907 = vld [vmem:[%s3904 + $0x10] sm:$0xff]
        %v3908 = vld [vmem:[%s3904 + $0x18] sm:$0xff]
        %v3909 = vld [vmem:[%s3904 + $0x20] sm:$0xff]
        %v3910 = vld [vmem:[%s3904 + $0x28] sm:$0xff]
        %v3911 = vld [vmem:[%s3904 + $0x30] sm:$0xff]
        %v3912 = vld [vmem:[%s3904 + $0x38] sm:$0xff]
        %v3913 = vld [vmem:[%s3904 + $0x40] sm:$0xff]
        %v3914 = vld [vmem:[%s3904 + $0x48] sm:$0xff]
        %v3915 = vld [vmem:[%s3904 + $0x50] sm:$0xff]
        %v3916 = vld [vmem:[%s3904 + $0x58] sm:$0xff]
        %v3917 = vld [vmem:[%s3904 + $0x60] sm:$0xff]
        %v3918 = vld [vmem:[%s3904 + $0x68] sm:$0xff]
        %v3919 = vld [vmem:[%s3904 + $0x70] sm:$0xff]
        %v3920 = vld [vmem:[%s3904 + $0x78] sm:$0xff]
        %v3921 = vld [vmem:[%s3904 + $0x80] sm:$0xff]
        %v3922 = vld [vmem:[%s3904 + $0x88] sm:$0xff]
        %v3923 = vld [vmem:[%s3904 + $0x90] sm:$0xff]
        %v3924 = vld [vmem:[%s3904 + $0x98] sm:$0xff]
        %v3925 = vld [vmem:[%s3904 + $0xa0] sm:$0xff]
        %v3926 = vld [vmem:[%s3904 + $0xa8] sm:$0xff]
        %v3927 = vld [vmem:[%s3904 + $0xb0] sm:$0xff]
        %v3928 = vld [vmem:[%s3904 + $0xb8] sm:$0xff]
        %v3930 = vunpack.c.l.b16 %v3903
        %v3931 = vpack.c.b16 %v718, %v3930
        %vm3932 = vcmask 1044480
        %v3933 = vrot.slane %v3931, 3
        %v3934 = vrot.slane %v3369, 3
        %v3935 = vsel %vm3932, %v3933, %v3934
        %v3960 = vunpack.c.l.b16 %v3905
        %v3961 = vunpack.c.h.b16 %v3905
        %v3962 = vunpack.c.l.b16 %v3906
        %v3963 = vunpack.c.h.b16 %v3906
        %v3964 = vunpack.c.l.b16 %v3907
        %v3965 = vunpack.c.h.b16 %v3907
        %v3966 = vunpack.c.l.b16 %v3908
        %v3967 = vunpack.c.h.b16 %v3908
        %v3968 = vunpack.c.l.b16 %v3909
        %v3969 = vunpack.c.h.b16 %v3909
        %v3970 = vunpack.c.l.b16 %v3910
        %v3971 = vunpack.c.h.b16 %v3910
        %v3972 = vunpack.c.l.b16 %v3911
        %v3973 = vunpack.c.h.b16 %v3911
        %v3974 = vunpack.c.l.b16 %v3912
        %v3975 = vunpack.c.h.b16 %v3912
        %v3976 = vunpack.c.l.b16 %v3913
        %v3977 = vunpack.c.h.b16 %v3913
        %v3978 = vunpack.c.l.b16 %v3914
        %v3979 = vunpack.c.h.b16 %v3914
        %v3980 = vunpack.c.l.b16 %v3915
        %v3981 = vunpack.c.h.b16 %v3915
        %v3982 = vunpack.c.l.b16 %v3916
        %v3983 = vunpack.c.h.b16 %v3916
        %v3984 = vunpack.c.l.b16 %v3917
        %v3985 = vunpack.c.h.b16 %v3917
        %v3986 = vunpack.c.l.b16 %v3918
        %v3987 = vunpack.c.h.b16 %v3918
        %v3988 = vunpack.c.l.b16 %v3919
        %v3989 = vunpack.c.h.b16 %v3919
        %v3990 = vunpack.c.l.b16 %v3920
        %v3991 = vunpack.c.h.b16 %v3920
        %v3992 = vunpack.c.l.b16 %v3921
        %v3993 = vunpack.c.h.b16 %v3921
        %v3994 = vunpack.c.l.b16 %v3922
        %v3995 = vunpack.c.h.b16 %v3922
        %v3996 = vunpack.c.l.b16 %v3923
        %v3997 = vunpack.c.h.b16 %v3923
        %v3998 = vunpack.c.l.b16 %v3924
        %v3999 = vunpack.c.h.b16 %v3924
        %v4000 = vunpack.c.l.b16 %v3925
        %v4001 = vunpack.c.h.b16 %v3925
        %v4002 = vunpack.c.l.b16 %v3926
        %v4003 = vunpack.c.h.b16 %v3926
        %v4004 = vunpack.c.l.b16 %v3927
        %v4005 = vunpack.c.h.b16 %v3927
        %v4006 = vunpack.c.l.b16 %v3928
        %v4007 = vunpack.c.h.b16 %v3928
        %v4008 = vpack.c.b16 %v3964, %v3960
        %v4009 = vpack.c.b16 %v3965, %v3961
        %v4010 = vpack.c.b16 %v3966, %v3962
        %v4011 = vpack.c.b16 %v3967, %v3963
        %v4012 = vpack.c.b16 %v3972, %v3968
        %v4013 = vpack.c.b16 %v3973, %v3969
        %v4014 = vpack.c.b16 %v3974, %v3970
        %v4015 = vpack.c.b16 %v3975, %v3971
        %v4016 = vpack.c.b16 %v3980, %v3976
        %v4017 = vpack.c.b16 %v3981, %v3977
        %v4018 = vpack.c.b16 %v3982, %v3978
        %v4019 = vpack.c.b16 %v3983, %v3979
        %v4020 = vpack.c.b16 %v3988, %v3984
        %v4021 = vpack.c.b16 %v3989, %v3985
        %v4022 = vpack.c.b16 %v3990, %v3986
        %v4023 = vpack.c.b16 %v3991, %v3987
        %v4024 = vpack.c.b16 %v3996, %v3992
        %v4025 = vpack.c.b16 %v3997, %v3993
        %v4026 = vpack.c.b16 %v3998, %v3994
        %v4027 = vpack.c.b16 %v3999, %v3995
        %v4028 = vpack.c.b16 %v4004, %v4000
        %v4029 = vpack.c.b16 %v4005, %v4001
        %v4030 = vpack.c.b16 %v4006, %v4002
        %v4031 = vpack.c.b16 %v4007, %v4003
        %v4057 = vsel %vm859, %v3935, 0
        %v4060 = vsel %vm859, %v3934, 0
        %4062 = vmatprep.subr.bf16.mxu0 0
        %4063 = vmatpush1.bf16.msra.mxu0 0
        %4064 = vmatprep.subr.bf16.mxu0 0
        %4065 = vmatpush1.bf16.msra.mxu0 0
        %4066 = vmatprep.subr.bf16.mxu0 %v4029
        %4067 = vmatpush1.bf16.msra.mxu0 %v4028
        %4068 = vmatprep.subr.bf16.mxu0 %v4025
        %4069 = vmatpush1.bf16.msra.mxu0 %v4024
        %4070 = vmatprep.subr.bf16.mxu0 %v4021
        %4071 = vmatpush1.bf16.msra.mxu0 %v4020
        %4072 = vmatprep.subr.bf16.mxu0 %v4017
        %4073 = vmatpush1.bf16.msra.mxu0 %v4016
        %4074 = vmatprep.subr.bf16.mxu0 %v4013
        %4075 = vmatpush1.bf16.msra.mxu0 %v4012
        %4076 = vmatprep.subr.bf16.mxu0 %v4009
        %4077 = vmatpush1.bf16.msra.mxu0 %v4008
        %4078 = vmatprep.subr.bf16.mxu0 0
        %4079 = vmatpush2.bf16.msra.mxu0 0
        %4080 = vmatprep.subr.bf16.mxu0 0
        %4081 = vmatpush2.bf16.msra.mxu0 0
        %4082 = vmatprep.subr.bf16.mxu0 0
        %4083 = vmatpush2.bf16.msra.mxu0 0
        %4084 = vmatprep.subr.bf16.mxu0 0
        %4085 = vmatpush2.bf16.msra.mxu0 0
        %4086 = vmatprep.subr.bf16.mxu0 0
        %4087 = vmatpush2.bf16.msra.mxu0 0
        %4088 = vmatprep.subr.bf16.mxu0 0
        %4089 = vmatpush2.bf16.msra.mxu0 0
        %4090 = vmatprep.subr.bf16.mxu0 0
        %4091 = vmatpush2.bf16.msra.mxu0 0
        %4092 = vmatprep.subr.bf16.mxu0 0
        %4093 = vmatpush2.bf16.msra.mxu0 0
        %4094 = vmatprep.mubr.bf16.mxu0 0
        %4095 = vmatmul.mubr.bf16.gmra.mxu0 %v4057
        %v4096 = vpop.f32.mrf.mxu0
        %v4097 = vadd.f32 0.0, %v4096
        %v4098 = vpop.f32.mrf.mxu0
        %v4099 = vadd.f32 0.0, %v4098
        %v4100 = vpop.f32.mrf.mxu0
        %v4101 = vadd.f32 0.0, %v4100
        %v4102 = vpop.f32.mrf.mxu0
        %v4103 = vadd.f32 0.0, %v4102
        %4104 = vmatprep.mubr.bf16.mxu0 0
        %4105 = vmatmul.mubr.bf16.gmra.mxu0 %v4060
        %v4106 = vpop.f32.mrf.mxu0
        %v4107 = vadd.f32 0.0, %v4106
        %v4108 = vpop.f32.mrf.mxu0
        %v4109 = vadd.f32 0.0, %v4108
        %v4110 = vpop.f32.mrf.mxu0
        %v4111 = vadd.f32 0.0, %v4110
        %v4112 = vpop.f32.mrf.mxu0
        %v4113 = vadd.f32 0.0, %v4112
        %4114 = vdwg.mxu0
        %4115 = vmatprep.subr.bf16.mxu0 0
        %4116 = vmatpush1.bf16.msra.mxu0 0
        %4117 = vmatprep.subr.bf16.mxu0 0
        %4118 = vmatpush1.bf16.msra.mxu0 0
        %4119 = vmatprep.subr.bf16.mxu0 %v4031
        %4120 = vmatpush1.bf16.msra.mxu0 %v4030
        %4121 = vmatprep.subr.bf16.mxu0 %v4027
        %4122 = vmatpush1.bf16.msra.mxu0 %v4026
        %4123 = vmatprep.subr.bf16.mxu0 %v4023
        %4124 = vmatpush1.bf16.msra.mxu0 %v4022
        %4125 = vmatprep.subr.bf16.mxu0 %v4019
        %4126 = vmatpush1.bf16.msra.mxu0 %v4018
        %4127 = vmatprep.subr.bf16.mxu0 %v4015
        %4128 = vmatpush1.bf16.msra.mxu0 %v4014
        %4129 = vmatprep.subr.bf16.mxu0 %v4011
        %4130 = vmatpush1.bf16.msra.mxu0 %v4010
        %4131 = vmatprep.subr.bf16.mxu0 0
        %4132 = vmatpush2.bf16.msra.mxu0 0
        %4133 = vmatprep.subr.bf16.mxu0 0
        %4134 = vmatpush2.bf16.msra.mxu0 0
        %4135 = vmatprep.subr.bf16.mxu0 0
        %4136 = vmatpush2.bf16.msra.mxu0 0
        %4137 = vmatprep.subr.bf16.mxu0 0
        %4138 = vmatpush2.bf16.msra.mxu0 0
        %4139 = vmatprep.subr.bf16.mxu0 0
        %4140 = vmatpush2.bf16.msra.mxu0 0
        %4141 = vmatprep.subr.bf16.mxu0 0
        %4142 = vmatpush2.bf16.msra.mxu0 0
        %4143 = vmatprep.subr.bf16.mxu0 0
        %4144 = vmatpush2.bf16.msra.mxu0 0
        %4145 = vmatprep.subr.bf16.mxu0 0
        %4146 = vmatpush2.bf16.msra.mxu0 0
        %4147 = vmatprep.mubr.bf16.mxu0 0
        %4148 = vmatmul.mubr.bf16.gmra.mxu0 %v4057
        %v4149 = vpop.f32.mrf.mxu0
        %v4150 = vadd.f32 0.0, %v4149
        %v4151 = vpop.f32.mrf.mxu0
        %v4152 = vadd.f32 0.0, %v4151
        %v4153 = vpop.f32.mrf.mxu0
        %v4154 = vadd.f32 0.0, %v4153
        %v4155 = vpop.f32.mrf.mxu0
        %v4156 = vadd.f32 0.0, %v4155
        %4157 = vmatprep.mubr.bf16.mxu0 0
        %4158 = vmatmul.mubr.bf16.gmra.mxu0 %v4060
        %v4159 = vpop.f32.mrf.mxu0
        %v4160 = vadd.f32 0.0, %v4159
        %v4161 = vpop.f32.mrf.mxu0
        %v4162 = vadd.f32 0.0, %v4161
        %v4163 = vpop.f32.mrf.mxu0
        %v4164 = vadd.f32 0.0, %v4163
        %v4165 = vpop.f32.mrf.mxu0
        %v4166 = vadd.f32 0.0, %v4165
        %4167 = vdwg.mxu0
        %v4168 = vadd.f32 %v3620, %v4097
        %v4169 = vadd.f32 %v3621, %v4099
        %v4170 = vadd.f32 %v3622, %v4150
        %v4171 = vadd.f32 %v3623, %v4152
        %v4172 = vadd.f32 %v3624, %v4101
        %v4173 = vadd.f32 %v3625, %v4103
        %v4174 = vadd.f32 %v3626, %v4154
        %v4175 = vadd.f32 %v3627, %v4156
        %v4176 = vadd.f32 %v3628, %v4107
        %v4177 = vadd.f32 %v3629, %v4109
        %v4178 = vadd.f32 %v3630, %v4160
        %v4179 = vadd.f32 %v3631, %v4162
        %v4180 = vadd.f32 %v3632, %v4111
        %v4181 = vadd.f32 %v3633, %v4113
        %v4182 = vadd.f32 %v3634, %v4164
        %v4183 = vadd.f32 %v3635, %v4166
        %s4184 = scalar_lea.vmem [#allocation7], 1152
        %v4185 = vld [vmem:[%s4184] sm:$0xff]
        %v4186 = vld [vmem:[%s4184 + $0x8] sm:$0xff]
        %v4187 = vld [vmem:[%s4184 + $0x10] sm:$0xff]
        %v4188 = vld [vmem:[%s4184 + $0x18] sm:$0xff]
        %v4189 = vld [vmem:[%s4184 + $0x20] sm:$0xff]
        %v4190 = vld [vmem:[%s4184 + $0x28] sm:$0xff]
        %v4191 = vld [vmem:[%s4184 + $0x30] sm:$0xff]
        %v4192 = vld [vmem:[%s4184 + $0x38] sm:$0xff]
        %v4193 = vld [vmem:[%s4184 + $0x40] sm:$0xff]
        %v4194 = vld [vmem:[%s4184 + $0x48] sm:$0xff]
        %v4195 = vld [vmem:[%s4184 + $0x50] sm:$0xff]
        %v4196 = vld [vmem:[%s4184 + $0x58] sm:$0xff]
        %v4197 = vld [vmem:[%s4184 + $0x60] sm:$0xff]
        %v4198 = vld [vmem:[%s4184 + $0x68] sm:$0xff]
        %v4199 = vld [vmem:[%s4184 + $0x70] sm:$0xff]
        %v4200 = vld [vmem:[%s4184 + $0x78] sm:$0xff]
        %v4201 = vld [vmem:[%s4184 + $0x80] sm:$0xff]
        %v4202 = vld [vmem:[%s4184 + $0x88] sm:$0xff]
        %v4203 = vld [vmem:[%s4184 + $0x90] sm:$0xff]
        %v4204 = vld [vmem:[%s4184 + $0x98] sm:$0xff]
        %v4205 = vld [vmem:[%s4184 + $0xa0] sm:$0xff]
        %v4206 = vld [vmem:[%s4184 + $0xa8] sm:$0xff]
        %v4207 = vld [vmem:[%s4184 + $0xb0] sm:$0xff]
        %v4208 = vld [vmem:[%s4184 + $0xb8] sm:$0xff]
        %v4233 = vunpack.c.l.b16 %v4185
        %v4234 = vunpack.c.h.b16 %v4185
        %v4235 = vunpack.c.l.b16 %v4186
        %v4236 = vunpack.c.h.b16 %v4186
        %v4237 = vunpack.c.l.b16 %v4187
        %v4238 = vunpack.c.h.b16 %v4187
        %v4239 = vunpack.c.l.b16 %v4188
        %v4240 = vunpack.c.h.b16 %v4188
        %v4241 = vunpack.c.l.b16 %v4189
        %v4242 = vunpack.c.h.b16 %v4189
        %v4243 = vunpack.c.l.b16 %v4190
        %v4244 = vunpack.c.h.b16 %v4190
        %v4245 = vunpack.c.l.b16 %v4191
        %v4246 = vunpack.c.h.b16 %v4191
        %v4247 = vunpack.c.l.b16 %v4192
        %v4248 = vunpack.c.h.b16 %v4192
        %v4249 = vunpack.c.l.b16 %v4193
        %v4250 = vunpack.c.h.b16 %v4193
        %v4251 = vunpack.c.l.b16 %v4194
        %v4252 = vunpack.c.h.b16 %v4194
        %v4253 = vunpack.c.l.b16 %v4195
        %v4254 = vunpack.c.h.b16 %v4195
        %v4255 = vunpack.c.l.b16 %v4196
        %v4256 = vunpack.c.h.b16 %v4196
        %v4257 = vunpack.c.l.b16 %v4197
        %v4258 = vunpack.c.h.b16 %v4197
        %v4259 = vunpack.c.l.b16 %v4198
        %v4260 = vunpack.c.h.b16 %v4198
        %v4261 = vunpack.c.l.b16 %v4199
        %v4262 = vunpack.c.h.b16 %v4199
        %v4263 = vunpack.c.l.b16 %v4200
        %v4264 = vunpack.c.h.b16 %v4200
        %v4265 = vunpack.c.l.b16 %v4201
        %v4266 = vunpack.c.h.b16 %v4201
        %v4267 = vunpack.c.l.b16 %v4202
        %v4268 = vunpack.c.h.b16 %v4202
        %v4269 = vunpack.c.l.b16 %v4203
        %v4270 = vunpack.c.h.b16 %v4203
        %v4271 = vunpack.c.l.b16 %v4204
        %v4272 = vunpack.c.h.b16 %v4204
        %v4273 = vunpack.c.l.b16 %v4205
        %v4274 = vunpack.c.h.b16 %v4205
        %v4275 = vunpack.c.l.b16 %v4206
        %v4276 = vunpack.c.h.b16 %v4206
        %v4277 = vunpack.c.l.b16 %v4207
        %v4278 = vunpack.c.h.b16 %v4207
        %v4279 = vunpack.c.l.b16 %v4208
        %v4280 = vunpack.c.h.b16 %v4208
        %v4281 = vpack.c.b16 %v4237, %v4233
        %v4282 = vpack.c.b16 %v4238, %v4234
        %v4283 = vpack.c.b16 %v4239, %v4235
        %v4284 = vpack.c.b16 %v4240, %v4236
        %v4285 = vpack.c.b16 %v4245, %v4241
        %v4286 = vpack.c.b16 %v4246, %v4242
        %v4287 = vpack.c.b16 %v4247, %v4243
        %v4288 = vpack.c.b16 %v4248, %v4244
        %v4289 = vpack.c.b16 %v4253, %v4249
        %v4290 = vpack.c.b16 %v4254, %v4250
        %v4291 = vpack.c.b16 %v4255, %v4251
        %v4292 = vpack.c.b16 %v4256, %v4252
        %v4293 = vpack.c.b16 %v4261, %v4257
        %v4294 = vpack.c.b16 %v4262, %v4258
        %v4295 = vpack.c.b16 %v4263, %v4259
        %v4296 = vpack.c.b16 %v4264, %v4260
        %v4297 = vpack.c.b16 %v4269, %v4265
        %v4298 = vpack.c.b16 %v4270, %v4266
        %v4299 = vpack.c.b16 %v4271, %v4267
        %v4300 = vpack.c.b16 %v4272, %v4268
        %v4301 = vpack.c.b16 %v4277, %v4273
        %v4302 = vpack.c.b16 %v4278, %v4274
        %v4303 = vpack.c.b16 %v4279, %v4275
        %v4304 = vpack.c.b16 %v4280, %v4276
        %4329 = vmatprep.subr.bf16.mxu0 0
        %4330 = vmatpush1.bf16.msra.mxu0 0
        %4331 = vmatprep.subr.bf16.mxu0 0
        %4332 = vmatpush1.bf16.msra.mxu0 0
        %4333 = vmatprep.subr.bf16.mxu0 %v4302
        %4334 = vmatpush1.bf16.msra.mxu0 %v4301
        %4335 = vmatprep.subr.bf16.mxu0 %v4298
        %4336 = vmatpush1.bf16.msra.mxu0 %v4297
        %4337 = vmatprep.subr.bf16.mxu0 %v4294
        %4338 = vmatpush1.bf16.msra.mxu0 %v4293
        %4339 = vmatprep.subr.bf16.mxu0 %v4290
        %4340 = vmatpush1.bf16.msra.mxu0 %v4289
        %4341 = vmatprep.subr.bf16.mxu0 %v4286
        %4342 = vmatpush1.bf16.msra.mxu0 %v4285
        %4343 = vmatprep.subr.bf16.mxu0 %v4282
        %4344 = vmatpush1.bf16.msra.mxu0 %v4281
        %4345 = vmatprep.subr.bf16.mxu0 0
        %4346 = vmatpush2.bf16.msra.mxu0 0
        %4347 = vmatprep.subr.bf16.mxu0 0
        %4348 = vmatpush2.bf16.msra.mxu0 0
        %4349 = vmatprep.subr.bf16.mxu0 0
        %4350 = vmatpush2.bf16.msra.mxu0 0
        %4351 = vmatprep.subr.bf16.mxu0 0
        %4352 = vmatpush2.bf16.msra.mxu0 0
        %4353 = vmatprep.subr.bf16.mxu0 0
        %4354 = vmatpush2.bf16.msra.mxu0 0
        %4355 = vmatprep.subr.bf16.mxu0 0
        %4356 = vmatpush2.bf16.msra.mxu0 0
        %4357 = vmatprep.subr.bf16.mxu0 0
        %4358 = vmatpush2.bf16.msra.mxu0 0
        %4359 = vmatprep.subr.bf16.mxu0 0
        %4360 = vmatpush2.bf16.msra.mxu0 0
        %4361 = vmatprep.mubr.bf16.mxu0 0
        %4362 = vmatmul.mubr.bf16.gmra.mxu0 %v4057
        %v4363 = vpop.f32.mrf.mxu0
        %v4364 = vadd.f32 0.0, %v4363
        %v4365 = vpop.f32.mrf.mxu0
        %v4366 = vadd.f32 0.0, %v4365
        %v4367 = vpop.f32.mrf.mxu0
        %v4368 = vadd.f32 0.0, %v4367
        %v4369 = vpop.f32.mrf.mxu0
        %v4370 = vadd.f32 0.0, %v4369
        %4371 = vmatprep.mubr.bf16.mxu0 0
        %4372 = vmatmul.mubr.bf16.gmra.mxu0 %v4060
        %v4373 = vpop.f32.mrf.mxu0
        %v4374 = vadd.f32 0.0, %v4373
        %v4375 = vpop.f32.mrf.mxu0
        %v4376 = vadd.f32 0.0, %v4375
        %v4377 = vpop.f32.mrf.mxu0
        %v4378 = vadd.f32 0.0, %v4377
        %v4379 = vpop.f32.mrf.mxu0
        %v4380 = vadd.f32 0.0, %v4379
        %4381 = vdwg.mxu0
        %4382 = vmatprep.subr.bf16.mxu0 0
        %4383 = vmatpush1.bf16.msra.mxu0 0
        %4384 = vmatprep.subr.bf16.mxu0 0
        %4385 = vmatpush1.bf16.msra.mxu0 0
        %4386 = vmatprep.subr.bf16.mxu0 %v4304
        %4387 = vmatpush1.bf16.msra.mxu0 %v4303
        %4388 = vmatprep.subr.bf16.mxu0 %v4300
        %4389 = vmatpush1.bf16.msra.mxu0 %v4299
        %4390 = vmatprep.subr.bf16.mxu0 %v4296
        %4391 = vmatpush1.bf16.msra.mxu0 %v4295
        %4392 = vmatprep.subr.bf16.mxu0 %v4292
        %4393 = vmatpush1.bf16.msra.mxu0 %v4291
        %4394 = vmatprep.subr.bf16.mxu0 %v4288
        %4395 = vmatpush1.bf16.msra.mxu0 %v4287
        %4396 = vmatprep.subr.bf16.mxu0 %v4284
        %4397 = vmatpush1.bf16.msra.mxu0 %v4283
        %4398 = vmatprep.subr.bf16.mxu0 0
        %4399 = vmatpush2.bf16.msra.mxu0 0
        %4400 = vmatprep.subr.bf16.mxu0 0
        %4401 = vmatpush2.bf16.msra.mxu0 0
        %4402 = vmatprep.subr.bf16.mxu0 0
        %4403 = vmatpush2.bf16.msra.mxu0 0
        %4404 = vmatprep.subr.bf16.mxu0 0
        %4405 = vmatpush2.bf16.msra.mxu0 0
        %4406 = vmatprep.subr.bf16.mxu0 0
        %4407 = vmatpush2.bf16.msra.mxu0 0
        %4408 = vmatprep.subr.bf16.mxu0 0
        %4409 = vmatpush2.bf16.msra.mxu0 0
        %4410 = vmatprep.subr.bf16.mxu0 0
        %4411 = vmatpush2.bf16.msra.mxu0 0
        %4412 = vmatprep.subr.bf16.mxu0 0
        %4413 = vmatpush2.bf16.msra.mxu0 0
        %4414 = vmatprep.mubr.bf16.mxu0 0
        %4415 = vmatmul.mubr.bf16.gmra.mxu0 %v4057
        %v4416 = vpop.f32.mrf.mxu0
        %v4417 = vadd.f32 0.0, %v4416
        %v4418 = vpop.f32.mrf.mxu0
        %v4419 = vadd.f32 0.0, %v4418
        %v4420 = vpop.f32.mrf.mxu0
        %v4421 = vadd.f32 0.0, %v4420
        %v4422 = vpop.f32.mrf.mxu0
        %v4423 = vadd.f32 0.0, %v4422
        %4424 = vmatprep.mubr.bf16.mxu0 0
        %4425 = vmatmul.mubr.bf16.gmra.mxu0 %v4060
        %v4426 = vpop.f32.mrf.mxu0
        %v4427 = vadd.f32 0.0, %v4426
        %v4428 = vpop.f32.mrf.mxu0
        %v4429 = vadd.f32 0.0, %v4428
        %v4430 = vpop.f32.mrf.mxu0
        %v4431 = vadd.f32 0.0, %v4430
        %v4432 = vpop.f32.mrf.mxu0
        %v4433 = vadd.f32 0.0, %v4432
        %4434 = vdwg.mxu0
        %v4435 = vadd.f32 %v3887, %v4364
        %v4436 = vadd.f32 %v3888, %v4366
        %v4437 = vadd.f32 %v3889, %v4417
        %v4438 = vadd.f32 %v3890, %v4419
        %v4439 = vadd.f32 %v3891, %v4368
        %v4440 = vadd.f32 %v3892, %v4370
        %v4441 = vadd.f32 %v3893, %v4421
        %v4442 = vadd.f32 %v3894, %v4423
        %v4443 = vadd.f32 %v3895, %v4374
        %v4444 = vadd.f32 %v3896, %v4376
        %v4445 = vadd.f32 %v3897, %v4427
        %v4446 = vadd.f32 %v3898, %v4429
        %v4447 = vadd.f32 %v3899, %v4378
        %v4448 = vadd.f32 %v3900, %v4380
        %v4449 = vadd.f32 %v3901, %v4431
        %v4450 = vadd.f32 %v3902, %v4433
        %v4451 = vmax.f32 %v4168, %v4435
        %v4452 = vmax.f32 %v4169, %v4436
        %v4453 = vmax.f32 %v4170, %v4437
        %v4454 = vmax.f32 %v4171, %v4438
        %v4455 = vmax.f32 %v4172, %v4439
        %v4456 = vmax.f32 %v4173, %v4440
        %v4457 = vmax.f32 %v4174, %v4441
        %v4458 = vmax.f32 %v4175, %v4442
        %v4459 = vmax.f32 %v4176, %v4443
        %v4460 = vmax.f32 %v4177, %v4444
        %v4461 = vmax.f32 %v4178, %v4445
        %v4462 = vmax.f32 %v4179, %v4446
        %v4463 = vmax.f32 %v4180, %v4447
        %v4464 = vmax.f32 %v4181, %v4448
        %v4465 = vmax.f32 %v4182, %v4449
        %v4466 = vmax.f32 %v4183, %v4450
        %v4467 = vld [vmem:[%s4] sm:$0xff]
        %v4468 = vld [vmem:[%s4 + $0x8] sm:$0x1f]
        %vm4469 = vcmask 211968
        %v4471 = vsel %vm4469, %v4467, 0
        %v4474 = vsel %vm4469, %v4468, 0
        %vm4476 = vcmask 1041408
        %v4478 = vsel %vm4476, %v4463, 0
        %v4481 = vsel %vm4476, %v4464, 0
        %v4484 = vsel %vm4476, %v4465, 0
        %v4487 = vsel %vm4476, %v4466, 0
        %4489 = vmatprep.subr.mxu0 0.0
        %4490 = vmatpush1.msra.mxu0 0.0
        %4491 = vmatprep.subr.mxu0 0.0
        %4492 = vmatpush1.msra.mxu0 0.0
        %4493 = vmatprep.subr.mxu0 0.0
        %4494 = vmatpush1.msra.mxu0 0.0
        %4495 = vmatprep.subr.mxu0 0.0
        %4496 = vmatpush1.msra.mxu0 0.0
        %4497 = vmatprep.subr.mxu0 0.0
        %4498 = vmatpush1.msra.mxu0 0.0
        %4499 = vmatprep.subr.mxu0 0.0
        %4500 = vmatpush1.msra.mxu0 0.0
        %4501 = vmatprep.subr.mxu0 0.0
        %4502 = vmatpush1.msra.mxu0 0.0
        %4503 = vmatprep.subr.mxu0 0.0
        %4504 = vmatpush1.msra.mxu0 0.0
        %4505 = vmatprep.subr.mxu0 0.0
        %4506 = vmatpush1.msra.mxu0 0.0
        %4507 = vmatprep.subr.mxu0 0.0
        %4508 = vmatpush1.msra.mxu0 0.0
        %4509 = vmatprep.subr.mxu0 0.0
        %4510 = vmatpush1.msra.mxu0 0.0
        %4511 = vmatprep.subr.mxu0 0.0
        %4512 = vmatpush1.msra.mxu0 0.0
        %4513 = vmatprep.subr.mxu0 %v4481
        %4514 = vmatpush1.msra.mxu0 %v4478
        %4515 = vmatprep.subr.mxu0 %v4460
        %4516 = vmatpush1.msra.mxu0 %v4459
        %4517 = vmatprep.subr.mxu0 %v4456
        %4518 = vmatpush1.msra.mxu0 %v4455
        %4519 = vmatprep.subr.mxu0 %v4452
        %4520 = vmatpush1.msra.mxu0 %v4451
        %4521 = vmatprep.subr.mxu0 0.0
        %4522 = vmatpush2.msra.mxu0 0.0
        %4523 = vmatprep.subr.mxu0 0.0
        %4524 = vmatpush2.msra.mxu0 0.0
        %4525 = vmatprep.subr.mxu0 0.0
        %4526 = vmatpush2.msra.mxu0 0.0
        %4527 = vmatprep.subr.mxu0 0.0
        %4528 = vmatpush2.msra.mxu0 0.0
        %4529 = vmatprep.subr.mxu0 0.0
        %4530 = vmatpush2.msra.mxu0 0.0
        %4531 = vmatprep.subr.mxu0 0.0
        %4532 = vmatpush2.msra.mxu0 0.0
        %4533 = vmatprep.subr.mxu0 0.0
        %4534 = vmatpush2.msra.mxu0 0.0
        %4535 = vmatprep.subr.mxu0 0.0
        %4536 = vmatpush2.msra.mxu0 0.0
        %4537 = vmatprep.subr.mxu0 0.0
        %4538 = vmatpush2.msra.mxu0 0.0
        %4539 = vmatprep.subr.mxu0 0.0
        %4540 = vmatpush2.msra.mxu0 0.0
        %4541 = vmatprep.subr.mxu0 0.0
        %4542 = vmatpush2.msra.mxu0 0.0
        %4543 = vmatprep.subr.mxu0 0.0
        %4544 = vmatpush2.msra.mxu0 0.0
        %4545 = vmatprep.subr.mxu0 0.0
        %4546 = vmatpush2.msra.mxu0 0.0
        %4547 = vmatprep.subr.mxu0 0.0
        %4548 = vmatpush2.msra.mxu0 0.0
        %4549 = vmatprep.subr.mxu0 0.0
        %4550 = vmatpush2.msra.mxu0 0.0
        %4551 = vmatprep.subr.mxu0 0.0
        %4552 = vmatpush2.msra.mxu0 0.0
        %4553 = vmatprep.mubr.f32.mxu0 0.0
        %4554 = vmatmul.mubr.f32.gmra.mxu0 %v4471
        %v4555 = vpop.f32.mrf.mxu0
        %v4556 = vadd.f32 0.0, %v4555
        %v4557 = vpop.f32.mrf.mxu0
        %v4558 = vadd.f32 0.0, %v4557
        %4559 = vmatprep.mubr.f32.mxu0 0.0
        %4560 = vmatmul.mubr.f32.gmra.mxu0 %v4474
        %v4561 = vpop.f32.mrf.mxu0
        %v4562 = vadd.f32 0.0, %v4561
        %v4563 = vpop.f32.mrf.mxu0
        %v4564 = vadd.f32 0.0, %v4563
        %4565 = vdwg.mxu0
        %4566 = vmatprep.subr.mxu0 0.0
        %4567 = vmatpush1.msra.mxu0 0.0
        %4568 = vmatprep.subr.mxu0 0.0
        %4569 = vmatpush1.msra.mxu0 0.0
        %4570 = vmatprep.subr.mxu0 0.0
        %4571 = vmatpush1.msra.mxu0 0.0
        %4572 = vmatprep.subr.mxu0 0.0
        %4573 = vmatpush1.msra.mxu0 0.0
        %4574 = vmatprep.subr.mxu0 0.0
        %4575 = vmatpush1.msra.mxu0 0.0
        %4576 = vmatprep.subr.mxu0 0.0
        %4577 = vmatpush1.msra.mxu0 0.0
        %4578 = vmatprep.subr.mxu0 0.0
        %4579 = vmatpush1.msra.mxu0 0.0
        %4580 = vmatprep.subr.mxu0 0.0
        %4581 = vmatpush1.msra.mxu0 0.0
        %4582 = vmatprep.subr.mxu0 0.0
        %4583 = vmatpush1.msra.mxu0 0.0
        %4584 = vmatprep.subr.mxu0 0.0
        %4585 = vmatpush1.msra.mxu0 0.0
        %4586 = vmatprep.subr.mxu0 0.0
        %4587 = vmatpush1.msra.mxu0 0.0
        %4588 = vmatprep.subr.mxu0 0.0
        %4589 = vmatpush1.msra.mxu0 0.0
        %4590 = vmatprep.subr.mxu0 %v4487
        %4591 = vmatpush1.msra.mxu0 %v4484
        %4592 = vmatprep.subr.mxu0 %v4462
        %4593 = vmatpush1.msra.mxu0 %v4461
        %4594 = vmatprep.subr.mxu0 %v4458
        %4595 = vmatpush1.msra.mxu0 %v4457
        %4596 = vmatprep.subr.mxu0 %v4454
        %4597 = vmatpush1.msra.mxu0 %v4453
        %4598 = vmatprep.subr.mxu0 0.0
        %4599 = vmatpush2.msra.mxu0 0.0
        %4600 = vmatprep.subr.mxu0 0.0
        %4601 = vmatpush2.msra.mxu0 0.0
        %4602 = vmatprep.subr.mxu0 0.0
        %4603 = vmatpush2.msra.mxu0 0.0
        %4604 = vmatprep.subr.mxu0 0.0
        %4605 = vmatpush2.msra.mxu0 0.0
        %4606 = vmatprep.subr.mxu0 0.0
        %4607 = vmatpush2.msra.mxu0 0.0
        %4608 = vmatprep.subr.mxu0 0.0
        %4609 = vmatpush2.msra.mxu0 0.0
        %4610 = vmatprep.subr.mxu0 0.0
        %4611 = vmatpush2.msra.mxu0 0.0
        %4612 = vmatprep.subr.mxu0 0.0
        %4613 = vmatpush2.msra.mxu0 0.0
        %4614 = vmatprep.subr.mxu0 0.0
        %4615 = vmatpush2.msra.mxu0 0.0
        %4616 = vmatprep.subr.mxu0 0.0
        %4617 = vmatpush2.msra.mxu0 0.0
        %4618 = vmatprep.subr.mxu0 0.0
        %4619 = vmatpush2.msra.mxu0 0.0
        %4620 = vmatprep.subr.mxu0 0.0
        %4621 = vmatpush2.msra.mxu0 0.0
        %4622 = vmatprep.subr.mxu0 0.0
        %4623 = vmatpush2.msra.mxu0 0.0
        %4624 = vmatprep.subr.mxu0 0.0
        %4625 = vmatpush2.msra.mxu0 0.0
        %4626 = vmatprep.subr.mxu0 0.0
        %4627 = vmatpush2.msra.mxu0 0.0
        %4628 = vmatprep.subr.mxu0 0.0
        %4629 = vmatpush2.msra.mxu0 0.0
        %4630 = vmatprep.mubr.f32.mxu0 0.0
        %4631 = vmatmul.mubr.f32.gmra.mxu0 %v4471
        %v4632 = vpop.f32.mrf.mxu0
        %v4633 = vadd.f32 0.0, %v4632
        %v4634 = vpop.f32.mrf.mxu0
        %v4635 = vadd.f32 0.0, %v4634
        %4636 = vmatprep.mubr.f32.mxu0 0.0
        %4637 = vmatmul.mubr.f32.gmra.mxu0 %v4474
        %v4638 = vpop.f32.mrf.mxu0
        %v4639 = vadd.f32 0.0, %v4638
        %v4640 = vpop.f32.mrf.mxu0
        %v4641 = vadd.f32 0.0, %v4640
        %4642 = vdwg.mxu0
        %s4643 = scalar_lea.vmem %s4, 16
        %v4644 = vld [vmem:[%s4643] sm:$0xff]
        %v4645 = vld [vmem:[%s4643 + $0x8] sm:$0x1f]
        %v4647 = vsel %vm4469, %v4644, 0
        %v4650 = vsel %vm4469, %v4645, 0
        %4652 = vmatprep.subr.mxu0 0.0
        %4653 = vmatpush1.msra.mxu0 0.0
        %4654 = vmatprep.subr.mxu0 0.0
        %4655 = vmatpush1.msra.mxu0 0.0
        %4656 = vmatprep.subr.mxu0 0.0
        %4657 = vmatpush1.msra.mxu0 0.0
        %4658 = vmatprep.subr.mxu0 0.0
        %4659 = vmatpush1.msra.mxu0 0.0
        %4660 = vmatprep.subr.mxu0 0.0
        %4661 = vmatpush1.msra.mxu0 0.0
        %4662 = vmatprep.subr.mxu0 0.0
        %4663 = vmatpush1.msra.mxu0 0.0
        %4664 = vmatprep.subr.mxu0 0.0
        %4665 = vmatpush1.msra.mxu0 0.0
        %4666 = vmatprep.subr.mxu0 0.0
        %4667 = vmatpush1.msra.mxu0 0.0
        %4668 = vmatprep.subr.mxu0 0.0
        %4669 = vmatpush1.msra.mxu0 0.0
        %4670 = vmatprep.subr.mxu0 0.0
        %4671 = vmatpush1.msra.mxu0 0.0
        %4672 = vmatprep.subr.mxu0 0.0
        %4673 = vmatpush1.msra.mxu0 0.0
        %4674 = vmatprep.subr.mxu0 0.0
        %4675 = vmatpush1.msra.mxu0 0.0
        %4676 = vmatprep.subr.mxu0 %v4481
        %4677 = vmatpush1.msra.mxu0 %v4478
        %4678 = vmatprep.subr.mxu0 %v4460
        %4679 = vmatpush1.msra.mxu0 %v4459
        %4680 = vmatprep.subr.mxu0 %v4456
        %4681 = vmatpush1.msra.mxu0 %v4455
        %4682 = vmatprep.subr.mxu0 %v4452
        %4683 = vmatpush1.msra.mxu0 %v4451
        %4684 = vmatprep.subr.mxu0 0.0
        %4685 = vmatpush2.msra.mxu0 0.0
        %4686 = vmatprep.subr.mxu0 0.0
        %4687 = vmatpush2.msra.mxu0 0.0
        %4688 = vmatprep.subr.mxu0 0.0
        %4689 = vmatpush2.msra.mxu0 0.0
        %4690 = vmatprep.subr.mxu0 0.0
        %4691 = vmatpush2.msra.mxu0 0.0
        %4692 = vmatprep.subr.mxu0 0.0
        %4693 = vmatpush2.msra.mxu0 0.0
        %4694 = vmatprep.subr.mxu0 0.0
        %4695 = vmatpush2.msra.mxu0 0.0
        %4696 = vmatprep.subr.mxu0 0.0
        %4697 = vmatpush2.msra.mxu0 0.0
        %4698 = vmatprep.subr.mxu0 0.0
        %4699 = vmatpush2.msra.mxu0 0.0
        %4700 = vmatprep.subr.mxu0 0.0
        %4701 = vmatpush2.msra.mxu0 0.0
        %4702 = vmatprep.subr.mxu0 0.0
        %4703 = vmatpush2.msra.mxu0 0.0
        %4704 = vmatprep.subr.mxu0 0.0
        %4705 = vmatpush2.msra.mxu0 0.0
        %4706 = vmatprep.subr.mxu0 0.0
        %4707 = vmatpush2.msra.mxu0 0.0
        %4708 = vmatprep.subr.mxu0 0.0
        %4709 = vmatpush2.msra.mxu0 0.0
        %4710 = vmatprep.subr.mxu0 0.0
        %4711 = vmatpush2.msra.mxu0 0.0
        %4712 = vmatprep.subr.mxu0 0.0
        %4713 = vmatpush2.msra.mxu0 0.0
        %4714 = vmatprep.subr.mxu0 0.0
        %4715 = vmatpush2.msra.mxu0 0.0
        %4716 = vmatprep.mubr.f32.mxu0 0.0
        %4717 = vmatmul.mubr.f32.gmra.mxu0 %v4647
        %v4718 = vpop.f32.mrf.mxu0
        %v4719 = vadd.f32 0.0, %v4718
        %v4720 = vpop.f32.mrf.mxu0
        %v4721 = vadd.f32 0.0, %v4720
        %4722 = vmatprep.mubr.f32.mxu0 0.0
        %4723 = vmatmul.mubr.f32.gmra.mxu0 %v4650
        %v4724 = vpop.f32.mrf.mxu0
        %v4725 = vadd.f32 0.0, %v4724
        %v4726 = vpop.f32.mrf.mxu0
        %v4727 = vadd.f32 0.0, %v4726
        %4728 = vdwg.mxu0
        %4729 = vmatprep.subr.mxu0 0.0
        %4730 = vmatpush1.msra.mxu0 0.0
        %4731 = vmatprep.subr.mxu0 0.0
        %4732 = vmatpush1.msra.mxu0 0.0
        %4733 = vmatprep.subr.mxu0 0.0
        %4734 = vmatpush1.msra.mxu0 0.0
        %4735 = vmatprep.subr.mxu0 0.0
        %4736 = vmatpush1.msra.mxu0 0.0
        %4737 = vmatprep.subr.mxu0 0.0
        %4738 = vmatpush1.msra.mxu0 0.0
        %4739 = vmatprep.subr.mxu0 0.0
        %4740 = vmatpush1.msra.mxu0 0.0
        %4741 = vmatprep.subr.mxu0 0.0
        %4742 = vmatpush1.msra.mxu0 0.0
        %4743 = vmatprep.subr.mxu0 0.0
        %4744 = vmatpush1.msra.mxu0 0.0
        %4745 = vmatprep.subr.mxu0 0.0
        %4746 = vmatpush1.msra.mxu0 0.0
        %4747 = vmatprep.subr.mxu0 0.0
        %4748 = vmatpush1.msra.mxu0 0.0
        %4749 = vmatprep.subr.mxu0 0.0
        %4750 = vmatpush1.msra.mxu0 0.0
        %4751 = vmatprep.subr.mxu0 0.0
        %4752 = vmatpush1.msra.mxu0 0.0
        %4753 = vmatprep.subr.mxu0 %v4487
        %4754 = vmatpush1.msra.mxu0 %v4484
        %4755 = vmatprep.subr.mxu0 %v4462
        %4756 = vmatpush1.msra.mxu0 %v4461
        %4757 = vmatprep.subr.mxu0 %v4458
        %4758 = vmatpush1.msra.mxu0 %v4457
        %4759 = vmatprep.subr.mxu0 %v4454
        %4760 = vmatpush1.msra.mxu0 %v4453
        %4761 = vmatprep.subr.mxu0 0.0
        %4762 = vmatpush2.msra.mxu0 0.0
        %4763 = vmatprep.subr.mxu0 0.0
        %4764 = vmatpush2.msra.mxu0 0.0
        %4765 = vmatprep.subr.mxu0 0.0
        %4766 = vmatpush2.msra.mxu0 0.0
        %4767 = vmatprep.subr.mxu0 0.0
        %4768 = vmatpush2.msra.mxu0 0.0
        %4769 = vmatprep.subr.mxu0 0.0
        %4770 = vmatpush2.msra.mxu0 0.0
        %4771 = vmatprep.subr.mxu0 0.0
        %4772 = vmatpush2.msra.mxu0 0.0
        %4773 = vmatprep.subr.mxu0 0.0
        %4774 = vmatpush2.msra.mxu0 0.0
        %4775 = vmatprep.subr.mxu0 0.0
        %4776 = vmatpush2.msra.mxu0 0.0
        %4777 = vmatprep.subr.mxu0 0.0
        %4778 = vmatpush2.msra.mxu0 0.0
        %4779 = vmatprep.subr.mxu0 0.0
        %4780 = vmatpush2.msra.mxu0 0.0
        %4781 = vmatprep.subr.mxu0 0.0
        %4782 = vmatpush2.msra.mxu0 0.0
        %4783 = vmatprep.subr.mxu0 0.0
        %4784 = vmatpush2.msra.mxu0 0.0
        %4785 = vmatprep.subr.mxu0 0.0
        %4786 = vmatpush2.msra.mxu0 0.0
        %4787 = vmatprep.subr.mxu0 0.0
        %4788 = vmatpush2.msra.mxu0 0.0
        %4789 = vmatprep.subr.mxu0 0.0
        %4790 = vmatpush2.msra.mxu0 0.0
        %4791 = vmatprep.subr.mxu0 0.0
        %4792 = vmatpush2.msra.mxu0 0.0
        %4793 = vmatprep.mubr.f32.mxu0 0.0
        %4794 = vmatmul.mubr.f32.gmra.mxu0 %v4647
        %v4795 = vpop.f32.mrf.mxu0
        %v4796 = vadd.f32 0.0, %v4795
        %v4797 = vpop.f32.mrf.mxu0
        %v4798 = vadd.f32 0.0, %v4797
        %4799 = vmatprep.mubr.f32.mxu0 0.0
        %4800 = vmatmul.mubr.f32.gmra.mxu0 %v4650
        %v4801 = vpop.f32.mrf.mxu0
        %v4802 = vadd.f32 0.0, %v4801
        %v4803 = vpop.f32.mrf.mxu0
        %v4804 = vadd.f32 0.0, %v4803
        %4805 = vdwg.mxu0
        %v4806 = vmax.f32 %v4556, %v4719
        %v4807 = vmax.f32 %v4558, %v4721
        %v4808 = vmax.f32 %v4633, %v4796
        %v4809 = vmax.f32 %v4635, %v4798
        %v4810 = vmax.f32 %v4562, %v4725
        %v4811 = vmax.f32 %v4564, %v4727
        %v4812 = vmax.f32 %v4639, %v4802
        %v4813 = vmax.f32 %v4641, %v4804
        %v4814 = vld [vmem:[%s3] sm:$0xf]
        %v4816 = vlaneseq
        %v4817 = vshrl.u32 %v4816, 7
        %v4818 = vsub.s32 0, %v4817
        %v4819 = vrot.slane %v4814, %v4818
        %v4820 = vlaneseq
        %v4821 = vshrl.u32 %v4820, 7
        %v4822 = vsub.s32 1, %v4821
        %v4823 = vrot.slane %v4814, %v4822
        %v4824 = vlaneseq
        %v4825 = vshrl.u32 %v4824, 7
        %v4826 = vsub.s32 2, %v4825
        %v4827 = vrot.slane %v4814, %v4826
        %v4828 = vlaneseq
        %v4829 = vshrl.u32 %v4828, 7
        %v4830 = vsub.s32 3, %v4829
        %v4831 = vrot.slane %v4814, %v4830
        %v4836 = vadd.f32 %v4806, %v4819
        %v4837 = vadd.f32 %v4807, %v4823
        %v4838 = vadd.f32 %v4808, %v4827
        %v4839 = vadd.f32 %v4809, %v4831
        %v4840 = vadd.f32 %v4810, %v4819
        %v4841 = vadd.f32 %v4811, %v4823
        %v4842 = vadd.f32 %v4812, %v4827
        %v4843 = vadd.f32 %v4813, %v4831
        %v4844 = vmax.f32 %v4836, 0.0
        %v4845 = vmax.f32 %v4837, 0.0
        %v4846 = vmax.f32 %v4838, 0.0
        %v4847 = vmax.f32 %v4839, 0.0
        %v4848 = vmax.f32 %v4840, 0.0
        %v4849 = vmax.f32 %v4841, 0.0
        %v4850 = vmax.f32 %v4842, 0.0
        %v4851 = vmax.f32 %v4843, 0.0
        %4852 = vst [vmem:[#allocation2] sm:$0xff] %v4844
        %4853 = vst [vmem:[#allocation2 + $0x8] sm:$0xff] %v4845
        %4854 = vst [vmem:[#allocation2 + $0x10] sm:$0xff] %v4846
        %vm4855 = vcmask 261120
        %4856 = vst.msk [vmem:[#allocation2 + $0x18] sm:$0xff] %vm4855, %v4847
        %4857 = vst [vmem:[#allocation2 + $0x20] sm:$0x1f] %v4848
        %4858 = vst [vmem:[#allocation2 + $0x28] sm:$0x1f] %v4849
        %4859 = vst [vmem:[#allocation2 + $0x30] sm:$0x1f] %v4850
        %vm4860 = vcmask 258048
        %4861 = vst.msk [vmem:[#allocation2 + $0x38] sm:$0x1f] %vm4860, %v4851
        %v4862 = vld [vmem:[#allocation2] sm:$0xff]
        %v4863 = vld [vmem:[#allocation2 + $0x8] sm:$0xff]
        %v4864 = vld [vmem:[#allocation2 + $0x10] sm:$0xff]
        %v4865 = vld [vmem:[#allocation2 + $0x18] sm:$0xff]
        %v4866 = vld [vmem:[#allocation2 + $0x20] sm:$0x7]
        %v4867 = vld [vmem:[#allocation2 + $0x28] sm:$0x7]
        %v4868 = vld [vmem:[#allocation2 + $0x30] sm:$0x7]
        %v4869 = vld [vmem:[#allocation2 + $0x38] sm:$0x7]
        %v4870 = vpack.c.bf16 %v4866, %v4862
        %v4871 = vpack.c.bf16 %v4867, %v4863
        %v4872 = vpack.c.bf16 %v4868, %v4864
        %v4873 = vpack.c.bf16 %v4869, %v4865
        %v4874 = vld [vmem:[#allocation9] sm:$0xff]
        %v4875 = vld [vmem:[#allocation9 + $0x8] sm:$0xf]
        %v4876 = vld [vmem:[#allocation9 + $0xc] sm:$0xff]
        %v4877 = vld [vmem:[#allocation9 + $0x14] sm:$0xf]
        %v4878 = vld [vmem:[#allocation9 + $0x18] sm:$0xff]
        %v4879 = vld [vmem:[#allocation9 + $0x20] sm:$0xf]
        %v4880 = vld [vmem:[#allocation9 + $0x24] sm:$0xff]
        %v4881 = vld [vmem:[#allocation9 + $0x2c] sm:$0xf]
        %v4882 = vld [vmem:[#allocation9 + $0x30] sm:$0xff]
        %v4883 = vld [vmem:[#allocation9 + $0x38] sm:$0xf]
        %v4884 = vld [vmem:[#allocation9 + $0x3c] sm:$0xff]
        %v4885 = vld [vmem:[#allocation9 + $0x44] sm:$0xf]
        %v4886 = vld [vmem:[#allocation9 + $0x48] sm:$0xff]
        %v4887 = vld [vmem:[#allocation9 + $0x50] sm:$0xf]
        %v4888 = vld [vmem:[#allocation9 + $0x54] sm:$0xff]
        %v4889 = vld [vmem:[#allocation9 + $0x5c] sm:$0xf]
        %v4890 = vld [vmem:[#allocation9 + $0x60] sm:$0xff]
        %v4891 = vld [vmem:[#allocation9 + $0x68] sm:$0xf]
        %v4892 = vld [vmem:[#allocation9 + $0x6c] sm:$0xff]
        %v4893 = vld [vmem:[#allocation9 + $0x74] sm:$0xf]
        %v4894 = vld [vmem:[#allocation9 + $0x78] sm:$0xff]
        %v4895 = vld [vmem:[#allocation9 + $0x80] sm:$0xf]
        %v4896 = vld [vmem:[#allocation9 + $0x84] sm:$0xff]
        %v4897 = vld [vmem:[#allocation9 + $0x8c] sm:$0xf]
        %v4898 = vld [vmem:[#allocation9 + $0x90] sm:$0xff]
        %v4899 = vld [vmem:[#allocation9 + $0x98] sm:$0xf]
        %v4900 = vld [vmem:[#allocation9 + $0x9c] sm:$0xff]
        %v4901 = vld [vmem:[#allocation9 + $0xa4] sm:$0xf]
        %v4902 = vld [vmem:[#allocation9 + $0xa8] sm:$0xff]
        %v4903 = vld [vmem:[#allocation9 + $0xb0] sm:$0xf]
        %v4904 = vld [vmem:[#allocation9 + $0xb4] sm:$0xff]
        %v4905 = vld [vmem:[#allocation9 + $0xbc] sm:$0xf]
        %v4906 = vld [vmem:[#allocation9 + $0xc0] sm:$0xff]
        %v4907 = vld [vmem:[#allocation9 + $0xc8] sm:$0xf]
        %v4908 = vld [vmem:[#allocation9 + $0xcc] sm:$0xff]
        %v4909 = vld [vmem:[#allocation9 + $0xd4] sm:$0xf]
        %v4910 = vld [vmem:[#allocation9 + $0xd8] sm:$0xff]
        %v4911 = vld [vmem:[#allocation9 + $0xe0] sm:$0xf]
        %v4912 = vld [vmem:[#allocation9 + $0xe4] sm:$0xff]
        %v4913 = vld [vmem:[#allocation9 + $0xec] sm:$0xf]
        %v4914 = vld [vmem:[#allocation9 + $0xf0] sm:$0xff]
        %v4915 = vld [vmem:[#allocation9 + $0xf8] sm:$0xf]
        %v4916 = vld [vmem:[#allocation9 + $0xfc] sm:$0xff]
        %v4917 = vld [vmem:[#allocation9 + $0x104] sm:$0xf]
        %v4918 = vld [vmem:[#allocation9 + $0x108] sm:$0xff]
        %v4919 = vld [vmem:[#allocation9 + $0x110] sm:$0xf]
        %v4920 = vld [vmem:[#allocation9 + $0x114] sm:$0xff]
        %v4921 = vld [vmem:[#allocation9 + $0x11c] sm:$0xf]
        %v4922 = vld [vmem:[#allocation9 + $0x120] sm:$0xff]
        %v4923 = vld [vmem:[#allocation9 + $0x128] sm:$0xf]
        %v4924 = vld [vmem:[#allocation9 + $0x12c] sm:$0xff]
        %v4925 = vld [vmem:[#allocation9 + $0x134] sm:$0xf]
        %v4926 = vld [vmem:[#allocation9 + $0x138] sm:$0xff]
        %v4927 = vld [vmem:[#allocation9 + $0x140] sm:$0xf]
        %v4928 = vld [vmem:[#allocation9 + $0x144] sm:$0xff]
        %v4929 = vld [vmem:[#allocation9 + $0x14c] sm:$0xf]
        %v4930 = vld [vmem:[#allocation9 + $0x150] sm:$0xff]
        %v4931 = vld [vmem:[#allocation9 + $0x158] sm:$0xf]
        %v4932 = vld [vmem:[#allocation9 + $0x15c] sm:$0xff]
        %v4933 = vld [vmem:[#allocation9 + $0x164] sm:$0xf]
        %v4934 = vld [vmem:[#allocation9 + $0x168] sm:$0xff]
        %v4935 = vld [vmem:[#allocation9 + $0x170] sm:$0xf]
        %v4936 = vld [vmem:[#allocation9 + $0x174] sm:$0xff]
        %v4937 = vld [vmem:[#allocation9 + $0x17c] sm:$0xf]
        %v4938 = vld [vmem:[#allocation9 + $0x180] sm:$0xff]
        %v4939 = vld [vmem:[#allocation9 + $0x188] sm:$0xf]
        %v4940 = vld [vmem:[#allocation9 + $0x18c] sm:$0xff]
        %v4941 = vld [vmem:[#allocation9 + $0x194] sm:$0xf]
        %v4942 = vld [vmem:[#allocation9 + $0x198] sm:$0xff]
        %v4943 = vld [vmem:[#allocation9 + $0x1a0] sm:$0xf]
        %v4944 = vld [vmem:[#allocation9 + $0x1a4] sm:$0xff]
        %v4945 = vld [vmem:[#allocation9 + $0x1ac] sm:$0xf]
        %v4946 = vld [vmem:[#allocation9 + $0x1b0] sm:$0xff]
        %v4947 = vld [vmem:[#allocation9 + $0x1b8] sm:$0xf]
        %v4948 = vld [vmem:[#allocation9 + $0x1bc] sm:$0xff]
        %v4949 = vld [vmem:[#allocation9 + $0x1c4] sm:$0xf]
        %v4950 = vld [vmem:[#allocation9 + $0x1c8] sm:$0xff]
        %v4951 = vld [vmem:[#allocation9 + $0x1d0] sm:$0xf]
        %v4952 = vld [vmem:[#allocation9 + $0x1d4] sm:$0xff]
        %v4953 = vld [vmem:[#allocation9 + $0x1dc] sm:$0xf]
        %v4954 = vld [vmem:[#allocation9 + $0x1e0] sm:$0xff]
        %v4955 = vld [vmem:[#allocation9 + $0x1e8] sm:$0xf]
        %v4956 = vld [vmem:[#allocation9 + $0x1ec] sm:$0xff]
        %v4957 = vld [vmem:[#allocation9 + $0x1f4] sm:$0xf]
        %v4958 = vld [vmem:[#allocation9 + $0x1f8] sm:$0xff]
        %v4959 = vld [vmem:[#allocation9 + $0x200] sm:$0xf]
        %v4960 = vld [vmem:[#allocation9 + $0x204] sm:$0xff]
        %v4961 = vld [vmem:[#allocation9 + $0x20c] sm:$0xf]
        %v4962 = vld [vmem:[#allocation9 + $0x210] sm:$0xff]
        %v4963 = vld [vmem:[#allocation9 + $0x218] sm:$0xf]
        %v4964 = vld [vmem:[#allocation9 + $0x21c] sm:$0xff]
        %v4965 = vld [vmem:[#allocation9 + $0x224] sm:$0xf]
        %v4966 = vld [vmem:[#allocation9 + $0x228] sm:$0xff]
        %v4967 = vld [vmem:[#allocation9 + $0x230] sm:$0xf]
        %v4968 = vld [vmem:[#allocation9 + $0x234] sm:$0xff]
        %v4969 = vld [vmem:[#allocation9 + $0x23c] sm:$0xf]
        %v4970 = vld [vmem:[#allocation9 + $0x240] sm:$0xff]
        %v4971 = vld [vmem:[#allocation9 + $0x248] sm:$0xf]
        %v4972 = vld [vmem:[#allocation9 + $0x24c] sm:$0xff]
        %v4973 = vld [vmem:[#allocation9 + $0x254] sm:$0xf]
        %v4974 = vld [vmem:[#allocation9 + $0x258] sm:$0xff]
        %v4975 = vld [vmem:[#allocation9 + $0x260] sm:$0xf]
        %v4976 = vld [vmem:[#allocation9 + $0x264] sm:$0xff]
        %v4977 = vld [vmem:[#allocation9 + $0x26c] sm:$0xf]
        %v4978 = vld [vmem:[#allocation10] sm:$0xff]
        %v4979 = vld [vmem:[#allocation10 + $0x8] sm:$0xf]
        %v4980 = vld [vmem:[#allocation10 + $0xc] sm:$0xff]
        %v4981 = vld [vmem:[#allocation10 + $0x14] sm:$0xf]
        %v4982 = vld [vmem:[#allocation10 + $0x18] sm:$0xff]
        %v4983 = vld [vmem:[#allocation10 + $0x20] sm:$0xf]
        %v4984 = vld [vmem:[#allocation10 + $0x24] sm:$0xff]
        %v4985 = vld [vmem:[#allocation10 + $0x2c] sm:$0xf]
        %v4986 = vld [vmem:[#allocation10 + $0x30] sm:$0xff]
        %v4987 = vld [vmem:[#allocation10 + $0x38] sm:$0xf]
        %v4988 = vld [vmem:[#allocation10 + $0x3c] sm:$0xff]
        %v4989 = vld [vmem:[#allocation10 + $0x44] sm:$0xf]
        %v4990 = vld [vmem:[#allocation10 + $0x48] sm:$0xff]
        %v4991 = vld [vmem:[#allocation10 + $0x50] sm:$0xf]
        %v4992 = vld [vmem:[#allocation10 + $0x54] sm:$0xff]
        %v4993 = vld [vmem:[#allocation10 + $0x5c] sm:$0xf]
        %v4994 = vld [vmem:[#allocation10 + $0x60] sm:$0xff]
        %v4995 = vld [vmem:[#allocation10 + $0x68] sm:$0xf]
        %v4996 = vld [vmem:[#allocation10 + $0x6c] sm:$0xff]
        %v4997 = vld [vmem:[#allocation10 + $0x74] sm:$0xf]
        %v4998 = vld [vmem:[#allocation10 + $0x78] sm:$0xff]
        %v4999 = vld [vmem:[#allocation10 + $0x80] sm:$0xf]
        %v5000 = vld [vmem:[#allocation10 + $0x84] sm:$0xff]
        %v5001 = vld [vmem:[#allocation10 + $0x8c] sm:$0xf]
        %v5002 = vld [vmem:[#allocation10 + $0x90] sm:$0xff]
        %v5003 = vld [vmem:[#allocation10 + $0x98] sm:$0xf]
        %v5004 = vld [vmem:[#allocation10 + $0x9c] sm:$0xff]
        %v5005 = vld [vmem:[#allocation10 + $0xa4] sm:$0xf]
        %v5006 = vld [vmem:[#allocation10 + $0xa8] sm:$0xff]
        %v5007 = vld [vmem:[#allocation10 + $0xb0] sm:$0xf]
        %v5008 = vld [vmem:[#allocation10 + $0xb4] sm:$0xff]
        %v5009 = vld [vmem:[#allocation10 + $0xbc] sm:$0xf]
        %v5010 = vld [vmem:[#allocation10 + $0xc0] sm:$0xff]
        %v5011 = vld [vmem:[#allocation10 + $0xc8] sm:$0xf]
        %v5012 = vld [vmem:[#allocation10 + $0xcc] sm:$0xff]
        %v5013 = vld [vmem:[#allocation10 + $0xd4] sm:$0xf]
        %v5014 = vld [vmem:[#allocation10 + $0xd8] sm:$0xff]
        %v5015 = vld [vmem:[#allocation10 + $0xe0] sm:$0xf]
        %v5016 = vld [vmem:[#allocation10 + $0xe4] sm:$0xff]
        %v5017 = vld [vmem:[#allocation10 + $0xec] sm:$0xf]
        %v5018 = vld [vmem:[#allocation10 + $0xf0] sm:$0xff]
        %v5019 = vld [vmem:[#allocation10 + $0xf8] sm:$0xf]
        %v5020 = vld [vmem:[#allocation10 + $0xfc] sm:$0xff]
        %v5021 = vld [vmem:[#allocation10 + $0x104] sm:$0xf]
        %v5022 = vld [vmem:[#allocation10 + $0x108] sm:$0xff]
        %v5023 = vld [vmem:[#allocation10 + $0x110] sm:$0xf]
        %v5024 = vld [vmem:[#allocation10 + $0x114] sm:$0xff]
        %v5025 = vld [vmem:[#allocation10 + $0x11c] sm:$0xf]
        %v5026 = vld [vmem:[#allocation10 + $0x120] sm:$0xff]
        %v5027 = vld [vmem:[#allocation10 + $0x128] sm:$0xf]
        %v5028 = vld [vmem:[#allocation10 + $0x12c] sm:$0xff]
        %v5029 = vld [vmem:[#allocation10 + $0x134] sm:$0xf]
        %v5030 = vld [vmem:[#allocation10 + $0x138] sm:$0xff]
        %v5031 = vld [vmem:[#allocation10 + $0x140] sm:$0xf]
        %v5032 = vld [vmem:[#allocation10 + $0x144] sm:$0xff]
        %v5033 = vld [vmem:[#allocation10 + $0x14c] sm:$0xf]
        %v5034 = vld [vmem:[#allocation10 + $0x150] sm:$0xff]
        %v5035 = vld [vmem:[#allocation10 + $0x158] sm:$0xf]
        %v5036 = vld [vmem:[#allocation10 + $0x15c] sm:$0xff]
        %v5037 = vld [vmem:[#allocation10 + $0x164] sm:$0xf]
        %v5038 = vld [vmem:[#allocation10 + $0x168] sm:$0xff]
        %v5039 = vld [vmem:[#allocation10 + $0x170] sm:$0xf]
        %v5040 = vld [vmem:[#allocation10 + $0x174] sm:$0xff]
        %v5041 = vld [vmem:[#allocation10 + $0x17c] sm:$0xf]
        %v5042 = vld [vmem:[#allocation10 + $0x180] sm:$0xff]
        %v5043 = vld [vmem:[#allocation10 + $0x188] sm:$0xf]
        %v5044 = vld [vmem:[#allocation10 + $0x18c] sm:$0xff]
        %v5045 = vld [vmem:[#allocation10 + $0x194] sm:$0xf]
        %v5046 = vld [vmem:[#allocation10 + $0x198] sm:$0xff]
        %v5047 = vld [vmem:[#allocation10 + $0x1a0] sm:$0xf]
        %v5048 = vld [vmem:[#allocation10 + $0x1a4] sm:$0xff]
        %v5049 = vld [vmem:[#allocation10 + $0x1ac] sm:$0xf]
        %v5050 = vld [vmem:[#allocation10 + $0x1b0] sm:$0xff]
        %v5051 = vld [vmem:[#allocation10 + $0x1b8] sm:$0xf]
        %v5052 = vld [vmem:[#allocation10 + $0x1bc] sm:$0xff]
        %v5053 = vld [vmem:[#allocation10 + $0x1c4] sm:$0xf]
        %v5054 = vld [vmem:[#allocation10 + $0x1c8] sm:$0xff]
        %v5055 = vld [vmem:[#allocation10 + $0x1d0] sm:$0xf]
        %v5056 = vld [vmem:[#allocation10 + $0x1d4] sm:$0xff]
        %v5057 = vld [vmem:[#allocation10 + $0x1dc] sm:$0xf]
        %v5058 = vld [vmem:[#allocation10 + $0x1e0] sm:$0xff]
        %v5059 = vld [vmem:[#allocation10 + $0x1e8] sm:$0xf]
        %v5060 = vld [vmem:[#allocation10 + $0x1ec] sm:$0xff]
        %v5061 = vld [vmem:[#allocation10 + $0x1f4] sm:$0xf]
        %v5062 = vld [vmem:[#allocation10 + $0x1f8] sm:$0xff]
        %v5063 = vld [vmem:[#allocation10 + $0x200] sm:$0xf]
        %v5064 = vld [vmem:[#allocation10 + $0x204] sm:$0xff]
        %v5065 = vld [vmem:[#allocation10 + $0x20c] sm:$0xf]
        %v5066 = vld [vmem:[#allocation10 + $0x210] sm:$0xff]
        %v5067 = vld [vmem:[#allocation10 + $0x218] sm:$0xf]
        %v5068 = vld [vmem:[#allocation10 + $0x21c] sm:$0xff]
        %v5069 = vld [vmem:[#allocation10 + $0x224] sm:$0xf]
        %v5070 = vld [vmem:[#allocation10 + $0x228] sm:$0xff]
        %v5071 = vld [vmem:[#allocation10 + $0x230] sm:$0xf]
        %v5072 = vld [vmem:[#allocation10 + $0x234] sm:$0xff]
        %v5073 = vld [vmem:[#allocation10 + $0x23c] sm:$0xf]
        %v5074 = vld [vmem:[#allocation10 + $0x240] sm:$0xff]
        %v5075 = vld [vmem:[#allocation10 + $0x248] sm:$0xf]
        %v5076 = vld [vmem:[#allocation10 + $0x24c] sm:$0xff]
        %v5077 = vld [vmem:[#allocation10 + $0x254] sm:$0xf]
        %v5078 = vld [vmem:[#allocation10 + $0x258] sm:$0xff]
        %v5079 = vld [vmem:[#allocation10 + $0x260] sm:$0xf]
        %v5080 = vld [vmem:[#allocation10 + $0x264] sm:$0xff]
        %v5081 = vld [vmem:[#allocation10 + $0x26c] sm:$0xf]
        %v5082 = vld [vmem:[#allocation2] sm:$0xfe]
        %v5083 = vld [vmem:[#allocation2 + $0x8] sm:$0xfe]
        %v5084 = vld [vmem:[#allocation2 + $0x10] sm:$0xfe]
        %v5085 = vld [vmem:[#allocation2 + $0x18] sm:$0xfe]
        %v5086 = vld [vmem:[#allocation2 + $0x20] sm:$0xf]
        %v5087 = vld [vmem:[#allocation2 + $0x28] sm:$0xf]
        %v5088 = vld [vmem:[#allocation2 + $0x30] sm:$0xf]
        %v5089 = vld [vmem:[#allocation2 + $0x38] sm:$0xf]
        %v5090 = vpack.c.bf16 %v5086, %v5082
        %v5091 = vpack.c.bf16 %v5087, %v5083
        %v5092 = vpack.c.bf16 %v5088, %v5084
        %v5093 = vpack.c.bf16 %v5089, %v5085
        %s5094 = scalar_lea.vmem [#allocation9], 624
        %v5095 = vld [vmem:[%s5094] sm:$0xff]
        %v5096 = vld [vmem:[%s5094 + $0x8] sm:$0xf]
        %v5097 = vld [vmem:[%s5094 + $0xc] sm:$0xff]
        %v5098 = vld [vmem:[%s5094 + $0x14] sm:$0xf]
        %v5099 = vld [vmem:[%s5094 + $0x18] sm:$0xff]
        %v5100 = vld [vmem:[%s5094 + $0x20] sm:$0xf]
        %v5101 = vld [vmem:[%s5094 + $0x24] sm:$0xff]
        %v5102 = vld [vmem:[%s5094 + $0x2c] sm:$0xf]
        %v5103 = vld [vmem:[%s5094 + $0x30] sm:$0xff]
        %v5104 = vld [vmem:[%s5094 + $0x38] sm:$0xf]
        %v5105 = vld [vmem:[%s5094 + $0x3c] sm:$0xff]
        %v5106 = vld [vmem:[%s5094 + $0x44] sm:$0xf]
        %v5107 = vld [vmem:[%s5094 + $0x48] sm:$0xff]
        %v5108 = vld [vmem:[%s5094 + $0x50] sm:$0xf]
        %v5109 = vld [vmem:[%s5094 + $0x54] sm:$0xff]
        %v5110 = vld [vmem:[%s5094 + $0x5c] sm:$0xf]
        %v5111 = vld [vmem:[%s5094 + $0x60] sm:$0xff]
        %v5112 = vld [vmem:[%s5094 + $0x68] sm:$0xf]
        %v5113 = vld [vmem:[%s5094 + $0x6c] sm:$0xff]
        %v5114 = vld [vmem:[%s5094 + $0x74] sm:$0xf]
        %v5115 = vld [vmem:[%s5094 + $0x78] sm:$0xff]
        %v5116 = vld [vmem:[%s5094 + $0x80] sm:$0xf]
        %v5117 = vld [vmem:[%s5094 + $0x84] sm:$0xff]
        %v5118 = vld [vmem:[%s5094 + $0x8c] sm:$0xf]
        %v5119 = vld [vmem:[%s5094 + $0x90] sm:$0xff]
        %v5120 = vld [vmem:[%s5094 + $0x98] sm:$0xf]
        %v5121 = vld [vmem:[%s5094 + $0x9c] sm:$0xff]
        %v5122 = vld [vmem:[%s5094 + $0xa4] sm:$0xf]
        %v5123 = vld [vmem:[%s5094 + $0xa8] sm:$0xff]
        %v5124 = vld [vmem:[%s5094 + $0xb0] sm:$0xf]
        %v5125 = vld [vmem:[%s5094 + $0xb4] sm:$0xff]
        %v5126 = vld [vmem:[%s5094 + $0xbc] sm:$0xf]
        %v5127 = vld [vmem:[%s5094 + $0xc0] sm:$0xff]
        %v5128 = vld [vmem:[%s5094 + $0xc8] sm:$0xf]
        %v5129 = vld [vmem:[%s5094 + $0xcc] sm:$0xff]
        %v5130 = vld [vmem:[%s5094 + $0xd4] sm:$0xf]
        %v5131 = vld [vmem:[%s5094 + $0xd8] sm:$0xff]
        %v5132 = vld [vmem:[%s5094 + $0xe0] sm:$0xf]
        %v5133 = vld [vmem:[%s5094 + $0xe4] sm:$0xff]
        %v5134 = vld [vmem:[%s5094 + $0xec] sm:$0xf]
        %v5135 = vld [vmem:[%s5094 + $0xf0] sm:$0xff]
        %v5136 = vld [vmem:[%s5094 + $0xf8] sm:$0xf]
        %v5137 = vld [vmem:[%s5094 + $0xfc] sm:$0xff]
        %v5138 = vld [vmem:[%s5094 + $0x104] sm:$0xf]
        %v5139 = vld [vmem:[%s5094 + $0x108] sm:$0xff]
        %v5140 = vld [vmem:[%s5094 + $0x110] sm:$0xf]
        %v5141 = vld [vmem:[%s5094 + $0x114] sm:$0xff]
        %v5142 = vld [vmem:[%s5094 + $0x11c] sm:$0xf]
        %v5143 = vld [vmem:[%s5094 + $0x120] sm:$0xff]
        %v5144 = vld [vmem:[%s5094 + $0x128] sm:$0xf]
        %v5145 = vld [vmem:[%s5094 + $0x12c] sm:$0xff]
        %v5146 = vld [vmem:[%s5094 + $0x134] sm:$0xf]
        %v5147 = vld [vmem:[%s5094 + $0x138] sm:$0xff]
        %v5148 = vld [vmem:[%s5094 + $0x140] sm:$0xf]
        %v5149 = vld [vmem:[%s5094 + $0x144] sm:$0xff]
        %v5150 = vld [vmem:[%s5094 + $0x14c] sm:$0xf]
        %v5151 = vld [vmem:[%s5094 + $0x150] sm:$0xff]
        %v5152 = vld [vmem:[%s5094 + $0x158] sm:$0xf]
        %v5153 = vld [vmem:[%s5094 + $0x15c] sm:$0xff]
        %v5154 = vld [vmem:[%s5094 + $0x164] sm:$0xf]
        %v5155 = vld [vmem:[%s5094 + $0x168] sm:$0xff]
        %v5156 = vld [vmem:[%s5094 + $0x170] sm:$0xf]
        %v5157 = vld [vmem:[%s5094 + $0x174] sm:$0xff]
        %v5158 = vld [vmem:[%s5094 + $0x17c] sm:$0xf]
        %v5159 = vld [vmem:[%s5094 + $0x180] sm:$0xff]
        %v5160 = vld [vmem:[%s5094 + $0x188] sm:$0xf]
        %v5161 = vld [vmem:[%s5094 + $0x18c] sm:$0xff]
        %v5162 = vld [vmem:[%s5094 + $0x194] sm:$0xf]
        %v5163 = vld [vmem:[%s5094 + $0x198] sm:$0xff]
        %v5164 = vld [vmem:[%s5094 + $0x1a0] sm:$0xf]
        %v5165 = vld [vmem:[%s5094 + $0x1a4] sm:$0xff]
        %v5166 = vld [vmem:[%s5094 + $0x1ac] sm:$0xf]
        %v5167 = vld [vmem:[%s5094 + $0x1b0] sm:$0xff]
        %v5168 = vld [vmem:[%s5094 + $0x1b8] sm:$0xf]
        %v5169 = vld [vmem:[%s5094 + $0x1bc] sm:$0xff]
        %v5170 = vld [vmem:[%s5094 + $0x1c4] sm:$0xf]
        %v5171 = vld [vmem:[%s5094 + $0x1c8] sm:$0xff]
        %v5172 = vld [vmem:[%s5094 + $0x1d0] sm:$0xf]
        %v5173 = vld [vmem:[%s5094 + $0x1d4] sm:$0xff]
        %v5174 = vld [vmem:[%s5094 + $0x1dc] sm:$0xf]
        %v5175 = vld [vmem:[%s5094 + $0x1e0] sm:$0xff]
        %v5176 = vld [vmem:[%s5094 + $0x1e8] sm:$0xf]
        %v5177 = vld [vmem:[%s5094 + $0x1ec] sm:$0xff]
        %v5178 = vld [vmem:[%s5094 + $0x1f4] sm:$0xf]
        %v5179 = vld [vmem:[%s5094 + $0x1f8] sm:$0xff]
        %v5180 = vld [vmem:[%s5094 + $0x200] sm:$0xf]
        %v5181 = vld [vmem:[%s5094 + $0x204] sm:$0xff]
        %v5182 = vld [vmem:[%s5094 + $0x20c] sm:$0xf]
        %v5183 = vld [vmem:[%s5094 + $0x210] sm:$0xff]
        %v5184 = vld [vmem:[%s5094 + $0x218] sm:$0xf]
        %v5185 = vld [vmem:[%s5094 + $0x21c] sm:$0xff]
        %v5186 = vld [vmem:[%s5094 + $0x224] sm:$0xf]
        %v5187 = vld [vmem:[%s5094 + $0x228] sm:$0xff]
        %v5188 = vld [vmem:[%s5094 + $0x230] sm:$0xf]
        %v5189 = vld [vmem:[%s5094 + $0x234] sm:$0xff]
        %v5190 = vld [vmem:[%s5094 + $0x23c] sm:$0xf]
        %v5191 = vld [vmem:[%s5094 + $0x240] sm:$0xff]
        %v5192 = vld [vmem:[%s5094 + $0x248] sm:$0xf]
        %v5193 = vld [vmem:[%s5094 + $0x24c] sm:$0xff]
        %v5194 = vld [vmem:[%s5094 + $0x254] sm:$0xf]
        %v5195 = vld [vmem:[%s5094 + $0x258] sm:$0xff]
        %v5196 = vld [vmem:[%s5094 + $0x260] sm:$0xf]
        %v5197 = vld [vmem:[%s5094 + $0x264] sm:$0xff]
        %v5198 = vld [vmem:[%s5094 + $0x26c] sm:$0xf]
        %v5200 = vshrl.u32 %v5090, 16
        %v5202 = vshll.u32 %v5090, 16
        %v5204 = vrot.slane %v5202, 1
        %v5205 = vor.u32 %v5200, %v5204
        %v5207 = vshrl.u32 %v5091, 16
        %v5209 = vshll.u32 %v5091, 16
        %v5211 = vrot.slane %v5209, 1
        %v5212 = vor.u32 %v5207, %v5211
        %v5214 = vshrl.u32 %v5092, 16
        %v5216 = vshll.u32 %v5092, 16
        %v5218 = vrot.slane %v5216, 1
        %v5219 = vor.u32 %v5214, %v5218
        %v5221 = vshrl.u32 %v5093, 16
        %v5223 = vshll.u32 %v5093, 16
        %v5225 = vrot.slane %v5223, 1
        %v5226 = vor.u32 %v5221, %v5225
        %v5334 = vunpack.c.l.b16 %v5095
        %v5335 = vunpack.c.h.b16 %v5095
        %v5336 = vunpack.c.l.b16 %v5096
        %v5337 = vunpack.c.l.b16 %v5097
        %v5338 = vunpack.c.h.b16 %v5097
        %v5339 = vunpack.c.l.b16 %v5098
        %v5340 = vunpack.c.l.b16 %v5099
        %v5341 = vunpack.c.h.b16 %v5099
        %v5342 = vunpack.c.l.b16 %v5100
        %v5343 = vunpack.c.l.b16 %v5101
        %v5344 = vunpack.c.h.b16 %v5101
        %v5345 = vunpack.c.l.b16 %v5102
        %v5346 = vunpack.c.l.b16 %v5103
        %v5347 = vunpack.c.h.b16 %v5103
        %v5348 = vunpack.c.l.b16 %v5104
        %v5349 = vunpack.c.l.b16 %v5105
        %v5350 = vunpack.c.h.b16 %v5105
        %v5351 = vunpack.c.l.b16 %v5106
        %v5352 = vunpack.c.l.b16 %v5107
        %v5353 = vunpack.c.h.b16 %v5107
        %v5354 = vunpack.c.l.b16 %v5108
        %v5355 = vunpack.c.l.b16 %v5109
        %v5356 = vunpack.c.h.b16 %v5109
        %v5357 = vunpack.c.l.b16 %v5110
        %v5358 = vunpack.c.l.b16 %v5111
        %v5359 = vunpack.c.h.b16 %v5111
        %v5360 = vunpack.c.l.b16 %v5112
        %v5361 = vunpack.c.l.b16 %v5113
        %v5362 = vunpack.c.h.b16 %v5113
        %v5363 = vunpack.c.l.b16 %v5114
        %v5364 = vunpack.c.l.b16 %v5115
        %v5365 = vunpack.c.h.b16 %v5115
        %v5366 = vunpack.c.l.b16 %v5116
        %v5367 = vunpack.c.l.b16 %v5117
        %v5368 = vunpack.c.h.b16 %v5117
        %v5369 = vunpack.c.l.b16 %v5118
        %v5370 = vunpack.c.l.b16 %v5119
        %v5371 = vunpack.c.h.b16 %v5119
        %v5372 = vunpack.c.l.b16 %v5120
        %v5373 = vunpack.c.l.b16 %v5121
        %v5374 = vunpack.c.h.b16 %v5121
        %v5375 = vunpack.c.l.b16 %v5122
        %v5376 = vunpack.c.l.b16 %v5123
        %v5377 = vunpack.c.h.b16 %v5123
        %v5378 = vunpack.c.l.b16 %v5124
        %v5379 = vunpack.c.l.b16 %v5125
        %v5380 = vunpack.c.h.b16 %v5125
        %v5381 = vunpack.c.l.b16 %v5126
        %v5382 = vunpack.c.l.b16 %v5127
        %v5383 = vunpack.c.h.b16 %v5127
        %v5384 = vunpack.c.l.b16 %v5128
        %v5385 = vunpack.c.l.b16 %v5129
        %v5386 = vunpack.c.h.b16 %v5129
        %v5387 = vunpack.c.l.b16 %v5130
        %v5388 = vunpack.c.l.b16 %v5131
        %v5389 = vunpack.c.h.b16 %v5131
        %v5390 = vunpack.c.l.b16 %v5132
        %v5391 = vunpack.c.l.b16 %v5133
        %v5392 = vunpack.c.h.b16 %v5133
        %v5393 = vunpack.c.l.b16 %v5134
        %v5394 = vunpack.c.l.b16 %v5135
        %v5395 = vunpack.c.h.b16 %v5135
        %v5396 = vunpack.c.l.b16 %v5136
        %v5397 = vunpack.c.l.b16 %v5137
        %v5398 = vunpack.c.h.b16 %v5137
        %v5399 = vunpack.c.l.b16 %v5138
        %v5400 = vunpack.c.l.b16 %v5139
        %v5401 = vunpack.c.h.b16 %v5139
        %v5402 = vunpack.c.l.b16 %v5140
        %v5403 = vunpack.c.l.b16 %v5141
        %v5404 = vunpack.c.h.b16 %v5141
        %v5405 = vunpack.c.l.b16 %v5142
        %v5406 = vunpack.c.l.b16 %v5143
        %v5407 = vunpack.c.h.b16 %v5143
        %v5408 = vunpack.c.l.b16 %v5144
        %v5409 = vunpack.c.l.b16 %v5145
        %v5410 = vunpack.c.h.b16 %v5145
        %v5411 = vunpack.c.l.b16 %v5146
        %v5412 = vunpack.c.l.b16 %v5147
        %v5413 = vunpack.c.h.b16 %v5147
        %v5414 = vunpack.c.l.b16 %v5148
        %v5415 = vunpack.c.l.b16 %v5149
        %v5416 = vunpack.c.h.b16 %v5149
        %v5417 = vunpack.c.l.b16 %v5150
        %v5418 = vunpack.c.l.b16 %v5151
        %v5419 = vunpack.c.h.b16 %v5151
        %v5420 = vunpack.c.l.b16 %v5152
        %v5421 = vunpack.c.l.b16 %v5153
        %v5422 = vunpack.c.h.b16 %v5153
        %v5423 = vunpack.c.l.b16 %v5154
        %v5424 = vunpack.c.l.b16 %v5155
        %v5425 = vunpack.c.h.b16 %v5155
        %v5426 = vunpack.c.l.b16 %v5156
        %v5427 = vunpack.c.l.b16 %v5157
        %v5428 = vunpack.c.h.b16 %v5157
        %v5429 = vunpack.c.l.b16 %v5158
        %v5430 = vunpack.c.l.b16 %v5159
        %v5431 = vunpack.c.h.b16 %v5159
        %v5432 = vunpack.c.l.b16 %v5160
        %v5433 = vunpack.c.l.b16 %v5161
        %v5434 = vunpack.c.h.b16 %v5161
        %v5435 = vunpack.c.l.b16 %v5162
        %v5436 = vunpack.c.l.b16 %v5163
        %v5437 = vunpack.c.h.b16 %v5163
        %v5438 = vunpack.c.l.b16 %v5164
        %v5439 = vunpack.c.l.b16 %v5165
        %v5440 = vunpack.c.h.b16 %v5165
        %v5441 = vunpack.c.l.b16 %v5166
        %v5442 = vunpack.c.l.b16 %v5167
        %v5443 = vunpack.c.h.b16 %v5167
        %v5444 = vunpack.c.l.b16 %v5168
        %v5445 = vunpack.c.l.b16 %v5169
        %v5446 = vunpack.c.h.b16 %v5169
        %v5447 = vunpack.c.l.b16 %v5170
        %v5448 = vunpack.c.l.b16 %v5171
        %v5449 = vunpack.c.h.b16 %v5171
        %v5450 = vunpack.c.l.b16 %v5172
        %v5451 = vunpack.c.l.b16 %v5173
        %v5452 = vunpack.c.h.b16 %v5173
        %v5453 = vunpack.c.l.b16 %v5174
        %v5454 = vunpack.c.l.b16 %v5175
        %v5455 = vunpack.c.h.b16 %v5175
        %v5456 = vunpack.c.l.b16 %v5176
        %v5457 = vunpack.c.l.b16 %v5177
        %v5458 = vunpack.c.h.b16 %v5177
        %v5459 = vunpack.c.l.b16 %v5178
        %v5460 = vunpack.c.l.b16 %v5179
        %v5461 = vunpack.c.h.b16 %v5179
        %v5462 = vunpack.c.l.b16 %v5180
        %v5463 = vunpack.c.l.b16 %v5181
        %v5464 = vunpack.c.h.b16 %v5181
        %v5465 = vunpack.c.l.b16 %v5182
        %v5466 = vunpack.c.l.b16 %v5183
        %v5467 = vunpack.c.h.b16 %v5183
        %v5468 = vunpack.c.l.b16 %v5184
        %v5469 = vunpack.c.l.b16 %v5185
        %v5470 = vunpack.c.h.b16 %v5185
        %v5471 = vunpack.c.l.b16 %v5186
        %v5472 = vunpack.c.l.b16 %v5187
        %v5473 = vunpack.c.h.b16 %v5187
        %v5474 = vunpack.c.l.b16 %v5188
        %v5475 = vunpack.c.l.b16 %v5189
        %v5476 = vunpack.c.h.b16 %v5189
        %v5477 = vunpack.c.l.b16 %v5190
        %v5478 = vunpack.c.l.b16 %v5191
        %v5479 = vunpack.c.h.b16 %v5191
        %v5480 = vunpack.c.l.b16 %v5192
        %v5481 = vunpack.c.l.b16 %v5193
        %v5482 = vunpack.c.h.b16 %v5193
        %v5483 = vunpack.c.l.b16 %v5194
        %v5484 = vunpack.c.l.b16 %v5195
        %v5485 = vunpack.c.h.b16 %v5195
        %v5486 = vunpack.c.l.b16 %v5196
        %v5487 = vunpack.c.l.b16 %v5197
        %v5488 = vunpack.c.h.b16 %v5197
        %v5489 = vunpack.c.l.b16 %v5198
        %v5490 = vpack.c.b16 %v5337, %v5334
        %v5491 = vpack.c.b16 %v5338, %v5335
        %v5492 = vpack.c.b16 %v5339, %v5336
        %v5493 = vpack.c.b16 %v5343, %v5340
        %v5494 = vpack.c.b16 %v5344, %v5341
        %v5495 = vpack.c.b16 %v5345, %v5342
        %v5496 = vpack.c.b16 %v5349, %v5346
        %v5497 = vpack.c.b16 %v5350, %v5347
        %v5498 = vpack.c.b16 %v5351, %v5348
        %v5499 = vpack.c.b16 %v5355, %v5352
        %v5500 = vpack.c.b16 %v5356, %v5353
        %v5501 = vpack.c.b16 %v5357, %v5354
        %v5502 = vpack.c.b16 %v5361, %v5358
        %v5503 = vpack.c.b16 %v5362, %v5359
        %v5504 = vpack.c.b16 %v5363, %v5360
        %v5505 = vpack.c.b16 %v5367, %v5364
        %v5506 = vpack.c.b16 %v5368, %v5365
        %v5507 = vpack.c.b16 %v5369, %v5366
        %v5508 = vpack.c.b16 %v5373, %v5370
        %v5509 = vpack.c.b16 %v5374, %v5371
        %v5510 = vpack.c.b16 %v5375, %v5372
        %v5511 = vpack.c.b16 %v5379, %v5376
        %v5512 = vpack.c.b16 %v5380, %v5377
        %v5513 = vpack.c.b16 %v5381, %v5378
        %v5514 = vpack.c.b16 %v5385, %v5382
        %v5515 = vpack.c.b16 %v5386, %v5383
        %v5516 = vpack.c.b16 %v5387, %v5384
        %v5517 = vpack.c.b16 %v5391, %v5388
        %v5518 = vpack.c.b16 %v5392, %v5389
        %v5519 = vpack.c.b16 %v5393, %v5390
        %v5520 = vpack.c.b16 %v5397, %v5394
        %v5521 = vpack.c.b16 %v5398, %v5395
        %v5522 = vpack.c.b16 %v5399, %v5396
        %v5523 = vpack.c.b16 %v5403, %v5400
        %v5524 = vpack.c.b16 %v5404, %v5401
        %v5525 = vpack.c.b16 %v5405, %v5402
        %v5526 = vpack.c.b16 %v5409, %v5406
        %v5527 = vpack.c.b16 %v5410, %v5407
        %v5528 = vpack.c.b16 %v5411, %v5408
        %v5529 = vpack.c.b16 %v5415, %v5412
        %v5530 = vpack.c.b16 %v5416, %v5413
        %v5531 = vpack.c.b16 %v5417, %v5414
        %v5532 = vpack.c.b16 %v5421, %v5418
        %v5533 = vpack.c.b16 %v5422, %v5419
        %v5534 = vpack.c.b16 %v5423, %v5420
        %v5535 = vpack.c.b16 %v5427, %v5424
        %v5536 = vpack.c.b16 %v5428, %v5425
        %v5537 = vpack.c.b16 %v5429, %v5426
        %v5538 = vpack.c.b16 %v5433, %v5430
        %v5539 = vpack.c.b16 %v5434, %v5431
        %v5540 = vpack.c.b16 %v5435, %v5432
        %v5541 = vpack.c.b16 %v5439, %v5436
        %v5542 = vpack.c.b16 %v5440, %v5437
        %v5543 = vpack.c.b16 %v5441, %v5438
        %v5544 = vpack.c.b16 %v5445, %v5442
        %v5545 = vpack.c.b16 %v5446, %v5443
        %v5546 = vpack.c.b16 %v5447, %v5444
        %v5547 = vpack.c.b16 %v5451, %v5448
        %v5548 = vpack.c.b16 %v5452, %v5449
        %v5549 = vpack.c.b16 %v5453, %v5450
        %v5550 = vpack.c.b16 %v5457, %v5454
        %v5551 = vpack.c.b16 %v5458, %v5455
        %v5552 = vpack.c.b16 %v5459, %v5456
        %v5553 = vpack.c.b16 %v5463, %v5460
        %v5554 = vpack.c.b16 %v5464, %v5461
        %v5555 = vpack.c.b16 %v5465, %v5462
        %v5556 = vpack.c.b16 %v5469, %v5466
        %v5557 = vpack.c.b16 %v5470, %v5467
        %v5558 = vpack.c.b16 %v5471, %v5468
        %v5559 = vpack.c.b16 %v5475, %v5472
        %v5560 = vpack.c.b16 %v5476, %v5473
        %v5561 = vpack.c.b16 %v5477, %v5474
        %v5562 = vpack.c.b16 %v5481, %v5478
        %v5563 = vpack.c.b16 %v5482, %v5479
        %v5564 = vpack.c.b16 %v5483, %v5480
        %v5565 = vpack.c.b16 %v5487, %v5484
        %v5566 = vpack.c.b16 %v5488, %v5485
        %v5567 = vpack.c.b16 %v5489, %v5486
        %v5647 = vsel %vm4855, %v5226, 0
        %5649 = vmatprep.subr.bf16.mxu0 %v5512
        %5650 = vmatpush1.bf16.msra.mxu0 %v5511
        %5651 = vmatprep.subr.bf16.mxu0 %v5509
        %5652 = vmatpush1.bf16.msra.mxu0 %v5508
        %5653 = vmatprep.subr.bf16.mxu0 %v5506
        %5654 = vmatpush1.bf16.msra.mxu0 %v5505
        %5655 = vmatprep.subr.bf16.mxu0 %v5503
        %5656 = vmatpush1.bf16.msra.mxu0 %v5502
        %5657 = vmatprep.subr.bf16.mxu0 %v5500
        %5658 = vmatpush1.bf16.msra.mxu0 %v5499
        %5659 = vmatprep.subr.bf16.mxu0 %v5497
        %5660 = vmatpush1.bf16.msra.mxu0 %v5496
        %5661 = vmatprep.subr.bf16.mxu0 %v5494
        %5662 = vmatpush1.bf16.msra.mxu0 %v5493
        %5663 = vmatprep.subr.bf16.mxu0 %v5491
        %5664 = vmatpush1.bf16.msra.mxu0 %v5490
        %5665 = vmatprep.subr.bf16.mxu0 %v5536
        %5666 = vmatpush2.bf16.msra.mxu0 %v5535
        %5667 = vmatprep.subr.bf16.mxu0 %v5533
        %5668 = vmatpush2.bf16.msra.mxu0 %v5532
        %5669 = vmatprep.subr.bf16.mxu0 %v5530
        %5670 = vmatpush2.bf16.msra.mxu0 %v5529
        %5671 = vmatprep.subr.bf16.mxu0 %v5527
        %5672 = vmatpush2.bf16.msra.mxu0 %v5526
        %5673 = vmatprep.subr.bf16.mxu0 %v5524
        %5674 = vmatpush2.bf16.msra.mxu0 %v5523
        %5675 = vmatprep.subr.bf16.mxu0 %v5521
        %5676 = vmatpush2.bf16.msra.mxu0 %v5520
        %5677 = vmatprep.subr.bf16.mxu0 %v5518
        %5678 = vmatpush2.bf16.msra.mxu0 %v5517
        %5679 = vmatprep.subr.bf16.mxu0 %v5515
        %5680 = vmatpush2.bf16.msra.mxu0 %v5514
        %5681 = vmatprep.mubr.bf16.mxu0 %v5212
        %5682 = vmatmul.mubr.bf16.gmra.mxu0 %v5205
        %v5683 = vpop.f32.mrf.mxu0
        %v5684 = vadd.f32 0.0, %v5683
        %v5685 = vpop.f32.mrf.mxu0
        %v5686 = vadd.f32 0.0, %v5685
        %v5687 = vpop.f32.mrf.mxu0
        %v5688 = vadd.f32 0.0, %v5687
        %v5689 = vpop.f32.mrf.mxu0
        %v5690 = vadd.f32 0.0, %v5689
        %5691 = vdwg.mxu0
        %5692 = vmatprep.subr.bf16.mxu0 %v5560
        %5693 = vmatpush1.bf16.msra.mxu0 %v5559
        %5694 = vmatprep.subr.bf16.mxu0 %v5557
        %5695 = vmatpush1.bf16.msra.mxu0 %v5556
        %5696 = vmatprep.subr.bf16.mxu0 %v5554
        %5697 = vmatpush1.bf16.msra.mxu0 %v5553
        %5698 = vmatprep.subr.bf16.mxu0 %v5551
        %5699 = vmatpush1.bf16.msra.mxu0 %v5550
        %5700 = vmatprep.subr.bf16.mxu0 %v5548
        %5701 = vmatpush1.bf16.msra.mxu0 %v5547
        %5702 = vmatprep.subr.bf16.mxu0 %v5545
        %5703 = vmatpush1.bf16.msra.mxu0 %v5544
        %5704 = vmatprep.subr.bf16.mxu0 %v5542
        %5705 = vmatpush1.bf16.msra.mxu0 %v5541
        %5706 = vmatprep.subr.bf16.mxu0 %v5539
        %5707 = vmatpush1.bf16.msra.mxu0 %v5538
        %5708 = vmatprep.subr.bf16.mxu0 0
        %5709 = vmatpush2.bf16.msra.mxu0 0
        %5710 = vmatprep.subr.bf16.mxu0 0
        %5711 = vmatpush2.bf16.msra.mxu0 0
        %5712 = vmatprep.subr.bf16.mxu0 0
        %5713 = vmatpush2.bf16.msra.mxu0 0
        %5714 = vmatprep.subr.bf16.mxu0 0
        %5715 = vmatpush2.bf16.msra.mxu0 0
        %5716 = vmatprep.subr.bf16.mxu0 0
        %5717 = vmatpush2.bf16.msra.mxu0 0
        %5718 = vmatprep.subr.bf16.mxu0 0
        %5719 = vmatpush2.bf16.msra.mxu0 0
        %5720 = vmatprep.subr.bf16.mxu0 %v5566
        %5721 = vmatpush2.bf16.msra.mxu0 %v5565
        %5722 = vmatprep.subr.bf16.mxu0 %v5563
        %5723 = vmatpush2.bf16.msra.mxu0 %v5562
        %5724 = vmatprep.mubr.bf16.mxu0 %v5647
        %5725 = vmatmul.mubr.bf16.gmra.mxu0 %v5219
        %v5726 = vpop.f32.mrf.mxu0
        %v5727 = vadd.f32 %v5684, %v5726
        %v5728 = vpop.f32.mrf.mxu0
        %v5729 = vadd.f32 %v5686, %v5728
        %v5730 = vpop.f32.mrf.mxu0
        %v5731 = vadd.f32 %v5688, %v5730
        %v5732 = vpop.f32.mrf.mxu0
        %v5733 = vadd.f32 %v5690, %v5732
        %5734 = vdwg.mxu0
        %5735 = vmatprep.subr.bf16.mxu0 0
        %5736 = vmatpush1.bf16.msra.mxu0 %v5513
        %5737 = vmatprep.subr.bf16.mxu0 0
        %5738 = vmatpush1.bf16.msra.mxu0 %v5510
        %5739 = vmatprep.subr.bf16.mxu0 0
        %5740 = vmatpush1.bf16.msra.mxu0 %v5507
        %5741 = vmatprep.subr.bf16.mxu0 0
        %5742 = vmatpush1.bf16.msra.mxu0 %v5504
        %5743 = vmatprep.subr.bf16.mxu0 0
        %5744 = vmatpush1.bf16.msra.mxu0 %v5501
        %5745 = vmatprep.subr.bf16.mxu0 0
        %5746 = vmatpush1.bf16.msra.mxu0 %v5498
        %5747 = vmatprep.subr.bf16.mxu0 0
        %5748 = vmatpush1.bf16.msra.mxu0 %v5495
        %5749 = vmatprep.subr.bf16.mxu0 0
        %5750 = vmatpush1.bf16.msra.mxu0 %v5492
        %5751 = vmatprep.subr.bf16.mxu0 0
        %5752 = vmatpush2.bf16.msra.mxu0 %v5537
        %5753 = vmatprep.subr.bf16.mxu0 0
        %5754 = vmatpush2.bf16.msra.mxu0 %v5534
        %5755 = vmatprep.subr.bf16.mxu0 0
        %5756 = vmatpush2.bf16.msra.mxu0 %v5531
        %5757 = vmatprep.subr.bf16.mxu0 0
        %5758 = vmatpush2.bf16.msra.mxu0 %v5528
        %5759 = vmatprep.subr.bf16.mxu0 0
        %5760 = vmatpush2.bf16.msra.mxu0 %v5525
        %5761 = vmatprep.subr.bf16.mxu0 0
        %5762 = vmatpush2.bf16.msra.mxu0 %v5522
        %5763 = vmatprep.subr.bf16.mxu0 0
        %5764 = vmatpush2.bf16.msra.mxu0 %v5519
        %5765 = vmatprep.subr.bf16.mxu0 0
        %5766 = vmatpush2.bf16.msra.mxu0 %v5516
        %5767 = vmatprep.mubr.bf16.mxu0 %v5212
        %5768 = vmatmul.mubr.bf16.gmra.mxu0 %v5205
        %v5769 = vpop.f32.mrf.mxu0
        %v5770 = vadd.f32 0.0, %v5769
        %v5771 = vpop.f32.mrf.mxu0
        %v5772 = vpop.f32.mrf.mxu0
        %v5773 = vadd.f32 0.0, %v5772
        %v5774 = vpop.f32.mrf.mxu0
        %5775 = vdwg.mxu0
        %5776 = vmatprep.subr.bf16.mxu0 0
        %5777 = vmatpush1.bf16.msra.mxu0 %v5561
        %5778 = vmatprep.subr.bf16.mxu0 0
        %5779 = vmatpush1.bf16.msra.mxu0 %v5558
        %5780 = vmatprep.subr.bf16.mxu0 0
        %5781 = vmatpush1.bf16.msra.mxu0 %v5555
        %5782 = vmatprep.subr.bf16.mxu0 0
        %5783 = vmatpush1.bf16.msra.mxu0 %v5552
        %5784 = vmatprep.subr.bf16.mxu0 0
        %5785 = vmatpush1.bf16.msra.mxu0 %v5549
        %5786 = vmatprep.subr.bf16.mxu0 0
        %5787 = vmatpush1.bf16.msra.mxu0 %v5546
        %5788 = vmatprep.subr.bf16.mxu0 0
        %5789 = vmatpush1.bf16.msra.mxu0 %v5543
        %5790 = vmatprep.subr.bf16.mxu0 0
        %5791 = vmatpush1.bf16.msra.mxu0 %v5540
        %5792 = vmatprep.subr.bf16.mxu0 0
        %5793 = vmatpush2.bf16.msra.mxu0 0
        %5794 = vmatprep.subr.bf16.mxu0 0
        %5795 = vmatpush2.bf16.msra.mxu0 0
        %5796 = vmatprep.subr.bf16.mxu0 0
        %5797 = vmatpush2.bf16.msra.mxu0 0
        %5798 = vmatprep.subr.bf16.mxu0 0
        %5799 = vmatpush2.bf16.msra.mxu0 0
        %5800 = vmatprep.subr.bf16.mxu0 0
        %5801 = vmatpush2.bf16.msra.mxu0 0
        %5802 = vmatprep.subr.bf16.mxu0 0
        %5803 = vmatpush2.bf16.msra.mxu0 0
        %5804 = vmatprep.subr.bf16.mxu0 0
        %5805 = vmatpush2.bf16.msra.mxu0 %v5567
        %5806 = vmatprep.subr.bf16.mxu0 0
        %5807 = vmatpush2.bf16.msra.mxu0 %v5564
        %5808 = vmatprep.mubr.bf16.mxu0 %v5647
        %5809 = vmatmul.mubr.bf16.gmra.mxu0 %v5219
        %v5810 = vpop.f32.mrf.mxu0
        %v5811 = vadd.f32 %v5770, %v5810
        %v5812 = vpop.f32.mrf.mxu0
        %v5813 = vpop.f32.mrf.mxu0
        %v5814 = vadd.f32 %v5773, %v5813
        %v5815 = vpop.f32.mrf.mxu0
        %5816 = vdwg.mxu0
        %v5921 = vunpack.c.l.b16 %v4874
        %v5922 = vunpack.c.h.b16 %v4874
        %v5923 = vunpack.c.l.b16 %v4875
        %v5924 = vunpack.c.l.b16 %v4876
        %v5925 = vunpack.c.h.b16 %v4876
        %v5926 = vunpack.c.l.b16 %v4877
        %v5927 = vunpack.c.l.b16 %v4878
        %v5928 = vunpack.c.h.b16 %v4878
        %v5929 = vunpack.c.l.b16 %v4879
        %v5930 = vunpack.c.l.b16 %v4880
        %v5931 = vunpack.c.h.b16 %v4880
        %v5932 = vunpack.c.l.b16 %v4881
        %v5933 = vunpack.c.l.b16 %v4882
        %v5934 = vunpack.c.h.b16 %v4882
        %v5935 = vunpack.c.l.b16 %v4883
        %v5936 = vunpack.c.l.b16 %v4884
        %v5937 = vunpack.c.h.b16 %v4884
        %v5938 = vunpack.c.l.b16 %v4885
        %v5939 = vunpack.c.l.b16 %v4886
        %v5940 = vunpack.c.h.b16 %v4886
        %v5941 = vunpack.c.l.b16 %v4887
        %v5942 = vunpack.c.l.b16 %v4888
        %v5943 = vunpack.c.h.b16 %v4888
        %v5944 = vunpack.c.l.b16 %v4889
        %v5945 = vunpack.c.l.b16 %v4890
        %v5946 = vunpack.c.h.b16 %v4890
        %v5947 = vunpack.c.l.b16 %v4891
        %v5948 = vunpack.c.l.b16 %v4892
        %v5949 = vunpack.c.h.b16 %v4892
        %v5950 = vunpack.c.l.b16 %v4893
        %v5951 = vunpack.c.l.b16 %v4894
        %v5952 = vunpack.c.h.b16 %v4894
        %v5953 = vunpack.c.l.b16 %v4895
        %v5954 = vunpack.c.l.b16 %v4896
        %v5955 = vunpack.c.h.b16 %v4896
        %v5956 = vunpack.c.l.b16 %v4897
        %v5957 = vunpack.c.l.b16 %v4898
        %v5958 = vunpack.c.h.b16 %v4898
        %v5959 = vunpack.c.l.b16 %v4899
        %v5960 = vunpack.c.l.b16 %v4900
        %v5961 = vunpack.c.h.b16 %v4900
        %v5962 = vunpack.c.l.b16 %v4901
        %v5963 = vunpack.c.l.b16 %v4902
        %v5964 = vunpack.c.h.b16 %v4902
        %v5965 = vunpack.c.l.b16 %v4903
        %v5966 = vunpack.c.l.b16 %v4904
        %v5967 = vunpack.c.h.b16 %v4904
        %v5968 = vunpack.c.l.b16 %v4905
        %v5969 = vunpack.c.l.b16 %v4906
        %v5970 = vunpack.c.h.b16 %v4906
        %v5971 = vunpack.c.l.b16 %v4907
        %v5972 = vunpack.c.l.b16 %v4908
        %v5973 = vunpack.c.h.b16 %v4908
        %v5974 = vunpack.c.l.b16 %v4909
        %v5975 = vunpack.c.l.b16 %v4910
        %v5976 = vunpack.c.h.b16 %v4910
        %v5977 = vunpack.c.l.b16 %v4911
        %v5978 = vunpack.c.l.b16 %v4912
        %v5979 = vunpack.c.h.b16 %v4912
        %v5980 = vunpack.c.l.b16 %v4913
        %v5981 = vunpack.c.l.b16 %v4914
        %v5982 = vunpack.c.h.b16 %v4914
        %v5983 = vunpack.c.l.b16 %v4915
        %v5984 = vunpack.c.l.b16 %v4916
        %v5985 = vunpack.c.h.b16 %v4916
        %v5986 = vunpack.c.l.b16 %v4917
        %v5987 = vunpack.c.l.b16 %v4918
        %v5988 = vunpack.c.h.b16 %v4918
        %v5989 = vunpack.c.l.b16 %v4919
        %v5990 = vunpack.c.l.b16 %v4920
        %v5991 = vunpack.c.h.b16 %v4920
        %v5992 = vunpack.c.l.b16 %v4921
        %v5993 = vunpack.c.l.b16 %v4922
        %v5994 = vunpack.c.h.b16 %v4922
        %v5995 = vunpack.c.l.b16 %v4923
        %v5996 = vunpack.c.l.b16 %v4924
        %v5997 = vunpack.c.h.b16 %v4924
        %v5998 = vunpack.c.l.b16 %v4925
        %v5999 = vunpack.c.l.b16 %v4926
        %v6000 = vunpack.c.h.b16 %v4926
        %v6001 = vunpack.c.l.b16 %v4927
        %v6002 = vunpack.c.l.b16 %v4928
        %v6003 = vunpack.c.h.b16 %v4928
        %v6004 = vunpack.c.l.b16 %v4929
        %v6005 = vunpack.c.l.b16 %v4930
        %v6006 = vunpack.c.h.b16 %v4930
        %v6007 = vunpack.c.l.b16 %v4931
        %v6008 = vunpack.c.l.b16 %v4932
        %v6009 = vunpack.c.h.b16 %v4932
        %v6010 = vunpack.c.l.b16 %v4933
        %v6011 = vunpack.c.l.b16 %v4934
        %v6012 = vunpack.c.h.b16 %v4934
        %v6013 = vunpack.c.l.b16 %v4935
        %v6014 = vunpack.c.l.b16 %v4936
        %v6015 = vunpack.c.h.b16 %v4936
        %v6016 = vunpack.c.l.b16 %v4937
        %v6017 = vunpack.c.l.b16 %v4938
        %v6018 = vunpack.c.h.b16 %v4938
        %v6019 = vunpack.c.l.b16 %v4939
        %v6020 = vunpack.c.l.b16 %v4940
        %v6021 = vunpack.c.h.b16 %v4940
        %v6022 = vunpack.c.l.b16 %v4941
        %v6023 = vunpack.c.l.b16 %v4942
        %v6024 = vunpack.c.h.b16 %v4942
        %v6025 = vunpack.c.l.b16 %v4943
        %v6026 = vunpack.c.l.b16 %v4944
        %v6027 = vunpack.c.h.b16 %v4944
        %v6028 = vunpack.c.l.b16 %v4945
        %v6029 = vunpack.c.l.b16 %v4946
        %v6030 = vunpack.c.h.b16 %v4946
        %v6031 = vunpack.c.l.b16 %v4947
        %v6032 = vunpack.c.l.b16 %v4948
        %v6033 = vunpack.c.h.b16 %v4948
        %v6034 = vunpack.c.l.b16 %v4949
        %v6035 = vunpack.c.l.b16 %v4950
        %v6036 = vunpack.c.h.b16 %v4950
        %v6037 = vunpack.c.l.b16 %v4951
        %v6038 = vunpack.c.l.b16 %v4952
        %v6039 = vunpack.c.h.b16 %v4952
        %v6040 = vunpack.c.l.b16 %v4953
        %v6041 = vunpack.c.l.b16 %v4954
        %v6042 = vunpack.c.h.b16 %v4954
        %v6043 = vunpack.c.l.b16 %v4955
        %v6044 = vunpack.c.l.b16 %v4956
        %v6045 = vunpack.c.h.b16 %v4956
        %v6046 = vunpack.c.l.b16 %v4957
        %v6047 = vunpack.c.l.b16 %v4958
        %v6048 = vunpack.c.h.b16 %v4958
        %v6049 = vunpack.c.l.b16 %v4959
        %v6050 = vunpack.c.l.b16 %v4960
        %v6051 = vunpack.c.h.b16 %v4960
        %v6052 = vunpack.c.l.b16 %v4961
        %v6053 = vunpack.c.l.b16 %v4962
        %v6054 = vunpack.c.h.b16 %v4962
        %v6055 = vunpack.c.l.b16 %v4963
        %v6056 = vunpack.c.l.b16 %v4964
        %v6057 = vunpack.c.h.b16 %v4964
        %v6058 = vunpack.c.l.b16 %v4965
        %v6059 = vunpack.c.l.b16 %v4966
        %v6060 = vunpack.c.h.b16 %v4966
        %v6061 = vunpack.c.l.b16 %v4967
        %v6062 = vunpack.c.l.b16 %v4968
        %v6063 = vunpack.c.h.b16 %v4968
        %v6064 = vunpack.c.l.b16 %v4969
        %v6065 = vunpack.c.l.b16 %v4970
        %v6066 = vunpack.c.h.b16 %v4970
        %v6067 = vunpack.c.l.b16 %v4971
        %v6068 = vunpack.c.l.b16 %v4972
        %v6069 = vunpack.c.h.b16 %v4972
        %v6070 = vunpack.c.l.b16 %v4973
        %v6071 = vunpack.c.l.b16 %v4974
        %v6072 = vunpack.c.h.b16 %v4974
        %v6073 = vunpack.c.l.b16 %v4975
        %v6074 = vunpack.c.l.b16 %v4976
        %v6075 = vunpack.c.h.b16 %v4976
        %v6076 = vunpack.c.l.b16 %v4977
        %v6077 = vpack.c.b16 %v5924, %v5921
        %v6078 = vpack.c.b16 %v5925, %v5922
        %v6079 = vpack.c.b16 %v5926, %v5923
        %v6080 = vpack.c.b16 %v5930, %v5927
        %v6081 = vpack.c.b16 %v5931, %v5928
        %v6082 = vpack.c.b16 %v5932, %v5929
        %v6083 = vpack.c.b16 %v5936, %v5933
        %v6084 = vpack.c.b16 %v5937, %v5934
        %v6085 = vpack.c.b16 %v5938, %v5935
        %v6086 = vpack.c.b16 %v5942, %v5939
        %v6087 = vpack.c.b16 %v5943, %v5940
        %v6088 = vpack.c.b16 %v5944, %v5941
        %v6089 = vpack.c.b16 %v5948, %v5945
        %v6090 = vpack.c.b16 %v5949, %v5946
        %v6091 = vpack.c.b16 %v5950, %v5947
        %v6092 = vpack.c.b16 %v5954, %v5951
        %v6093 = vpack.c.b16 %v5955, %v5952
        %v6094 = vpack.c.b16 %v5956, %v5953
        %v6095 = vpack.c.b16 %v5960, %v5957
        %v6096 = vpack.c.b16 %v5961, %v5958
        %v6097 = vpack.c.b16 %v5962, %v5959
        %v6098 = vpack.c.b16 %v5966, %v5963
        %v6099 = vpack.c.b16 %v5967, %v5964
        %v6100 = vpack.c.b16 %v5968, %v5965
        %v6101 = vpack.c.b16 %v5972, %v5969
        %v6102 = vpack.c.b16 %v5973, %v5970
        %v6103 = vpack.c.b16 %v5974, %v5971
        %v6104 = vpack.c.b16 %v5978, %v5975
        %v6105 = vpack.c.b16 %v5979, %v5976
        %v6106 = vpack.c.b16 %v5980, %v5977
        %v6107 = vpack.c.b16 %v5984, %v5981
        %v6108 = vpack.c.b16 %v5985, %v5982
        %v6109 = vpack.c.b16 %v5986, %v5983
        %v6110 = vpack.c.b16 %v5990, %v5987
        %v6111 = vpack.c.b16 %v5991, %v5988
        %v6112 = vpack.c.b16 %v5992, %v5989
        %v6113 = vpack.c.b16 %v5996, %v5993
        %v6114 = vpack.c.b16 %v5997, %v5994
        %v6115 = vpack.c.b16 %v5998, %v5995
        %v6116 = vpack.c.b16 %v6002, %v5999
        %v6117 = vpack.c.b16 %v6003, %v6000
        %v6118 = vpack.c.b16 %v6004, %v6001
        %v6119 = vpack.c.b16 %v6008, %v6005
        %v6120 = vpack.c.b16 %v6009, %v6006
        %v6121 = vpack.c.b16 %v6010, %v6007
        %v6122 = vpack.c.b16 %v6014, %v6011
        %v6123 = vpack.c.b16 %v6015, %v6012
        %v6124 = vpack.c.b16 %v6016, %v6013
        %v6125 = vpack.c.b16 %v6020, %v6017
        %v6126 = vpack.c.b16 %v6021, %v6018
        %v6127 = vpack.c.b16 %v6022, %v6019
        %v6128 = vpack.c.b16 %v6026, %v6023
        %v6129 = vpack.c.b16 %v6027, %v6024
        %v6130 = vpack.c.b16 %v6028, %v6025
        %v6131 = vpack.c.b16 %v6032, %v6029
        %v6132 = vpack.c.b16 %v6033, %v6030
        %v6133 = vpack.c.b16 %v6034, %v6031
        %v6134 = vpack.c.b16 %v6038, %v6035
        %v6135 = vpack.c.b16 %v6039, %v6036
        %v6136 = vpack.c.b16 %v6040, %v6037
        %v6137 = vpack.c.b16 %v6044, %v6041
        %v6138 = vpack.c.b16 %v6045, %v6042
        %v6139 = vpack.c.b16 %v6046, %v6043
        %v6140 = vpack.c.b16 %v6050, %v6047
        %v6141 = vpack.c.b16 %v6051, %v6048
        %v6142 = vpack.c.b16 %v6052, %v6049
        %v6143 = vpack.c.b16 %v6056, %v6053
        %v6144 = vpack.c.b16 %v6057, %v6054
        %v6145 = vpack.c.b16 %v6058, %v6055
        %v6146 = vpack.c.b16 %v6062, %v6059
        %v6147 = vpack.c.b16 %v6063, %v6060
        %v6148 = vpack.c.b16 %v6064, %v6061
        %v6149 = vpack.c.b16 %v6068, %v6065
        %v6150 = vpack.c.b16 %v6069, %v6066
        %v6151 = vpack.c.b16 %v6070, %v6067
        %v6152 = vpack.c.b16 %v6074, %v6071
        %v6153 = vpack.c.b16 %v6075, %v6072
        %v6154 = vpack.c.b16 %v6076, %v6073
        %v6234 = vsel %vm4855, %v4873, 0
        %6236 = vmatprep.subr.bf16.mxu0 %v6099
        %6237 = vmatpush1.bf16.msra.mxu0 %v6098
        %6238 = vmatprep.subr.bf16.mxu0 %v6096
        %6239 = vmatpush1.bf16.msra.mxu0 %v6095
        %6240 = vmatprep.subr.bf16.mxu0 %v6093
        %6241 = vmatpush1.bf16.msra.mxu0 %v6092
        %6242 = vmatprep.subr.bf16.mxu0 %v6090
        %6243 = vmatpush1.bf16.msra.mxu0 %v6089
        %6244 = vmatprep.subr.bf16.mxu0 %v6087
        %6245 = vmatpush1.bf16.msra.mxu0 %v6086
        %6246 = vmatprep.subr.bf16.mxu0 %v6084
        %6247 = vmatpush1.bf16.msra.mxu0 %v6083
        %6248 = vmatprep.subr.bf16.mxu0 %v6081
        %6249 = vmatpush1.bf16.msra.mxu0 %v6080
        %6250 = vmatprep.subr.bf16.mxu0 %v6078
        %6251 = vmatpush1.bf16.msra.mxu0 %v6077
        %6252 = vmatprep.subr.bf16.mxu0 %v6123
        %6253 = vmatpush2.bf16.msra.mxu0 %v6122
        %6254 = vmatprep.subr.bf16.mxu0 %v6120
        %6255 = vmatpush2.bf16.msra.mxu0 %v6119
        %6256 = vmatprep.subr.bf16.mxu0 %v6117
        %6257 = vmatpush2.bf16.msra.mxu0 %v6116
        %6258 = vmatprep.subr.bf16.mxu0 %v6114
        %6259 = vmatpush2.bf16.msra.mxu0 %v6113
        %6260 = vmatprep.subr.bf16.mxu0 %v6111
        %6261 = vmatpush2.bf16.msra.mxu0 %v6110
        %6262 = vmatprep.subr.bf16.mxu0 %v6108
        %6263 = vmatpush2.bf16.msra.mxu0 %v6107
        %6264 = vmatprep.subr.bf16.mxu0 %v6105
        %6265 = vmatpush2.bf16.msra.mxu0 %v6104
        %6266 = vmatprep.subr.bf16.mxu0 %v6102
        %6267 = vmatpush2.bf16.msra.mxu0 %v6101
        %6268 = vmatprep.mubr.bf16.mxu0 %v4871
        %6269 = vmatmul.mubr.bf16.gmra.mxu0 %v4870
        %v6270 = vpop.f32.mrf.mxu0
        %v6271 = vadd.f32 %v5727, %v6270
        %v6272 = vpop.f32.mrf.mxu0
        %v6273 = vadd.f32 %v5729, %v6272
        %v6274 = vpop.f32.mrf.mxu0
        %v6275 = vadd.f32 %v5731, %v6274
        %v6276 = vpop.f32.mrf.mxu0
        %v6277 = vadd.f32 %v5733, %v6276
        %6278 = vdwg.mxu0
        %6279 = vmatprep.subr.bf16.mxu0 %v6147
        %6280 = vmatpush1.bf16.msra.mxu0 %v6146
        %6281 = vmatprep.subr.bf16.mxu0 %v6144
        %6282 = vmatpush1.bf16.msra.mxu0 %v6143
        %6283 = vmatprep.subr.bf16.mxu0 %v6141
        %6284 = vmatpush1.bf16.msra.mxu0 %v6140
        %6285 = vmatprep.subr.bf16.mxu0 %v6138
        %6286 = vmatpush1.bf16.msra.mxu0 %v6137
        %6287 = vmatprep.subr.bf16.mxu0 %v6135
        %6288 = vmatpush1.bf16.msra.mxu0 %v6134
        %6289 = vmatprep.subr.bf16.mxu0 %v6132
        %6290 = vmatpush1.bf16.msra.mxu0 %v6131
        %6291 = vmatprep.subr.bf16.mxu0 %v6129
        %6292 = vmatpush1.bf16.msra.mxu0 %v6128
        %6293 = vmatprep.subr.bf16.mxu0 %v6126
        %6294 = vmatpush1.bf16.msra.mxu0 %v6125
        %6295 = vmatprep.subr.bf16.mxu0 0
        %6296 = vmatpush2.bf16.msra.mxu0 0
        %6297 = vmatprep.subr.bf16.mxu0 0
        %6298 = vmatpush2.bf16.msra.mxu0 0
        %6299 = vmatprep.subr.bf16.mxu0 0
        %6300 = vmatpush2.bf16.msra.mxu0 0
        %6301 = vmatprep.subr.bf16.mxu0 0
        %6302 = vmatpush2.bf16.msra.mxu0 0
        %6303 = vmatprep.subr.bf16.mxu0 0
        %6304 = vmatpush2.bf16.msra.mxu0 0
        %6305 = vmatprep.subr.bf16.mxu0 0
        %6306 = vmatpush2.bf16.msra.mxu0 0
        %6307 = vmatprep.subr.bf16.mxu0 %v6153
        %6308 = vmatpush2.bf16.msra.mxu0 %v6152
        %6309 = vmatprep.subr.bf16.mxu0 %v6150
        %6310 = vmatpush2.bf16.msra.mxu0 %v6149
        %6311 = vmatprep.mubr.bf16.mxu0 %v6234
        %6312 = vmatmul.mubr.bf16.gmra.mxu0 %v4872
        %v6313 = vpop.f32.mrf.mxu0
        %v6314 = vadd.f32 %v6271, %v6313
        %v6315 = vpop.f32.mrf.mxu0
        %v6316 = vadd.f32 %v6273, %v6315
        %v6317 = vpop.f32.mrf.mxu0
        %v6318 = vadd.f32 %v6275, %v6317
        %v6319 = vpop.f32.mrf.mxu0
        %v6320 = vadd.f32 %v6277, %v6319
        %6321 = vdwg.mxu0
        %6322 = vmatprep.subr.bf16.mxu0 0
        %6323 = vmatpush1.bf16.msra.mxu0 %v6100
        %6324 = vmatprep.subr.bf16.mxu0 0
        %6325 = vmatpush1.bf16.msra.mxu0 %v6097
        %6326 = vmatprep.subr.bf16.mxu0 0
        %6327 = vmatpush1.bf16.msra.mxu0 %v6094
        %6328 = vmatprep.subr.bf16.mxu0 0
        %6329 = vmatpush1.bf16.msra.mxu0 %v6091
        %6330 = vmatprep.subr.bf16.mxu0 0
        %6331 = vmatpush1.bf16.msra.mxu0 %v6088
        %6332 = vmatprep.subr.bf16.mxu0 0
        %6333 = vmatpush1.bf16.msra.mxu0 %v6085
        %6334 = vmatprep.subr.bf16.mxu0 0
        %6335 = vmatpush1.bf16.msra.mxu0 %v6082
        %6336 = vmatprep.subr.bf16.mxu0 0
        %6337 = vmatpush1.bf16.msra.mxu0 %v6079
        %6338 = vmatprep.subr.bf16.mxu0 0
        %6339 = vmatpush2.bf16.msra.mxu0 %v6124
        %6340 = vmatprep.subr.bf16.mxu0 0
        %6341 = vmatpush2.bf16.msra.mxu0 %v6121
        %6342 = vmatprep.subr.bf16.mxu0 0
        %6343 = vmatpush2.bf16.msra.mxu0 %v6118
        %6344 = vmatprep.subr.bf16.mxu0 0
        %6345 = vmatpush2.bf16.msra.mxu0 %v6115
        %6346 = vmatprep.subr.bf16.mxu0 0
        %6347 = vmatpush2.bf16.msra.mxu0 %v6112
        %6348 = vmatprep.subr.bf16.mxu0 0
        %6349 = vmatpush2.bf16.msra.mxu0 %v6109
        %6350 = vmatprep.subr.bf16.mxu0 0
        %6351 = vmatpush2.bf16.msra.mxu0 %v6106
        %6352 = vmatprep.subr.bf16.mxu0 0
        %6353 = vmatpush2.bf16.msra.mxu0 %v6103
        %6354 = vmatprep.mubr.bf16.mxu0 %v4871
        %6355 = vmatmul.mubr.bf16.gmra.mxu0 %v4870
        %v6356 = vpop.f32.mrf.mxu0
        %v6357 = vadd.f32 %v5811, %v6356
        %v6358 = vpop.f32.mrf.mxu0
        %v6359 = vpop.f32.mrf.mxu0
        %v6360 = vadd.f32 %v5814, %v6359
        %v6361 = vpop.f32.mrf.mxu0
        %6362 = vdwg.mxu0
        %6363 = vmatprep.subr.bf16.mxu0 0
        %6364 = vmatpush1.bf16.msra.mxu0 %v6148
        %6365 = vmatprep.subr.bf16.mxu0 0
        %6366 = vmatpush1.bf16.msra.mxu0 %v6145
        %6367 = vmatprep.subr.bf16.mxu0 0
        %6368 = vmatpush1.bf16.msra.mxu0 %v6142
        %6369 = vmatprep.subr.bf16.mxu0 0
        %6370 = vmatpush1.bf16.msra.mxu0 %v6139
        %6371 = vmatprep.subr.bf16.mxu0 0
        %6372 = vmatpush1.bf16.msra.mxu0 %v6136
        %6373 = vmatprep.subr.bf16.mxu0 0
        %6374 = vmatpush1.bf16.msra.mxu0 %v6133
        %6375 = vmatprep.subr.bf16.mxu0 0
        %6376 = vmatpush1.bf16.msra.mxu0 %v6130
        %6377 = vmatprep.subr.bf16.mxu0 0
        %6378 = vmatpush1.bf16.msra.mxu0 %v6127
        %6379 = vmatprep.subr.bf16.mxu0 0
        %6380 = vmatpush2.bf16.msra.mxu0 0
        %6381 = vmatprep.subr.bf16.mxu0 0
        %6382 = vmatpush2.bf16.msra.mxu0 0
        %6383 = vmatprep.subr.bf16.mxu0 0
        %6384 = vmatpush2.bf16.msra.mxu0 0
        %6385 = vmatprep.subr.bf16.mxu0 0
        %6386 = vmatpush2.bf16.msra.mxu0 0
        %6387 = vmatprep.subr.bf16.mxu0 0
        %6388 = vmatpush2.bf16.msra.mxu0 0
        %6389 = vmatprep.subr.bf16.mxu0 0
        %6390 = vmatpush2.bf16.msra.mxu0 0
        %6391 = vmatprep.subr.bf16.mxu0 0
        %6392 = vmatpush2.bf16.msra.mxu0 %v6154
        %6393 = vmatprep.subr.bf16.mxu0 0
        %6394 = vmatpush2.bf16.msra.mxu0 %v6151
        %6395 = vmatprep.mubr.bf16.mxu0 %v6234
        %6396 = vmatmul.mubr.bf16.gmra.mxu0 %v4872
        %v6397 = vpop.f32.mrf.mxu0
        %v6398 = vadd.f32 %v6357, %v6397
        %v6399 = vpop.f32.mrf.mxu0
        %v6400 = vpop.f32.mrf.mxu0
        %v6401 = vadd.f32 %v6360, %v6400
        %v6402 = vpop.f32.mrf.mxu0
        %6403 = vdwg.mxu0
        %s6404 = scalar_lea.vmem [#allocation10], 624
        %v6405 = vld [vmem:[%s6404] sm:$0xff]
        %v6406 = vld [vmem:[%s6404 + $0x8] sm:$0xf]
        %v6407 = vld [vmem:[%s6404 + $0xc] sm:$0xff]
        %v6408 = vld [vmem:[%s6404 + $0x14] sm:$0xf]
        %v6409 = vld [vmem:[%s6404 + $0x18] sm:$0xff]
        %v6410 = vld [vmem:[%s6404 + $0x20] sm:$0xf]
        %v6411 = vld [vmem:[%s6404 + $0x24] sm:$0xff]
        %v6412 = vld [vmem:[%s6404 + $0x2c] sm:$0xf]
        %v6413 = vld [vmem:[%s6404 + $0x30] sm:$0xff]
        %v6414 = vld [vmem:[%s6404 + $0x38] sm:$0xf]
        %v6415 = vld [vmem:[%s6404 + $0x3c] sm:$0xff]
        %v6416 = vld [vmem:[%s6404 + $0x44] sm:$0xf]
        %v6417 = vld [vmem:[%s6404 + $0x48] sm:$0xff]
        %v6418 = vld [vmem:[%s6404 + $0x50] sm:$0xf]
        %v6419 = vld [vmem:[%s6404 + $0x54] sm:$0xff]
        %v6420 = vld [vmem:[%s6404 + $0x5c] sm:$0xf]
        %v6421 = vld [vmem:[%s6404 + $0x60] sm:$0xff]
        %v6422 = vld [vmem:[%s6404 + $0x68] sm:$0xf]
        %v6423 = vld [vmem:[%s6404 + $0x6c] sm:$0xff]
        %v6424 = vld [vmem:[%s6404 + $0x74] sm:$0xf]
        %v6425 = vld [vmem:[%s6404 + $0x78] sm:$0xff]
        %v6426 = vld [vmem:[%s6404 + $0x80] sm:$0xf]
        %v6427 = vld [vmem:[%s6404 + $0x84] sm:$0xff]
        %v6428 = vld [vmem:[%s6404 + $0x8c] sm:$0xf]
        %v6429 = vld [vmem:[%s6404 + $0x90] sm:$0xff]
        %v6430 = vld [vmem:[%s6404 + $0x98] sm:$0xf]
        %v6431 = vld [vmem:[%s6404 + $0x9c] sm:$0xff]
        %v6432 = vld [vmem:[%s6404 + $0xa4] sm:$0xf]
        %v6433 = vld [vmem:[%s6404 + $0xa8] sm:$0xff]
        %v6434 = vld [vmem:[%s6404 + $0xb0] sm:$0xf]
        %v6435 = vld [vmem:[%s6404 + $0xb4] sm:$0xff]
        %v6436 = vld [vmem:[%s6404 + $0xbc] sm:$0xf]
        %v6437 = vld [vmem:[%s6404 + $0xc0] sm:$0xff]
        %v6438 = vld [vmem:[%s6404 + $0xc8] sm:$0xf]
        %v6439 = vld [vmem:[%s6404 + $0xcc] sm:$0xff]
        %v6440 = vld [vmem:[%s6404 + $0xd4] sm:$0xf]
        %v6441 = vld [vmem:[%s6404 + $0xd8] sm:$0xff]
        %v6442 = vld [vmem:[%s6404 + $0xe0] sm:$0xf]
        %v6443 = vld [vmem:[%s6404 + $0xe4] sm:$0xff]
        %v6444 = vld [vmem:[%s6404 + $0xec] sm:$0xf]
        %v6445 = vld [vmem:[%s6404 + $0xf0] sm:$0xff]
        %v6446 = vld [vmem:[%s6404 + $0xf8] sm:$0xf]
        %v6447 = vld [vmem:[%s6404 + $0xfc] sm:$0xff]
        %v6448 = vld [vmem:[%s6404 + $0x104] sm:$0xf]
        %v6449 = vld [vmem:[%s6404 + $0x108] sm:$0xff]
        %v6450 = vld [vmem:[%s6404 + $0x110] sm:$0xf]
        %v6451 = vld [vmem:[%s6404 + $0x114] sm:$0xff]
        %v6452 = vld [vmem:[%s6404 + $0x11c] sm:$0xf]
        %v6453 = vld [vmem:[%s6404 + $0x120] sm:$0xff]
        %v6454 = vld [vmem:[%s6404 + $0x128] sm:$0xf]
        %v6455 = vld [vmem:[%s6404 + $0x12c] sm:$0xff]
        %v6456 = vld [vmem:[%s6404 + $0x134] sm:$0xf]
        %v6457 = vld [vmem:[%s6404 + $0x138] sm:$0xff]
        %v6458 = vld [vmem:[%s6404 + $0x140] sm:$0xf]
        %v6459 = vld [vmem:[%s6404 + $0x144] sm:$0xff]
        %v6460 = vld [vmem:[%s6404 + $0x14c] sm:$0xf]
        %v6461 = vld [vmem:[%s6404 + $0x150] sm:$0xff]
        %v6462 = vld [vmem:[%s6404 + $0x158] sm:$0xf]
        %v6463 = vld [vmem:[%s6404 + $0x15c] sm:$0xff]
        %v6464 = vld [vmem:[%s6404 + $0x164] sm:$0xf]
        %v6465 = vld [vmem:[%s6404 + $0x168] sm:$0xff]
        %v6466 = vld [vmem:[%s6404 + $0x170] sm:$0xf]
        %v6467 = vld [vmem:[%s6404 + $0x174] sm:$0xff]
        %v6468 = vld [vmem:[%s6404 + $0x17c] sm:$0xf]
        %v6469 = vld [vmem:[%s6404 + $0x180] sm:$0xff]
        %v6470 = vld [vmem:[%s6404 + $0x188] sm:$0xf]
        %v6471 = vld [vmem:[%s6404 + $0x18c] sm:$0xff]
        %v6472 = vld [vmem:[%s6404 + $0x194] sm:$0xf]
        %v6473 = vld [vmem:[%s6404 + $0x198] sm:$0xff]
        %v6474 = vld [vmem:[%s6404 + $0x1a0] sm:$0xf]
        %v6475 = vld [vmem:[%s6404 + $0x1a4] sm:$0xff]
        %v6476 = vld [vmem:[%s6404 + $0x1ac] sm:$0xf]
        %v6477 = vld [vmem:[%s6404 + $0x1b0] sm:$0xff]
        %v6478 = vld [vmem:[%s6404 + $0x1b8] sm:$0xf]
        %v6479 = vld [vmem:[%s6404 + $0x1bc] sm:$0xff]
        %v6480 = vld [vmem:[%s6404 + $0x1c4] sm:$0xf]
        %v6481 = vld [vmem:[%s6404 + $0x1c8] sm:$0xff]
        %v6482 = vld [vmem:[%s6404 + $0x1d0] sm:$0xf]
        %v6483 = vld [vmem:[%s6404 + $0x1d4] sm:$0xff]
        %v6484 = vld [vmem:[%s6404 + $0x1dc] sm:$0xf]
        %v6485 = vld [vmem:[%s6404 + $0x1e0] sm:$0xff]
        %v6486 = vld [vmem:[%s6404 + $0x1e8] sm:$0xf]
        %v6487 = vld [vmem:[%s6404 + $0x1ec] sm:$0xff]
        %v6488 = vld [vmem:[%s6404 + $0x1f4] sm:$0xf]
        %v6489 = vld [vmem:[%s6404 + $0x1f8] sm:$0xff]
        %v6490 = vld [vmem:[%s6404 + $0x200] sm:$0xf]
        %v6491 = vld [vmem:[%s6404 + $0x204] sm:$0xff]
        %v6492 = vld [vmem:[%s6404 + $0x20c] sm:$0xf]
        %v6493 = vld [vmem:[%s6404 + $0x210] sm:$0xff]
        %v6494 = vld [vmem:[%s6404 + $0x218] sm:$0xf]
        %v6495 = vld [vmem:[%s6404 + $0x21c] sm:$0xff]
        %v6496 = vld [vmem:[%s6404 + $0x224] sm:$0xf]
        %v6497 = vld [vmem:[%s6404 + $0x228] sm:$0xff]
        %v6498 = vld [vmem:[%s6404 + $0x230] sm:$0xf]
        %v6499 = vld [vmem:[%s6404 + $0x234] sm:$0xff]
        %v6500 = vld [vmem:[%s6404 + $0x23c] sm:$0xf]
        %v6501 = vld [vmem:[%s6404 + $0x240] sm:$0xff]
        %v6502 = vld [vmem:[%s6404 + $0x248] sm:$0xf]
        %v6503 = vld [vmem:[%s6404 + $0x24c] sm:$0xff]
        %v6504 = vld [vmem:[%s6404 + $0x254] sm:$0xf]
        %v6505 = vld [vmem:[%s6404 + $0x258] sm:$0xff]
        %v6506 = vld [vmem:[%s6404 + $0x260] sm:$0xf]
        %v6507 = vld [vmem:[%s6404 + $0x264] sm:$0xff]
        %v6508 = vld [vmem:[%s6404 + $0x26c] sm:$0xf]
        %v6613 = vunpack.c.l.b16 %v6405
        %v6614 = vunpack.c.h.b16 %v6405
        %v6615 = vunpack.c.l.b16 %v6406
        %v6616 = vunpack.c.l.b16 %v6407
        %v6617 = vunpack.c.h.b16 %v6407
        %v6618 = vunpack.c.l.b16 %v6408
        %v6619 = vunpack.c.l.b16 %v6409
        %v6620 = vunpack.c.h.b16 %v6409
        %v6621 = vunpack.c.l.b16 %v6410
        %v6622 = vunpack.c.l.b16 %v6411
        %v6623 = vunpack.c.h.b16 %v6411
        %v6624 = vunpack.c.l.b16 %v6412
        %v6625 = vunpack.c.l.b16 %v6413
        %v6626 = vunpack.c.h.b16 %v6413
        %v6627 = vunpack.c.l.b16 %v6414
        %v6628 = vunpack.c.l.b16 %v6415
        %v6629 = vunpack.c.h.b16 %v6415
        %v6630 = vunpack.c.l.b16 %v6416
        %v6631 = vunpack.c.l.b16 %v6417
        %v6632 = vunpack.c.h.b16 %v6417
        %v6633 = vunpack.c.l.b16 %v6418
        %v6634 = vunpack.c.l.b16 %v6419
        %v6635 = vunpack.c.h.b16 %v6419
        %v6636 = vunpack.c.l.b16 %v6420
        %v6637 = vunpack.c.l.b16 %v6421
        %v6638 = vunpack.c.h.b16 %v6421
        %v6639 = vunpack.c.l.b16 %v6422
        %v6640 = vunpack.c.l.b16 %v6423
        %v6641 = vunpack.c.h.b16 %v6423
        %v6642 = vunpack.c.l.b16 %v6424
        %v6643 = vunpack.c.l.b16 %v6425
        %v6644 = vunpack.c.h.b16 %v6425
        %v6645 = vunpack.c.l.b16 %v6426
        %v6646 = vunpack.c.l.b16 %v6427
        %v6647 = vunpack.c.h.b16 %v6427
        %v6648 = vunpack.c.l.b16 %v6428
        %v6649 = vunpack.c.l.b16 %v6429
        %v6650 = vunpack.c.h.b16 %v6429
        %v6651 = vunpack.c.l.b16 %v6430
        %v6652 = vunpack.c.l.b16 %v6431
        %v6653 = vunpack.c.h.b16 %v6431
        %v6654 = vunpack.c.l.b16 %v6432
        %v6655 = vunpack.c.l.b16 %v6433
        %v6656 = vunpack.c.h.b16 %v6433
        %v6657 = vunpack.c.l.b16 %v6434
        %v6658 = vunpack.c.l.b16 %v6435
        %v6659 = vunpack.c.h.b16 %v6435
        %v6660 = vunpack.c.l.b16 %v6436
        %v6661 = vunpack.c.l.b16 %v6437
        %v6662 = vunpack.c.h.b16 %v6437
        %v6663 = vunpack.c.l.b16 %v6438
        %v6664 = vunpack.c.l.b16 %v6439
        %v6665 = vunpack.c.h.b16 %v6439
        %v6666 = vunpack.c.l.b16 %v6440
        %v6667 = vunpack.c.l.b16 %v6441
        %v6668 = vunpack.c.h.b16 %v6441
        %v6669 = vunpack.c.l.b16 %v6442
        %v6670 = vunpack.c.l.b16 %v6443
        %v6671 = vunpack.c.h.b16 %v6443
        %v6672 = vunpack.c.l.b16 %v6444
        %v6673 = vunpack.c.l.b16 %v6445
        %v6674 = vunpack.c.h.b16 %v6445
        %v6675 = vunpack.c.l.b16 %v6446
        %v6676 = vunpack.c.l.b16 %v6447
        %v6677 = vunpack.c.h.b16 %v6447
        %v6678 = vunpack.c.l.b16 %v6448
        %v6679 = vunpack.c.l.b16 %v6449
        %v6680 = vunpack.c.h.b16 %v6449
        %v6681 = vunpack.c.l.b16 %v6450
        %v6682 = vunpack.c.l.b16 %v6451
        %v6683 = vunpack.c.h.b16 %v6451
        %v6684 = vunpack.c.l.b16 %v6452
        %v6685 = vunpack.c.l.b16 %v6453
        %v6686 = vunpack.c.h.b16 %v6453
        %v6687 = vunpack.c.l.b16 %v6454
        %v6688 = vunpack.c.l.b16 %v6455
        %v6689 = vunpack.c.h.b16 %v6455
        %v6690 = vunpack.c.l.b16 %v6456
        %v6691 = vunpack.c.l.b16 %v6457
        %v6692 = vunpack.c.h.b16 %v6457
        %v6693 = vunpack.c.l.b16 %v6458
        %v6694 = vunpack.c.l.b16 %v6459
        %v6695 = vunpack.c.h.b16 %v6459
        %v6696 = vunpack.c.l.b16 %v6460
        %v6697 = vunpack.c.l.b16 %v6461
        %v6698 = vunpack.c.h.b16 %v6461
        %v6699 = vunpack.c.l.b16 %v6462
        %v6700 = vunpack.c.l.b16 %v6463
        %v6701 = vunpack.c.h.b16 %v6463
        %v6702 = vunpack.c.l.b16 %v6464
        %v6703 = vunpack.c.l.b16 %v6465
        %v6704 = vunpack.c.h.b16 %v6465
        %v6705 = vunpack.c.l.b16 %v6466
        %v6706 = vunpack.c.l.b16 %v6467
        %v6707 = vunpack.c.h.b16 %v6467
        %v6708 = vunpack.c.l.b16 %v6468
        %v6709 = vunpack.c.l.b16 %v6469
        %v6710 = vunpack.c.h.b16 %v6469
        %v6711 = vunpack.c.l.b16 %v6470
        %v6712 = vunpack.c.l.b16 %v6471
        %v6713 = vunpack.c.h.b16 %v6471
        %v6714 = vunpack.c.l.b16 %v6472
        %v6715 = vunpack.c.l.b16 %v6473
        %v6716 = vunpack.c.h.b16 %v6473
        %v6717 = vunpack.c.l.b16 %v6474
        %v6718 = vunpack.c.l.b16 %v6475
        %v6719 = vunpack.c.h.b16 %v6475
        %v6720 = vunpack.c.l.b16 %v6476
        %v6721 = vunpack.c.l.b16 %v6477
        %v6722 = vunpack.c.h.b16 %v6477
        %v6723 = vunpack.c.l.b16 %v6478
        %v6724 = vunpack.c.l.b16 %v6479
        %v6725 = vunpack.c.h.b16 %v6479
        %v6726 = vunpack.c.l.b16 %v6480
        %v6727 = vunpack.c.l.b16 %v6481
        %v6728 = vunpack.c.h.b16 %v6481
        %v6729 = vunpack.c.l.b16 %v6482
        %v6730 = vunpack.c.l.b16 %v6483
        %v6731 = vunpack.c.h.b16 %v6483
        %v6732 = vunpack.c.l.b16 %v6484
        %v6733 = vunpack.c.l.b16 %v6485
        %v6734 = vunpack.c.h.b16 %v6485
        %v6735 = vunpack.c.l.b16 %v6486
        %v6736 = vunpack.c.l.b16 %v6487
        %v6737 = vunpack.c.h.b16 %v6487
        %v6738 = vunpack.c.l.b16 %v6488
        %v6739 = vunpack.c.l.b16 %v6489
        %v6740 = vunpack.c.h.b16 %v6489
        %v6741 = vunpack.c.l.b16 %v6490
        %v6742 = vunpack.c.l.b16 %v6491
        %v6743 = vunpack.c.h.b16 %v6491
        %v6744 = vunpack.c.l.b16 %v6492
        %v6745 = vunpack.c.l.b16 %v6493
        %v6746 = vunpack.c.h.b16 %v6493
        %v6747 = vunpack.c.l.b16 %v6494
        %v6748 = vunpack.c.l.b16 %v6495
        %v6749 = vunpack.c.h.b16 %v6495
        %v6750 = vunpack.c.l.b16 %v6496
        %v6751 = vunpack.c.l.b16 %v6497
        %v6752 = vunpack.c.h.b16 %v6497
        %v6753 = vunpack.c.l.b16 %v6498
        %v6754 = vunpack.c.l.b16 %v6499
        %v6755 = vunpack.c.h.b16 %v6499
        %v6756 = vunpack.c.l.b16 %v6500
        %v6757 = vunpack.c.l.b16 %v6501
        %v6758 = vunpack.c.h.b16 %v6501
        %v6759 = vunpack.c.l.b16 %v6502
        %v6760 = vunpack.c.l.b16 %v6503
        %v6761 = vunpack.c.h.b16 %v6503
        %v6762 = vunpack.c.l.b16 %v6504
        %v6763 = vunpack.c.l.b16 %v6505
        %v6764 = vunpack.c.h.b16 %v6505
        %v6765 = vunpack.c.l.b16 %v6506
        %v6766 = vunpack.c.l.b16 %v6507
        %v6767 = vunpack.c.h.b16 %v6507
        %v6768 = vunpack.c.l.b16 %v6508
        %v6769 = vpack.c.b16 %v6616, %v6613
        %v6770 = vpack.c.b16 %v6617, %v6614
        %v6771 = vpack.c.b16 %v6618, %v6615
        %v6772 = vpack.c.b16 %v6622, %v6619
        %v6773 = vpack.c.b16 %v6623, %v6620
        %v6774 = vpack.c.b16 %v6624, %v6621
        %v6775 = vpack.c.b16 %v6628, %v6625
        %v6776 = vpack.c.b16 %v6629, %v6626
        %v6777 = vpack.c.b16 %v6630, %v6627
        %v6778 = vpack.c.b16 %v6634, %v6631
        %v6779 = vpack.c.b16 %v6635, %v6632
        %v6780 = vpack.c.b16 %v6636, %v6633
        %v6781 = vpack.c.b16 %v6640, %v6637
        %v6782 = vpack.c.b16 %v6641, %v6638
        %v6783 = vpack.c.b16 %v6642, %v6639
        %v6784 = vpack.c.b16 %v6646, %v6643
        %v6785 = vpack.c.b16 %v6647, %v6644
        %v6786 = vpack.c.b16 %v6648, %v6645
        %v6787 = vpack.c.b16 %v6652, %v6649
        %v6788 = vpack.c.b16 %v6653, %v6650
        %v6789 = vpack.c.b16 %v6654, %v6651
        %v6790 = vpack.c.b16 %v6658, %v6655
        %v6791 = vpack.c.b16 %v6659, %v6656
        %v6792 = vpack.c.b16 %v6660, %v6657
        %v6793 = vpack.c.b16 %v6664, %v6661
        %v6794 = vpack.c.b16 %v6665, %v6662
        %v6795 = vpack.c.b16 %v6666, %v6663
        %v6796 = vpack.c.b16 %v6670, %v6667
        %v6797 = vpack.c.b16 %v6671, %v6668
        %v6798 = vpack.c.b16 %v6672, %v6669
        %v6799 = vpack.c.b16 %v6676, %v6673
        %v6800 = vpack.c.b16 %v6677, %v6674
        %v6801 = vpack.c.b16 %v6678, %v6675
        %v6802 = vpack.c.b16 %v6682, %v6679
        %v6803 = vpack.c.b16 %v6683, %v6680
        %v6804 = vpack.c.b16 %v6684, %v6681
        %v6805 = vpack.c.b16 %v6688, %v6685
        %v6806 = vpack.c.b16 %v6689, %v6686
        %v6807 = vpack.c.b16 %v6690, %v6687
        %v6808 = vpack.c.b16 %v6694, %v6691
        %v6809 = vpack.c.b16 %v6695, %v6692
        %v6810 = vpack.c.b16 %v6696, %v6693
        %v6811 = vpack.c.b16 %v6700, %v6697
        %v6812 = vpack.c.b16 %v6701, %v6698
        %v6813 = vpack.c.b16 %v6702, %v6699
        %v6814 = vpack.c.b16 %v6706, %v6703
        %v6815 = vpack.c.b16 %v6707, %v6704
        %v6816 = vpack.c.b16 %v6708, %v6705
        %v6817 = vpack.c.b16 %v6712, %v6709
        %v6818 = vpack.c.b16 %v6713, %v6710
        %v6819 = vpack.c.b16 %v6714, %v6711
        %v6820 = vpack.c.b16 %v6718, %v6715
        %v6821 = vpack.c.b16 %v6719, %v6716
        %v6822 = vpack.c.b16 %v6720, %v6717
        %v6823 = vpack.c.b16 %v6724, %v6721
        %v6824 = vpack.c.b16 %v6725, %v6722
        %v6825 = vpack.c.b16 %v6726, %v6723
        %v6826 = vpack.c.b16 %v6730, %v6727
        %v6827 = vpack.c.b16 %v6731, %v6728
        %v6828 = vpack.c.b16 %v6732, %v6729
        %v6829 = vpack.c.b16 %v6736, %v6733
        %v6830 = vpack.c.b16 %v6737, %v6734
        %v6831 = vpack.c.b16 %v6738, %v6735
        %v6832 = vpack.c.b16 %v6742, %v6739
        %v6833 = vpack.c.b16 %v6743, %v6740
        %v6834 = vpack.c.b16 %v6744, %v6741
        %v6835 = vpack.c.b16 %v6748, %v6745
        %v6836 = vpack.c.b16 %v6749, %v6746
        %v6837 = vpack.c.b16 %v6750, %v6747
        %v6838 = vpack.c.b16 %v6754, %v6751
        %v6839 = vpack.c.b16 %v6755, %v6752
        %v6840 = vpack.c.b16 %v6756, %v6753
        %v6841 = vpack.c.b16 %v6760, %v6757
        %v6842 = vpack.c.b16 %v6761, %v6758
        %v6843 = vpack.c.b16 %v6762, %v6759
        %v6844 = vpack.c.b16 %v6766, %v6763
        %v6845 = vpack.c.b16 %v6767, %v6764
        %v6846 = vpack.c.b16 %v6768, %v6765
        %6925 = vmatprep.subr.bf16.mxu0 %v6791
        %6926 = vmatpush1.bf16.msra.mxu0 %v6790
        %6927 = vmatprep.subr.bf16.mxu0 %v6788
        %6928 = vmatpush1.bf16.msra.mxu0 %v6787
        %6929 = vmatprep.subr.bf16.mxu0 %v6785
        %6930 = vmatpush1.bf16.msra.mxu0 %v6784
        %6931 = vmatprep.subr.bf16.mxu0 %v6782
        %6932 = vmatpush1.bf16.msra.mxu0 %v6781
        %6933 = vmatprep.subr.bf16.mxu0 %v6779
        %6934 = vmatpush1.bf16.msra.mxu0 %v6778
        %6935 = vmatprep.subr.bf16.mxu0 %v6776
        %6936 = vmatpush1.bf16.msra.mxu0 %v6775
        %6937 = vmatprep.subr.bf16.mxu0 %v6773
        %6938 = vmatpush1.bf16.msra.mxu0 %v6772
        %6939 = vmatprep.subr.bf16.mxu0 %v6770
        %6940 = vmatpush1.bf16.msra.mxu0 %v6769
        %6941 = vmatprep.subr.bf16.mxu0 %v6815
        %6942 = vmatpush2.bf16.msra.mxu0 %v6814
        %6943 = vmatprep.subr.bf16.mxu0 %v6812
        %6944 = vmatpush2.bf16.msra.mxu0 %v6811
        %6945 = vmatprep.subr.bf16.mxu0 %v6809
        %6946 = vmatpush2.bf16.msra.mxu0 %v6808
        %6947 = vmatprep.subr.bf16.mxu0 %v6806
        %6948 = vmatpush2.bf16.msra.mxu0 %v6805
        %6949 = vmatprep.subr.bf16.mxu0 %v6803
        %6950 = vmatpush2.bf16.msra.mxu0 %v6802
        %6951 = vmatprep.subr.bf16.mxu0 %v6800
        %6952 = vmatpush2.bf16.msra.mxu0 %v6799
        %6953 = vmatprep.subr.bf16.mxu0 %v6797
        %6954 = vmatpush2.bf16.msra.mxu0 %v6796
        %6955 = vmatprep.subr.bf16.mxu0 %v6794
        %6956 = vmatpush2.bf16.msra.mxu0 %v6793
        %6957 = vmatprep.mubr.bf16.mxu0 %v5212
        %6958 = vmatmul.mubr.bf16.gmra.mxu0 %v5205
        %v6959 = vpop.f32.mrf.mxu0
        %v6960 = vadd.f32 0.0, %v6959
        %v6961 = vpop.f32.mrf.mxu0
        %v6962 = vadd.f32 0.0, %v6961
        %v6963 = vpop.f32.mrf.mxu0
        %v6964 = vadd.f32 0.0, %v6963
        %v6965 = vpop.f32.mrf.mxu0
        %v6966 = vadd.f32 0.0, %v6965
        %6967 = vdwg.mxu0
        %6968 = vmatprep.subr.bf16.mxu0 %v6839
        %6969 = vmatpush1.bf16.msra.mxu0 %v6838
        %6970 = vmatprep.subr.bf16.mxu0 %v6836
        %6971 = vmatpush1.bf16.msra.mxu0 %v6835
        %6972 = vmatprep.subr.bf16.mxu0 %v6833
        %6973 = vmatpush1.bf16.msra.mxu0 %v6832
        %6974 = vmatprep.subr.bf16.mxu0 %v6830
        %6975 = vmatpush1.bf16.msra.mxu0 %v6829
        %6976 = vmatprep.subr.bf16.mxu0 %v6827
        %6977 = vmatpush1.bf16.msra.mxu0 %v6826
        %6978 = vmatprep.subr.bf16.mxu0 %v6824
        %6979 = vmatpush1.bf16.msra.mxu0 %v6823
        %6980 = vmatprep.subr.bf16.mxu0 %v6821
        %6981 = vmatpush1.bf16.msra.mxu0 %v6820
        %6982 = vmatprep.subr.bf16.mxu0 %v6818
        %6983 = vmatpush1.bf16.msra.mxu0 %v6817
        %6984 = vmatprep.subr.bf16.mxu0 0
        %6985 = vmatpush2.bf16.msra.mxu0 0
        %6986 = vmatprep.subr.bf16.mxu0 0
        %6987 = vmatpush2.bf16.msra.mxu0 0
        %6988 = vmatprep.subr.bf16.mxu0 0
        %6989 = vmatpush2.bf16.msra.mxu0 0
        %6990 = vmatprep.subr.bf16.mxu0 0
        %6991 = vmatpush2.bf16.msra.mxu0 0
        %6992 = vmatprep.subr.bf16.mxu0 0
        %6993 = vmatpush2.bf16.msra.mxu0 0
        %6994 = vmatprep.subr.bf16.mxu0 0
        %6995 = vmatpush2.bf16.msra.mxu0 0
        %6996 = vmatprep.subr.bf16.mxu0 %v6845
        %6997 = vmatpush2.bf16.msra.mxu0 %v6844
        %6998 = vmatprep.subr.bf16.mxu0 %v6842
        %6999 = vmatpush2.bf16.msra.mxu0 %v6841
        %7000 = vmatprep.mubr.bf16.mxu0 %v5647
        %7001 = vmatmul.mubr.bf16.gmra.mxu0 %v5219
        %v7002 = vpop.f32.mrf.mxu0
        %v7003 = vadd.f32 %v6960, %v7002
        %v7004 = vpop.f32.mrf.mxu0
        %v7005 = vadd.f32 %v6962, %v7004
        %v7006 = vpop.f32.mrf.mxu0
        %v7007 = vadd.f32 %v6964, %v7006
        %v7008 = vpop.f32.mrf.mxu0
        %v7009 = vadd.f32 %v6966, %v7008
        %7010 = vdwg.mxu0
        %7011 = vmatprep.subr.bf16.mxu0 0
        %7012 = vmatpush1.bf16.msra.mxu0 %v6792
        %7013 = vmatprep.subr.bf16.mxu0 0
        %7014 = vmatpush1.bf16.msra.mxu0 %v6789
        %7015 = vmatprep.subr.bf16.mxu0 0
        %7016 = vmatpush1.bf16.msra.mxu0 %v6786
        %7017 = vmatprep.subr.bf16.mxu0 0
        %7018 = vmatpush1.bf16.msra.mxu0 %v6783
        %7019 = vmatprep.subr.bf16.mxu0 0
        %7020 = vmatpush1.bf16.msra.mxu0 %v6780
        %7021 = vmatprep.subr.bf16.mxu0 0
        %7022 = vmatpush1.bf16.msra.mxu0 %v6777
        %7023 = vmatprep.subr.bf16.mxu0 0
        %7024 = vmatpush1.bf16.msra.mxu0 %v6774
        %7025 = vmatprep.subr.bf16.mxu0 0
        %7026 = vmatpush1.bf16.msra.mxu0 %v6771
        %7027 = vmatprep.subr.bf16.mxu0 0
        %7028 = vmatpush2.bf16.msra.mxu0 %v6816
        %7029 = vmatprep.subr.bf16.mxu0 0
        %7030 = vmatpush2.bf16.msra.mxu0 %v6813
        %7031 = vmatprep.subr.bf16.mxu0 0
        %7032 = vmatpush2.bf16.msra.mxu0 %v6810
        %7033 = vmatprep.subr.bf16.mxu0 0
        %7034 = vmatpush2.bf16.msra.mxu0 %v6807
        %7035 = vmatprep.subr.bf16.mxu0 0
        %7036 = vmatpush2.bf16.msra.mxu0 %v6804
        %7037 = vmatprep.subr.bf16.mxu0 0
        %7038 = vmatpush2.bf16.msra.mxu0 %v6801
        %7039 = vmatprep.subr.bf16.mxu0 0
        %7040 = vmatpush2.bf16.msra.mxu0 %v6798
        %7041 = vmatprep.subr.bf16.mxu0 0
        %7042 = vmatpush2.bf16.msra.mxu0 %v6795
        %7043 = vmatprep.mubr.bf16.mxu0 %v5212
        %7044 = vmatmul.mubr.bf16.gmra.mxu0 %v5205
        %v7045 = vpop.f32.mrf.mxu0
        %v7046 = vadd.f32 0.0, %v7045
        %v7047 = vpop.f32.mrf.mxu0
        %v7048 = vpop.f32.mrf.mxu0
        %v7049 = vadd.f32 0.0, %v7048
        %v7050 = vpop.f32.mrf.mxu0
        %7051 = vdwg.mxu0
        %7052 = vmatprep.subr.bf16.mxu0 0
        %7053 = vmatpush1.bf16.msra.mxu0 %v6840
        %7054 = vmatprep.subr.bf16.mxu0 0
        %7055 = vmatpush1.bf16.msra.mxu0 %v6837
        %7056 = vmatprep.subr.bf16.mxu0 0
        %7057 = vmatpush1.bf16.msra.mxu0 %v6834
        %7058 = vmatprep.subr.bf16.mxu0 0
        %7059 = vmatpush1.bf16.msra.mxu0 %v6831
        %7060 = vmatprep.subr.bf16.mxu0 0
        %7061 = vmatpush1.bf16.msra.mxu0 %v6828
        %7062 = vmatprep.subr.bf16.mxu0 0
        %7063 = vmatpush1.bf16.msra.mxu0 %v6825
        %7064 = vmatprep.subr.bf16.mxu0 0
        %7065 = vmatpush1.bf16.msra.mxu0 %v6822
        %7066 = vmatprep.subr.bf16.mxu0 0
        %7067 = vmatpush1.bf16.msra.mxu0 %v6819
        %7068 = vmatprep.subr.bf16.mxu0 0
        %7069 = vmatpush2.bf16.msra.mxu0 0
        %7070 = vmatprep.subr.bf16.mxu0 0
        %7071 = vmatpush2.bf16.msra.mxu0 0
        %7072 = vmatprep.subr.bf16.mxu0 0
        %7073 = vmatpush2.bf16.msra.mxu0 0
        %7074 = vmatprep.subr.bf16.mxu0 0
        %7075 = vmatpush2.bf16.msra.mxu0 0
        %7076 = vmatprep.subr.bf16.mxu0 0
        %7077 = vmatpush2.bf16.msra.mxu0 0
        %7078 = vmatprep.subr.bf16.mxu0 0
        %7079 = vmatpush2.bf16.msra.mxu0 0
        %7080 = vmatprep.subr.bf16.mxu0 0
        %7081 = vmatpush2.bf16.msra.mxu0 %v6846
        %7082 = vmatprep.subr.bf16.mxu0 0
        %7083 = vmatpush2.bf16.msra.mxu0 %v6843
        %7084 = vmatprep.mubr.bf16.mxu0 %v5647
        %7085 = vmatmul.mubr.bf16.gmra.mxu0 %v5219
        %v7086 = vpop.f32.mrf.mxu0
        %v7087 = vadd.f32 %v7046, %v7086
        %v7088 = vpop.f32.mrf.mxu0
        %v7089 = vpop.f32.mrf.mxu0
        %v7090 = vadd.f32 %v7049, %v7089
        %v7091 = vpop.f32.mrf.mxu0
        %7092 = vdwg.mxu0
        %v7197 = vunpack.c.l.b16 %v4978
        %v7198 = vunpack.c.h.b16 %v4978
        %v7199 = vunpack.c.l.b16 %v4979
        %v7200 = vunpack.c.l.b16 %v4980
        %v7201 = vunpack.c.h.b16 %v4980
        %v7202 = vunpack.c.l.b16 %v4981
        %v7203 = vunpack.c.l.b16 %v4982
        %v7204 = vunpack.c.h.b16 %v4982
        %v7205 = vunpack.c.l.b16 %v4983
        %v7206 = vunpack.c.l.b16 %v4984
        %v7207 = vunpack.c.h.b16 %v4984
        %v7208 = vunpack.c.l.b16 %v4985
        %v7209 = vunpack.c.l.b16 %v4986
        %v7210 = vunpack.c.h.b16 %v4986
        %v7211 = vunpack.c.l.b16 %v4987
        %v7212 = vunpack.c.l.b16 %v4988
        %v7213 = vunpack.c.h.b16 %v4988
        %v7214 = vunpack.c.l.b16 %v4989
        %v7215 = vunpack.c.l.b16 %v4990
        %v7216 = vunpack.c.h.b16 %v4990
        %v7217 = vunpack.c.l.b16 %v4991
        %v7218 = vunpack.c.l.b16 %v4992
        %v7219 = vunpack.c.h.b16 %v4992
        %v7220 = vunpack.c.l.b16 %v4993
        %v7221 = vunpack.c.l.b16 %v4994
        %v7222 = vunpack.c.h.b16 %v4994
        %v7223 = vunpack.c.l.b16 %v4995
        %v7224 = vunpack.c.l.b16 %v4996
        %v7225 = vunpack.c.h.b16 %v4996
        %v7226 = vunpack.c.l.b16 %v4997
        %v7227 = vunpack.c.l.b16 %v4998
        %v7228 = vunpack.c.h.b16 %v4998
        %v7229 = vunpack.c.l.b16 %v4999
        %v7230 = vunpack.c.l.b16 %v5000
        %v7231 = vunpack.c.h.b16 %v5000
        %v7232 = vunpack.c.l.b16 %v5001
        %v7233 = vunpack.c.l.b16 %v5002
        %v7234 = vunpack.c.h.b16 %v5002
        %v7235 = vunpack.c.l.b16 %v5003
        %v7236 = vunpack.c.l.b16 %v5004
        %v7237 = vunpack.c.h.b16 %v5004
        %v7238 = vunpack.c.l.b16 %v5005
        %v7239 = vunpack.c.l.b16 %v5006
        %v7240 = vunpack.c.h.b16 %v5006
        %v7241 = vunpack.c.l.b16 %v5007
        %v7242 = vunpack.c.l.b16 %v5008
        %v7243 = vunpack.c.h.b16 %v5008
        %v7244 = vunpack.c.l.b16 %v5009
        %v7245 = vunpack.c.l.b16 %v5010
        %v7246 = vunpack.c.h.b16 %v5010
        %v7247 = vunpack.c.l.b16 %v5011
        %v7248 = vunpack.c.l.b16 %v5012
        %v7249 = vunpack.c.h.b16 %v5012
        %v7250 = vunpack.c.l.b16 %v5013
        %v7251 = vunpack.c.l.b16 %v5014
        %v7252 = vunpack.c.h.b16 %v5014
        %v7253 = vunpack.c.l.b16 %v5015
        %v7254 = vunpack.c.l.b16 %v5016
        %v7255 = vunpack.c.h.b16 %v5016
        %v7256 = vunpack.c.l.b16 %v5017
        %v7257 = vunpack.c.l.b16 %v5018
        %v7258 = vunpack.c.h.b16 %v5018
        %v7259 = vunpack.c.l.b16 %v5019
        %v7260 = vunpack.c.l.b16 %v5020
        %v7261 = vunpack.c.h.b16 %v5020
        %v7262 = vunpack.c.l.b16 %v5021
        %v7263 = vunpack.c.l.b16 %v5022
        %v7264 = vunpack.c.h.b16 %v5022
        %v7265 = vunpack.c.l.b16 %v5023
        %v7266 = vunpack.c.l.b16 %v5024
        %v7267 = vunpack.c.h.b16 %v5024
        %v7268 = vunpack.c.l.b16 %v5025
        %v7269 = vunpack.c.l.b16 %v5026
        %v7270 = vunpack.c.h.b16 %v5026
        %v7271 = vunpack.c.l.b16 %v5027
        %v7272 = vunpack.c.l.b16 %v5028
        %v7273 = vunpack.c.h.b16 %v5028
        %v7274 = vunpack.c.l.b16 %v5029
        %v7275 = vunpack.c.l.b16 %v5030
        %v7276 = vunpack.c.h.b16 %v5030
        %v7277 = vunpack.c.l.b16 %v5031
        %v7278 = vunpack.c.l.b16 %v5032
        %v7279 = vunpack.c.h.b16 %v5032
        %v7280 = vunpack.c.l.b16 %v5033
        %v7281 = vunpack.c.l.b16 %v5034
        %v7282 = vunpack.c.h.b16 %v5034
        %v7283 = vunpack.c.l.b16 %v5035
        %v7284 = vunpack.c.l.b16 %v5036
        %v7285 = vunpack.c.h.b16 %v5036
        %v7286 = vunpack.c.l.b16 %v5037
        %v7287 = vunpack.c.l.b16 %v5038
        %v7288 = vunpack.c.h.b16 %v5038
        %v7289 = vunpack.c.l.b16 %v5039
        %v7290 = vunpack.c.l.b16 %v5040
        %v7291 = vunpack.c.h.b16 %v5040
        %v7292 = vunpack.c.l.b16 %v5041
        %v7293 = vunpack.c.l.b16 %v5042
        %v7294 = vunpack.c.h.b16 %v5042
        %v7295 = vunpack.c.l.b16 %v5043
        %v7296 = vunpack.c.l.b16 %v5044
        %v7297 = vunpack.c.h.b16 %v5044
        %v7298 = vunpack.c.l.b16 %v5045
        %v7299 = vunpack.c.l.b16 %v5046
        %v7300 = vunpack.c.h.b16 %v5046
        %v7301 = vunpack.c.l.b16 %v5047
        %v7302 = vunpack.c.l.b16 %v5048
        %v7303 = vunpack.c.h.b16 %v5048
        %v7304 = vunpack.c.l.b16 %v5049
        %v7305 = vunpack.c.l.b16 %v5050
        %v7306 = vunpack.c.h.b16 %v5050
        %v7307 = vunpack.c.l.b16 %v5051
        %v7308 = vunpack.c.l.b16 %v5052
        %v7309 = vunpack.c.h.b16 %v5052
        %v7310 = vunpack.c.l.b16 %v5053
        %v7311 = vunpack.c.l.b16 %v5054
        %v7312 = vunpack.c.h.b16 %v5054
        %v7313 = vunpack.c.l.b16 %v5055
        %v7314 = vunpack.c.l.b16 %v5056
        %v7315 = vunpack.c.h.b16 %v5056
        %v7316 = vunpack.c.l.b16 %v5057
        %v7317 = vunpack.c.l.b16 %v5058
        %v7318 = vunpack.c.h.b16 %v5058
        %v7319 = vunpack.c.l.b16 %v5059
        %v7320 = vunpack.c.l.b16 %v5060
        %v7321 = vunpack.c.h.b16 %v5060
        %v7322 = vunpack.c.l.b16 %v5061
        %v7323 = vunpack.c.l.b16 %v5062
        %v7324 = vunpack.c.h.b16 %v5062
        %v7325 = vunpack.c.l.b16 %v5063
        %v7326 = vunpack.c.l.b16 %v5064
        %v7327 = vunpack.c.h.b16 %v5064
        %v7328 = vunpack.c.l.b16 %v5065
        %v7329 = vunpack.c.l.b16 %v5066
        %v7330 = vunpack.c.h.b16 %v5066
        %v7331 = vunpack.c.l.b16 %v5067
        %v7332 = vunpack.c.l.b16 %v5068
        %v7333 = vunpack.c.h.b16 %v5068
        %v7334 = vunpack.c.l.b16 %v5069
        %v7335 = vunpack.c.l.b16 %v5070
        %v7336 = vunpack.c.h.b16 %v5070
        %v7337 = vunpack.c.l.b16 %v5071
        %v7338 = vunpack.c.l.b16 %v5072
        %v7339 = vunpack.c.h.b16 %v5072
        %v7340 = vunpack.c.l.b16 %v5073
        %v7341 = vunpack.c.l.b16 %v5074
        %v7342 = vunpack.c.h.b16 %v5074
        %v7343 = vunpack.c.l.b16 %v5075
        %v7344 = vunpack.c.l.b16 %v5076
        %v7345 = vunpack.c.h.b16 %v5076
        %v7346 = vunpack.c.l.b16 %v5077
        %v7347 = vunpack.c.l.b16 %v5078
        %v7348 = vunpack.c.h.b16 %v5078
        %v7349 = vunpack.c.l.b16 %v5079
        %v7350 = vunpack.c.l.b16 %v5080
        %v7351 = vunpack.c.h.b16 %v5080
        %v7352 = vunpack.c.l.b16 %v5081
        %v7353 = vpack.c.b16 %v7200, %v7197
        %v7354 = vpack.c.b16 %v7201, %v7198
        %v7355 = vpack.c.b16 %v7202, %v7199
        %v7356 = vpack.c.b16 %v7206, %v7203
        %v7357 = vpack.c.b16 %v7207, %v7204
        %v7358 = vpack.c.b16 %v7208, %v7205
        %v7359 = vpack.c.b16 %v7212, %v7209
        %v7360 = vpack.c.b16 %v7213, %v7210
        %v7361 = vpack.c.b16 %v7214, %v7211
        %v7362 = vpack.c.b16 %v7218, %v7215
        %v7363 = vpack.c.b16 %v7219, %v7216
        %v7364 = vpack.c.b16 %v7220, %v7217
        %v7365 = vpack.c.b16 %v7224, %v7221
        %v7366 = vpack.c.b16 %v7225, %v7222
        %v7367 = vpack.c.b16 %v7226, %v7223
        %v7368 = vpack.c.b16 %v7230, %v7227
        %v7369 = vpack.c.b16 %v7231, %v7228
        %v7370 = vpack.c.b16 %v7232, %v7229
        %v7371 = vpack.c.b16 %v7236, %v7233
        %v7372 = vpack.c.b16 %v7237, %v7234
        %v7373 = vpack.c.b16 %v7238, %v7235
        %v7374 = vpack.c.b16 %v7242, %v7239
        %v7375 = vpack.c.b16 %v7243, %v7240
        %v7376 = vpack.c.b16 %v7244, %v7241
        %v7377 = vpack.c.b16 %v7248, %v7245
        %v7378 = vpack.c.b16 %v7249, %v7246
        %v7379 = vpack.c.b16 %v7250, %v7247
        %v7380 = vpack.c.b16 %v7254, %v7251
        %v7381 = vpack.c.b16 %v7255, %v7252
        %v7382 = vpack.c.b16 %v7256, %v7253
        %v7383 = vpack.c.b16 %v7260, %v7257
        %v7384 = vpack.c.b16 %v7261, %v7258
        %v7385 = vpack.c.b16 %v7262, %v7259
        %v7386 = vpack.c.b16 %v7266, %v7263
        %v7387 = vpack.c.b16 %v7267, %v7264
        %v7388 = vpack.c.b16 %v7268, %v7265
        %v7389 = vpack.c.b16 %v7272, %v7269
        %v7390 = vpack.c.b16 %v7273, %v7270
        %v7391 = vpack.c.b16 %v7274, %v7271
        %v7392 = vpack.c.b16 %v7278, %v7275
        %v7393 = vpack.c.b16 %v7279, %v7276
        %v7394 = vpack.c.b16 %v7280, %v7277
        %v7395 = vpack.c.b16 %v7284, %v7281
        %v7396 = vpack.c.b16 %v7285, %v7282
        %v7397 = vpack.c.b16 %v7286, %v7283
        %v7398 = vpack.c.b16 %v7290, %v7287
        %v7399 = vpack.c.b16 %v7291, %v7288
        %v7400 = vpack.c.b16 %v7292, %v7289
        %v7401 = vpack.c.b16 %v7296, %v7293
        %v7402 = vpack.c.b16 %v7297, %v7294
        %v7403 = vpack.c.b16 %v7298, %v7295
        %v7404 = vpack.c.b16 %v7302, %v7299
        %v7405 = vpack.c.b16 %v7303, %v7300
        %v7406 = vpack.c.b16 %v7304, %v7301
        %v7407 = vpack.c.b16 %v7308, %v7305
        %v7408 = vpack.c.b16 %v7309, %v7306
        %v7409 = vpack.c.b16 %v7310, %v7307
        %v7410 = vpack.c.b16 %v7314, %v7311
        %v7411 = vpack.c.b16 %v7315, %v7312
        %v7412 = vpack.c.b16 %v7316, %v7313
        %v7413 = vpack.c.b16 %v7320, %v7317
        %v7414 = vpack.c.b16 %v7321, %v7318
        %v7415 = vpack.c.b16 %v7322, %v7319
        %v7416 = vpack.c.b16 %v7326, %v7323
        %v7417 = vpack.c.b16 %v7327, %v7324
        %v7418 = vpack.c.b16 %v7328, %v7325
        %v7419 = vpack.c.b16 %v7332, %v7329
        %v7420 = vpack.c.b16 %v7333, %v7330
        %v7421 = vpack.c.b16 %v7334, %v7331
        %v7422 = vpack.c.b16 %v7338, %v7335
        %v7423 = vpack.c.b16 %v7339, %v7336
        %v7424 = vpack.c.b16 %v7340, %v7337
        %v7425 = vpack.c.b16 %v7344, %v7341
        %v7426 = vpack.c.b16 %v7345, %v7342
        %v7427 = vpack.c.b16 %v7346, %v7343
        %v7428 = vpack.c.b16 %v7350, %v7347
        %v7429 = vpack.c.b16 %v7351, %v7348
        %v7430 = vpack.c.b16 %v7352, %v7349
        %7509 = vmatprep.subr.bf16.mxu0 %v7375
        %7510 = vmatpush1.bf16.msra.mxu0 %v7374
        %7511 = vmatprep.subr.bf16.mxu0 %v7372
        %7512 = vmatpush1.bf16.msra.mxu0 %v7371
        %7513 = vmatprep.subr.bf16.mxu0 %v7369
        %7514 = vmatpush1.bf16.msra.mxu0 %v7368
        %7515 = vmatprep.subr.bf16.mxu0 %v7366
        %7516 = vmatpush1.bf16.msra.mxu0 %v7365
        %7517 = vmatprep.subr.bf16.mxu0 %v7363
        %7518 = vmatpush1.bf16.msra.mxu0 %v7362
        %7519 = vmatprep.subr.bf16.mxu0 %v7360
        %7520 = vmatpush1.bf16.msra.mxu0 %v7359
        %7521 = vmatprep.subr.bf16.mxu0 %v7357
        %7522 = vmatpush1.bf16.msra.mxu0 %v7356
        %7523 = vmatprep.subr.bf16.mxu0 %v7354
        %7524 = vmatpush1.bf16.msra.mxu0 %v7353
        %7525 = vmatprep.subr.bf16.mxu0 %v7399
        %7526 = vmatpush2.bf16.msra.mxu0 %v7398
        %7527 = vmatprep.subr.bf16.mxu0 %v7396
        %7528 = vmatpush2.bf16.msra.mxu0 %v7395
        %7529 = vmatprep.subr.bf16.mxu0 %v7393
        %7530 = vmatpush2.bf16.msra.mxu0 %v7392
        %7531 = vmatprep.subr.bf16.mxu0 %v7390
        %7532 = vmatpush2.bf16.msra.mxu0 %v7389
        %7533 = vmatprep.subr.bf16.mxu0 %v7387
        %7534 = vmatpush2.bf16.msra.mxu0 %v7386
        %7535 = vmatprep.subr.bf16.mxu0 %v7384
        %7536 = vmatpush2.bf16.msra.mxu0 %v7383
        %7537 = vmatprep.subr.bf16.mxu0 %v7381
        %7538 = vmatpush2.bf16.msra.mxu0 %v7380
        %7539 = vmatprep.subr.bf16.mxu0 %v7378
        %7540 = vmatpush2.bf16.msra.mxu0 %v7377
        %7541 = vmatprep.mubr.bf16.mxu0 %v4871
        %7542 = vmatmul.mubr.bf16.gmra.mxu0 %v4870
        %v7543 = vpop.f32.mrf.mxu0
        %v7544 = vadd.f32 %v7003, %v7543
        %v7545 = vpop.f32.mrf.mxu0
        %v7546 = vadd.f32 %v7005, %v7545
        %v7547 = vpop.f32.mrf.mxu0
        %v7548 = vadd.f32 %v7007, %v7547
        %v7549 = vpop.f32.mrf.mxu0
        %v7550 = vadd.f32 %v7009, %v7549
        %7551 = vdwg.mxu0
        %7552 = vmatprep.subr.bf16.mxu0 %v7423
        %7553 = vmatpush1.bf16.msra.mxu0 %v7422
        %7554 = vmatprep.subr.bf16.mxu0 %v7420
        %7555 = vmatpush1.bf16.msra.mxu0 %v7419
        %7556 = vmatprep.subr.bf16.mxu0 %v7417
        %7557 = vmatpush1.bf16.msra.mxu0 %v7416
        %7558 = vmatprep.subr.bf16.mxu0 %v7414
        %7559 = vmatpush1.bf16.msra.mxu0 %v7413
        %7560 = vmatprep.subr.bf16.mxu0 %v7411
        %7561 = vmatpush1.bf16.msra.mxu0 %v7410
        %7562 = vmatprep.subr.bf16.mxu0 %v7408
        %7563 = vmatpush1.bf16.msra.mxu0 %v7407
        %7564 = vmatprep.subr.bf16.mxu0 %v7405
        %7565 = vmatpush1.bf16.msra.mxu0 %v7404
        %7566 = vmatprep.subr.bf16.mxu0 %v7402
        %7567 = vmatpush1.bf16.msra.mxu0 %v7401
        %7568 = vmatprep.subr.bf16.mxu0 0
        %7569 = vmatpush2.bf16.msra.mxu0 0
        %7570 = vmatprep.subr.bf16.mxu0 0
        %7571 = vmatpush2.bf16.msra.mxu0 0
        %7572 = vmatprep.subr.bf16.mxu0 0
        %7573 = vmatpush2.bf16.msra.mxu0 0
        %7574 = vmatprep.subr.bf16.mxu0 0
        %7575 = vmatpush2.bf16.msra.mxu0 0
        %7576 = vmatprep.subr.bf16.mxu0 0
        %7577 = vmatpush2.bf16.msra.mxu0 0
        %7578 = vmatprep.subr.bf16.mxu0 0
        %7579 = vmatpush2.bf16.msra.mxu0 0
        %7580 = vmatprep.subr.bf16.mxu0 %v7429
        %7581 = vmatpush2.bf16.msra.mxu0 %v7428
        %7582 = vmatprep.subr.bf16.mxu0 %v7426
        %7583 = vmatpush2.bf16.msra.mxu0 %v7425
        %7584 = vmatprep.mubr.bf16.mxu0 %v6234
        %7585 = vmatmul.mubr.bf16.gmra.mxu0 %v4872
        %v7586 = vpop.f32.mrf.mxu0
        %v7587 = vadd.f32 %v7544, %v7586
        %v7588 = vpop.f32.mrf.mxu0
        %v7589 = vadd.f32 %v7546, %v7588
        %v7590 = vpop.f32.mrf.mxu0
        %v7591 = vadd.f32 %v7548, %v7590
        %v7592 = vpop.f32.mrf.mxu0
        %v7593 = vadd.f32 %v7550, %v7592
        %7594 = vdwg.mxu0
        %7595 = vmatprep.subr.bf16.mxu0 0
        %7596 = vmatpush1.bf16.msra.mxu0 %v7376
        %7597 = vmatprep.subr.bf16.mxu0 0
        %7598 = vmatpush1.bf16.msra.mxu0 %v7373
        %7599 = vmatprep.subr.bf16.mxu0 0
        %7600 = vmatpush1.bf16.msra.mxu0 %v7370
        %7601 = vmatprep.subr.bf16.mxu0 0
        %7602 = vmatpush1.bf16.msra.mxu0 %v7367
        %7603 = vmatprep.subr.bf16.mxu0 0
        %7604 = vmatpush1.bf16.msra.mxu0 %v7364
        %7605 = vmatprep.subr.bf16.mxu0 0
        %7606 = vmatpush1.bf16.msra.mxu0 %v7361
        %7607 = vmatprep.subr.bf16.mxu0 0
        %7608 = vmatpush1.bf16.msra.mxu0 %v7358
        %7609 = vmatprep.subr.bf16.mxu0 0
        %7610 = vmatpush1.bf16.msra.mxu0 %v7355
        %7611 = vmatprep.subr.bf16.mxu0 0
        %7612 = vmatpush2.bf16.msra.mxu0 %v7400
        %7613 = vmatprep.subr.bf16.mxu0 0
        %7614 = vmatpush2.bf16.msra.mxu0 %v7397
        %7615 = vmatprep.subr.bf16.mxu0 0
        %7616 = vmatpush2.bf16.msra.mxu0 %v7394
        %7617 = vmatprep.subr.bf16.mxu0 0
        %7618 = vmatpush2.bf16.msra.mxu0 %v7391
        %7619 = vmatprep.subr.bf16.mxu0 0
        %7620 = vmatpush2.bf16.msra.mxu0 %v7388
        %7621 = vmatprep.subr.bf16.mxu0 0
        %7622 = vmatpush2.bf16.msra.mxu0 %v7385
        %7623 = vmatprep.subr.bf16.mxu0 0
        %7624 = vmatpush2.bf16.msra.mxu0 %v7382
        %7625 = vmatprep.subr.bf16.mxu0 0
        %7626 = vmatpush2.bf16.msra.mxu0 %v7379
        %7627 = vmatprep.mubr.bf16.mxu0 %v4871
        %7628 = vmatmul.mubr.bf16.gmra.mxu0 %v4870
        %v7629 = vpop.f32.mrf.mxu0
        %v7630 = vadd.f32 %v7087, %v7629
        %v7631 = vpop.f32.mrf.mxu0
        %v7632 = vpop.f32.mrf.mxu0
        %v7633 = vadd.f32 %v7090, %v7632
        %v7634 = vpop.f32.mrf.mxu0
        %7635 = vdwg.mxu0
        %7636 = vmatprep.subr.bf16.mxu0 0
        %7637 = vmatpush1.bf16.msra.mxu0 %v7424
        %7638 = vmatprep.subr.bf16.mxu0 0
        %7639 = vmatpush1.bf16.msra.mxu0 %v7421
        %7640 = vmatprep.subr.bf16.mxu0 0
        %7641 = vmatpush1.bf16.msra.mxu0 %v7418
        %7642 = vmatprep.subr.bf16.mxu0 0
        %7643 = vmatpush1.bf16.msra.mxu0 %v7415
        %7644 = vmatprep.subr.bf16.mxu0 0
        %7645 = vmatpush1.bf16.msra.mxu0 %v7412
        %7646 = vmatprep.subr.bf16.mxu0 0
        %7647 = vmatpush1.bf16.msra.mxu0 %v7409
        %7648 = vmatprep.subr.bf16.mxu0 0
        %7649 = vmatpush1.bf16.msra.mxu0 %v7406
        %7650 = vmatprep.subr.bf16.mxu0 0
        %7651 = vmatpush1.bf16.msra.mxu0 %v7403
        %7652 = vmatprep.subr.bf16.mxu0 0
        %7653 = vmatpush2.bf16.msra.mxu0 0
        %7654 = vmatprep.subr.bf16.mxu0 0
        %7655 = vmatpush2.bf16.msra.mxu0 0
        %7656 = vmatprep.subr.bf16.mxu0 0
        %7657 = vmatpush2.bf16.msra.mxu0 0
        %7658 = vmatprep.subr.bf16.mxu0 0
        %7659 = vmatpush2.bf16.msra.mxu0 0
        %7660 = vmatprep.subr.bf16.mxu0 0
        %7661 = vmatpush2.bf16.msra.mxu0 0
        %7662 = vmatprep.subr.bf16.mxu0 0
        %7663 = vmatpush2.bf16.msra.mxu0 0
        %7664 = vmatprep.subr.bf16.mxu0 0
        %7665 = vmatpush2.bf16.msra.mxu0 %v7430
        %7666 = vmatprep.subr.bf16.mxu0 0
        %7667 = vmatpush2.bf16.msra.mxu0 %v7427
        %7668 = vmatprep.mubr.bf16.mxu0 %v6234
        %7669 = vmatmul.mubr.bf16.gmra.mxu0 %v4872
        %v7670 = vpop.f32.mrf.mxu0
        %v7671 = vadd.f32 %v7630, %v7670
        %v7672 = vpop.f32.mrf.mxu0
        %v7673 = vpop.f32.mrf.mxu0
        %v7674 = vadd.f32 %v7633, %v7673
        %v7675 = vpop.f32.mrf.mxu0
        %7676 = vdwg.mxu0
        %v7677 = vld [vmem:[#allocation2] sm:$0xfc]
        %v7678 = vld [vmem:[#allocation2 + $0x8] sm:$0xfc]
        %v7679 = vld [vmem:[#allocation2 + $0x10] sm:$0xfc]
        %v7680 = vld [vmem:[#allocation2 + $0x18] sm:$0xfc]
        %v7681 = vld [vmem:[#allocation2 + $0x20] sm:$0x1f]
        %v7682 = vld [vmem:[#allocation2 + $0x28] sm:$0x1f]
        %v7683 = vld [vmem:[#allocation2 + $0x30] sm:$0x1f]
        %v7684 = vld [vmem:[#allocation2 + $0x38] sm:$0x1f]
        %v7685 = vpack.c.bf16 %v7681, %v7677
        %v7686 = vpack.c.bf16 %v7682, %v7678
        %v7687 = vpack.c.bf16 %v7683, %v7679
        %v7688 = vpack.c.bf16 %v7684, %v7680
        %s7689 = scalar_lea.vmem [#allocation9], 1248
        %v7690 = vld [vmem:[%s7689] sm:$0xff]
        %v7691 = vld [vmem:[%s7689 + $0x8] sm:$0xf]
        %v7692 = vld [vmem:[%s7689 + $0xc] sm:$0xff]
        %v7693 = vld [vmem:[%s7689 + $0x14] sm:$0xf]
        %v7694 = vld [vmem:[%s7689 + $0x18] sm:$0xff]
        %v7695 = vld [vmem:[%s7689 + $0x20] sm:$0xf]
        %v7696 = vld [vmem:[%s7689 + $0x24] sm:$0xff]
        %v7697 = vld [vmem:[%s7689 + $0x2c] sm:$0xf]
        %v7698 = vld [vmem:[%s7689 + $0x30] sm:$0xff]
        %v7699 = vld [vmem:[%s7689 + $0x38] sm:$0xf]
        %v7700 = vld [vmem:[%s7689 + $0x3c] sm:$0xff]
        %v7701 = vld [vmem:[%s7689 + $0x44] sm:$0xf]
        %v7702 = vld [vmem:[%s7689 + $0x48] sm:$0xff]
        %v7703 = vld [vmem:[%s7689 + $0x50] sm:$0xf]
        %v7704 = vld [vmem:[%s7689 + $0x54] sm:$0xff]
        %v7705 = vld [vmem:[%s7689 + $0x5c] sm:$0xf]
        %v7706 = vld [vmem:[%s7689 + $0x60] sm:$0xff]
        %v7707 = vld [vmem:[%s7689 + $0x68] sm:$0xf]
        %v7708 = vld [vmem:[%s7689 + $0x6c] sm:$0xff]
        %v7709 = vld [vmem:[%s7689 + $0x74] sm:$0xf]
        %v7710 = vld [vmem:[%s7689 + $0x78] sm:$0xff]
        %v7711 = vld [vmem:[%s7689 + $0x80] sm:$0xf]
        %v7712 = vld [vmem:[%s7689 + $0x84] sm:$0xff]
        %v7713 = vld [vmem:[%s7689 + $0x8c] sm:$0xf]
        %v7714 = vld [vmem:[%s7689 + $0x90] sm:$0xff]
        %v7715 = vld [vmem:[%s7689 + $0x98] sm:$0xf]
        %v7716 = vld [vmem:[%s7689 + $0x9c] sm:$0xff]
        %v7717 = vld [vmem:[%s7689 + $0xa4] sm:$0xf]
        %v7718 = vld [vmem:[%s7689 + $0xa8] sm:$0xff]
        %v7719 = vld [vmem:[%s7689 + $0xb0] sm:$0xf]
        %v7720 = vld [vmem:[%s7689 + $0xb4] sm:$0xff]
        %v7721 = vld [vmem:[%s7689 + $0xbc] sm:$0xf]
        %v7722 = vld [vmem:[%s7689 + $0xc0] sm:$0xff]
        %v7723 = vld [vmem:[%s7689 + $0xc8] sm:$0xf]
        %v7724 = vld [vmem:[%s7689 + $0xcc] sm:$0xff]
        %v7725 = vld [vmem:[%s7689 + $0xd4] sm:$0xf]
        %v7726 = vld [vmem:[%s7689 + $0xd8] sm:$0xff]
        %v7727 = vld [vmem:[%s7689 + $0xe0] sm:$0xf]
        %v7728 = vld [vmem:[%s7689 + $0xe4] sm:$0xff]
        %v7729 = vld [vmem:[%s7689 + $0xec] sm:$0xf]
        %v7730 = vld [vmem:[%s7689 + $0xf0] sm:$0xff]
        %v7731 = vld [vmem:[%s7689 + $0xf8] sm:$0xf]
        %v7732 = vld [vmem:[%s7689 + $0xfc] sm:$0xff]
        %v7733 = vld [vmem:[%s7689 + $0x104] sm:$0xf]
        %v7734 = vld [vmem:[%s7689 + $0x108] sm:$0xff]
        %v7735 = vld [vmem:[%s7689 + $0x110] sm:$0xf]
        %v7736 = vld [vmem:[%s7689 + $0x114] sm:$0xff]
        %v7737 = vld [vmem:[%s7689 + $0x11c] sm:$0xf]
        %v7738 = vld [vmem:[%s7689 + $0x120] sm:$0xff]
        %v7739 = vld [vmem:[%s7689 + $0x128] sm:$0xf]
        %v7740 = vld [vmem:[%s7689 + $0x12c] sm:$0xff]
        %v7741 = vld [vmem:[%s7689 + $0x134] sm:$0xf]
        %v7742 = vld [vmem:[%s7689 + $0x138] sm:$0xff]
        %v7743 = vld [vmem:[%s7689 + $0x140] sm:$0xf]
        %v7744 = vld [vmem:[%s7689 + $0x144] sm:$0xff]
        %v7745 = vld [vmem:[%s7689 + $0x14c] sm:$0xf]
        %v7746 = vld [vmem:[%s7689 + $0x150] sm:$0xff]
        %v7747 = vld [vmem:[%s7689 + $0x158] sm:$0xf]
        %v7748 = vld [vmem:[%s7689 + $0x15c] sm:$0xff]
        %v7749 = vld [vmem:[%s7689 + $0x164] sm:$0xf]
        %v7750 = vld [vmem:[%s7689 + $0x168] sm:$0xff]
        %v7751 = vld [vmem:[%s7689 + $0x170] sm:$0xf]
        %v7752 = vld [vmem:[%s7689 + $0x174] sm:$0xff]
        %v7753 = vld [vmem:[%s7689 + $0x17c] sm:$0xf]
        %v7754 = vld [vmem:[%s7689 + $0x180] sm:$0xff]
        %v7755 = vld [vmem:[%s7689 + $0x188] sm:$0xf]
        %v7756 = vld [vmem:[%s7689 + $0x18c] sm:$0xff]
        %v7757 = vld [vmem:[%s7689 + $0x194] sm:$0xf]
        %v7758 = vld [vmem:[%s7689 + $0x198] sm:$0xff]
        %v7759 = vld [vmem:[%s7689 + $0x1a0] sm:$0xf]
        %v7760 = vld [vmem:[%s7689 + $0x1a4] sm:$0xff]
        %v7761 = vld [vmem:[%s7689 + $0x1ac] sm:$0xf]
        %v7762 = vld [vmem:[%s7689 + $0x1b0] sm:$0xff]
        %v7763 = vld [vmem:[%s7689 + $0x1b8] sm:$0xf]
        %v7764 = vld [vmem:[%s7689 + $0x1bc] sm:$0xff]
        %v7765 = vld [vmem:[%s7689 + $0x1c4] sm:$0xf]
        %v7766 = vld [vmem:[%s7689 + $0x1c8] sm:$0xff]
        %v7767 = vld [vmem:[%s7689 + $0x1d0] sm:$0xf]
        %v7768 = vld [vmem:[%s7689 + $0x1d4] sm:$0xff]
        %v7769 = vld [vmem:[%s7689 + $0x1dc] sm:$0xf]
        %v7770 = vld [vmem:[%s7689 + $0x1e0] sm:$0xff]
        %v7771 = vld [vmem:[%s7689 + $0x1e8] sm:$0xf]
        %v7772 = vld [vmem:[%s7689 + $0x1ec] sm:$0xff]
        %v7773 = vld [vmem:[%s7689 + $0x1f4] sm:$0xf]
        %v7774 = vld [vmem:[%s7689 + $0x1f8] sm:$0xff]
        %v7775 = vld [vmem:[%s7689 + $0x200] sm:$0xf]
        %v7776 = vld [vmem:[%s7689 + $0x204] sm:$0xff]
        %v7777 = vld [vmem:[%s7689 + $0x20c] sm:$0xf]
        %v7778 = vld [vmem:[%s7689 + $0x210] sm:$0xff]
        %v7779 = vld [vmem:[%s7689 + $0x218] sm:$0xf]
        %v7780 = vld [vmem:[%s7689 + $0x21c] sm:$0xff]
        %v7781 = vld [vmem:[%s7689 + $0x224] sm:$0xf]
        %v7782 = vld [vmem:[%s7689 + $0x228] sm:$0xff]
        %v7783 = vld [vmem:[%s7689 + $0x230] sm:$0xf]
        %v7784 = vld [vmem:[%s7689 + $0x234] sm:$0xff]
        %v7785 = vld [vmem:[%s7689 + $0x23c] sm:$0xf]
        %v7786 = vld [vmem:[%s7689 + $0x240] sm:$0xff]
        %v7787 = vld [vmem:[%s7689 + $0x248] sm:$0xf]
        %v7788 = vld [vmem:[%s7689 + $0x24c] sm:$0xff]
        %v7789 = vld [vmem:[%s7689 + $0x254] sm:$0xf]
        %v7790 = vld [vmem:[%s7689 + $0x258] sm:$0xff]
        %v7791 = vld [vmem:[%s7689 + $0x260] sm:$0xf]
        %v7792 = vld [vmem:[%s7689 + $0x264] sm:$0xff]
        %v7793 = vld [vmem:[%s7689 + $0x26c] sm:$0xf]
        %v7798 = vrot.slane %v7685, 1
        %v7799 = vrot.slane %v7686, 1
        %v7800 = vrot.slane %v7687, 1
        %v7801 = vrot.slane %v7688, 1
        %v7909 = vunpack.c.l.b16 %v7690
        %v7910 = vunpack.c.h.b16 %v7690
        %v7911 = vunpack.c.l.b16 %v7691
        %v7912 = vunpack.c.l.b16 %v7692
        %v7913 = vunpack.c.h.b16 %v7692
        %v7914 = vunpack.c.l.b16 %v7693
        %v7915 = vunpack.c.l.b16 %v7694
        %v7916 = vunpack.c.h.b16 %v7694
        %v7917 = vunpack.c.l.b16 %v7695
        %v7918 = vunpack.c.l.b16 %v7696
        %v7919 = vunpack.c.h.b16 %v7696
        %v7920 = vunpack.c.l.b16 %v7697
        %v7921 = vunpack.c.l.b16 %v7698
        %v7922 = vunpack.c.h.b16 %v7698
        %v7923 = vunpack.c.l.b16 %v7699
        %v7924 = vunpack.c.l.b16 %v7700
        %v7925 = vunpack.c.h.b16 %v7700
        %v7926 = vunpack.c.l.b16 %v7701
        %v7927 = vunpack.c.l.b16 %v7702
        %v7928 = vunpack.c.h.b16 %v7702
        %v7929 = vunpack.c.l.b16 %v7703
        %v7930 = vunpack.c.l.b16 %v7704
        %v7931 = vunpack.c.h.b16 %v7704
        %v7932 = vunpack.c.l.b16 %v7705
        %v7933 = vunpack.c.l.b16 %v7706
        %v7934 = vunpack.c.h.b16 %v7706
        %v7935 = vunpack.c.l.b16 %v7707
        %v7936 = vunpack.c.l.b16 %v7708
        %v7937 = vunpack.c.h.b16 %v7708
        %v7938 = vunpack.c.l.b16 %v7709
        %v7939 = vunpack.c.l.b16 %v7710
        %v7940 = vunpack.c.h.b16 %v7710
        %v7941 = vunpack.c.l.b16 %v7711
        %v7942 = vunpack.c.l.b16 %v7712
        %v7943 = vunpack.c.h.b16 %v7712
        %v7944 = vunpack.c.l.b16 %v7713
        %v7945 = vunpack.c.l.b16 %v7714
        %v7946 = vunpack.c.h.b16 %v7714
        %v7947 = vunpack.c.l.b16 %v7715
        %v7948 = vunpack.c.l.b16 %v7716
        %v7949 = vunpack.c.h.b16 %v7716
        %v7950 = vunpack.c.l.b16 %v7717
        %v7951 = vunpack.c.l.b16 %v7718
        %v7952 = vunpack.c.h.b16 %v7718
        %v7953 = vunpack.c.l.b16 %v7719
        %v7954 = vunpack.c.l.b16 %v7720
        %v7955 = vunpack.c.h.b16 %v7720
        %v7956 = vunpack.c.l.b16 %v7721
        %v7957 = vunpack.c.l.b16 %v7722
        %v7958 = vunpack.c.h.b16 %v7722
        %v7959 = vunpack.c.l.b16 %v7723
        %v7960 = vunpack.c.l.b16 %v7724
        %v7961 = vunpack.c.h.b16 %v7724
        %v7962 = vunpack.c.l.b16 %v7725
        %v7963 = vunpack.c.l.b16 %v7726
        %v7964 = vunpack.c.h.b16 %v7726
        %v7965 = vunpack.c.l.b16 %v7727
        %v7966 = vunpack.c.l.b16 %v7728
        %v7967 = vunpack.c.h.b16 %v7728
        %v7968 = vunpack.c.l.b16 %v7729
        %v7969 = vunpack.c.l.b16 %v7730
        %v7970 = vunpack.c.h.b16 %v7730
        %v7971 = vunpack.c.l.b16 %v7731
        %v7972 = vunpack.c.l.b16 %v7732
        %v7973 = vunpack.c.h.b16 %v7732
        %v7974 = vunpack.c.l.b16 %v7733
        %v7975 = vunpack.c.l.b16 %v7734
        %v7976 = vunpack.c.h.b16 %v7734
        %v7977 = vunpack.c.l.b16 %v7735
        %v7978 = vunpack.c.l.b16 %v7736
        %v7979 = vunpack.c.h.b16 %v7736
        %v7980 = vunpack.c.l.b16 %v7737
        %v7981 = vunpack.c.l.b16 %v7738
        %v7982 = vunpack.c.h.b16 %v7738
        %v7983 = vunpack.c.l.b16 %v7739
        %v7984 = vunpack.c.l.b16 %v7740
        %v7985 = vunpack.c.h.b16 %v7740
        %v7986 = vunpack.c.l.b16 %v7741
        %v7987 = vunpack.c.l.b16 %v7742
        %v7988 = vunpack.c.h.b16 %v7742
        %v7989 = vunpack.c.l.b16 %v7743
        %v7990 = vunpack.c.l.b16 %v7744
        %v7991 = vunpack.c.h.b16 %v7744
        %v7992 = vunpack.c.l.b16 %v7745
        %v7993 = vunpack.c.l.b16 %v7746
        %v7994 = vunpack.c.h.b16 %v7746
        %v7995 = vunpack.c.l.b16 %v7747
        %v7996 = vunpack.c.l.b16 %v7748
        %v7997 = vunpack.c.h.b16 %v7748
        %v7998 = vunpack.c.l.b16 %v7749
        %v7999 = vunpack.c.l.b16 %v7750
        %v8000 = vunpack.c.h.b16 %v7750
        %v8001 = vunpack.c.l.b16 %v7751
        %v8002 = vunpack.c.l.b16 %v7752
        %v8003 = vunpack.c.h.b16 %v7752
        %v8004 = vunpack.c.l.b16 %v7753
        %v8005 = vunpack.c.l.b16 %v7754
        %v8006 = vunpack.c.h.b16 %v7754
        %v8007 = vunpack.c.l.b16 %v7755
        %v8008 = vunpack.c.l.b16 %v7756
        %v8009 = vunpack.c.h.b16 %v7756
        %v8010 = vunpack.c.l.b16 %v7757
        %v8011 = vunpack.c.l.b16 %v7758
        %v8012 = vunpack.c.h.b16 %v7758
        %v8013 = vunpack.c.l.b16 %v7759
        %v8014 = vunpack.c.l.b16 %v7760
        %v8015 = vunpack.c.h.b16 %v7760
        %v8016 = vunpack.c.l.b16 %v7761
        %v8017 = vunpack.c.l.b16 %v7762
        %v8018 = vunpack.c.h.b16 %v7762
        %v8019 = vunpack.c.l.b16 %v7763
        %v8020 = vunpack.c.l.b16 %v7764
        %v8021 = vunpack.c.h.b16 %v7764
        %v8022 = vunpack.c.l.b16 %v7765
        %v8023 = vunpack.c.l.b16 %v7766
        %v8024 = vunpack.c.h.b16 %v7766
        %v8025 = vunpack.c.l.b16 %v7767
        %v8026 = vunpack.c.l.b16 %v7768
        %v8027 = vunpack.c.h.b16 %v7768
        %v8028 = vunpack.c.l.b16 %v7769
        %v8029 = vunpack.c.l.b16 %v7770
        %v8030 = vunpack.c.h.b16 %v7770
        %v8031 = vunpack.c.l.b16 %v7771
        %v8032 = vunpack.c.l.b16 %v7772
        %v8033 = vunpack.c.h.b16 %v7772
        %v8034 = vunpack.c.l.b16 %v7773
        %v8035 = vunpack.c.l.b16 %v7774
        %v8036 = vunpack.c.h.b16 %v7774
        %v8037 = vunpack.c.l.b16 %v7775
        %v8038 = vunpack.c.l.b16 %v7776
        %v8039 = vunpack.c.h.b16 %v7776
        %v8040 = vunpack.c.l.b16 %v7777
        %v8041 = vunpack.c.l.b16 %v7778
        %v8042 = vunpack.c.h.b16 %v7778
        %v8043 = vunpack.c.l.b16 %v7779
        %v8044 = vunpack.c.l.b16 %v7780
        %v8045 = vunpack.c.h.b16 %v7780
        %v8046 = vunpack.c.l.b16 %v7781
        %v8047 = vunpack.c.l.b16 %v7782
        %v8048 = vunpack.c.h.b16 %v7782
        %v8049 = vunpack.c.l.b16 %v7783
        %v8050 = vunpack.c.l.b16 %v7784
        %v8051 = vunpack.c.h.b16 %v7784
        %v8052 = vunpack.c.l.b16 %v7785
        %v8053 = vunpack.c.l.b16 %v7786
        %v8054 = vunpack.c.h.b16 %v7786
        %v8055 = vunpack.c.l.b16 %v7787
        %v8056 = vunpack.c.l.b16 %v7788
        %v8057 = vunpack.c.h.b16 %v7788
        %v8058 = vunpack.c.l.b16 %v7789
        %v8059 = vunpack.c.l.b16 %v7790
        %v8060 = vunpack.c.h.b16 %v7790
        %v8061 = vunpack.c.l.b16 %v7791
        %v8062 = vunpack.c.l.b16 %v7792
        %v8063 = vunpack.c.h.b16 %v7792
        %v8064 = vunpack.c.l.b16 %v7793
        %v8065 = vpack.c.b16 %v7912, %v7909
        %v8066 = vpack.c.b16 %v7913, %v7910
        %v8067 = vpack.c.b16 %v7914, %v7911
        %v8068 = vpack.c.b16 %v7918, %v7915
        %v8069 = vpack.c.b16 %v7919, %v7916
        %v8070 = vpack.c.b16 %v7920, %v7917
        %v8071 = vpack.c.b16 %v7924, %v7921
        %v8072 = vpack.c.b16 %v7925, %v7922
        %v8073 = vpack.c.b16 %v7926, %v7923
        %v8074 = vpack.c.b16 %v7930, %v7927
        %v8075 = vpack.c.b16 %v7931, %v7928
        %v8076 = vpack.c.b16 %v7932, %v7929
        %v8077 = vpack.c.b16 %v7936, %v7933
        %v8078 = vpack.c.b16 %v7937, %v7934
        %v8079 = vpack.c.b16 %v7938, %v7935
        %v8080 = vpack.c.b16 %v7942, %v7939
        %v8081 = vpack.c.b16 %v7943, %v7940
        %v8082 = vpack.c.b16 %v7944, %v7941
        %v8083 = vpack.c.b16 %v7948, %v7945
        %v8084 = vpack.c.b16 %v7949, %v7946
        %v8085 = vpack.c.b16 %v7950, %v7947
        %v8086 = vpack.c.b16 %v7954, %v7951
        %v8087 = vpack.c.b16 %v7955, %v7952
        %v8088 = vpack.c.b16 %v7956, %v7953
        %v8089 = vpack.c.b16 %v7960, %v7957
        %v8090 = vpack.c.b16 %v7961, %v7958
        %v8091 = vpack.c.b16 %v7962, %v7959
        %v8092 = vpack.c.b16 %v7966, %v7963
        %v8093 = vpack.c.b16 %v7967, %v7964
        %v8094 = vpack.c.b16 %v7968, %v7965
        %v8095 = vpack.c.b16 %v7972, %v7969
        %v8096 = vpack.c.b16 %v7973, %v7970
        %v8097 = vpack.c.b16 %v7974, %v7971
        %v8098 = vpack.c.b16 %v7978, %v7975
        %v8099 = vpack.c.b16 %v7979, %v7976
        %v8100 = vpack.c.b16 %v7980, %v7977
        %v8101 = vpack.c.b16 %v7984, %v7981
        %v8102 = vpack.c.b16 %v7985, %v7982
        %v8103 = vpack.c.b16 %v7986, %v7983
        %v8104 = vpack.c.b16 %v7990, %v7987
        %v8105 = vpack.c.b16 %v7991, %v7988
        %v8106 = vpack.c.b16 %v7992, %v7989
        %v8107 = vpack.c.b16 %v7996, %v7993
        %v8108 = vpack.c.b16 %v7997, %v7994
        %v8109 = vpack.c.b16 %v7998, %v7995
        %v8110 = vpack.c.b16 %v8002, %v7999
        %v8111 = vpack.c.b16 %v8003, %v8000
        %v8112 = vpack.c.b16 %v8004, %v8001
        %v8113 = vpack.c.b16 %v8008, %v8005
        %v8114 = vpack.c.b16 %v8009, %v8006
        %v8115 = vpack.c.b16 %v8010, %v8007
        %v8116 = vpack.c.b16 %v8014, %v8011
        %v8117 = vpack.c.b16 %v8015, %v8012
        %v8118 = vpack.c.b16 %v8016, %v8013
        %v8119 = vpack.c.b16 %v8020, %v8017
        %v8120 = vpack.c.b16 %v8021, %v8018
        %v8121 = vpack.c.b16 %v8022, %v8019
        %v8122 = vpack.c.b16 %v8026, %v8023
        %v8123 = vpack.c.b16 %v8027, %v8024
        %v8124 = vpack.c.b16 %v8028, %v8025
        %v8125 = vpack.c.b16 %v8032, %v8029
        %v8126 = vpack.c.b16 %v8033, %v8030
        %v8127 = vpack.c.b16 %v8034, %v8031
        %v8128 = vpack.c.b16 %v8038, %v8035
        %v8129 = vpack.c.b16 %v8039, %v8036
        %v8130 = vpack.c.b16 %v8040, %v8037
        %v8131 = vpack.c.b16 %v8044, %v8041
        %v8132 = vpack.c.b16 %v8045, %v8042
        %v8133 = vpack.c.b16 %v8046, %v8043
        %v8134 = vpack.c.b16 %v8050, %v8047
        %v8135 = vpack.c.b16 %v8051, %v8048
        %v8136 = vpack.c.b16 %v8052, %v8049
        %v8137 = vpack.c.b16 %v8056, %v8053
        %v8138 = vpack.c.b16 %v8057, %v8054
        %v8139 = vpack.c.b16 %v8058, %v8055
        %v8140 = vpack.c.b16 %v8062, %v8059
        %v8141 = vpack.c.b16 %v8063, %v8060
        %v8142 = vpack.c.b16 %v8064, %v8061
        %v8222 = vsel %vm4855, %v7801, 0
        %8224 = vmatprep.subr.bf16.mxu0 %v8087
        %8225 = vmatpush1.bf16.msra.mxu0 %v8086
        %8226 = vmatprep.subr.bf16.mxu0 %v8084
        %8227 = vmatpush1.bf16.msra.mxu0 %v8083
        %8228 = vmatprep.subr.bf16.mxu0 %v8081
        %8229 = vmatpush1.bf16.msra.mxu0 %v8080
        %8230 = vmatprep.subr.bf16.mxu0 %v8078
        %8231 = vmatpush1.bf16.msra.mxu0 %v8077
        %8232 = vmatprep.subr.bf16.mxu0 %v8075
        %8233 = vmatpush1.bf16.msra.mxu0 %v8074
        %8234 = vmatprep.subr.bf16.mxu0 %v8072
        %8235 = vmatpush1.bf16.msra.mxu0 %v8071
        %8236 = vmatprep.subr.bf16.mxu0 %v8069
        %8237 = vmatpush1.bf16.msra.mxu0 %v8068
        %8238 = vmatprep.subr.bf16.mxu0 %v8066
        %8239 = vmatpush1.bf16.msra.mxu0 %v8065
        %8240 = vmatprep.subr.bf16.mxu0 %v8111
        %8241 = vmatpush2.bf16.msra.mxu0 %v8110
        %8242 = vmatprep.subr.bf16.mxu0 %v8108
        %8243 = vmatpush2.bf16.msra.mxu0 %v8107
        %8244 = vmatprep.subr.bf16.mxu0 %v8105
        %8245 = vmatpush2.bf16.msra.mxu0 %v8104
        %8246 = vmatprep.subr.bf16.mxu0 %v8102
        %8247 = vmatpush2.bf16.msra.mxu0 %v8101
        %8248 = vmatprep.subr.bf16.mxu0 %v8099
        %8249 = vmatpush2.bf16.msra.mxu0 %v8098
        %8250 = vmatprep.subr.bf16.mxu0 %v8096
        %8251 = vmatpush2.bf16.msra.mxu0 %v8095
        %8252 = vmatprep.subr.bf16.mxu0 %v8093
        %8253 = vmatpush2.bf16.msra.mxu0 %v8092
        %8254 = vmatprep.subr.bf16.mxu0 %v8090
        %8255 = vmatpush2.bf16.msra.mxu0 %v8089
        %8256 = vmatprep.mubr.bf16.mxu0 %v7799
        %8257 = vmatmul.mubr.bf16.gmra.mxu0 %v7798
        %v8258 = vpop.f32.mrf.mxu0
        %v8259 = vadd.f32 0.0, %v8258
        %v8260 = vpop.f32.mrf.mxu0
        %v8261 = vadd.f32 0.0, %v8260
        %v8262 = vpop.f32.mrf.mxu0
        %v8263 = vadd.f32 0.0, %v8262
        %v8264 = vpop.f32.mrf.mxu0
        %v8265 = vadd.f32 0.0, %v8264
        %8266 = vdwg.mxu0
        %8267 = vmatprep.subr.bf16.mxu0 %v8135
        %8268 = vmatpush1.bf16.msra.mxu0 %v8134
        %8269 = vmatprep.subr.bf16.mxu0 %v8132
        %8270 = vmatpush1.bf16.msra.mxu0 %v8131
        %8271 = vmatprep.subr.bf16.mxu0 %v8129
        %8272 = vmatpush1.bf16.msra.mxu0 %v8128
        %8273 = vmatprep.subr.bf16.mxu0 %v8126
        %8274 = vmatpush1.bf16.msra.mxu0 %v8125
        %8275 = vmatprep.subr.bf16.mxu0 %v8123
        %8276 = vmatpush1.bf16.msra.mxu0 %v8122
        %8277 = vmatprep.subr.bf16.mxu0 %v8120
        %8278 = vmatpush1.bf16.msra.mxu0 %v8119
        %8279 = vmatprep.subr.bf16.mxu0 %v8117
        %8280 = vmatpush1.bf16.msra.mxu0 %v8116
        %8281 = vmatprep.subr.bf16.mxu0 %v8114
        %8282 = vmatpush1.bf16.msra.mxu0 %v8113
        %8283 = vmatprep.subr.bf16.mxu0 0
        %8284 = vmatpush2.bf16.msra.mxu0 0
        %8285 = vmatprep.subr.bf16.mxu0 0
        %8286 = vmatpush2.bf16.msra.mxu0 0
        %8287 = vmatprep.subr.bf16.mxu0 0
        %8288 = vmatpush2.bf16.msra.mxu0 0
        %8289 = vmatprep.subr.bf16.mxu0 0
        %8290 = vmatpush2.bf16.msra.mxu0 0
        %8291 = vmatprep.subr.bf16.mxu0 0
        %8292 = vmatpush2.bf16.msra.mxu0 0
        %8293 = vmatprep.subr.bf16.mxu0 0
        %8294 = vmatpush2.bf16.msra.mxu0 0
        %8295 = vmatprep.subr.bf16.mxu0 %v8141
        %8296 = vmatpush2.bf16.msra.mxu0 %v8140
        %8297 = vmatprep.subr.bf16.mxu0 %v8138
        %8298 = vmatpush2.bf16.msra.mxu0 %v8137
        %8299 = vmatprep.mubr.bf16.mxu0 %v8222
        %8300 = vmatmul.mubr.bf16.gmra.mxu0 %v7800
        %v8301 = vpop.f32.mrf.mxu0
        %v8302 = vadd.f32 %v8259, %v8301
        %v8303 = vpop.f32.mrf.mxu0
        %v8304 = vadd.f32 %v8261, %v8303
        %v8305 = vpop.f32.mrf.mxu0
        %v8306 = vadd.f32 %v8263, %v8305
        %v8307 = vpop.f32.mrf.mxu0
        %v8308 = vadd.f32 %v8265, %v8307
        %8309 = vdwg.mxu0
        %8310 = vmatprep.subr.bf16.mxu0 0
        %8311 = vmatpush1.bf16.msra.mxu0 %v8088
        %8312 = vmatprep.subr.bf16.mxu0 0
        %8313 = vmatpush1.bf16.msra.mxu0 %v8085
        %8314 = vmatprep.subr.bf16.mxu0 0
        %8315 = vmatpush1.bf16.msra.mxu0 %v8082
        %8316 = vmatprep.subr.bf16.mxu0 0
        %8317 = vmatpush1.bf16.msra.mxu0 %v8079
        %8318 = vmatprep.subr.bf16.mxu0 0
        %8319 = vmatpush1.bf16.msra.mxu0 %v8076
        %8320 = vmatprep.subr.bf16.mxu0 0
        %8321 = vmatpush1.bf16.msra.mxu0 %v8073
        %8322 = vmatprep.subr.bf16.mxu0 0
        %8323 = vmatpush1.bf16.msra.mxu0 %v8070
        %8324 = vmatprep.subr.bf16.mxu0 0
        %8325 = vmatpush1.bf16.msra.mxu0 %v8067
        %8326 = vmatprep.subr.bf16.mxu0 0
        %8327 = vmatpush2.bf16.msra.mxu0 %v8112
        %8328 = vmatprep.subr.bf16.mxu0 0
        %8329 = vmatpush2.bf16.msra.mxu0 %v8109
        %8330 = vmatprep.subr.bf16.mxu0 0
        %8331 = vmatpush2.bf16.msra.mxu0 %v8106
        %8332 = vmatprep.subr.bf16.mxu0 0
        %8333 = vmatpush2.bf16.msra.mxu0 %v8103
        %8334 = vmatprep.subr.bf16.mxu0 0
        %8335 = vmatpush2.bf16.msra.mxu0 %v8100
        %8336 = vmatprep.subr.bf16.mxu0 0
        %8337 = vmatpush2.bf16.msra.mxu0 %v8097
        %8338 = vmatprep.subr.bf16.mxu0 0
        %8339 = vmatpush2.bf16.msra.mxu0 %v8094
        %8340 = vmatprep.subr.bf16.mxu0 0
        %8341 = vmatpush2.bf16.msra.mxu0 %v8091
        %8342 = vmatprep.mubr.bf16.mxu0 %v7799
        %8343 = vmatmul.mubr.bf16.gmra.mxu0 %v7798
        %v8344 = vpop.f32.mrf.mxu0
        %v8345 = vadd.f32 0.0, %v8344
        %v8346 = vpop.f32.mrf.mxu0
        %v8347 = vpop.f32.mrf.mxu0
        %v8348 = vadd.f32 0.0, %v8347
        %v8349 = vpop.f32.mrf.mxu0
        %8350 = vdwg.mxu0
        %8351 = vmatprep.subr.bf16.mxu0 0
        %8352 = vmatpush1.bf16.msra.mxu0 %v8136
        %8353 = vmatprep.subr.bf16.mxu0 0
        %8354 = vmatpush1.bf16.msra.mxu0 %v8133
        %8355 = vmatprep.subr.bf16.mxu0 0
        %8356 = vmatpush1.bf16.msra.mxu0 %v8130
        %8357 = vmatprep.subr.bf16.mxu0 0
        %8358 = vmatpush1.bf16.msra.mxu0 %v8127
        %8359 = vmatprep.subr.bf16.mxu0 0
        %8360 = vmatpush1.bf16.msra.mxu0 %v8124
        %8361 = vmatprep.subr.bf16.mxu0 0
        %8362 = vmatpush1.bf16.msra.mxu0 %v8121
        %8363 = vmatprep.subr.bf16.mxu0 0
        %8364 = vmatpush1.bf16.msra.mxu0 %v8118
        %8365 = vmatprep.subr.bf16.mxu0 0
        %8366 = vmatpush1.bf16.msra.mxu0 %v8115
        %8367 = vmatprep.subr.bf16.mxu0 0
        %8368 = vmatpush2.bf16.msra.mxu0 0
        %8369 = vmatprep.subr.bf16.mxu0 0
        %8370 = vmatpush2.bf16.msra.mxu0 0
        %8371 = vmatprep.subr.bf16.mxu0 0
        %8372 = vmatpush2.bf16.msra.mxu0 0
        %8373 = vmatprep.subr.bf16.mxu0 0
        %8374 = vmatpush2.bf16.msra.mxu0 0
        %8375 = vmatprep.subr.bf16.mxu0 0
        %8376 = vmatpush2.bf16.msra.mxu0 0
        %8377 = vmatprep.subr.bf16.mxu0 0
        %8378 = vmatpush2.bf16.msra.mxu0 0
        %8379 = vmatprep.subr.bf16.mxu0 0
        %8380 = vmatpush2.bf16.msra.mxu0 %v8142
        %8381 = vmatprep.subr.bf16.mxu0 0
        %8382 = vmatpush2.bf16.msra.mxu0 %v8139
        %8383 = vmatprep.mubr.bf16.mxu0 %v8222
        %8384 = vmatmul.mubr.bf16.gmra.mxu0 %v7800
        %v8385 = vpop.f32.mrf.mxu0
        %v8386 = vadd.f32 %v8345, %v8385
        %v8387 = vpop.f32.mrf.mxu0
        %v8388 = vpop.f32.mrf.mxu0
        %v8389 = vadd.f32 %v8348, %v8388
        %v8390 = vpop.f32.mrf.mxu0
        %8391 = vdwg.mxu0
        %v8392 = vadd.f32 %v6314, %v8302
        %v8393 = vadd.f32 %v6316, %v8304
        %v8394 = vadd.f32 %v6398, %v8386
        %v8395 = vadd.f32 %v6318, %v8306
        %v8396 = vadd.f32 %v6320, %v8308
        %v8397 = vadd.f32 %v6401, %v8389
        %s8398 = scalar_lea.vmem [#allocation10], 1248
        %v8399 = vld [vmem:[%s8398] sm:$0xff]
        %v8400 = vld [vmem:[%s8398 + $0x8] sm:$0xf]
        %v8401 = vld [vmem:[%s8398 + $0xc] sm:$0xff]
        %v8402 = vld [vmem:[%s8398 + $0x14] sm:$0xf]
        %v8403 = vld [vmem:[%s8398 + $0x18] sm:$0xff]
        %v8404 = vld [vmem:[%s8398 + $0x20] sm:$0xf]
        %v8405 = vld [vmem:[%s8398 + $0x24] sm:$0xff]
        %v8406 = vld [vmem:[%s8398 + $0x2c] sm:$0xf]
        %v8407 = vld [vmem:[%s8398 + $0x30] sm:$0xff]
        %v8408 = vld [vmem:[%s8398 + $0x38] sm:$0xf]
        %v8409 = vld [vmem:[%s8398 + $0x3c] sm:$0xff]
        %v8410 = vld [vmem:[%s8398 + $0x44] sm:$0xf]
        %v8411 = vld [vmem:[%s8398 + $0x48] sm:$0xff]
        %v8412 = vld [vmem:[%s8398 + $0x50] sm:$0xf]
        %v8413 = vld [vmem:[%s8398 + $0x54] sm:$0xff]
        %v8414 = vld [vmem:[%s8398 + $0x5c] sm:$0xf]
        %v8415 = vld [vmem:[%s8398 + $0x60] sm:$0xff]
        %v8416 = vld [vmem:[%s8398 + $0x68] sm:$0xf]
        %v8417 = vld [vmem:[%s8398 + $0x6c] sm:$0xff]
        %v8418 = vld [vmem:[%s8398 + $0x74] sm:$0xf]
        %v8419 = vld [vmem:[%s8398 + $0x78] sm:$0xff]
        %v8420 = vld [vmem:[%s8398 + $0x80] sm:$0xf]
        %v8421 = vld [vmem:[%s8398 + $0x84] sm:$0xff]
        %v8422 = vld [vmem:[%s8398 + $0x8c] sm:$0xf]
        %v8423 = vld [vmem:[%s8398 + $0x90] sm:$0xff]
        %v8424 = vld [vmem:[%s8398 + $0x98] sm:$0xf]
        %v8425 = vld [vmem:[%s8398 + $0x9c] sm:$0xff]
        %v8426 = vld [vmem:[%s8398 + $0xa4] sm:$0xf]
        %v8427 = vld [vmem:[%s8398 + $0xa8] sm:$0xff]
        %v8428 = vld [vmem:[%s8398 + $0xb0] sm:$0xf]
        %v8429 = vld [vmem:[%s8398 + $0xb4] sm:$0xff]
        %v8430 = vld [vmem:[%s8398 + $0xbc] sm:$0xf]
        %v8431 = vld [vmem:[%s8398 + $0xc0] sm:$0xff]
        %v8432 = vld [vmem:[%s8398 + $0xc8] sm:$0xf]
        %v8433 = vld [vmem:[%s8398 + $0xcc] sm:$0xff]
        %v8434 = vld [vmem:[%s8398 + $0xd4] sm:$0xf]
        %v8435 = vld [vmem:[%s8398 + $0xd8] sm:$0xff]
        %v8436 = vld [vmem:[%s8398 + $0xe0] sm:$0xf]
        %v8437 = vld [vmem:[%s8398 + $0xe4] sm:$0xff]
        %v8438 = vld [vmem:[%s8398 + $0xec] sm:$0xf]
        %v8439 = vld [vmem:[%s8398 + $0xf0] sm:$0xff]
        %v8440 = vld [vmem:[%s8398 + $0xf8] sm:$0xf]
        %v8441 = vld [vmem:[%s8398 + $0xfc] sm:$0xff]
        %v8442 = vld [vmem:[%s8398 + $0x104] sm:$0xf]
        %v8443 = vld [vmem:[%s8398 + $0x108] sm:$0xff]
        %v8444 = vld [vmem:[%s8398 + $0x110] sm:$0xf]
        %v8445 = vld [vmem:[%s8398 + $0x114] sm:$0xff]
        %v8446 = vld [vmem:[%s8398 + $0x11c] sm:$0xf]
        %v8447 = vld [vmem:[%s8398 + $0x120] sm:$0xff]
        %v8448 = vld [vmem:[%s8398 + $0x128] sm:$0xf]
        %v8449 = vld [vmem:[%s8398 + $0x12c] sm:$0xff]
        %v8450 = vld [vmem:[%s8398 + $0x134] sm:$0xf]
        %v8451 = vld [vmem:[%s8398 + $0x138] sm:$0xff]
        %v8452 = vld [vmem:[%s8398 + $0x140] sm:$0xf]
        %v8453 = vld [vmem:[%s8398 + $0x144] sm:$0xff]
        %v8454 = vld [vmem:[%s8398 + $0x14c] sm:$0xf]
        %v8455 = vld [vmem:[%s8398 + $0x150] sm:$0xff]
        %v8456 = vld [vmem:[%s8398 + $0x158] sm:$0xf]
        %v8457 = vld [vmem:[%s8398 + $0x15c] sm:$0xff]
        %v8458 = vld [vmem:[%s8398 + $0x164] sm:$0xf]
        %v8459 = vld [vmem:[%s8398 + $0x168] sm:$0xff]
        %v8460 = vld [vmem:[%s8398 + $0x170] sm:$0xf]
        %v8461 = vld [vmem:[%s8398 + $0x174] sm:$0xff]
        %v8462 = vld [vmem:[%s8398 + $0x17c] sm:$0xf]
        %v8463 = vld [vmem:[%s8398 + $0x180] sm:$0xff]
        %v8464 = vld [vmem:[%s8398 + $0x188] sm:$0xf]
        %v8465 = vld [vmem:[%s8398 + $0x18c] sm:$0xff]
        %v8466 = vld [vmem:[%s8398 + $0x194] sm:$0xf]
        %v8467 = vld [vmem:[%s8398 + $0x198] sm:$0xff]
        %v8468 = vld [vmem:[%s8398 + $0x1a0] sm:$0xf]
        %v8469 = vld [vmem:[%s8398 + $0x1a4] sm:$0xff]
        %v8470 = vld [vmem:[%s8398 + $0x1ac] sm:$0xf]
        %v8471 = vld [vmem:[%s8398 + $0x1b0] sm:$0xff]
        %v8472 = vld [vmem:[%s8398 + $0x1b8] sm:$0xf]
        %v8473 = vld [vmem:[%s8398 + $0x1bc] sm:$0xff]
        %v8474 = vld [vmem:[%s8398 + $0x1c4] sm:$0xf]
        %v8475 = vld [vmem:[%s8398 + $0x1c8] sm:$0xff]
        %v8476 = vld [vmem:[%s8398 + $0x1d0] sm:$0xf]
        %v8477 = vld [vmem:[%s8398 + $0x1d4] sm:$0xff]
        %v8478 = vld [vmem:[%s8398 + $0x1dc] sm:$0xf]
        %v8479 = vld [vmem:[%s8398 + $0x1e0] sm:$0xff]
        %v8480 = vld [vmem:[%s8398 + $0x1e8] sm:$0xf]
        %v8481 = vld [vmem:[%s8398 + $0x1ec] sm:$0xff]
        %v8482 = vld [vmem:[%s8398 + $0x1f4] sm:$0xf]
        %v8483 = vld [vmem:[%s8398 + $0x1f8] sm:$0xff]
        %v8484 = vld [vmem:[%s8398 + $0x200] sm:$0xf]
        %v8485 = vld [vmem:[%s8398 + $0x204] sm:$0xff]
        %v8486 = vld [vmem:[%s8398 + $0x20c] sm:$0xf]
        %v8487 = vld [vmem:[%s8398 + $0x210] sm:$0xff]
        %v8488 = vld [vmem:[%s8398 + $0x218] sm:$0xf]
        %v8489 = vld [vmem:[%s8398 + $0x21c] sm:$0xff]
        %v8490 = vld [vmem:[%s8398 + $0x224] sm:$0xf]
        %v8491 = vld [vmem:[%s8398 + $0x228] sm:$0xff]
        %v8492 = vld [vmem:[%s8398 + $0x230] sm:$0xf]
        %v8493 = vld [vmem:[%s8398 + $0x234] sm:$0xff]
        %v8494 = vld [vmem:[%s8398 + $0x23c] sm:$0xf]
        %v8495 = vld [vmem:[%s8398 + $0x240] sm:$0xff]
        %v8496 = vld [vmem:[%s8398 + $0x248] sm:$0xf]
        %v8497 = vld [vmem:[%s8398 + $0x24c] sm:$0xff]
        %v8498 = vld [vmem:[%s8398 + $0x254] sm:$0xf]
        %v8499 = vld [vmem:[%s8398 + $0x258] sm:$0xff]
        %v8500 = vld [vmem:[%s8398 + $0x260] sm:$0xf]
        %v8501 = vld [vmem:[%s8398 + $0x264] sm:$0xff]
        %v8502 = vld [vmem:[%s8398 + $0x26c] sm:$0xf]
        %v8607 = vunpack.c.l.b16 %v8399
        %v8608 = vunpack.c.h.b16 %v8399
        %v8609 = vunpack.c.l.b16 %v8400
        %v8610 = vunpack.c.l.b16 %v8401
        %v8611 = vunpack.c.h.b16 %v8401
        %v8612 = vunpack.c.l.b16 %v8402
        %v8613 = vunpack.c.l.b16 %v8403
        %v8614 = vunpack.c.h.b16 %v8403
        %v8615 = vunpack.c.l.b16 %v8404
        %v8616 = vunpack.c.l.b16 %v8405
        %v8617 = vunpack.c.h.b16 %v8405
        %v8618 = vunpack.c.l.b16 %v8406
        %v8619 = vunpack.c.l.b16 %v8407
        %v8620 = vunpack.c.h.b16 %v8407
        %v8621 = vunpack.c.l.b16 %v8408
        %v8622 = vunpack.c.l.b16 %v8409
        %v8623 = vunpack.c.h.b16 %v8409
        %v8624 = vunpack.c.l.b16 %v8410
        %v8625 = vunpack.c.l.b16 %v8411
        %v8626 = vunpack.c.h.b16 %v8411
        %v8627 = vunpack.c.l.b16 %v8412
        %v8628 = vunpack.c.l.b16 %v8413
        %v8629 = vunpack.c.h.b16 %v8413
        %v8630 = vunpack.c.l.b16 %v8414
        %v8631 = vunpack.c.l.b16 %v8415
        %v8632 = vunpack.c.h.b16 %v8415
        %v8633 = vunpack.c.l.b16 %v8416
        %v8634 = vunpack.c.l.b16 %v8417
        %v8635 = vunpack.c.h.b16 %v8417
        %v8636 = vunpack.c.l.b16 %v8418
        %v8637 = vunpack.c.l.b16 %v8419
        %v8638 = vunpack.c.h.b16 %v8419
        %v8639 = vunpack.c.l.b16 %v8420
        %v8640 = vunpack.c.l.b16 %v8421
        %v8641 = vunpack.c.h.b16 %v8421
        %v8642 = vunpack.c.l.b16 %v8422
        %v8643 = vunpack.c.l.b16 %v8423
        %v8644 = vunpack.c.h.b16 %v8423
        %v8645 = vunpack.c.l.b16 %v8424
        %v8646 = vunpack.c.l.b16 %v8425
        %v8647 = vunpack.c.h.b16 %v8425
        %v8648 = vunpack.c.l.b16 %v8426
        %v8649 = vunpack.c.l.b16 %v8427
        %v8650 = vunpack.c.h.b16 %v8427
        %v8651 = vunpack.c.l.b16 %v8428
        %v8652 = vunpack.c.l.b16 %v8429
        %v8653 = vunpack.c.h.b16 %v8429
        %v8654 = vunpack.c.l.b16 %v8430
        %v8655 = vunpack.c.l.b16 %v8431
        %v8656 = vunpack.c.h.b16 %v8431
        %v8657 = vunpack.c.l.b16 %v8432
        %v8658 = vunpack.c.l.b16 %v8433
        %v8659 = vunpack.c.h.b16 %v8433
        %v8660 = vunpack.c.l.b16 %v8434
        %v8661 = vunpack.c.l.b16 %v8435
        %v8662 = vunpack.c.h.b16 %v8435
        %v8663 = vunpack.c.l.b16 %v8436
        %v8664 = vunpack.c.l.b16 %v8437
        %v8665 = vunpack.c.h.b16 %v8437
        %v8666 = vunpack.c.l.b16 %v8438
        %v8667 = vunpack.c.l.b16 %v8439
        %v8668 = vunpack.c.h.b16 %v8439
        %v8669 = vunpack.c.l.b16 %v8440
        %v8670 = vunpack.c.l.b16 %v8441
        %v8671 = vunpack.c.h.b16 %v8441
        %v8672 = vunpack.c.l.b16 %v8442
        %v8673 = vunpack.c.l.b16 %v8443
        %v8674 = vunpack.c.h.b16 %v8443
        %v8675 = vunpack.c.l.b16 %v8444
        %v8676 = vunpack.c.l.b16 %v8445
        %v8677 = vunpack.c.h.b16 %v8445
        %v8678 = vunpack.c.l.b16 %v8446
        %v8679 = vunpack.c.l.b16 %v8447
        %v8680 = vunpack.c.h.b16 %v8447
        %v8681 = vunpack.c.l.b16 %v8448
        %v8682 = vunpack.c.l.b16 %v8449
        %v8683 = vunpack.c.h.b16 %v8449
        %v8684 = vunpack.c.l.b16 %v8450
        %v8685 = vunpack.c.l.b16 %v8451
        %v8686 = vunpack.c.h.b16 %v8451
        %v8687 = vunpack.c.l.b16 %v8452
        %v8688 = vunpack.c.l.b16 %v8453
        %v8689 = vunpack.c.h.b16 %v8453
        %v8690 = vunpack.c.l.b16 %v8454
        %v8691 = vunpack.c.l.b16 %v8455
        %v8692 = vunpack.c.h.b16 %v8455
        %v8693 = vunpack.c.l.b16 %v8456
        %v8694 = vunpack.c.l.b16 %v8457
        %v8695 = vunpack.c.h.b16 %v8457
        %v8696 = vunpack.c.l.b16 %v8458
        %v8697 = vunpack.c.l.b16 %v8459
        %v8698 = vunpack.c.h.b16 %v8459
        %v8699 = vunpack.c.l.b16 %v8460
        %v8700 = vunpack.c.l.b16 %v8461
        %v8701 = vunpack.c.h.b16 %v8461
        %v8702 = vunpack.c.l.b16 %v8462
        %v8703 = vunpack.c.l.b16 %v8463
        %v8704 = vunpack.c.h.b16 %v8463
        %v8705 = vunpack.c.l.b16 %v8464
        %v8706 = vunpack.c.l.b16 %v8465
        %v8707 = vunpack.c.h.b16 %v8465
        %v8708 = vunpack.c.l.b16 %v8466
        %v8709 = vunpack.c.l.b16 %v8467
        %v8710 = vunpack.c.h.b16 %v8467
        %v8711 = vunpack.c.l.b16 %v8468
        %v8712 = vunpack.c.l.b16 %v8469
        %v8713 = vunpack.c.h.b16 %v8469
        %v8714 = vunpack.c.l.b16 %v8470
        %v8715 = vunpack.c.l.b16 %v8471
        %v8716 = vunpack.c.h.b16 %v8471
        %v8717 = vunpack.c.l.b16 %v8472
        %v8718 = vunpack.c.l.b16 %v8473
        %v8719 = vunpack.c.h.b16 %v8473
        %v8720 = vunpack.c.l.b16 %v8474
        %v8721 = vunpack.c.l.b16 %v8475
        %v8722 = vunpack.c.h.b16 %v8475
        %v8723 = vunpack.c.l.b16 %v8476
        %v8724 = vunpack.c.l.b16 %v8477
        %v8725 = vunpack.c.h.b16 %v8477
        %v8726 = vunpack.c.l.b16 %v8478
        %v8727 = vunpack.c.l.b16 %v8479
        %v8728 = vunpack.c.h.b16 %v8479
        %v8729 = vunpack.c.l.b16 %v8480
        %v8730 = vunpack.c.l.b16 %v8481
        %v8731 = vunpack.c.h.b16 %v8481
        %v8732 = vunpack.c.l.b16 %v8482
        %v8733 = vunpack.c.l.b16 %v8483
        %v8734 = vunpack.c.h.b16 %v8483
        %v8735 = vunpack.c.l.b16 %v8484
        %v8736 = vunpack.c.l.b16 %v8485
        %v8737 = vunpack.c.h.b16 %v8485
        %v8738 = vunpack.c.l.b16 %v8486
        %v8739 = vunpack.c.l.b16 %v8487
        %v8740 = vunpack.c.h.b16 %v8487
        %v8741 = vunpack.c.l.b16 %v8488
        %v8742 = vunpack.c.l.b16 %v8489
        %v8743 = vunpack.c.h.b16 %v8489
        %v8744 = vunpack.c.l.b16 %v8490
        %v8745 = vunpack.c.l.b16 %v8491
        %v8746 = vunpack.c.h.b16 %v8491
        %v8747 = vunpack.c.l.b16 %v8492
        %v8748 = vunpack.c.l.b16 %v8493
        %v8749 = vunpack.c.h.b16 %v8493
        %v8750 = vunpack.c.l.b16 %v8494
        %v8751 = vunpack.c.l.b16 %v8495
        %v8752 = vunpack.c.h.b16 %v8495
        %v8753 = vunpack.c.l.b16 %v8496
        %v8754 = vunpack.c.l.b16 %v8497
        %v8755 = vunpack.c.h.b16 %v8497
        %v8756 = vunpack.c.l.b16 %v8498
        %v8757 = vunpack.c.l.b16 %v8499
        %v8758 = vunpack.c.h.b16 %v8499
        %v8759 = vunpack.c.l.b16 %v8500
        %v8760 = vunpack.c.l.b16 %v8501
        %v8761 = vunpack.c.h.b16 %v8501
        %v8762 = vunpack.c.l.b16 %v8502
        %v8763 = vpack.c.b16 %v8610, %v8607
        %v8764 = vpack.c.b16 %v8611, %v8608
        %v8765 = vpack.c.b16 %v8612, %v8609
        %v8766 = vpack.c.b16 %v8616, %v8613
        %v8767 = vpack.c.b16 %v8617, %v8614
        %v8768 = vpack.c.b16 %v8618, %v8615
        %v8769 = vpack.c.b16 %v8622, %v8619
        %v8770 = vpack.c.b16 %v8623, %v8620
        %v8771 = vpack.c.b16 %v8624, %v8621
        %v8772 = vpack.c.b16 %v8628, %v8625
        %v8773 = vpack.c.b16 %v8629, %v8626
        %v8774 = vpack.c.b16 %v8630, %v8627
        %v8775 = vpack.c.b16 %v8634, %v8631
        %v8776 = vpack.c.b16 %v8635, %v8632
        %v8777 = vpack.c.b16 %v8636, %v8633
        %v8778 = vpack.c.b16 %v8640, %v8637
        %v8779 = vpack.c.b16 %v8641, %v8638
        %v8780 = vpack.c.b16 %v8642, %v8639
        %v8781 = vpack.c.b16 %v8646, %v8643
        %v8782 = vpack.c.b16 %v8647, %v8644
        %v8783 = vpack.c.b16 %v8648, %v8645
        %v8784 = vpack.c.b16 %v8652, %v8649
        %v8785 = vpack.c.b16 %v8653, %v8650
        %v8786 = vpack.c.b16 %v8654, %v8651
        %v8787 = vpack.c.b16 %v8658, %v8655
        %v8788 = vpack.c.b16 %v8659, %v8656
        %v8789 = vpack.c.b16 %v8660, %v8657
        %v8790 = vpack.c.b16 %v8664, %v8661
        %v8791 = vpack.c.b16 %v8665, %v8662
        %v8792 = vpack.c.b16 %v8666, %v8663
        %v8793 = vpack.c.b16 %v8670, %v8667
        %v8794 = vpack.c.b16 %v8671, %v8668
        %v8795 = vpack.c.b16 %v8672, %v8669
        %v8796 = vpack.c.b16 %v8676, %v8673
        %v8797 = vpack.c.b16 %v8677, %v8674
        %v8798 = vpack.c.b16 %v8678, %v8675
        %v8799 = vpack.c.b16 %v8682, %v8679
        %v8800 = vpack.c.b16 %v8683, %v8680
        %v8801 = vpack.c.b16 %v8684, %v8681
        %v8802 = vpack.c.b16 %v8688, %v8685
        %v8803 = vpack.c.b16 %v8689, %v8686
        %v8804 = vpack.c.b16 %v8690, %v8687
        %v8805 = vpack.c.b16 %v8694, %v8691
        %v8806 = vpack.c.b16 %v8695, %v8692
        %v8807 = vpack.c.b16 %v8696, %v8693
        %v8808 = vpack.c.b16 %v8700, %v8697
        %v8809 = vpack.c.b16 %v8701, %v8698
        %v8810 = vpack.c.b16 %v8702, %v8699
        %v8811 = vpack.c.b16 %v8706, %v8703
        %v8812 = vpack.c.b16 %v8707, %v8704
        %v8813 = vpack.c.b16 %v8708, %v8705
        %v8814 = vpack.c.b16 %v8712, %v8709
        %v8815 = vpack.c.b16 %v8713, %v8710
        %v8816 = vpack.c.b16 %v8714, %v8711
        %v8817 = vpack.c.b16 %v8718, %v8715
        %v8818 = vpack.c.b16 %v8719, %v8716
        %v8819 = vpack.c.b16 %v8720, %v8717
        %v8820 = vpack.c.b16 %v8724, %v8721
        %v8821 = vpack.c.b16 %v8725, %v8722
        %v8822 = vpack.c.b16 %v8726, %v8723
        %v8823 = vpack.c.b16 %v8730, %v8727
        %v8824 = vpack.c.b16 %v8731, %v8728
        %v8825 = vpack.c.b16 %v8732, %v8729
        %v8826 = vpack.c.b16 %v8736, %v8733
        %v8827 = vpack.c.b16 %v8737, %v8734
        %v8828 = vpack.c.b16 %v8738, %v8735
        %v8829 = vpack.c.b16 %v8742, %v8739
        %v8830 = vpack.c.b16 %v8743, %v8740
        %v8831 = vpack.c.b16 %v8744, %v8741
        %v8832 = vpack.c.b16 %v8748, %v8745
        %v8833 = vpack.c.b16 %v8749, %v8746
        %v8834 = vpack.c.b16 %v8750, %v8747
        %v8835 = vpack.c.b16 %v8754, %v8751
        %v8836 = vpack.c.b16 %v8755, %v8752
        %v8837 = vpack.c.b16 %v8756, %v8753
        %v8838 = vpack.c.b16 %v8760, %v8757
        %v8839 = vpack.c.b16 %v8761, %v8758
        %v8840 = vpack.c.b16 %v8762, %v8759
        %8919 = vmatprep.subr.bf16.mxu0 %v8785
        %8920 = vmatpush1.bf16.msra.mxu0 %v8784
        %8921 = vmatprep.subr.bf16.mxu0 %v8782
        %8922 = vmatpush1.bf16.msra.mxu0 %v8781
        %8923 = vmatprep.subr.bf16.mxu0 %v8779
        %8924 = vmatpush1.bf16.msra.mxu0 %v8778
        %8925 = vmatprep.subr.bf16.mxu0 %v8776
        %8926 = vmatpush1.bf16.msra.mxu0 %v8775
        %8927 = vmatprep.subr.bf16.mxu0 %v8773
        %8928 = vmatpush1.bf16.msra.mxu0 %v8772
        %8929 = vmatprep.subr.bf16.mxu0 %v8770
        %8930 = vmatpush1.bf16.msra.mxu0 %v8769
        %8931 = vmatprep.subr.bf16.mxu0 %v8767
        %8932 = vmatpush1.bf16.msra.mxu0 %v8766
        %8933 = vmatprep.subr.bf16.mxu0 %v8764
        %8934 = vmatpush1.bf16.msra.mxu0 %v8763
        %8935 = vmatprep.subr.bf16.mxu0 %v8809
        %8936 = vmatpush2.bf16.msra.mxu0 %v8808
        %8937 = vmatprep.subr.bf16.mxu0 %v8806
        %8938 = vmatpush2.bf16.msra.mxu0 %v8805
        %8939 = vmatprep.subr.bf16.mxu0 %v8803
        %8940 = vmatpush2.bf16.msra.mxu0 %v8802
        %8941 = vmatprep.subr.bf16.mxu0 %v8800
        %8942 = vmatpush2.bf16.msra.mxu0 %v8799
        %8943 = vmatprep.subr.bf16.mxu0 %v8797
        %8944 = vmatpush2.bf16.msra.mxu0 %v8796
        %8945 = vmatprep.subr.bf16.mxu0 %v8794
        %8946 = vmatpush2.bf16.msra.mxu0 %v8793
        %8947 = vmatprep.subr.bf16.mxu0 %v8791
        %8948 = vmatpush2.bf16.msra.mxu0 %v8790
        %8949 = vmatprep.subr.bf16.mxu0 %v8788
        %8950 = vmatpush2.bf16.msra.mxu0 %v8787
        %8951 = vmatprep.mubr.bf16.mxu0 %v7799
        %8952 = vmatmul.mubr.bf16.gmra.mxu0 %v7798
        %v8953 = vpop.f32.mrf.mxu0
        %v8954 = vadd.f32 0.0, %v8953
        %v8955 = vpop.f32.mrf.mxu0
        %v8956 = vadd.f32 0.0, %v8955
        %v8957 = vpop.f32.mrf.mxu0
        %v8958 = vadd.f32 0.0, %v8957
        %v8959 = vpop.f32.mrf.mxu0
        %v8960 = vadd.f32 0.0, %v8959
        %8961 = vdwg.mxu0
        %8962 = vmatprep.subr.bf16.mxu0 %v8833
        %8963 = vmatpush1.bf16.msra.mxu0 %v8832
        %8964 = vmatprep.subr.bf16.mxu0 %v8830
        %8965 = vmatpush1.bf16.msra.mxu0 %v8829
        %8966 = vmatprep.subr.bf16.mxu0 %v8827
        %8967 = vmatpush1.bf16.msra.mxu0 %v8826
        %8968 = vmatprep.subr.bf16.mxu0 %v8824
        %8969 = vmatpush1.bf16.msra.mxu0 %v8823
        %8970 = vmatprep.subr.bf16.mxu0 %v8821
        %8971 = vmatpush1.bf16.msra.mxu0 %v8820
        %8972 = vmatprep.subr.bf16.mxu0 %v8818
        %8973 = vmatpush1.bf16.msra.mxu0 %v8817
        %8974 = vmatprep.subr.bf16.mxu0 %v8815
        %8975 = vmatpush1.bf16.msra.mxu0 %v8814
        %8976 = vmatprep.subr.bf16.mxu0 %v8812
        %8977 = vmatpush1.bf16.msra.mxu0 %v8811
        %8978 = vmatprep.subr.bf16.mxu0 0
        %8979 = vmatpush2.bf16.msra.mxu0 0
        %8980 = vmatprep.subr.bf16.mxu0 0
        %8981 = vmatpush2.bf16.msra.mxu0 0
        %8982 = vmatprep.subr.bf16.mxu0 0
        %8983 = vmatpush2.bf16.msra.mxu0 0
        %8984 = vmatprep.subr.bf16.mxu0 0
        %8985 = vmatpush2.bf16.msra.mxu0 0
        %8986 = vmatprep.subr.bf16.mxu0 0
        %8987 = vmatpush2.bf16.msra.mxu0 0
        %8988 = vmatprep.subr.bf16.mxu0 0
        %8989 = vmatpush2.bf16.msra.mxu0 0
        %8990 = vmatprep.subr.bf16.mxu0 %v8839
        %8991 = vmatpush2.bf16.msra.mxu0 %v8838
        %8992 = vmatprep.subr.bf16.mxu0 %v8836
        %8993 = vmatpush2.bf16.msra.mxu0 %v8835
        %8994 = vmatprep.mubr.bf16.mxu0 %v8222
        %8995 = vmatmul.mubr.bf16.gmra.mxu0 %v7800
        %v8996 = vpop.f32.mrf.mxu0
        %v8997 = vadd.f32 %v8954, %v8996
        %v8998 = vpop.f32.mrf.mxu0
        %v8999 = vadd.f32 %v8956, %v8998
        %v9000 = vpop.f32.mrf.mxu0
        %v9001 = vadd.f32 %v8958, %v9000
        %v9002 = vpop.f32.mrf.mxu0
        %v9003 = vadd.f32 %v8960, %v9002
        %9004 = vdwg.mxu0
        %9005 = vmatprep.subr.bf16.mxu0 0
        %9006 = vmatpush1.bf16.msra.mxu0 %v8786
        %9007 = vmatprep.subr.bf16.mxu0 0
        %9008 = vmatpush1.bf16.msra.mxu0 %v8783
        %9009 = vmatprep.subr.bf16.mxu0 0
        %9010 = vmatpush1.bf16.msra.mxu0 %v8780
        %9011 = vmatprep.subr.bf16.mxu0 0
        %9012 = vmatpush1.bf16.msra.mxu0 %v8777
        %9013 = vmatprep.subr.bf16.mxu0 0
        %9014 = vmatpush1.bf16.msra.mxu0 %v8774
        %9015 = vmatprep.subr.bf16.mxu0 0
        %9016 = vmatpush1.bf16.msra.mxu0 %v8771
        %9017 = vmatprep.subr.bf16.mxu0 0
        %9018 = vmatpush1.bf16.msra.mxu0 %v8768
        %9019 = vmatprep.subr.bf16.mxu0 0
        %9020 = vmatpush1.bf16.msra.mxu0 %v8765
        %9021 = vmatprep.subr.bf16.mxu0 0
        %9022 = vmatpush2.bf16.msra.mxu0 %v8810
        %9023 = vmatprep.subr.bf16.mxu0 0
        %9024 = vmatpush2.bf16.msra.mxu0 %v8807
        %9025 = vmatprep.subr.bf16.mxu0 0
        %9026 = vmatpush2.bf16.msra.mxu0 %v8804
        %9027 = vmatprep.subr.bf16.mxu0 0
        %9028 = vmatpush2.bf16.msra.mxu0 %v8801
        %9029 = vmatprep.subr.bf16.mxu0 0
        %9030 = vmatpush2.bf16.msra.mxu0 %v8798
        %9031 = vmatprep.subr.bf16.mxu0 0
        %9032 = vmatpush2.bf16.msra.mxu0 %v8795
        %9033 = vmatprep.subr.bf16.mxu0 0
        %9034 = vmatpush2.bf16.msra.mxu0 %v8792
        %9035 = vmatprep.subr.bf16.mxu0 0
        %9036 = vmatpush2.bf16.msra.mxu0 %v8789
        %9037 = vmatprep.mubr.bf16.mxu0 %v7799
        %9038 = vmatmul.mubr.bf16.gmra.mxu0 %v7798
        %v9039 = vpop.f32.mrf.mxu0
        %v9040 = vadd.f32 0.0, %v9039
        %v9041 = vpop.f32.mrf.mxu0
        %v9042 = vpop.f32.mrf.mxu0
        %v9043 = vadd.f32 0.0, %v9042
        %v9044 = vpop.f32.mrf.mxu0
        %9045 = vdwg.mxu0
        %9046 = vmatprep.subr.bf16.mxu0 0
        %9047 = vmatpush1.bf16.msra.mxu0 %v8834
        %9048 = vmatprep.subr.bf16.mxu0 0
        %9049 = vmatpush1.bf16.msra.mxu0 %v8831
        %9050 = vmatprep.subr.bf16.mxu0 0
        %9051 = vmatpush1.bf16.msra.mxu0 %v8828
        %9052 = vmatprep.subr.bf16.mxu0 0
        %9053 = vmatpush1.bf16.msra.mxu0 %v8825
        %9054 = vmatprep.subr.bf16.mxu0 0
        %9055 = vmatpush1.bf16.msra.mxu0 %v8822
        %9056 = vmatprep.subr.bf16.mxu0 0
        %9057 = vmatpush1.bf16.msra.mxu0 %v8819
        %9058 = vmatprep.subr.bf16.mxu0 0
        %9059 = vmatpush1.bf16.msra.mxu0 %v8816
        %9060 = vmatprep.subr.bf16.mxu0 0
        %9061 = vmatpush1.bf16.msra.mxu0 %v8813
        %9062 = vmatprep.subr.bf16.mxu0 0
        %9063 = vmatpush2.bf16.msra.mxu0 0
        %9064 = vmatprep.subr.bf16.mxu0 0
        %9065 = vmatpush2.bf16.msra.mxu0 0
        %9066 = vmatprep.subr.bf16.mxu0 0
        %9067 = vmatpush2.bf16.msra.mxu0 0
        %9068 = vmatprep.subr.bf16.mxu0 0
        %9069 = vmatpush2.bf16.msra.mxu0 0
        %9070 = vmatprep.subr.bf16.mxu0 0
        %9071 = vmatpush2.bf16.msra.mxu0 0
        %9072 = vmatprep.subr.bf16.mxu0 0
        %9073 = vmatpush2.bf16.msra.mxu0 0
        %9074 = vmatprep.subr.bf16.mxu0 0
        %9075 = vmatpush2.bf16.msra.mxu0 %v8840
        %9076 = vmatprep.subr.bf16.mxu0 0
        %9077 = vmatpush2.bf16.msra.mxu0 %v8837
        %9078 = vmatprep.mubr.bf16.mxu0 %v8222
        %9079 = vmatmul.mubr.bf16.gmra.mxu0 %v7800
        %v9080 = vpop.f32.mrf.mxu0
        %v9081 = vadd.f32 %v9040, %v9080
        %v9082 = vpop.f32.mrf.mxu0
        %v9083 = vpop.f32.mrf.mxu0
        %v9084 = vadd.f32 %v9043, %v9083
        %v9085 = vpop.f32.mrf.mxu0
        %9086 = vdwg.mxu0
        %v9087 = vadd.f32 %v7587, %v8997
        %v9088 = vadd.f32 %v7589, %v8999
        %v9089 = vadd.f32 %v7671, %v9081
        %v9090 = vadd.f32 %v7591, %v9001
        %v9091 = vadd.f32 %v7593, %v9003
        %v9092 = vadd.f32 %v7674, %v9084
        %v9093 = vmax.f32 %v8392, %v9087
        %v9094 = vmax.f32 %v8393, %v9088
        %v9095 = vmax.f32 %v8394, %v9089
        %v9096 = vmax.f32 %v8395, %v9090
        %v9097 = vmax.f32 %v8396, %v9091
        %v9098 = vmax.f32 %v8397, %v9092
        %v9099 = vld [vmem:[%s8] sm:$0x1f]
        %vm9100 = vcmask 89088
        %v9102 = vsel %vm9100, %v9099, 0
        %vm9104 = vcmask 1042432
        %v9106 = vsel %vm9104, %v9096, 0
        %v9109 = vsel %vm9104, %v9097, 0
        %v9112 = vsel %vm9104, %v9098, 0
        %9114 = vmatprep.subr.mxu0 0.0
        %9115 = vmatpush1.msra.mxu0 0.0
        %9116 = vmatprep.subr.mxu0 0.0
        %9117 = vmatpush1.msra.mxu0 0.0
        %9118 = vmatprep.subr.mxu0 0.0
        %9119 = vmatpush1.msra.mxu0 0.0
        %9120 = vmatprep.subr.mxu0 0.0
        %9121 = vmatpush1.msra.mxu0 0.0
        %9122 = vmatprep.subr.mxu0 0.0
        %9123 = vmatpush1.msra.mxu0 0.0
        %9124 = vmatprep.subr.mxu0 0.0
        %9125 = vmatpush1.msra.mxu0 0.0
        %9126 = vmatprep.subr.mxu0 0.0
        %9127 = vmatpush1.msra.mxu0 0.0
        %9128 = vmatprep.subr.mxu0 0.0
        %9129 = vmatpush1.msra.mxu0 0.0
        %9130 = vmatprep.subr.mxu0 0.0
        %9131 = vmatpush1.msra.mxu0 0.0
        %9132 = vmatprep.subr.mxu0 0.0
        %9133 = vmatpush1.msra.mxu0 0.0
        %9134 = vmatprep.subr.mxu0 0.0
        %9135 = vmatpush1.msra.mxu0 0.0
        %9136 = vmatprep.subr.mxu0 0.0
        %9137 = vmatpush1.msra.mxu0 0.0
        %9138 = vmatprep.subr.mxu0 0.0
        %9139 = vmatpush1.msra.mxu0 0.0
        %9140 = vmatprep.subr.mxu0 0.0
        %9141 = vmatpush1.msra.mxu0 0.0
        %9142 = vmatprep.subr.mxu0 %v9109
        %9143 = vmatpush1.msra.mxu0 %v9106
        %9144 = vmatprep.subr.mxu0 %v9094
        %9145 = vmatpush1.msra.mxu0 %v9093
        %9146 = vmatprep.subr.mxu0 0.0
        %9147 = vmatpush2.msra.mxu0 0.0
        %9148 = vmatprep.subr.mxu0 0.0
        %9149 = vmatpush2.msra.mxu0 0.0
        %9150 = vmatprep.subr.mxu0 0.0
        %9151 = vmatpush2.msra.mxu0 0.0
        %9152 = vmatprep.subr.mxu0 0.0
        %9153 = vmatpush2.msra.mxu0 0.0
        %9154 = vmatprep.subr.mxu0 0.0
        %9155 = vmatpush2.msra.mxu0 0.0
        %9156 = vmatprep.subr.mxu0 0.0
        %9157 = vmatpush2.msra.mxu0 0.0
        %9158 = vmatprep.subr.mxu0 0.0
        %9159 = vmatpush2.msra.mxu0 0.0
        %9160 = vmatprep.subr.mxu0 0.0
        %9161 = vmatpush2.msra.mxu0 0.0
        %9162 = vmatprep.subr.mxu0 0.0
        %9163 = vmatpush2.msra.mxu0 0.0
        %9164 = vmatprep.subr.mxu0 0.0
        %9165 = vmatpush2.msra.mxu0 0.0
        %9166 = vmatprep.subr.mxu0 0.0
        %9167 = vmatpush2.msra.mxu0 0.0
        %9168 = vmatprep.subr.mxu0 0.0
        %9169 = vmatpush2.msra.mxu0 0.0
        %9170 = vmatprep.subr.mxu0 0.0
        %9171 = vmatpush2.msra.mxu0 0.0
        %9172 = vmatprep.subr.mxu0 0.0
        %9173 = vmatpush2.msra.mxu0 0.0
        %9174 = vmatprep.subr.mxu0 0.0
        %9175 = vmatpush2.msra.mxu0 0.0
        %9176 = vmatprep.subr.mxu0 0.0
        %9177 = vmatpush2.msra.mxu0 0.0
        %9178 = vmatprep.mubr.f32.mxu0 0.0
        %9179 = vmatmul.mubr.f32.gmra.mxu0 %v9102
        %v9180 = vpop.f32.mrf.mxu0
        %v9181 = vadd.f32 0.0, %v9180
        %v9182 = vpop.f32.mrf.mxu0
        %v9183 = vadd.f32 0.0, %v9182
        %9184 = vdwg.mxu0
        %9185 = vmatprep.subr.mxu0 0.0
        %9186 = vmatpush1.msra.mxu0 0.0
        %9187 = vmatprep.subr.mxu0 0.0
        %9188 = vmatpush1.msra.mxu0 0.0
        %9189 = vmatprep.subr.mxu0 0.0
        %9190 = vmatpush1.msra.mxu0 0.0
        %9191 = vmatprep.subr.mxu0 0.0
        %9192 = vmatpush1.msra.mxu0 0.0
        %9193 = vmatprep.subr.mxu0 0.0
        %9194 = vmatpush1.msra.mxu0 0.0
        %9195 = vmatprep.subr.mxu0 0.0
        %9196 = vmatpush1.msra.mxu0 0.0
        %9197 = vmatprep.subr.mxu0 0.0
        %9198 = vmatpush1.msra.mxu0 0.0
        %9199 = vmatprep.subr.mxu0 0.0
        %9200 = vmatpush1.msra.mxu0 0.0
        %9201 = vmatprep.subr.mxu0 0.0
        %9202 = vmatpush1.msra.mxu0 0.0
        %9203 = vmatprep.subr.mxu0 0.0
        %9204 = vmatpush1.msra.mxu0 0.0
        %9205 = vmatprep.subr.mxu0 0.0
        %9206 = vmatpush1.msra.mxu0 0.0
        %9207 = vmatprep.subr.mxu0 0.0
        %9208 = vmatpush1.msra.mxu0 0.0
        %9209 = vmatprep.subr.mxu0 0.0
        %9210 = vmatpush1.msra.mxu0 0.0
        %9211 = vmatprep.subr.mxu0 0.0
        %9212 = vmatpush1.msra.mxu0 0.0
        %9213 = vmatprep.subr.mxu0 0.0
        %9214 = vmatpush1.msra.mxu0 %v9112
        %9215 = vmatprep.subr.mxu0 0.0
        %9216 = vmatpush1.msra.mxu0 %v9095
        %9217 = vmatprep.subr.mxu0 0.0
        %9218 = vmatpush2.msra.mxu0 0.0
        %9219 = vmatprep.subr.mxu0 0.0
        %9220 = vmatpush2.msra.mxu0 0.0
        %9221 = vmatprep.subr.mxu0 0.0
        %9222 = vmatpush2.msra.mxu0 0.0
        %9223 = vmatprep.subr.mxu0 0.0
        %9224 = vmatpush2.msra.mxu0 0.0
        %9225 = vmatprep.subr.mxu0 0.0
        %9226 = vmatpush2.msra.mxu0 0.0
        %9227 = vmatprep.subr.mxu0 0.0
        %9228 = vmatpush2.msra.mxu0 0.0
        %9229 = vmatprep.subr.mxu0 0.0
        %9230 = vmatpush2.msra.mxu0 0.0
        %9231 = vmatprep.subr.mxu0 0.0
        %9232 = vmatpush2.msra.mxu0 0.0
        %9233 = vmatprep.subr.mxu0 0.0
        %9234 = vmatpush2.msra.mxu0 0.0
        %9235 = vmatprep.subr.mxu0 0.0
        %9236 = vmatpush2.msra.mxu0 0.0
        %9237 = vmatprep.subr.mxu0 0.0
        %9238 = vmatpush2.msra.mxu0 0.0
        %9239 = vmatprep.subr.mxu0 0.0
        %9240 = vmatpush2.msra.mxu0 0.0
        %9241 = vmatprep.subr.mxu0 0.0
        %9242 = vmatpush2.msra.mxu0 0.0
        %9243 = vmatprep.subr.mxu0 0.0
        %9244 = vmatpush2.msra.mxu0 0.0
        %9245 = vmatprep.subr.mxu0 0.0
        %9246 = vmatpush2.msra.mxu0 0.0
        %9247 = vmatprep.subr.mxu0 0.0
        %9248 = vmatpush2.msra.mxu0 0.0
        %9249 = vmatprep.mubr.f32.mxu0 0.0
        %9250 = vmatmul.mubr.f32.gmra.mxu0 %v9102
        %v9251 = vpop.f32.mrf.mxu0
        %v9252 = vadd.f32 0.0, %v9251
        %v9253 = vpop.f32.mrf.mxu0
        %9254 = vdwg.mxu0
        %s9255 = scalar_lea.vmem %s8, 8
        %v9256 = vld [vmem:[%s9255] sm:$0x1f]
        %v9258 = vsel %vm9100, %v9256, 0
        %9260 = vmatprep.subr.mxu0 0.0
        %9261 = vmatpush1.msra.mxu0 0.0
        %9262 = vmatprep.subr.mxu0 0.0
        %9263 = vmatpush1.msra.mxu0 0.0
        %9264 = vmatprep.subr.mxu0 0.0
        %9265 = vmatpush1.msra.mxu0 0.0
        %9266 = vmatprep.subr.mxu0 0.0
        %9267 = vmatpush1.msra.mxu0 0.0
        %9268 = vmatprep.subr.mxu0 0.0
        %9269 = vmatpush1.msra.mxu0 0.0
        %9270 = vmatprep.subr.mxu0 0.0
        %9271 = vmatpush1.msra.mxu0 0.0
        %9272 = vmatprep.subr.mxu0 0.0
        %9273 = vmatpush1.msra.mxu0 0.0
        %9274 = vmatprep.subr.mxu0 0.0
        %9275 = vmatpush1.msra.mxu0 0.0
        %9276 = vmatprep.subr.mxu0 0.0
        %9277 = vmatpush1.msra.mxu0 0.0
        %9278 = vmatprep.subr.mxu0 0.0
        %9279 = vmatpush1.msra.mxu0 0.0
        %9280 = vmatprep.subr.mxu0 0.0
        %9281 = vmatpush1.msra.mxu0 0.0
        %9282 = vmatprep.subr.mxu0 0.0
        %9283 = vmatpush1.msra.mxu0 0.0
        %9284 = vmatprep.subr.mxu0 0.0
        %9285 = vmatpush1.msra.mxu0 0.0
        %9286 = vmatprep.subr.mxu0 0.0
        %9287 = vmatpush1.msra.mxu0 0.0
        %9288 = vmatprep.subr.mxu0 %v9109
        %9289 = vmatpush1.msra.mxu0 %v9106
        %9290 = vmatprep.subr.mxu0 %v9094
        %9291 = vmatpush1.msra.mxu0 %v9093
        %9292 = vmatprep.subr.mxu0 0.0
        %9293 = vmatpush2.msra.mxu0 0.0
        %9294 = vmatprep.subr.mxu0 0.0
        %9295 = vmatpush2.msra.mxu0 0.0
        %9296 = vmatprep.subr.mxu0 0.0
        %9297 = vmatpush2.msra.mxu0 0.0
        %9298 = vmatprep.subr.mxu0 0.0
        %9299 = vmatpush2.msra.mxu0 0.0
        %9300 = vmatprep.subr.mxu0 0.0
        %9301 = vmatpush2.msra.mxu0 0.0
        %9302 = vmatprep.subr.mxu0 0.0
        %9303 = vmatpush2.msra.mxu0 0.0
        %9304 = vmatprep.subr.mxu0 0.0
        %9305 = vmatpush2.msra.mxu0 0.0
        %9306 = vmatprep.subr.mxu0 0.0
        %9307 = vmatpush2.msra.mxu0 0.0
        %9308 = vmatprep.subr.mxu0 0.0
        %9309 = vmatpush2.msra.mxu0 0.0
        %9310 = vmatprep.subr.mxu0 0.0
        %9311 = vmatpush2.msra.mxu0 0.0
        %9312 = vmatprep.subr.mxu0 0.0
        %9313 = vmatpush2.msra.mxu0 0.0
        %9314 = vmatprep.subr.mxu0 0.0
        %9315 = vmatpush2.msra.mxu0 0.0
        %9316 = vmatprep.subr.mxu0 0.0
        %9317 = vmatpush2.msra.mxu0 0.0
        %9318 = vmatprep.subr.mxu0 0.0
        %9319 = vmatpush2.msra.mxu0 0.0
        %9320 = vmatprep.subr.mxu0 0.0
        %9321 = vmatpush2.msra.mxu0 0.0
        %9322 = vmatprep.subr.mxu0 0.0
        %9323 = vmatpush2.msra.mxu0 0.0
        %9324 = vmatprep.mubr.f32.mxu0 0.0
        %9325 = vmatmul.mubr.f32.gmra.mxu0 %v9258
        %v9326 = vpop.f32.mrf.mxu0
        %v9327 = vadd.f32 0.0, %v9326
        %v9328 = vpop.f32.mrf.mxu0
        %v9329 = vadd.f32 0.0, %v9328
        %9330 = vdwg.mxu0
        %9331 = vmatprep.subr.mxu0 0.0
        %9332 = vmatpush1.msra.mxu0 0.0
        %9333 = vmatprep.subr.mxu0 0.0
        %9334 = vmatpush1.msra.mxu0 0.0
        %9335 = vmatprep.subr.mxu0 0.0
        %9336 = vmatpush1.msra.mxu0 0.0
        %9337 = vmatprep.subr.mxu0 0.0
        %9338 = vmatpush1.msra.mxu0 0.0
        %9339 = vmatprep.subr.mxu0 0.0
        %9340 = vmatpush1.msra.mxu0 0.0
        %9341 = vmatprep.subr.mxu0 0.0
        %9342 = vmatpush1.msra.mxu0 0.0
        %9343 = vmatprep.subr.mxu0 0.0
        %9344 = vmatpush1.msra.mxu0 0.0
        %9345 = vmatprep.subr.mxu0 0.0
        %9346 = vmatpush1.msra.mxu0 0.0
        %9347 = vmatprep.subr.mxu0 0.0
        %9348 = vmatpush1.msra.mxu0 0.0
        %9349 = vmatprep.subr.mxu0 0.0
        %9350 = vmatpush1.msra.mxu0 0.0
        %9351 = vmatprep.subr.mxu0 0.0
        %9352 = vmatpush1.msra.mxu0 0.0
        %9353 = vmatprep.subr.mxu0 0.0
        %9354 = vmatpush1.msra.mxu0 0.0
        %9355 = vmatprep.subr.mxu0 0.0
        %9356 = vmatpush1.msra.mxu0 0.0
        %9357 = vmatprep.subr.mxu0 0.0
        %9358 = vmatpush1.msra.mxu0 0.0
        %9359 = vmatprep.subr.mxu0 0.0
        %9360 = vmatpush1.msra.mxu0 %v9112
        %9361 = vmatprep.subr.mxu0 0.0
        %9362 = vmatpush1.msra.mxu0 %v9095
        %9363 = vmatprep.subr.mxu0 0.0
        %9364 = vmatpush2.msra.mxu0 0.0
        %9365 = vmatprep.subr.mxu0 0.0
        %9366 = vmatpush2.msra.mxu0 0.0
        %9367 = vmatprep.subr.mxu0 0.0
        %9368 = vmatpush2.msra.mxu0 0.0
        %9369 = vmatprep.subr.mxu0 0.0
        %9370 = vmatpush2.msra.mxu0 0.0
        %9371 = vmatprep.subr.mxu0 0.0
        %9372 = vmatpush2.msra.mxu0 0.0
        %9373 = vmatprep.subr.mxu0 0.0
        %9374 = vmatpush2.msra.mxu0 0.0
        %9375 = vmatprep.subr.mxu0 0.0
        %9376 = vmatpush2.msra.mxu0 0.0
        %9377 = vmatprep.subr.mxu0 0.0
        %9378 = vmatpush2.msra.mxu0 0.0
        %9379 = vmatprep.subr.mxu0 0.0
        %9380 = vmatpush2.msra.mxu0 0.0
        %9381 = vmatprep.subr.mxu0 0.0
        %9382 = vmatpush2.msra.mxu0 0.0
        %9383 = vmatprep.subr.mxu0 0.0
        %9384 = vmatpush2.msra.mxu0 0.0
        %9385 = vmatprep.subr.mxu0 0.0
        %9386 = vmatpush2.msra.mxu0 0.0
        %9387 = vmatprep.subr.mxu0 0.0
        %9388 = vmatpush2.msra.mxu0 0.0
        %9389 = vmatprep.subr.mxu0 0.0
        %9390 = vmatpush2.msra.mxu0 0.0
        %9391 = vmatprep.subr.mxu0 0.0
        %9392 = vmatpush2.msra.mxu0 0.0
        %9393 = vmatprep.subr.mxu0 0.0
        %9394 = vmatpush2.msra.mxu0 0.0
        %9395 = vmatprep.mubr.f32.mxu0 0.0
        %9396 = vmatmul.mubr.f32.gmra.mxu0 %v9258
        %v9397 = vpop.f32.mrf.mxu0
        %v9398 = vadd.f32 0.0, %v9397
        %v9399 = vpop.f32.mrf.mxu0
        %9400 = vdwg.mxu0
        %v9401 = vmax.f32 %v9181, %v9327
        %v9402 = vmax.f32 %v9183, %v9329
        %v9403 = vmax.f32 %v9252, %v9398
        %v9404 = vld [vmem:[%s7] sm:$0x7]
        %v9406 = vlaneseq
        %v9407 = vshrl.u32 %v9406, 7
        %v9408 = vsub.s32 0, %v9407
        %v9409 = vrot.slane %v9404, %v9408
        %v9410 = vlaneseq
        %v9411 = vshrl.u32 %v9410, 7
        %v9412 = vsub.s32 1, %v9411
        %v9413 = vrot.slane %v9404, %v9412
        %v9414 = vlaneseq
        %v9415 = vshrl.u32 %v9414, 7
        %v9416 = vsub.s32 2, %v9415
        %v9417 = vrot.slane %v9404, %v9416
        %v9421 = vadd.f32 %v9401, %v9409
        %v9422 = vadd.f32 %v9402, %v9413
        %v9423 = vadd.f32 %v9403, %v9417
        %v9424 = vmax.f32 %v9421, 0.0
        %v9425 = vmax.f32 %v9422, 0.0
        %v9426 = vmax.f32 %v9423, 0.0
        %9427 = vst [vmem:[#allocation3] sm:$0x1f] %v9424
        %9428 = vst [vmem:[#allocation3 + $0x8] sm:$0x1f] %v9425
        %vm9429 = vcmask 520192
        %9430 = vst.msk [vmem:[#allocation3 + $0x10] sm:$0x1f] %vm9429, %v9426
        %v9431 = vld [vmem:[#allocation3] sm:$0x7]
        %v9432 = vld [vmem:[#allocation3 + $0x8] sm:$0x7]
        %v9433 = vld [vmem:[#allocation3 + $0x10] sm:$0x7]
        %v9434 = vpack.c.bf16 %v9431, %v9431
        %v9435 = vpack.c.bf16 %v9432, %v9432
        %v9436 = vpack.c.bf16 %v9433, %v9433
        %v9437 = vld [vmem:[%s9] sm:$0xf]
        %v9438 = vld [vmem:[%s9 + $0x4] sm:$0xf]
        %v9439 = vld [vmem:[%s9 + $0x8] sm:$0xf]
        %v9440 = vld [vmem:[%s9 + $0xc] sm:$0xf]
        %v9441 = vld [vmem:[%s9 + $0x10] sm:$0xf]
        %v9442 = vld [vmem:[%s9 + $0x14] sm:$0xf]
        %v9443 = vld [vmem:[%s9 + $0x18] sm:$0xf]
        %v9444 = vld [vmem:[%s9 + $0x1c] sm:$0xf]
        %v9445 = vld [vmem:[%s9 + $0x20] sm:$0xf]
        %v9446 = vld [vmem:[%s9 + $0x24] sm:$0xf]
        %v9447 = vld [vmem:[%s9 + $0x28] sm:$0xf]
        %v9448 = vld [vmem:[%s9 + $0x2c] sm:$0xf]
        %v9449 = vld [vmem:[%s9 + $0x30] sm:$0xf]
        %v9450 = vld [vmem:[%s9 + $0x34] sm:$0xf]
        %v9451 = vld [vmem:[%s9 + $0x38] sm:$0xf]
        %v9452 = vld [vmem:[%s9 + $0x3c] sm:$0xf]
        %v9453 = vld [vmem:[%s9 + $0x40] sm:$0xf]
        %v9454 = vld [vmem:[%s9 + $0x44] sm:$0xf]
        %v9455 = vld [vmem:[%s9 + $0x48] sm:$0xf]
        %v9456 = vld [vmem:[%s9 + $0x4c] sm:$0xf]
        %v9457 = vld [vmem:[%s9 + $0x50] sm:$0xf]
        %v9458 = vld [vmem:[%s9 + $0x54] sm:$0xf]
        %v9459 = vld [vmem:[%s9 + $0x58] sm:$0xf]
        %v9460 = vld [vmem:[%s9 + $0x5c] sm:$0xf]
        %v9461 = vld [vmem:[%s9 + $0x60] sm:$0xf]
        %v9462 = vld [vmem:[%s9 + $0x64] sm:$0xf]
        %v9463 = vld [vmem:[%s9 + $0x68] sm:$0xf]
        %v9464 = vld [vmem:[%s9 + $0x6c] sm:$0xf]
        %v9465 = vld [vmem:[%s9 + $0x70] sm:$0xf]
        %v9466 = vld [vmem:[%s9 + $0x74] sm:$0xf]
        %v9467 = vld [vmem:[%s9 + $0x78] sm:$0xf]
        %v9468 = vld [vmem:[%s9 + $0x7c] sm:$0xf]
        %v9469 = vld [vmem:[%s9 + $0x80] sm:$0xf]
        %v9470 = vld [vmem:[%s9 + $0x84] sm:$0xf]
        %v9471 = vld [vmem:[%s9 + $0x88] sm:$0xf]
        %v9472 = vld [vmem:[%s9 + $0x8c] sm:$0xf]
        %v9473 = vld [vmem:[%s9 + $0x90] sm:$0xf]
        %v9474 = vld [vmem:[%s9 + $0x94] sm:$0xf]
        %v9475 = vld [vmem:[%s9 + $0x98] sm:$0xf]
        %v9476 = vld [vmem:[%s9 + $0x9c] sm:$0xf]
        %v9477 = vld [vmem:[#allocation12] sm:$0xf]
        %v9478 = vld [vmem:[#allocation12 + $0x4] sm:$0xf]
        %v9479 = vld [vmem:[#allocation12 + $0x8] sm:$0xf]
        %v9480 = vld [vmem:[#allocation12 + $0xc] sm:$0xf]
        %v9481 = vld [vmem:[#allocation12 + $0x10] sm:$0xf]
        %v9482 = vld [vmem:[#allocation12 + $0x14] sm:$0xf]
        %v9483 = vld [vmem:[#allocation12 + $0x18] sm:$0xf]
        %v9484 = vld [vmem:[#allocation12 + $0x1c] sm:$0xf]
        %v9485 = vld [vmem:[#allocation12 + $0x20] sm:$0xf]
        %v9486 = vld [vmem:[#allocation12 + $0x24] sm:$0xf]
        %v9487 = vld [vmem:[#allocation12 + $0x28] sm:$0xf]
        %v9488 = vld [vmem:[#allocation12 + $0x2c] sm:$0xf]
        %v9489 = vld [vmem:[#allocation12 + $0x30] sm:$0xf]
        %v9490 = vld [vmem:[#allocation12 + $0x34] sm:$0xf]
        %v9491 = vld [vmem:[#allocation12 + $0x38] sm:$0xf]
        %v9492 = vld [vmem:[#allocation12 + $0x3c] sm:$0xf]
        %v9493 = vld [vmem:[#allocation12 + $0x40] sm:$0xf]
        %v9494 = vld [vmem:[#allocation12 + $0x44] sm:$0xf]
        %v9495 = vld [vmem:[#allocation12 + $0x48] sm:$0xf]
        %v9496 = vld [vmem:[#allocation12 + $0x4c] sm:$0xf]
        %v9497 = vld [vmem:[#allocation12 + $0x50] sm:$0xf]
        %v9498 = vld [vmem:[#allocation12 + $0x54] sm:$0xf]
        %v9499 = vld [vmem:[#allocation12 + $0x58] sm:$0xf]
        %v9500 = vld [vmem:[#allocation12 + $0x5c] sm:$0xf]
        %v9501 = vld [vmem:[#allocation12 + $0x60] sm:$0xf]
        %v9502 = vld [vmem:[#allocation12 + $0x64] sm:$0xf]
        %v9503 = vld [vmem:[#allocation12 + $0x68] sm:$0xf]
        %v9504 = vld [vmem:[#allocation12 + $0x6c] sm:$0xf]
        %v9505 = vld [vmem:[#allocation12 + $0x70] sm:$0xf]
        %v9506 = vld [vmem:[#allocation12 + $0x74] sm:$0xf]
        %v9507 = vld [vmem:[#allocation12 + $0x78] sm:$0xf]
        %v9508 = vld [vmem:[#allocation12 + $0x7c] sm:$0xf]
        %v9509 = vld [vmem:[#allocation12 + $0x80] sm:$0xf]
        %v9510 = vld [vmem:[#allocation12 + $0x84] sm:$0xf]
        %v9511 = vld [vmem:[#allocation12 + $0x88] sm:$0xf]
        %v9512 = vld [vmem:[#allocation12 + $0x8c] sm:$0xf]
        %v9513 = vld [vmem:[#allocation12 + $0x90] sm:$0xf]
        %v9514 = vld [vmem:[#allocation12 + $0x94] sm:$0xf]
        %v9515 = vld [vmem:[#allocation12 + $0x98] sm:$0xf]
        %v9516 = vld [vmem:[#allocation12 + $0x9c] sm:$0xf]
        %v9517 = vld [vmem:[#allocation3] sm:$0xe]
        %v9518 = vld [vmem:[#allocation3 + $0x8] sm:$0xe]
        %v9519 = vld [vmem:[#allocation3 + $0x10] sm:$0xe]
        %v9520 = vpack.c.bf16 %v9517, %v9517
        %v9521 = vpack.c.bf16 %v9518, %v9518
        %v9522 = vpack.c.bf16 %v9519, %v9519
        %s9523 = scalar_lea.vmem %s9, 160
        %v9524 = vld [vmem:[%s9523] sm:$0xf]
        %v9525 = vld [vmem:[%s9523 + $0x4] sm:$0xf]
        %v9526 = vld [vmem:[%s9523 + $0x8] sm:$0xf]
        %v9527 = vld [vmem:[%s9523 + $0xc] sm:$0xf]
        %v9528 = vld [vmem:[%s9523 + $0x10] sm:$0xf]
        %v9529 = vld [vmem:[%s9523 + $0x14] sm:$0xf]
        %v9530 = vld [vmem:[%s9523 + $0x18] sm:$0xf]
        %v9531 = vld [vmem:[%s9523 + $0x1c] sm:$0xf]
        %v9532 = vld [vmem:[%s9523 + $0x20] sm:$0xf]
        %v9533 = vld [vmem:[%s9523 + $0x24] sm:$0xf]
        %v9534 = vld [vmem:[%s9523 + $0x28] sm:$0xf]
        %v9535 = vld [vmem:[%s9523 + $0x2c] sm:$0xf]
        %v9536 = vld [vmem:[%s9523 + $0x30] sm:$0xf]
        %v9537 = vld [vmem:[%s9523 + $0x34] sm:$0xf]
        %v9538 = vld [vmem:[%s9523 + $0x38] sm:$0xf]
        %v9539 = vld [vmem:[%s9523 + $0x3c] sm:$0xf]
        %v9540 = vld [vmem:[%s9523 + $0x40] sm:$0xf]
        %v9541 = vld [vmem:[%s9523 + $0x44] sm:$0xf]
        %v9542 = vld [vmem:[%s9523 + $0x48] sm:$0xf]
        %v9543 = vld [vmem:[%s9523 + $0x4c] sm:$0xf]
        %v9544 = vld [vmem:[%s9523 + $0x50] sm:$0xf]
        %v9545 = vld [vmem:[%s9523 + $0x54] sm:$0xf]
        %v9546 = vld [vmem:[%s9523 + $0x58] sm:$0xf]
        %v9547 = vld [vmem:[%s9523 + $0x5c] sm:$0xf]
        %v9548 = vld [vmem:[%s9523 + $0x60] sm:$0xf]
        %v9549 = vld [vmem:[%s9523 + $0x64] sm:$0xf]
        %v9550 = vld [vmem:[%s9523 + $0x68] sm:$0xf]
        %v9551 = vld [vmem:[%s9523 + $0x6c] sm:$0xf]
        %v9552 = vld [vmem:[%s9523 + $0x70] sm:$0xf]
        %v9553 = vld [vmem:[%s9523 + $0x74] sm:$0xf]
        %v9554 = vld [vmem:[%s9523 + $0x78] sm:$0xf]
        %v9555 = vld [vmem:[%s9523 + $0x7c] sm:$0xf]
        %v9556 = vld [vmem:[%s9523 + $0x80] sm:$0xf]
        %v9557 = vld [vmem:[%s9523 + $0x84] sm:$0xf]
        %v9558 = vld [vmem:[%s9523 + $0x88] sm:$0xf]
        %v9559 = vld [vmem:[%s9523 + $0x8c] sm:$0xf]
        %v9560 = vld [vmem:[%s9523 + $0x90] sm:$0xf]
        %v9561 = vld [vmem:[%s9523 + $0x94] sm:$0xf]
        %v9562 = vld [vmem:[%s9523 + $0x98] sm:$0xf]
        %v9563 = vld [vmem:[%s9523 + $0x9c] sm:$0xf]
        %v9565 = vshrl.u32 %v9520, 16
        %v9567 = vshll.u32 %v9520, 16
        %v9569 = vrot.slane %v9567, 1
        %v9570 = vor.u32 %v9565, %v9569
        %v9572 = vshrl.u32 %v9521, 16
        %v9574 = vshll.u32 %v9521, 16
        %v9576 = vrot.slane %v9574, 1
        %v9577 = vor.u32 %v9572, %v9576
        %v9579 = vshrl.u32 %v9522, 16
        %v9581 = vshll.u32 %v9522, 16
        %v9583 = vrot.slane %v9581, 1
        %v9584 = vor.u32 %v9579, %v9583
        %v9627 = vunpack.c.l.b16 %v9524
        %v9628 = vunpack.c.l.b16 %v9525
        %v9629 = vunpack.c.l.b16 %v9526
        %v9630 = vunpack.c.l.b16 %v9527
        %v9631 = vunpack.c.l.b16 %v9528
        %v9632 = vunpack.c.l.b16 %v9529
        %v9633 = vunpack.c.l.b16 %v9530
        %v9634 = vunpack.c.l.b16 %v9531
        %v9635 = vunpack.c.l.b16 %v9532
        %v9636 = vunpack.c.l.b16 %v9533
        %v9637 = vunpack.c.l.b16 %v9534
        %v9638 = vunpack.c.l.b16 %v9535
        %v9639 = vunpack.c.l.b16 %v9536
        %v9640 = vunpack.c.l.b16 %v9537
        %v9641 = vunpack.c.l.b16 %v9538
        %v9642 = vunpack.c.l.b16 %v9539
        %v9643 = vunpack.c.l.b16 %v9540
        %v9644 = vunpack.c.l.b16 %v9541
        %v9645 = vunpack.c.l.b16 %v9542
        %v9646 = vunpack.c.l.b16 %v9543
        %v9647 = vunpack.c.l.b16 %v9544
        %v9648 = vunpack.c.l.b16 %v9545
        %v9649 = vunpack.c.l.b16 %v9546
        %v9650 = vunpack.c.l.b16 %v9547
        %v9651 = vunpack.c.l.b16 %v9548
        %v9652 = vunpack.c.l.b16 %v9549
        %v9653 = vunpack.c.l.b16 %v9550
        %v9654 = vunpack.c.l.b16 %v9551
        %v9655 = vunpack.c.l.b16 %v9552
        %v9656 = vunpack.c.l.b16 %v9553
        %v9657 = vunpack.c.l.b16 %v9554
        %v9658 = vunpack.c.l.b16 %v9555
        %v9659 = vunpack.c.l.b16 %v9556
        %v9660 = vunpack.c.l.b16 %v9557
        %v9661 = vunpack.c.l.b16 %v9558
        %v9662 = vunpack.c.l.b16 %v9559
        %v9663 = vunpack.c.l.b16 %v9560
        %v9664 = vunpack.c.l.b16 %v9561
        %v9665 = vunpack.c.l.b16 %v9562
        %v9666 = vunpack.c.l.b16 %v9563
        %v9667 = vpack.c.b16 %v9628, %v9627
        %v9668 = vpack.c.b16 %v9630, %v9629
        %v9669 = vpack.c.b16 %v9632, %v9631
        %v9670 = vpack.c.b16 %v9634, %v9633
        %v9671 = vpack.c.b16 %v9636, %v9635
        %v9672 = vpack.c.b16 %v9638, %v9637
        %v9673 = vpack.c.b16 %v9640, %v9639
        %v9674 = vpack.c.b16 %v9642, %v9641
        %v9675 = vpack.c.b16 %v9644, %v9643
        %v9676 = vpack.c.b16 %v9646, %v9645
        %v9677 = vpack.c.b16 %v9648, %v9647
        %v9678 = vpack.c.b16 %v9650, %v9649
        %v9679 = vpack.c.b16 %v9652, %v9651
        %v9680 = vpack.c.b16 %v9654, %v9653
        %v9681 = vpack.c.b16 %v9656, %v9655
        %v9682 = vpack.c.b16 %v9658, %v9657
        %v9683 = vpack.c.b16 %v9660, %v9659
        %v9684 = vpack.c.b16 %v9662, %v9661
        %v9685 = vpack.c.b16 %v9664, %v9663
        %v9686 = vpack.c.b16 %v9666, %v9665
        %vm9707 = vcmask 523264
        %v9709 = vsel %vm9707, %v9584, 0
        %9711 = vmatprep.subr.bf16.mxu0 0
        %9712 = vmatpush1.bf16.msra.mxu0 %v9674
        %9713 = vmatprep.subr.bf16.mxu0 0
        %9714 = vmatpush1.bf16.msra.mxu0 %v9673
        %9715 = vmatprep.subr.bf16.mxu0 0
        %9716 = vmatpush1.bf16.msra.mxu0 %v9672
        %9717 = vmatprep.subr.bf16.mxu0 0
        %9718 = vmatpush1.bf16.msra.mxu0 %v9671
        %9719 = vmatprep.subr.bf16.mxu0 0
        %9720 = vmatpush1.bf16.msra.mxu0 %v9670
        %9721 = vmatprep.subr.bf16.mxu0 0
        %9722 = vmatpush1.bf16.msra.mxu0 %v9669
        %9723 = vmatprep.subr.bf16.mxu0 0
        %9724 = vmatpush1.bf16.msra.mxu0 %v9668
        %9725 = vmatprep.subr.bf16.mxu0 0
        %9726 = vmatpush1.bf16.msra.mxu0 %v9667
        %9727 = vmatprep.subr.bf16.mxu0 0
        %9728 = vmatpush2.bf16.msra.mxu0 %v9682
        %9729 = vmatprep.subr.bf16.mxu0 0
        %9730 = vmatpush2.bf16.msra.mxu0 %v9681
        %9731 = vmatprep.subr.bf16.mxu0 0
        %9732 = vmatpush2.bf16.msra.mxu0 %v9680
        %9733 = vmatprep.subr.bf16.mxu0 0
        %9734 = vmatpush2.bf16.msra.mxu0 %v9679
        %9735 = vmatprep.subr.bf16.mxu0 0
        %9736 = vmatpush2.bf16.msra.mxu0 %v9678
        %9737 = vmatprep.subr.bf16.mxu0 0
        %9738 = vmatpush2.bf16.msra.mxu0 %v9677
        %9739 = vmatprep.subr.bf16.mxu0 0
        %9740 = vmatpush2.bf16.msra.mxu0 %v9676
        %9741 = vmatprep.subr.bf16.mxu0 0
        %9742 = vmatpush2.bf16.msra.mxu0 %v9675
        %9743 = vmatprep.mubr.bf16.mxu0 %v9577
        %9744 = vmatmul.mubr.bf16.gmra.mxu0 %v9570
        %v9745 = vpop.f32.mrf.mxu0
        %v9746 = vadd.f32 0.0, %v9745
        %v9747 = vpop.f32.mrf.mxu0
        %v9748 = vpop.f32.mrf.mxu0
        %v9749 = vpop.f32.mrf.mxu0
        %9750 = vdwg.mxu0
        %9751 = vmatprep.subr.bf16.mxu0 0
        %9752 = vmatpush1.bf16.msra.mxu0 0
        %9753 = vmatprep.subr.bf16.mxu0 0
        %9754 = vmatpush1.bf16.msra.mxu0 0
        %9755 = vmatprep.subr.bf16.mxu0 0
        %9756 = vmatpush1.bf16.msra.mxu0 0
        %9757 = vmatprep.subr.bf16.mxu0 0
        %9758 = vmatpush1.bf16.msra.mxu0 0
        %9759 = vmatprep.subr.bf16.mxu0 0
        %9760 = vmatpush1.bf16.msra.mxu0 %v9686
        %9761 = vmatprep.subr.bf16.mxu0 0
        %9762 = vmatpush1.bf16.msra.mxu0 %v9685
        %9763 = vmatprep.subr.bf16.mxu0 0
        %9764 = vmatpush1.bf16.msra.mxu0 %v9684
        %9765 = vmatprep.subr.bf16.mxu0 0
        %9766 = vmatpush1.bf16.msra.mxu0 %v9683
        %9767 = vmatprep.subr.bf16.mxu0 0
        %9768 = vmatpush2.bf16.msra.mxu0 0
        %9769 = vmatprep.subr.bf16.mxu0 0
        %9770 = vmatpush2.bf16.msra.mxu0 0
        %9771 = vmatprep.subr.bf16.mxu0 0
        %9772 = vmatpush2.bf16.msra.mxu0 0
        %9773 = vmatprep.subr.bf16.mxu0 0
        %9774 = vmatpush2.bf16.msra.mxu0 0
        %9775 = vmatprep.subr.bf16.mxu0 0
        %9776 = vmatpush2.bf16.msra.mxu0 0
        %9777 = vmatprep.subr.bf16.mxu0 0
        %9778 = vmatpush2.bf16.msra.mxu0 0
        %9779 = vmatprep.subr.bf16.mxu0 0
        %9780 = vmatpush2.bf16.msra.mxu0 0
        %9781 = vmatprep.subr.bf16.mxu0 0
        %9782 = vmatpush2.bf16.msra.mxu0 0
        %9783 = vmatprep.mubr.bf16.mxu0 0
        %9784 = vmatmul.mubr.bf16.gmra.mxu0 %v9709
        %v9785 = vpop.f32.mrf.mxu0
        %v9786 = vadd.f32 %v9746, %v9785
        %v9787 = vpop.f32.mrf.mxu0
        %v9788 = vpop.f32.mrf.mxu0
        %v9789 = vpop.f32.mrf.mxu0
        %9790 = vdwg.mxu0
        %v9831 = vunpack.c.l.b16 %v9437
        %v9832 = vunpack.c.l.b16 %v9438
        %v9833 = vunpack.c.l.b16 %v9439
        %v9834 = vunpack.c.l.b16 %v9440
        %v9835 = vunpack.c.l.b16 %v9441
        %v9836 = vunpack.c.l.b16 %v9442
        %v9837 = vunpack.c.l.b16 %v9443
        %v9838 = vunpack.c.l.b16 %v9444
        %v9839 = vunpack.c.l.b16 %v9445
        %v9840 = vunpack.c.l.b16 %v9446
        %v9841 = vunpack.c.l.b16 %v9447
        %v9842 = vunpack.c.l.b16 %v9448
        %v9843 = vunpack.c.l.b16 %v9449
        %v9844 = vunpack.c.l.b16 %v9450
        %v9845 = vunpack.c.l.b16 %v9451
        %v9846 = vunpack.c.l.b16 %v9452
        %v9847 = vunpack.c.l.b16 %v9453
        %v9848 = vunpack.c.l.b16 %v9454
        %v9849 = vunpack.c.l.b16 %v9455
        %v9850 = vunpack.c.l.b16 %v9456
        %v9851 = vunpack.c.l.b16 %v9457
        %v9852 = vunpack.c.l.b16 %v9458
        %v9853 = vunpack.c.l.b16 %v9459
        %v9854 = vunpack.c.l.b16 %v9460
        %v9855 = vunpack.c.l.b16 %v9461
        %v9856 = vunpack.c.l.b16 %v9462
        %v9857 = vunpack.c.l.b16 %v9463
        %v9858 = vunpack.c.l.b16 %v9464
        %v9859 = vunpack.c.l.b16 %v9465
        %v9860 = vunpack.c.l.b16 %v9466
        %v9861 = vunpack.c.l.b16 %v9467
        %v9862 = vunpack.c.l.b16 %v9468
        %v9863 = vunpack.c.l.b16 %v9469
        %v9864 = vunpack.c.l.b16 %v9470
        %v9865 = vunpack.c.l.b16 %v9471
        %v9866 = vunpack.c.l.b16 %v9472
        %v9867 = vunpack.c.l.b16 %v9473
        %v9868 = vunpack.c.l.b16 %v9474
        %v9869 = vunpack.c.l.b16 %v9475
        %v9870 = vunpack.c.l.b16 %v9476
        %v9871 = vpack.c.b16 %v9832, %v9831
        %v9872 = vpack.c.b16 %v9834, %v9833
        %v9873 = vpack.c.b16 %v9836, %v9835
        %v9874 = vpack.c.b16 %v9838, %v9837
        %v9875 = vpack.c.b16 %v9840, %v9839
        %v9876 = vpack.c.b16 %v9842, %v9841
        %v9877 = vpack.c.b16 %v9844, %v9843
        %v9878 = vpack.c.b16 %v9846, %v9845
        %v9879 = vpack.c.b16 %v9848, %v9847
        %v9880 = vpack.c.b16 %v9850, %v9849
        %v9881 = vpack.c.b16 %v9852, %v9851
        %v9882 = vpack.c.b16 %v9854, %v9853
        %v9883 = vpack.c.b16 %v9856, %v9855
        %v9884 = vpack.c.b16 %v9858, %v9857
        %v9885 = vpack.c.b16 %v9860, %v9859
        %v9886 = vpack.c.b16 %v9862, %v9861
        %v9887 = vpack.c.b16 %v9864, %v9863
        %v9888 = vpack.c.b16 %v9866, %v9865
        %v9889 = vpack.c.b16 %v9868, %v9867
        %v9890 = vpack.c.b16 %v9870, %v9869
        %v9912 = vsel %vm9707, %v9436, 0
        %9914 = vmatprep.subr.bf16.mxu0 0
        %9915 = vmatpush1.bf16.msra.mxu0 %v9878
        %9916 = vmatprep.subr.bf16.mxu0 0
        %9917 = vmatpush1.bf16.msra.mxu0 %v9877
        %9918 = vmatprep.subr.bf16.mxu0 0
        %9919 = vmatpush1.bf16.msra.mxu0 %v9876
        %9920 = vmatprep.subr.bf16.mxu0 0
        %9921 = vmatpush1.bf16.msra.mxu0 %v9875
        %9922 = vmatprep.subr.bf16.mxu0 0
        %9923 = vmatpush1.bf16.msra.mxu0 %v9874
        %9924 = vmatprep.subr.bf16.mxu0 0
        %9925 = vmatpush1.bf16.msra.mxu0 %v9873
        %9926 = vmatprep.subr.bf16.mxu0 0
        %9927 = vmatpush1.bf16.msra.mxu0 %v9872
        %9928 = vmatprep.subr.bf16.mxu0 0
        %9929 = vmatpush1.bf16.msra.mxu0 %v9871
        %9930 = vmatprep.subr.bf16.mxu0 0
        %9931 = vmatpush2.bf16.msra.mxu0 %v9886
        %9932 = vmatprep.subr.bf16.mxu0 0
        %9933 = vmatpush2.bf16.msra.mxu0 %v9885
        %9934 = vmatprep.subr.bf16.mxu0 0
        %9935 = vmatpush2.bf16.msra.mxu0 %v9884
        %9936 = vmatprep.subr.bf16.mxu0 0
        %9937 = vmatpush2.bf16.msra.mxu0 %v9883
        %9938 = vmatprep.subr.bf16.mxu0 0
        %9939 = vmatpush2.bf16.msra.mxu0 %v9882
        %9940 = vmatprep.subr.bf16.mxu0 0
        %9941 = vmatpush2.bf16.msra.mxu0 %v9881
        %9942 = vmatprep.subr.bf16.mxu0 0
        %9943 = vmatpush2.bf16.msra.mxu0 %v9880
        %9944 = vmatprep.subr.bf16.mxu0 0
        %9945 = vmatpush2.bf16.msra.mxu0 %v9879
        %9946 = vmatprep.mubr.bf16.mxu0 %v9435
        %9947 = vmatmul.mubr.bf16.gmra.mxu0 %v9434
        %v9948 = vpop.f32.mrf.mxu0
        %v9949 = vadd.f32 %v9786, %v9948
        %v9950 = vpop.f32.mrf.mxu0
        %v9951 = vpop.f32.mrf.mxu0
        %v9952 = vpop.f32.mrf.mxu0
        %9953 = vdwg.mxu0
        %9954 = vmatprep.subr.bf16.mxu0 0
        %9955 = vmatpush1.bf16.msra.mxu0 0
        %9956 = vmatprep.subr.bf16.mxu0 0
        %9957 = vmatpush1.bf16.msra.mxu0 0
        %9958 = vmatprep.subr.bf16.mxu0 0
        %9959 = vmatpush1.bf16.msra.mxu0 0
        %9960 = vmatprep.subr.bf16.mxu0 0
        %9961 = vmatpush1.bf16.msra.mxu0 0
        %9962 = vmatprep.subr.bf16.mxu0 0
        %9963 = vmatpush1.bf16.msra.mxu0 %v9890
        %9964 = vmatprep.subr.bf16.mxu0 0
        %9965 = vmatpush1.bf16.msra.mxu0 %v9889
        %9966 = vmatprep.subr.bf16.mxu0 0
        %9967 = vmatpush1.bf16.msra.mxu0 %v9888
        %9968 = vmatprep.subr.bf16.mxu0 0
        %9969 = vmatpush1.bf16.msra.mxu0 %v9887
        %9970 = vmatprep.subr.bf16.mxu0 0
        %9971 = vmatpush2.bf16.msra.mxu0 0
        %9972 = vmatprep.subr.bf16.mxu0 0
        %9973 = vmatpush2.bf16.msra.mxu0 0
        %9974 = vmatprep.subr.bf16.mxu0 0
        %9975 = vmatpush2.bf16.msra.mxu0 0
        %9976 = vmatprep.subr.bf16.mxu0 0
        %9977 = vmatpush2.bf16.msra.mxu0 0
        %9978 = vmatprep.subr.bf16.mxu0 0
        %9979 = vmatpush2.bf16.msra.mxu0 0
        %9980 = vmatprep.subr.bf16.mxu0 0
        %9981 = vmatpush2.bf16.msra.mxu0 0
        %9982 = vmatprep.subr.bf16.mxu0 0
        %9983 = vmatpush2.bf16.msra.mxu0 0
        %9984 = vmatprep.subr.bf16.mxu0 0
        %9985 = vmatpush2.bf16.msra.mxu0 0
        %9986 = vmatprep.mubr.bf16.mxu0 0
        %9987 = vmatmul.mubr.bf16.gmra.mxu0 %v9912
        %v9988 = vpop.f32.mrf.mxu0
        %v9989 = vadd.f32 %v9949, %v9988
        %v9990 = vpop.f32.mrf.mxu0
        %v9991 = vpop.f32.mrf.mxu0
        %v9992 = vpop.f32.mrf.mxu0
        %9993 = vdwg.mxu0
        %s9994 = scalar_lea.vmem [#allocation12], 160
        %v9995 = vld [vmem:[%s9994] sm:$0xf]
        %v9996 = vld [vmem:[%s9994 + $0x4] sm:$0xf]
        %v9997 = vld [vmem:[%s9994 + $0x8] sm:$0xf]
        %v9998 = vld [vmem:[%s9994 + $0xc] sm:$0xf]
        %v9999 = vld [vmem:[%s9994 + $0x10] sm:$0xf]
        %v10000 = vld [vmem:[%s9994 + $0x14] sm:$0xf]
        %v10001 = vld [vmem:[%s9994 + $0x18] sm:$0xf]
        %v10002 = vld [vmem:[%s9994 + $0x1c] sm:$0xf]
        %v10003 = vld [vmem:[%s9994 + $0x20] sm:$0xf]
        %v10004 = vld [vmem:[%s9994 + $0x24] sm:$0xf]
        %v10005 = vld [vmem:[%s9994 + $0x28] sm:$0xf]
        %v10006 = vld [vmem:[%s9994 + $0x2c] sm:$0xf]
        %v10007 = vld [vmem:[%s9994 + $0x30] sm:$0xf]
        %v10008 = vld [vmem:[%s9994 + $0x34] sm:$0xf]
        %v10009 = vld [vmem:[%s9994 + $0x38] sm:$0xf]
        %v10010 = vld [vmem:[%s9994 + $0x3c] sm:$0xf]
        %v10011 = vld [vmem:[%s9994 + $0x40] sm:$0xf]
        %v10012 = vld [vmem:[%s9994 + $0x44] sm:$0xf]
        %v10013 = vld [vmem:[%s9994 + $0x48] sm:$0xf]
        %v10014 = vld [vmem:[%s9994 + $0x4c] sm:$0xf]
        %v10015 = vld [vmem:[%s9994 + $0x50] sm:$0xf]
        %v10016 = vld [vmem:[%s9994 + $0x54] sm:$0xf]
        %v10017 = vld [vmem:[%s9994 + $0x58] sm:$0xf]
        %v10018 = vld [vmem:[%s9994 + $0x5c] sm:$0xf]
        %v10019 = vld [vmem:[%s9994 + $0x60] sm:$0xf]
        %v10020 = vld [vmem:[%s9994 + $0x64] sm:$0xf]
        %v10021 = vld [vmem:[%s9994 + $0x68] sm:$0xf]
        %v10022 = vld [vmem:[%s9994 + $0x6c] sm:$0xf]
        %v10023 = vld [vmem:[%s9994 + $0x70] sm:$0xf]
        %v10024 = vld [vmem:[%s9994 + $0x74] sm:$0xf]
        %v10025 = vld [vmem:[%s9994 + $0x78] sm:$0xf]
        %v10026 = vld [vmem:[%s9994 + $0x7c] sm:$0xf]
        %v10027 = vld [vmem:[%s9994 + $0x80] sm:$0xf]
        %v10028 = vld [vmem:[%s9994 + $0x84] sm:$0xf]
        %v10029 = vld [vmem:[%s9994 + $0x88] sm:$0xf]
        %v10030 = vld [vmem:[%s9994 + $0x8c] sm:$0xf]
        %v10031 = vld [vmem:[%s9994 + $0x90] sm:$0xf]
        %v10032 = vld [vmem:[%s9994 + $0x94] sm:$0xf]
        %v10033 = vld [vmem:[%s9994 + $0x98] sm:$0xf]
        %v10034 = vld [vmem:[%s9994 + $0x9c] sm:$0xf]
        %v10075 = vunpack.c.l.b16 %v9995
        %v10076 = vunpack.c.l.b16 %v9996
        %v10077 = vunpack.c.l.b16 %v9997
        %v10078 = vunpack.c.l.b16 %v9998
        %v10079 = vunpack.c.l.b16 %v9999
        %v10080 = vunpack.c.l.b16 %v10000
        %v10081 = vunpack.c.l.b16 %v10001
        %v10082 = vunpack.c.l.b16 %v10002
        %v10083 = vunpack.c.l.b16 %v10003
        %v10084 = vunpack.c.l.b16 %v10004
        %v10085 = vunpack.c.l.b16 %v10005
        %v10086 = vunpack.c.l.b16 %v10006
        %v10087 = vunpack.c.l.b16 %v10007
        %v10088 = vunpack.c.l.b16 %v10008
        %v10089 = vunpack.c.l.b16 %v10009
        %v10090 = vunpack.c.l.b16 %v10010
        %v10091 = vunpack.c.l.b16 %v10011
        %v10092 = vunpack.c.l.b16 %v10012
        %v10093 = vunpack.c.l.b16 %v10013
        %v10094 = vunpack.c.l.b16 %v10014
        %v10095 = vunpack.c.l.b16 %v10015
        %v10096 = vunpack.c.l.b16 %v10016
        %v10097 = vunpack.c.l.b16 %v10017
        %v10098 = vunpack.c.l.b16 %v10018
        %v10099 = vunpack.c.l.b16 %v10019
        %v10100 = vunpack.c.l.b16 %v10020
        %v10101 = vunpack.c.l.b16 %v10021
        %v10102 = vunpack.c.l.b16 %v10022
        %v10103 = vunpack.c.l.b16 %v10023
        %v10104 = vunpack.c.l.b16 %v10024
        %v10105 = vunpack.c.l.b16 %v10025
        %v10106 = vunpack.c.l.b16 %v10026
        %v10107 = vunpack.c.l.b16 %v10027
        %v10108 = vunpack.c.l.b16 %v10028
        %v10109 = vunpack.c.l.b16 %v10029
        %v10110 = vunpack.c.l.b16 %v10030
        %v10111 = vunpack.c.l.b16 %v10031
        %v10112 = vunpack.c.l.b16 %v10032
        %v10113 = vunpack.c.l.b16 %v10033
        %v10114 = vunpack.c.l.b16 %v10034
        %v10115 = vpack.c.b16 %v10076, %v10075
        %v10116 = vpack.c.b16 %v10078, %v10077
        %v10117 = vpack.c.b16 %v10080, %v10079
        %v10118 = vpack.c.b16 %v10082, %v10081
        %v10119 = vpack.c.b16 %v10084, %v10083
        %v10120 = vpack.c.b16 %v10086, %v10085
        %v10121 = vpack.c.b16 %v10088, %v10087
        %v10122 = vpack.c.b16 %v10090, %v10089
        %v10123 = vpack.c.b16 %v10092, %v10091
        %v10124 = vpack.c.b16 %v10094, %v10093
        %v10125 = vpack.c.b16 %v10096, %v10095
        %v10126 = vpack.c.b16 %v10098, %v10097
        %v10127 = vpack.c.b16 %v10100, %v10099
        %v10128 = vpack.c.b16 %v10102, %v10101
        %v10129 = vpack.c.b16 %v10104, %v10103
        %v10130 = vpack.c.b16 %v10106, %v10105
        %v10131 = vpack.c.b16 %v10108, %v10107
        %v10132 = vpack.c.b16 %v10110, %v10109
        %v10133 = vpack.c.b16 %v10112, %v10111
        %v10134 = vpack.c.b16 %v10114, %v10113
        %10155 = vmatprep.subr.bf16.mxu0 0
        %10156 = vmatpush1.bf16.msra.mxu0 %v10122
        %10157 = vmatprep.subr.bf16.mxu0 0
        %10158 = vmatpush1.bf16.msra.mxu0 %v10121
        %10159 = vmatprep.subr.bf16.mxu0 0
        %10160 = vmatpush1.bf16.msra.mxu0 %v10120
        %10161 = vmatprep.subr.bf16.mxu0 0
        %10162 = vmatpush1.bf16.msra.mxu0 %v10119
        %10163 = vmatprep.subr.bf16.mxu0 0
        %10164 = vmatpush1.bf16.msra.mxu0 %v10118
        %10165 = vmatprep.subr.bf16.mxu0 0
        %10166 = vmatpush1.bf16.msra.mxu0 %v10117
        %10167 = vmatprep.subr.bf16.mxu0 0
        %10168 = vmatpush1.bf16.msra.mxu0 %v10116
        %10169 = vmatprep.subr.bf16.mxu0 0
        %10170 = vmatpush1.bf16.msra.mxu0 %v10115
        %10171 = vmatprep.subr.bf16.mxu0 0
        %10172 = vmatpush2.bf16.msra.mxu0 %v10130
        %10173 = vmatprep.subr.bf16.mxu0 0
        %10174 = vmatpush2.bf16.msra.mxu0 %v10129
        %10175 = vmatprep.subr.bf16.mxu0 0
        %10176 = vmatpush2.bf16.msra.mxu0 %v10128
        %10177 = vmatprep.subr.bf16.mxu0 0
        %10178 = vmatpush2.bf16.msra.mxu0 %v10127
        %10179 = vmatprep.subr.bf16.mxu0 0
        %10180 = vmatpush2.bf16.msra.mxu0 %v10126
        %10181 = vmatprep.subr.bf16.mxu0 0
        %10182 = vmatpush2.bf16.msra.mxu0 %v10125
        %10183 = vmatprep.subr.bf16.mxu0 0
        %10184 = vmatpush2.bf16.msra.mxu0 %v10124
        %10185 = vmatprep.subr.bf16.mxu0 0
        %10186 = vmatpush2.bf16.msra.mxu0 %v10123
        %10187 = vmatprep.mubr.bf16.mxu0 %v9577
        %10188 = vmatmul.mubr.bf16.gmra.mxu0 %v9570
        %v10189 = vpop.f32.mrf.mxu0
        %v10190 = vadd.f32 0.0, %v10189
        %v10191 = vpop.f32.mrf.mxu0
        %v10192 = vpop.f32.mrf.mxu0
        %v10193 = vpop.f32.mrf.mxu0
        %10194 = vdwg.mxu0
        %10195 = vmatprep.subr.bf16.mxu0 0
        %10196 = vmatpush1.bf16.msra.mxu0 0
        %10197 = vmatprep.subr.bf16.mxu0 0
        %10198 = vmatpush1.bf16.msra.mxu0 0
        %10199 = vmatprep.subr.bf16.mxu0 0
        %10200 = vmatpush1.bf16.msra.mxu0 0
        %10201 = vmatprep.subr.bf16.mxu0 0
        %10202 = vmatpush1.bf16.msra.mxu0 0
        %10203 = vmatprep.subr.bf16.mxu0 0
        %10204 = vmatpush1.bf16.msra.mxu0 %v10134
        %10205 = vmatprep.subr.bf16.mxu0 0
        %10206 = vmatpush1.bf16.msra.mxu0 %v10133
        %10207 = vmatprep.subr.bf16.mxu0 0
        %10208 = vmatpush1.bf16.msra.mxu0 %v10132
        %10209 = vmatprep.subr.bf16.mxu0 0
        %10210 = vmatpush1.bf16.msra.mxu0 %v10131
        %10211 = vmatprep.subr.bf16.mxu0 0
        %10212 = vmatpush2.bf16.msra.mxu0 0
        %10213 = vmatprep.subr.bf16.mxu0 0
        %10214 = vmatpush2.bf16.msra.mxu0 0
        %10215 = vmatprep.subr.bf16.mxu0 0
        %10216 = vmatpush2.bf16.msra.mxu0 0
        %10217 = vmatprep.subr.bf16.mxu0 0
        %10218 = vmatpush2.bf16.msra.mxu0 0
        %10219 = vmatprep.subr.bf16.mxu0 0
        %10220 = vmatpush2.bf16.msra.mxu0 0
        %10221 = vmatprep.subr.bf16.mxu0 0
        %10222 = vmatpush2.bf16.msra.mxu0 0
        %10223 = vmatprep.subr.bf16.mxu0 0
        %10224 = vmatpush2.bf16.msra.mxu0 0
        %10225 = vmatprep.subr.bf16.mxu0 0
        %10226 = vmatpush2.bf16.msra.mxu0 0
        %10227 = vmatprep.mubr.bf16.mxu0 0
        %10228 = vmatmul.mubr.bf16.gmra.mxu0 %v9709
        %v10229 = vpop.f32.mrf.mxu0
        %v10230 = vadd.f32 %v10190, %v10229
        %v10231 = vpop.f32.mrf.mxu0
        %v10232 = vpop.f32.mrf.mxu0
        %v10233 = vpop.f32.mrf.mxu0
        %10234 = vdwg.mxu0
        %v10275 = vunpack.c.l.b16 %v9477
        %v10276 = vunpack.c.l.b16 %v9478
        %v10277 = vunpack.c.l.b16 %v9479
        %v10278 = vunpack.c.l.b16 %v9480
        %v10279 = vunpack.c.l.b16 %v9481
        %v10280 = vunpack.c.l.b16 %v9482
        %v10281 = vunpack.c.l.b16 %v9483
        %v10282 = vunpack.c.l.b16 %v9484
        %v10283 = vunpack.c.l.b16 %v9485
        %v10284 = vunpack.c.l.b16 %v9486
        %v10285 = vunpack.c.l.b16 %v9487
        %v10286 = vunpack.c.l.b16 %v9488
        %v10287 = vunpack.c.l.b16 %v9489
        %v10288 = vunpack.c.l.b16 %v9490
        %v10289 = vunpack.c.l.b16 %v9491
        %v10290 = vunpack.c.l.b16 %v9492
        %v10291 = vunpack.c.l.b16 %v9493
        %v10292 = vunpack.c.l.b16 %v9494
        %v10293 = vunpack.c.l.b16 %v9495
        %v10294 = vunpack.c.l.b16 %v9496
        %v10295 = vunpack.c.l.b16 %v9497
        %v10296 = vunpack.c.l.b16 %v9498
        %v10297 = vunpack.c.l.b16 %v9499
        %v10298 = vunpack.c.l.b16 %v9500
        %v10299 = vunpack.c.l.b16 %v9501
        %v10300 = vunpack.c.l.b16 %v9502
        %v10301 = vunpack.c.l.b16 %v9503
        %v10302 = vunpack.c.l.b16 %v9504
        %v10303 = vunpack.c.l.b16 %v9505
        %v10304 = vunpack.c.l.b16 %v9506
        %v10305 = vunpack.c.l.b16 %v9507
        %v10306 = vunpack.c.l.b16 %v9508
        %v10307 = vunpack.c.l.b16 %v9509
        %v10308 = vunpack.c.l.b16 %v9510
        %v10309 = vunpack.c.l.b16 %v9511
        %v10310 = vunpack.c.l.b16 %v9512
        %v10311 = vunpack.c.l.b16 %v9513
        %v10312 = vunpack.c.l.b16 %v9514
        %v10313 = vunpack.c.l.b16 %v9515
        %v10314 = vunpack.c.l.b16 %v9516
        %v10315 = vpack.c.b16 %v10276, %v10275
        %v10316 = vpack.c.b16 %v10278, %v10277
        %v10317 = vpack.c.b16 %v10280, %v10279
        %v10318 = vpack.c.b16 %v10282, %v10281
        %v10319 = vpack.c.b16 %v10284, %v10283
        %v10320 = vpack.c.b16 %v10286, %v10285
        %v10321 = vpack.c.b16 %v10288, %v10287
        %v10322 = vpack.c.b16 %v10290, %v10289
        %v10323 = vpack.c.b16 %v10292, %v10291
        %v10324 = vpack.c.b16 %v10294, %v10293
        %v10325 = vpack.c.b16 %v10296, %v10295
        %v10326 = vpack.c.b16 %v10298, %v10297
        %v10327 = vpack.c.b16 %v10300, %v10299
        %v10328 = vpack.c.b16 %v10302, %v10301
        %v10329 = vpack.c.b16 %v10304, %v10303
        %v10330 = vpack.c.b16 %v10306, %v10305
        %v10331 = vpack.c.b16 %v10308, %v10307
        %v10332 = vpack.c.b16 %v10310, %v10309
        %v10333 = vpack.c.b16 %v10312, %v10311
        %v10334 = vpack.c.b16 %v10314, %v10313
        %10355 = vmatprep.subr.bf16.mxu0 0
        %10356 = vmatpush1.bf16.msra.mxu0 %v10322
        %10357 = vmatprep.subr.bf16.mxu0 0
        %10358 = vmatpush1.bf16.msra.mxu0 %v10321
        %10359 = vmatprep.subr.bf16.mxu0 0
        %10360 = vmatpush1.bf16.msra.mxu0 %v10320
        %10361 = vmatprep.subr.bf16.mxu0 0
        %10362 = vmatpush1.bf16.msra.mxu0 %v10319
        %10363 = vmatprep.subr.bf16.mxu0 0
        %10364 = vmatpush1.bf16.msra.mxu0 %v10318
        %10365 = vmatprep.subr.bf16.mxu0 0
        %10366 = vmatpush1.bf16.msra.mxu0 %v10317
        %10367 = vmatprep.subr.bf16.mxu0 0
        %10368 = vmatpush1.bf16.msra.mxu0 %v10316
        %10369 = vmatprep.subr.bf16.mxu0 0
        %10370 = vmatpush1.bf16.msra.mxu0 %v10315
        %10371 = vmatprep.subr.bf16.mxu0 0
        %10372 = vmatpush2.bf16.msra.mxu0 %v10330
        %10373 = vmatprep.subr.bf16.mxu0 0
        %10374 = vmatpush2.bf16.msra.mxu0 %v10329
        %10375 = vmatprep.subr.bf16.mxu0 0
        %10376 = vmatpush2.bf16.msra.mxu0 %v10328
        %10377 = vmatprep.subr.bf16.mxu0 0
        %10378 = vmatpush2.bf16.msra.mxu0 %v10327
        %10379 = vmatprep.subr.bf16.mxu0 0
        %10380 = vmatpush2.bf16.msra.mxu0 %v10326
        %10381 = vmatprep.subr.bf16.mxu0 0
        %10382 = vmatpush2.bf16.msra.mxu0 %v10325
        %10383 = vmatprep.subr.bf16.mxu0 0
        %10384 = vmatpush2.bf16.msra.mxu0 %v10324
        %10385 = vmatprep.subr.bf16.mxu0 0
        %10386 = vmatpush2.bf16.msra.mxu0 %v10323
        %10387 = vmatprep.mubr.bf16.mxu0 %v9435
        %10388 = vmatmul.mubr.bf16.gmra.mxu0 %v9434
        %v10389 = vpop.f32.mrf.mxu0
        %v10390 = vadd.f32 %v10230, %v10389
        %v10391 = vpop.f32.mrf.mxu0
        %v10392 = vpop.f32.mrf.mxu0
        %v10393 = vpop.f32.mrf.mxu0
        %10394 = vdwg.mxu0
        %10395 = vmatprep.subr.bf16.mxu0 0
        %10396 = vmatpush1.bf16.msra.mxu0 0
        %10397 = vmatprep.subr.bf16.mxu0 0
        %10398 = vmatpush1.bf16.msra.mxu0 0
        %10399 = vmatprep.subr.bf16.mxu0 0
        %10400 = vmatpush1.bf16.msra.mxu0 0
        %10401 = vmatprep.subr.bf16.mxu0 0
        %10402 = vmatpush1.bf16.msra.mxu0 0
        %10403 = vmatprep.subr.bf16.mxu0 0
        %10404 = vmatpush1.bf16.msra.mxu0 %v10334
        %10405 = vmatprep.subr.bf16.mxu0 0
        %10406 = vmatpush1.bf16.msra.mxu0 %v10333
        %10407 = vmatprep.subr.bf16.mxu0 0
        %10408 = vmatpush1.bf16.msra.mxu0 %v10332
        %10409 = vmatprep.subr.bf16.mxu0 0
        %10410 = vmatpush1.bf16.msra.mxu0 %v10331
        %10411 = vmatprep.subr.bf16.mxu0 0
        %10412 = vmatpush2.bf16.msra.mxu0 0
        %10413 = vmatprep.subr.bf16.mxu0 0
        %10414 = vmatpush2.bf16.msra.mxu0 0
        %10415 = vmatprep.subr.bf16.mxu0 0
        %10416 = vmatpush2.bf16.msra.mxu0 0
        %10417 = vmatprep.subr.bf16.mxu0 0
        %10418 = vmatpush2.bf16.msra.mxu0 0
        %10419 = vmatprep.subr.bf16.mxu0 0
        %10420 = vmatpush2.bf16.msra.mxu0 0
        %10421 = vmatprep.subr.bf16.mxu0 0
        %10422 = vmatpush2.bf16.msra.mxu0 0
        %10423 = vmatprep.subr.bf16.mxu0 0
        %10424 = vmatpush2.bf16.msra.mxu0 0
        %10425 = vmatprep.subr.bf16.mxu0 0
        %10426 = vmatpush2.bf16.msra.mxu0 0
        %10427 = vmatprep.mubr.bf16.mxu0 0
        %10428 = vmatmul.mubr.bf16.gmra.mxu0 %v9912
        %v10429 = vpop.f32.mrf.mxu0
        %v10430 = vadd.f32 %v10390, %v10429
        %v10431 = vpop.f32.mrf.mxu0
        %v10432 = vpop.f32.mrf.mxu0
        %v10433 = vpop.f32.mrf.mxu0
        %10434 = vdwg.mxu0
        %v10435 = vld [vmem:[#allocation3] sm:$0x1c]
        %v10436 = vld [vmem:[#allocation3 + $0x8] sm:$0x1c]
        %v10437 = vld [vmem:[#allocation3 + $0x10] sm:$0x1c]
        %v10438 = vpack.c.bf16 %v10435, %v10435
        %v10439 = vpack.c.bf16 %v10436, %v10436
        %v10440 = vpack.c.bf16 %v10437, %v10437
        %s10441 = scalar_lea.vmem %s9, 320
        %v10442 = vld [vmem:[%s10441] sm:$0xf]
        %v10443 = vld [vmem:[%s10441 + $0x4] sm:$0xf]
        %v10444 = vld [vmem:[%s10441 + $0x8] sm:$0xf]
        %v10445 = vld [vmem:[%s10441 + $0xc] sm:$0xf]
        %v10446 = vld [vmem:[%s10441 + $0x10] sm:$0xf]
        %v10447 = vld [vmem:[%s10441 + $0x14] sm:$0xf]
        %v10448 = vld [vmem:[%s10441 + $0x18] sm:$0xf]
        %v10449 = vld [vmem:[%s10441 + $0x1c] sm:$0xf]
        %v10450 = vld [vmem:[%s10441 + $0x20] sm:$0xf]
        %v10451 = vld [vmem:[%s10441 + $0x24] sm:$0xf]
        %v10452 = vld [vmem:[%s10441 + $0x28] sm:$0xf]
        %v10453 = vld [vmem:[%s10441 + $0x2c] sm:$0xf]
        %v10454 = vld [vmem:[%s10441 + $0x30] sm:$0xf]
        %v10455 = vld [vmem:[%s10441 + $0x34] sm:$0xf]
        %v10456 = vld [vmem:[%s10441 + $0x38] sm:$0xf]
        %v10457 = vld [vmem:[%s10441 + $0x3c] sm:$0xf]
        %v10458 = vld [vmem:[%s10441 + $0x40] sm:$0xf]
        %v10459 = vld [vmem:[%s10441 + $0x44] sm:$0xf]
        %v10460 = vld [vmem:[%s10441 + $0x48] sm:$0xf]
        %v10461 = vld [vmem:[%s10441 + $0x4c] sm:$0xf]
        %v10462 = vld [vmem:[%s10441 + $0x50] sm:$0xf]
        %v10463 = vld [vmem:[%s10441 + $0x54] sm:$0xf]
        %v10464 = vld [vmem:[%s10441 + $0x58] sm:$0xf]
        %v10465 = vld [vmem:[%s10441 + $0x5c] sm:$0xf]
        %v10466 = vld [vmem:[%s10441 + $0x60] sm:$0xf]
        %v10467 = vld [vmem:[%s10441 + $0x64] sm:$0xf]
        %v10468 = vld [vmem:[%s10441 + $0x68] sm:$0xf]
        %v10469 = vld [vmem:[%s10441 + $0x6c] sm:$0xf]
        %v10470 = vld [vmem:[%s10441 + $0x70] sm:$0xf]
        %v10471 = vld [vmem:[%s10441 + $0x74] sm:$0xf]
        %v10472 = vld [vmem:[%s10441 + $0x78] sm:$0xf]
        %v10473 = vld [vmem:[%s10441 + $0x7c] sm:$0xf]
        %v10474 = vld [vmem:[%s10441 + $0x80] sm:$0xf]
        %v10475 = vld [vmem:[%s10441 + $0x84] sm:$0xf]
        %v10476 = vld [vmem:[%s10441 + $0x88] sm:$0xf]
        %v10477 = vld [vmem:[%s10441 + $0x8c] sm:$0xf]
        %v10478 = vld [vmem:[%s10441 + $0x90] sm:$0xf]
        %v10479 = vld [vmem:[%s10441 + $0x94] sm:$0xf]
        %v10480 = vld [vmem:[%s10441 + $0x98] sm:$0xf]
        %v10481 = vld [vmem:[%s10441 + $0x9c] sm:$0xf]
        %v10485 = vrot.slane %v10438, 1
        %v10486 = vrot.slane %v10439, 1
        %v10487 = vrot.slane %v10440, 1
        %v10530 = vunpack.c.l.b16 %v10442
        %v10531 = vunpack.c.l.b16 %v10443
        %v10532 = vunpack.c.l.b16 %v10444
        %v10533 = vunpack.c.l.b16 %v10445
        %v10534 = vunpack.c.l.b16 %v10446
        %v10535 = vunpack.c.l.b16 %v10447
        %v10536 = vunpack.c.l.b16 %v10448
        %v10537 = vunpack.c.l.b16 %v10449
        %v10538 = vunpack.c.l.b16 %v10450
        %v10539 = vunpack.c.l.b16 %v10451
        %v10540 = vunpack.c.l.b16 %v10452
        %v10541 = vunpack.c.l.b16 %v10453
        %v10542 = vunpack.c.l.b16 %v10454
        %v10543 = vunpack.c.l.b16 %v10455
        %v10544 = vunpack.c.l.b16 %v10456
        %v10545 = vunpack.c.l.b16 %v10457
        %v10546 = vunpack.c.l.b16 %v10458
        %v10547 = vunpack.c.l.b16 %v10459
        %v10548 = vunpack.c.l.b16 %v10460
        %v10549 = vunpack.c.l.b16 %v10461
        %v10550 = vunpack.c.l.b16 %v10462
        %v10551 = vunpack.c.l.b16 %v10463
        %v10552 = vunpack.c.l.b16 %v10464
        %v10553 = vunpack.c.l.b16 %v10465
        %v10554 = vunpack.c.l.b16 %v10466
        %v10555 = vunpack.c.l.b16 %v10467
        %v10556 = vunpack.c.l.b16 %v10468
        %v10557 = vunpack.c.l.b16 %v10469
        %v10558 = vunpack.c.l.b16 %v10470
        %v10559 = vunpack.c.l.b16 %v10471
        %v10560 = vunpack.c.l.b16 %v10472
        %v10561 = vunpack.c.l.b16 %v10473
        %v10562 = vunpack.c.l.b16 %v10474
        %v10563 = vunpack.c.l.b16 %v10475
        %v10564 = vunpack.c.l.b16 %v10476
        %v10565 = vunpack.c.l.b16 %v10477
        %v10566 = vunpack.c.l.b16 %v10478
        %v10567 = vunpack.c.l.b16 %v10479
        %v10568 = vunpack.c.l.b16 %v10480
        %v10569 = vunpack.c.l.b16 %v10481
        %v10570 = vpack.c.b16 %v10531, %v10530
        %v10571 = vpack.c.b16 %v10533, %v10532
        %v10572 = vpack.c.b16 %v10535, %v10534
        %v10573 = vpack.c.b16 %v10537, %v10536
        %v10574 = vpack.c.b16 %v10539, %v10538
        %v10575 = vpack.c.b16 %v10541, %v10540
        %v10576 = vpack.c.b16 %v10543, %v10542
        %v10577 = vpack.c.b16 %v10545, %v10544
        %v10578 = vpack.c.b16 %v10547, %v10546
        %v10579 = vpack.c.b16 %v10549, %v10548
        %v10580 = vpack.c.b16 %v10551, %v10550
        %v10581 = vpack.c.b16 %v10553, %v10552
        %v10582 = vpack.c.b16 %v10555, %v10554
        %v10583 = vpack.c.b16 %v10557, %v10556
        %v10584 = vpack.c.b16 %v10559, %v10558
        %v10585 = vpack.c.b16 %v10561, %v10560
        %v10586 = vpack.c.b16 %v10563, %v10562
        %v10587 = vpack.c.b16 %v10565, %v10564
        %v10588 = vpack.c.b16 %v10567, %v10566
        %v10589 = vpack.c.b16 %v10569, %v10568
        %v10611 = vsel %vm9707, %v10487, 0
        %10613 = vmatprep.subr.bf16.mxu0 0
        %10614 = vmatpush1.bf16.msra.mxu0 %v10577
        %10615 = vmatprep.subr.bf16.mxu0 0
        %10616 = vmatpush1.bf16.msra.mxu0 %v10576
        %10617 = vmatprep.subr.bf16.mxu0 0
        %10618 = vmatpush1.bf16.msra.mxu0 %v10575
        %10619 = vmatprep.subr.bf16.mxu0 0
        %10620 = vmatpush1.bf16.msra.mxu0 %v10574
        %10621 = vmatprep.subr.bf16.mxu0 0
        %10622 = vmatpush1.bf16.msra.mxu0 %v10573
        %10623 = vmatprep.subr.bf16.mxu0 0
        %10624 = vmatpush1.bf16.msra.mxu0 %v10572
        %10625 = vmatprep.subr.bf16.mxu0 0
        %10626 = vmatpush1.bf16.msra.mxu0 %v10571
        %10627 = vmatprep.subr.bf16.mxu0 0
        %10628 = vmatpush1.bf16.msra.mxu0 %v10570
        %10629 = vmatprep.subr.bf16.mxu0 0
        %10630 = vmatpush2.bf16.msra.mxu0 %v10585
        %10631 = vmatprep.subr.bf16.mxu0 0
        %10632 = vmatpush2.bf16.msra.mxu0 %v10584
        %10633 = vmatprep.subr.bf16.mxu0 0
        %10634 = vmatpush2.bf16.msra.mxu0 %v10583
        %10635 = vmatprep.subr.bf16.mxu0 0
        %10636 = vmatpush2.bf16.msra.mxu0 %v10582
        %10637 = vmatprep.subr.bf16.mxu0 0
        %10638 = vmatpush2.bf16.msra.mxu0 %v10581
        %10639 = vmatprep.subr.bf16.mxu0 0
        %10640 = vmatpush2.bf16.msra.mxu0 %v10580
        %10641 = vmatprep.subr.bf16.mxu0 0
        %10642 = vmatpush2.bf16.msra.mxu0 %v10579
        %10643 = vmatprep.subr.bf16.mxu0 0
        %10644 = vmatpush2.bf16.msra.mxu0 %v10578
        %10645 = vmatprep.mubr.bf16.mxu0 %v10486
        %10646 = vmatmul.mubr.bf16.gmra.mxu0 %v10485
        %v10647 = vpop.f32.mrf.mxu0
        %v10648 = vadd.f32 0.0, %v10647
        %v10649 = vpop.f32.mrf.mxu0
        %v10650 = vpop.f32.mrf.mxu0
        %v10651 = vpop.f32.mrf.mxu0
        %10652 = vdwg.mxu0
        %10653 = vmatprep.subr.bf16.mxu0 0
        %10654 = vmatpush1.bf16.msra.mxu0 0
        %10655 = vmatprep.subr.bf16.mxu0 0
        %10656 = vmatpush1.bf16.msra.mxu0 0
        %10657 = vmatprep.subr.bf16.mxu0 0
        %10658 = vmatpush1.bf16.msra.mxu0 0
        %10659 = vmatprep.subr.bf16.mxu0 0
        %10660 = vmatpush1.bf16.msra.mxu0 0
        %10661 = vmatprep.subr.bf16.mxu0 0
        %10662 = vmatpush1.bf16.msra.mxu0 %v10589
        %10663 = vmatprep.subr.bf16.mxu0 0
        %10664 = vmatpush1.bf16.msra.mxu0 %v10588
        %10665 = vmatprep.subr.bf16.mxu0 0
        %10666 = vmatpush1.bf16.msra.mxu0 %v10587
        %10667 = vmatprep.subr.bf16.mxu0 0
        %10668 = vmatpush1.bf16.msra.mxu0 %v10586
        %10669 = vmatprep.subr.bf16.mxu0 0
        %10670 = vmatpush2.bf16.msra.mxu0 0
        %10671 = vmatprep.subr.bf16.mxu0 0
        %10672 = vmatpush2.bf16.msra.mxu0 0
        %10673 = vmatprep.subr.bf16.mxu0 0
        %10674 = vmatpush2.bf16.msra.mxu0 0
        %10675 = vmatprep.subr.bf16.mxu0 0
        %10676 = vmatpush2.bf16.msra.mxu0 0
        %10677 = vmatprep.subr.bf16.mxu0 0
        %10678 = vmatpush2.bf16.msra.mxu0 0
        %10679 = vmatprep.subr.bf16.mxu0 0
        %10680 = vmatpush2.bf16.msra.mxu0 0
        %10681 = vmatprep.subr.bf16.mxu0 0
        %10682 = vmatpush2.bf16.msra.mxu0 0
        %10683 = vmatprep.subr.bf16.mxu0 0
        %10684 = vmatpush2.bf16.msra.mxu0 0
        %10685 = vmatprep.mubr.bf16.mxu0 0
        %10686 = vmatmul.mubr.bf16.gmra.mxu0 %v10611
        %v10687 = vpop.f32.mrf.mxu0
        %v10688 = vadd.f32 %v10648, %v10687
        %v10689 = vpop.f32.mrf.mxu0
        %v10690 = vpop.f32.mrf.mxu0
        %v10691 = vpop.f32.mrf.mxu0
        %10692 = vdwg.mxu0
        %v10693 = vadd.f32 %v9989, %v10688
        %s10694 = scalar_lea.vmem [#allocation12], 320
        %v10695 = vld [vmem:[%s10694] sm:$0xf]
        %v10696 = vld [vmem:[%s10694 + $0x4] sm:$0xf]
        %v10697 = vld [vmem:[%s10694 + $0x8] sm:$0xf]
        %v10698 = vld [vmem:[%s10694 + $0xc] sm:$0xf]
        %v10699 = vld [vmem:[%s10694 + $0x10] sm:$0xf]
        %v10700 = vld [vmem:[%s10694 + $0x14] sm:$0xf]
        %v10701 = vld [vmem:[%s10694 + $0x18] sm:$0xf]
        %v10702 = vld [vmem:[%s10694 + $0x1c] sm:$0xf]
        %v10703 = vld [vmem:[%s10694 + $0x20] sm:$0xf]
        %v10704 = vld [vmem:[%s10694 + $0x24] sm:$0xf]
        %v10705 = vld [vmem:[%s10694 + $0x28] sm:$0xf]
        %v10706 = vld [vmem:[%s10694 + $0x2c] sm:$0xf]
        %v10707 = vld [vmem:[%s10694 + $0x30] sm:$0xf]
        %v10708 = vld [vmem:[%s10694 + $0x34] sm:$0xf]
        %v10709 = vld [vmem:[%s10694 + $0x38] sm:$0xf]
        %v10710 = vld [vmem:[%s10694 + $0x3c] sm:$0xf]
        %v10711 = vld [vmem:[%s10694 + $0x40] sm:$0xf]
        %v10712 = vld [vmem:[%s10694 + $0x44] sm:$0xf]
        %v10713 = vld [vmem:[%s10694 + $0x48] sm:$0xf]
        %v10714 = vld [vmem:[%s10694 + $0x4c] sm:$0xf]
        %v10715 = vld [vmem:[%s10694 + $0x50] sm:$0xf]
        %v10716 = vld [vmem:[%s10694 + $0x54] sm:$0xf]
        %v10717 = vld [vmem:[%s10694 + $0x58] sm:$0xf]
        %v10718 = vld [vmem:[%s10694 + $0x5c] sm:$0xf]
        %v10719 = vld [vmem:[%s10694 + $0x60] sm:$0xf]
        %v10720 = vld [vmem:[%s10694 + $0x64] sm:$0xf]
        %v10721 = vld [vmem:[%s10694 + $0x68] sm:$0xf]
        %v10722 = vld [vmem:[%s10694 + $0x6c] sm:$0xf]
        %v10723 = vld [vmem:[%s10694 + $0x70] sm:$0xf]
        %v10724 = vld [vmem:[%s10694 + $0x74] sm:$0xf]
        %v10725 = vld [vmem:[%s10694 + $0x78] sm:$0xf]
        %v10726 = vld [vmem:[%s10694 + $0x7c] sm:$0xf]
        %v10727 = vld [vmem:[%s10694 + $0x80] sm:$0xf]
        %v10728 = vld [vmem:[%s10694 + $0x84] sm:$0xf]
        %v10729 = vld [vmem:[%s10694 + $0x88] sm:$0xf]
        %v10730 = vld [vmem:[%s10694 + $0x8c] sm:$0xf]
        %v10731 = vld [vmem:[%s10694 + $0x90] sm:$0xf]
        %v10732 = vld [vmem:[%s10694 + $0x94] sm:$0xf]
        %v10733 = vld [vmem:[%s10694 + $0x98] sm:$0xf]
        %v10734 = vld [vmem:[%s10694 + $0x9c] sm:$0xf]
        %v10775 = vunpack.c.l.b16 %v10695
        %v10776 = vunpack.c.l.b16 %v10696
        %v10777 = vunpack.c.l.b16 %v10697
        %v10778 = vunpack.c.l.b16 %v10698
        %v10779 = vunpack.c.l.b16 %v10699
        %v10780 = vunpack.c.l.b16 %v10700
        %v10781 = vunpack.c.l.b16 %v10701
        %v10782 = vunpack.c.l.b16 %v10702
        %v10783 = vunpack.c.l.b16 %v10703
        %v10784 = vunpack.c.l.b16 %v10704
        %v10785 = vunpack.c.l.b16 %v10705
        %v10786 = vunpack.c.l.b16 %v10706
        %v10787 = vunpack.c.l.b16 %v10707
        %v10788 = vunpack.c.l.b16 %v10708
        %v10789 = vunpack.c.l.b16 %v10709
        %v10790 = vunpack.c.l.b16 %v10710
        %v10791 = vunpack.c.l.b16 %v10711
        %v10792 = vunpack.c.l.b16 %v10712
        %v10793 = vunpack.c.l.b16 %v10713
        %v10794 = vunpack.c.l.b16 %v10714
        %v10795 = vunpack.c.l.b16 %v10715
        %v10796 = vunpack.c.l.b16 %v10716
        %v10797 = vunpack.c.l.b16 %v10717
        %v10798 = vunpack.c.l.b16 %v10718
        %v10799 = vunpack.c.l.b16 %v10719
        %v10800 = vunpack.c.l.b16 %v10720
        %v10801 = vunpack.c.l.b16 %v10721
        %v10802 = vunpack.c.l.b16 %v10722
        %v10803 = vunpack.c.l.b16 %v10723
        %v10804 = vunpack.c.l.b16 %v10724
        %v10805 = vunpack.c.l.b16 %v10725
        %v10806 = vunpack.c.l.b16 %v10726
        %v10807 = vunpack.c.l.b16 %v10727
        %v10808 = vunpack.c.l.b16 %v10728
        %v10809 = vunpack.c.l.b16 %v10729
        %v10810 = vunpack.c.l.b16 %v10730
        %v10811 = vunpack.c.l.b16 %v10731
        %v10812 = vunpack.c.l.b16 %v10732
        %v10813 = vunpack.c.l.b16 %v10733
        %v10814 = vunpack.c.l.b16 %v10734
        %v10815 = vpack.c.b16 %v10776, %v10775
        %v10816 = vpack.c.b16 %v10778, %v10777
        %v10817 = vpack.c.b16 %v10780, %v10779
        %v10818 = vpack.c.b16 %v10782, %v10781
        %v10819 = vpack.c.b16 %v10784, %v10783
        %v10820 = vpack.c.b16 %v10786, %v10785
        %v10821 = vpack.c.b16 %v10788, %v10787
        %v10822 = vpack.c.b16 %v10790, %v10789
        %v10823 = vpack.c.b16 %v10792, %v10791
        %v10824 = vpack.c.b16 %v10794, %v10793
        %v10825 = vpack.c.b16 %v10796, %v10795
        %v10826 = vpack.c.b16 %v10798, %v10797
        %v10827 = vpack.c.b16 %v10800, %v10799
        %v10828 = vpack.c.b16 %v10802, %v10801
        %v10829 = vpack.c.b16 %v10804, %v10803
        %v10830 = vpack.c.b16 %v10806, %v10805
        %v10831 = vpack.c.b16 %v10808, %v10807
        %v10832 = vpack.c.b16 %v10810, %v10809
        %v10833 = vpack.c.b16 %v10812, %v10811
        %v10834 = vpack.c.b16 %v10814, %v10813
        %10855 = vmatprep.subr.bf16.mxu0 0
        %10856 = vmatpush1.bf16.msra.mxu0 %v10822
        %10857 = vmatprep.subr.bf16.mxu0 0
        %10858 = vmatpush1.bf16.msra.mxu0 %v10821
        %10859 = vmatprep.subr.bf16.mxu0 0
        %10860 = vmatpush1.bf16.msra.mxu0 %v10820
        %10861 = vmatprep.subr.bf16.mxu0 0
        %10862 = vmatpush1.bf16.msra.mxu0 %v10819
        %10863 = vmatprep.subr.bf16.mxu0 0
        %10864 = vmatpush1.bf16.msra.mxu0 %v10818
        %10865 = vmatprep.subr.bf16.mxu0 0
        %10866 = vmatpush1.bf16.msra.mxu0 %v10817
        %10867 = vmatprep.subr.bf16.mxu0 0
        %10868 = vmatpush1.bf16.msra.mxu0 %v10816
        %10869 = vmatprep.subr.bf16.mxu0 0
        %10870 = vmatpush1.bf16.msra.mxu0 %v10815
        %10871 = vmatprep.subr.bf16.mxu0 0
        %10872 = vmatpush2.bf16.msra.mxu0 %v10830
        %10873 = vmatprep.subr.bf16.mxu0 0
        %10874 = vmatpush2.bf16.msra.mxu0 %v10829
        %10875 = vmatprep.subr.bf16.mxu0 0
        %10876 = vmatpush2.bf16.msra.mxu0 %v10828
        %10877 = vmatprep.subr.bf16.mxu0 0
        %10878 = vmatpush2.bf16.msra.mxu0 %v10827
        %10879 = vmatprep.subr.bf16.mxu0 0
        %10880 = vmatpush2.bf16.msra.mxu0 %v10826
        %10881 = vmatprep.subr.bf16.mxu0 0
        %10882 = vmatpush2.bf16.msra.mxu0 %v10825
        %10883 = vmatprep.subr.bf16.mxu0 0
        %10884 = vmatpush2.bf16.msra.mxu0 %v10824
        %10885 = vmatprep.subr.bf16.mxu0 0
        %10886 = vmatpush2.bf16.msra.mxu0 %v10823
        %10887 = vmatprep.mubr.bf16.mxu0 %v10486
        %10888 = vmatmul.mubr.bf16.gmra.mxu0 %v10485
        %v10889 = vpop.f32.mrf.mxu0
        %v10890 = vadd.f32 0.0, %v10889
        %v10891 = vpop.f32.mrf.mxu0
        %v10892 = vpop.f32.mrf.mxu0
        %v10893 = vpop.f32.mrf.mxu0
        %10894 = vdwg.mxu0
        %10895 = vmatprep.subr.bf16.mxu0 0
        %10896 = vmatpush1.bf16.msra.mxu0 0
        %10897 = vmatprep.subr.bf16.mxu0 0
        %10898 = vmatpush1.bf16.msra.mxu0 0
        %10899 = vmatprep.subr.bf16.mxu0 0
        %10900 = vmatpush1.bf16.msra.mxu0 0
        %10901 = vmatprep.subr.bf16.mxu0 0
        %10902 = vmatpush1.bf16.msra.mxu0 0
        %10903 = vmatprep.subr.bf16.mxu0 0
        %10904 = vmatpush1.bf16.msra.mxu0 %v10834
        %10905 = vmatprep.subr.bf16.mxu0 0
        %10906 = vmatpush1.bf16.msra.mxu0 %v10833
        %10907 = vmatprep.subr.bf16.mxu0 0
        %10908 = vmatpush1.bf16.msra.mxu0 %v10832
        %10909 = vmatprep.subr.bf16.mxu0 0
        %10910 = vmatpush1.bf16.msra.mxu0 %v10831
        %10911 = vmatprep.subr.bf16.mxu0 0
        %10912 = vmatpush2.bf16.msra.mxu0 0
        %10913 = vmatprep.subr.bf16.mxu0 0
        %10914 = vmatpush2.bf16.msra.mxu0 0
        %10915 = vmatprep.subr.bf16.mxu0 0
        %10916 = vmatpush2.bf16.msra.mxu0 0
        %10917 = vmatprep.subr.bf16.mxu0 0
        %10918 = vmatpush2.bf16.msra.mxu0 0
        %10919 = vmatprep.subr.bf16.mxu0 0
        %10920 = vmatpush2.bf16.msra.mxu0 0
        %10921 = vmatprep.subr.bf16.mxu0 0
        %10922 = vmatpush2.bf16.msra.mxu0 0
        %10923 = vmatprep.subr.bf16.mxu0 0
        %10924 = vmatpush2.bf16.msra.mxu0 0
        %10925 = vmatprep.subr.bf16.mxu0 0
        %10926 = vmatpush2.bf16.msra.mxu0 0
        %10927 = vmatprep.mubr.bf16.mxu0 0
        %10928 = vmatmul.mubr.bf16.gmra.mxu0 %v10611
        %v10929 = vpop.f32.mrf.mxu0
        %v10930 = vadd.f32 %v10890, %v10929
        %v10931 = vpop.f32.mrf.mxu0
        %v10932 = vpop.f32.mrf.mxu0
        %v10933 = vpop.f32.mrf.mxu0
        %10934 = vdwg.mxu0
        %v10935 = vadd.f32 %v10430, %v10930
        %v10936 = vmax.f32 %v10693, %v10935
        %v10937 = vld [vmem:[%s12] sm:$0x1]
        %vm10938 = vcmask 23552
        %v10940 = vsel %vm10938, %v10937, 0
        %v10943 = vsel %vm9104, %v10936, 0
        %10945 = vmatprep.subr.mxu0 0.0
        %10946 = vmatpush1.msra.mxu0 0.0
        %10947 = vmatprep.subr.mxu0 0.0
        %10948 = vmatpush1.msra.mxu0 0.0
        %10949 = vmatprep.subr.mxu0 0.0
        %10950 = vmatpush1.msra.mxu0 0.0
        %10951 = vmatprep.subr.mxu0 0.0
        %10952 = vmatpush1.msra.mxu0 0.0
        %10953 = vmatprep.subr.mxu0 0.0
        %10954 = vmatpush1.msra.mxu0 0.0
        %10955 = vmatprep.subr.mxu0 0.0
        %10956 = vmatpush1.msra.mxu0 0.0
        %10957 = vmatprep.subr.mxu0 0.0
        %10958 = vmatpush1.msra.mxu0 0.0
        %10959 = vmatprep.subr.mxu0 0.0
        %10960 = vmatpush1.msra.mxu0 0.0
        %10961 = vmatprep.subr.mxu0 0.0
        %10962 = vmatpush1.msra.mxu0 0.0
        %10963 = vmatprep.subr.mxu0 0.0
        %10964 = vmatpush1.msra.mxu0 0.0
        %10965 = vmatprep.subr.mxu0 0.0
        %10966 = vmatpush1.msra.mxu0 0.0
        %10967 = vmatprep.subr.mxu0 0.0
        %10968 = vmatpush1.msra.mxu0 0.0
        %10969 = vmatprep.subr.mxu0 0.0
        %10970 = vmatpush1.msra.mxu0 0.0
        %10971 = vmatprep.subr.mxu0 0.0
        %10972 = vmatpush1.msra.mxu0 0.0
        %10973 = vmatprep.subr.mxu0 0.0
        %10974 = vmatpush1.msra.mxu0 0.0
        %10975 = vmatprep.subr.mxu0 0.0
        %10976 = vmatpush1.msra.mxu0 %v10943
        %10977 = vmatprep.subr.mxu0 0.0
        %10978 = vmatpush2.msra.mxu0 0.0
        %10979 = vmatprep.subr.mxu0 0.0
        %10980 = vmatpush2.msra.mxu0 0.0
        %10981 = vmatprep.subr.mxu0 0.0
        %10982 = vmatpush2.msra.mxu0 0.0
        %10983 = vmatprep.subr.mxu0 0.0
        %10984 = vmatpush2.msra.mxu0 0.0
        %10985 = vmatprep.subr.mxu0 0.0
        %10986 = vmatpush2.msra.mxu0 0.0
        %10987 = vmatprep.subr.mxu0 0.0
        %10988 = vmatpush2.msra.mxu0 0.0
        %10989 = vmatprep.subr.mxu0 0.0
        %10990 = vmatpush2.msra.mxu0 0.0
        %10991 = vmatprep.subr.mxu0 0.0
        %10992 = vmatpush2.msra.mxu0 0.0
        %10993 = vmatprep.subr.mxu0 0.0
        %10994 = vmatpush2.msra.mxu0 0.0
        %10995 = vmatprep.subr.mxu0 0.0
        %10996 = vmatpush2.msra.mxu0 0.0
        %10997 = vmatprep.subr.mxu0 0.0
        %10998 = vmatpush2.msra.mxu0 0.0
        %10999 = vmatprep.subr.mxu0 0.0
        %11000 = vmatpush2.msra.mxu0 0.0
        %11001 = vmatprep.subr.mxu0 0.0
        %11002 = vmatpush2.msra.mxu0 0.0
        %11003 = vmatprep.subr.mxu0 0.0
        %11004 = vmatpush2.msra.mxu0 0.0
        %11005 = vmatprep.subr.mxu0 0.0
        %11006 = vmatpush2.msra.mxu0 0.0
        %11007 = vmatprep.subr.mxu0 0.0
        %11008 = vmatpush2.msra.mxu0 0.0
        %11009 = vmatprep.mubr.f32.mxu0 0.0
        %11010 = vmatmul.mubr.f32.gmra.mxu0 %v10940
        %v11011 = vpop.f32.mrf.mxu0
        %v11012 = vadd.f32 0.0, %v11011
        %v11013 = vpop.f32.mrf.mxu0
        %11014 = vdwg.mxu0
        %s11015 = scalar_lea.vmem %s12, 1
        %v11016 = vld [vmem:[%s11015] sm:$0x1]
        %v11018 = vsel %vm10938, %v11016, 0
        %11020 = vmatprep.subr.mxu0 0.0
        %11021 = vmatpush1.msra.mxu0 0.0
        %11022 = vmatprep.subr.mxu0 0.0
        %11023 = vmatpush1.msra.mxu0 0.0
        %11024 = vmatprep.subr.mxu0 0.0
        %11025 = vmatpush1.msra.mxu0 0.0
        %11026 = vmatprep.subr.mxu0 0.0
        %11027 = vmatpush1.msra.mxu0 0.0
        %11028 = vmatprep.subr.mxu0 0.0
        %11029 = vmatpush1.msra.mxu0 0.0
        %11030 = vmatprep.subr.mxu0 0.0
        %11031 = vmatpush1.msra.mxu0 0.0
        %11032 = vmatprep.subr.mxu0 0.0
        %11033 = vmatpush1.msra.mxu0 0.0
        %11034 = vmatprep.subr.mxu0 0.0
        %11035 = vmatpush1.msra.mxu0 0.0
        %11036 = vmatprep.subr.mxu0 0.0
        %11037 = vmatpush1.msra.mxu0 0.0
        %11038 = vmatprep.subr.mxu0 0.0
        %11039 = vmatpush1.msra.mxu0 0.0
        %11040 = vmatprep.subr.mxu0 0.0
        %11041 = vmatpush1.msra.mxu0 0.0
        %11042 = vmatprep.subr.mxu0 0.0
        %11043 = vmatpush1.msra.mxu0 0.0
        %11044 = vmatprep.subr.mxu0 0.0
        %11045 = vmatpush1.msra.mxu0 0.0
        %11046 = vmatprep.subr.mxu0 0.0
        %11047 = vmatpush1.msra.mxu0 0.0
        %11048 = vmatprep.subr.mxu0 0.0
        %11049 = vmatpush1.msra.mxu0 0.0
        %11050 = vmatprep.subr.mxu0 0.0
        %11051 = vmatpush1.msra.mxu0 %v10943
        %11052 = vmatprep.subr.mxu0 0.0
        %11053 = vmatpush2.msra.mxu0 0.0
        %11054 = vmatprep.subr.mxu0 0.0
        %11055 = vmatpush2.msra.mxu0 0.0
        %11056 = vmatprep.subr.mxu0 0.0
        %11057 = vmatpush2.msra.mxu0 0.0
        %11058 = vmatprep.subr.mxu0 0.0
        %11059 = vmatpush2.msra.mxu0 0.0
        %11060 = vmatprep.subr.mxu0 0.0
        %11061 = vmatpush2.msra.mxu0 0.0
        %11062 = vmatprep.subr.mxu0 0.0
        %11063 = vmatpush2.msra.mxu0 0.0
        %11064 = vmatprep.subr.mxu0 0.0
        %11065 = vmatpush2.msra.mxu0 0.0
        %11066 = vmatprep.subr.mxu0 0.0
        %11067 = vmatpush2.msra.mxu0 0.0
        %11068 = vmatprep.subr.mxu0 0.0
        %11069 = vmatpush2.msra.mxu0 0.0
        %11070 = vmatprep.subr.mxu0 0.0
        %11071 = vmatpush2.msra.mxu0 0.0
        %11072 = vmatprep.subr.mxu0 0.0
        %11073 = vmatpush2.msra.mxu0 0.0
        %11074 = vmatprep.subr.mxu0 0.0
        %11075 = vmatpush2.msra.mxu0 0.0
        %11076 = vmatprep.subr.mxu0 0.0
        %11077 = vmatpush2.msra.mxu0 0.0
        %11078 = vmatprep.subr.mxu0 0.0
        %11079 = vmatpush2.msra.mxu0 0.0
        %11080 = vmatprep.subr.mxu0 0.0
        %11081 = vmatpush2.msra.mxu0 0.0
        %11082 = vmatprep.subr.mxu0 0.0
        %11083 = vmatpush2.msra.mxu0 0.0
        %11084 = vmatprep.mubr.f32.mxu0 0.0
        %11085 = vmatmul.mubr.f32.gmra.mxu0 %v11018
        %v11086 = vpop.f32.mrf.mxu0
        %v11087 = vadd.f32 0.0, %v11086
        %v11088 = vpop.f32.mrf.mxu0
        %11089 = vdwg.mxu0
        %v11090 = vmax.f32 %v11012, %v11087
        %v11091 = vld [vmem:[%s11] sm:$0x1]
        %v11092 = vadd.f32 %v11090, %v11091
        %v11093 = vmax.f32 %v11092, 0.0
        %v11094 = vadd.f32 %v11093, 0.0
        %v11095 = vld [vmem:[%s13] sm:$0xff]
        %v11096 = vld [vmem:[%s13 + $0x8] sm:$0xff]
        %v11097 = vld [vmem:[%s13 + $0x10] sm:$0xff]
        %v11098 = vld [vmem:[%s13 + $0x18] sm:$0xff]
        %v11099 = vld [vmem:[%s13 + $0x20] sm:$0xff]
        %v11100 = vld [vmem:[%s13 + $0x28] sm:$0xff]
        %v11101 = vld [vmem:[%s13 + $0x30] sm:$0xff]
        %v11102 = vld [vmem:[%s13 + $0x38] sm:$0xff]
        %v11103 = vld [vmem:[%s13 + $0x40] sm:$0xff]
        %v11104 = vld [vmem:[%s13 + $0x48] sm:$0xff]
        %v11105 = vld [vmem:[%s13 + $0x50] sm:$0xff]
        %v11106 = vld [vmem:[%s13 + $0x58] sm:$0xff]
        %v11107 = vld [vmem:[%s13 + $0x60] sm:$0xff]
        %v11108 = vld [vmem:[%s13 + $0x68] sm:$0xff]
        %v11109 = vld [vmem:[%s13 + $0x70] sm:$0xff]
        %v11110 = vld [vmem:[%s13 + $0x78] sm:$0xff]
        %v11111 = vld [vmem:[%s14] sm:$0x1]
        %11112 = vmatprep.subr.mxu0 0.0
        %11113 = vmatpush1.msra.mxu0 %v11110
        %11114 = vmatprep.subr.mxu0 0.0
        %11115 = vmatpush1.msra.mxu0 %v11109
        %11116 = vmatprep.subr.mxu0 0.0
        %11117 = vmatpush1.msra.mxu0 %v11108
        %11118 = vmatprep.subr.mxu0 0.0
        %11119 = vmatpush1.msra.mxu0 %v11107
        %11120 = vmatprep.subr.mxu0 0.0
        %11121 = vmatpush1.msra.mxu0 %v11106
        %11122 = vmatprep.subr.mxu0 0.0
        %11123 = vmatpush1.msra.mxu0 %v11105
        %11124 = vmatprep.subr.mxu0 0.0
        %11125 = vmatpush1.msra.mxu0 %v11104
        %11126 = vmatprep.subr.mxu0 0.0
        %11127 = vmatpush1.msra.mxu0 %v11103
        %11128 = vmatprep.subr.mxu0 0.0
        %11129 = vmatpush1.msra.mxu0 %v11102
        %11130 = vmatprep.subr.mxu0 0.0
        %11131 = vmatpush1.msra.mxu0 %v11101
        %11132 = vmatprep.subr.mxu0 0.0
        %11133 = vmatpush1.msra.mxu0 %v11100
        %11134 = vmatprep.subr.mxu0 0.0
        %11135 = vmatpush1.msra.mxu0 %v11099
        %11136 = vmatprep.subr.mxu0 0.0
        %11137 = vmatpush1.msra.mxu0 %v11098
        %11138 = vmatprep.subr.mxu0 0.0
        %11139 = vmatpush1.msra.mxu0 %v11097
        %11140 = vmatprep.subr.mxu0 0.0
        %11141 = vmatpush1.msra.mxu0 %v11096
        %11142 = vmatprep.subr.mxu0 0.0
        %11143 = vmatpush1.msra.mxu0 %v11095
        %11144 = vmatprep.subr.mxu0 0.0
        %11145 = vmatpush2.msra.mxu0 0.0
        %11146 = vmatprep.subr.mxu0 0.0
        %11147 = vmatpush2.msra.mxu0 0.0
        %11148 = vmatprep.subr.mxu0 0.0
        %11149 = vmatpush2.msra.mxu0 0.0
        %11150 = vmatprep.subr.mxu0 0.0
        %11151 = vmatpush2.msra.mxu0 0.0
        %11152 = vmatprep.subr.mxu0 0.0
        %11153 = vmatpush2.msra.mxu0 0.0
        %11154 = vmatprep.subr.mxu0 0.0
        %11155 = vmatpush2.msra.mxu0 0.0
        %11156 = vmatprep.subr.mxu0 0.0
        %11157 = vmatpush2.msra.mxu0 0.0
        %11158 = vmatprep.subr.mxu0 0.0
        %11159 = vmatpush2.msra.mxu0 0.0
        %11160 = vmatprep.subr.mxu0 0.0
        %11161 = vmatpush2.msra.mxu0 0.0
        %11162 = vmatprep.subr.mxu0 0.0
        %11163 = vmatpush2.msra.mxu0 0.0
        %11164 = vmatprep.subr.mxu0 0.0
        %11165 = vmatpush2.msra.mxu0 0.0
        %11166 = vmatprep.subr.mxu0 0.0
        %11167 = vmatpush2.msra.mxu0 0.0
        %11168 = vmatprep.subr.mxu0 0.0
        %11169 = vmatpush2.msra.mxu0 0.0
        %11170 = vmatprep.subr.mxu0 0.0
        %11171 = vmatpush2.msra.mxu0 0.0
        %11172 = vmatprep.subr.mxu0 0.0
        %11173 = vmatpush2.msra.mxu0 0.0
        %11174 = vmatprep.subr.mxu0 0.0
        %11175 = vmatpush2.msra.mxu0 0.0
        %11176 = vmatprep.mubr.f32.mxu0 0.0
        %11177 = vmatmul.mubr.f32.gmra.mxu0 %v11094
        %v11178 = vpop.f32.mrf.mxu0
        %v11179 = vadd.f32 %v11111, %v11178
        %v11180 = vpop.f32.mrf.mxu0
        %11181 = vdwg.mxu0
        %v11182 = vld [vmem:[#allocation13] sm:$0xff]
        %v11183 = vld [vmem:[#allocation13 + $0x8] sm:$0xff]
        %v11184 = vld [vmem:[#allocation13 + $0x10] sm:$0xff]
        %v11185 = vld [vmem:[#allocation13 + $0x18] sm:$0xff]
        %v11186 = vld [vmem:[#allocation13 + $0x20] sm:$0xff]
        %v11187 = vld [vmem:[#allocation13 + $0x28] sm:$0xff]
        %v11188 = vld [vmem:[#allocation13 + $0x30] sm:$0xff]
        %v11189 = vld [vmem:[#allocation13 + $0x38] sm:$0xff]
        %v11190 = vld [vmem:[#allocation13 + $0x40] sm:$0xff]
        %v11191 = vld [vmem:[#allocation13 + $0x48] sm:$0xff]
        %v11192 = vld [vmem:[#allocation13 + $0x50] sm:$0xff]
        %v11193 = vld [vmem:[#allocation13 + $0x58] sm:$0xff]
        %v11194 = vld [vmem:[#allocation13 + $0x60] sm:$0xff]
        %v11195 = vld [vmem:[#allocation13 + $0x68] sm:$0xff]
        %v11196 = vld [vmem:[#allocation13 + $0x70] sm:$0xff]
        %v11197 = vld [vmem:[#allocation13 + $0x78] sm:$0xff]
        %v11198 = vld [vmem:[%s16] sm:$0x1]
        %11199 = vmatprep.subr.mxu0 0.0
        %11200 = vmatpush1.msra.mxu0 %v11197
        %11201 = vmatprep.subr.mxu0 0.0
        %11202 = vmatpush1.msra.mxu0 %v11196
        %11203 = vmatprep.subr.mxu0 0.0
        %11204 = vmatpush1.msra.mxu0 %v11195
        %11205 = vmatprep.subr.mxu0 0.0
        %11206 = vmatpush1.msra.mxu0 %v11194
        %11207 = vmatprep.subr.mxu0 0.0
        %11208 = vmatpush1.msra.mxu0 %v11193
        %11209 = vmatprep.subr.mxu0 0.0
        %11210 = vmatpush1.msra.mxu0 %v11192
        %11211 = vmatprep.subr.mxu0 0.0
        %11212 = vmatpush1.msra.mxu0 %v11191
        %11213 = vmatprep.subr.mxu0 0.0
        %11214 = vmatpush1.msra.mxu0 %v11190
        %11215 = vmatprep.subr.mxu0 0.0
        %11216 = vmatpush1.msra.mxu0 %v11189
        %11217 = vmatprep.subr.mxu0 0.0
        %11218 = vmatpush1.msra.mxu0 %v11188
        %11219 = vmatprep.subr.mxu0 0.0
        %11220 = vmatpush1.msra.mxu0 %v11187
        %11221 = vmatprep.subr.mxu0 0.0
        %11222 = vmatpush1.msra.mxu0 %v11186
        %11223 = vmatprep.subr.mxu0 0.0
        %11224 = vmatpush1.msra.mxu0 %v11185
        %11225 = vmatprep.subr.mxu0 0.0
        %11226 = vmatpush1.msra.mxu0 %v11184
        %11227 = vmatprep.subr.mxu0 0.0
        %11228 = vmatpush1.msra.mxu0 %v11183
        %11229 = vmatprep.subr.mxu0 0.0
        %11230 = vmatpush1.msra.mxu0 %v11182
        %11231 = vmatprep.subr.mxu0 0.0
        %11232 = vmatpush2.msra.mxu0 0.0
        %11233 = vmatprep.subr.mxu0 0.0
        %11234 = vmatpush2.msra.mxu0 0.0
        %11235 = vmatprep.subr.mxu0 0.0
        %11236 = vmatpush2.msra.mxu0 0.0
        %11237 = vmatprep.subr.mxu0 0.0
        %11238 = vmatpush2.msra.mxu0 0.0
        %11239 = vmatprep.subr.mxu0 0.0
        %11240 = vmatpush2.msra.mxu0 0.0
        %11241 = vmatprep.subr.mxu0 0.0
        %11242 = vmatpush2.msra.mxu0 0.0
        %11243 = vmatprep.subr.mxu0 0.0
        %11244 = vmatpush2.msra.mxu0 0.0
        %11245 = vmatprep.subr.mxu0 0.0
        %11246 = vmatpush2.msra.mxu0 0.0
        %11247 = vmatprep.subr.mxu0 0.0
        %11248 = vmatpush2.msra.mxu0 0.0
        %11249 = vmatprep.subr.mxu0 0.0
        %11250 = vmatpush2.msra.mxu0 0.0
        %11251 = vmatprep.subr.mxu0 0.0
        %11252 = vmatpush2.msra.mxu0 0.0
        %11253 = vmatprep.subr.mxu0 0.0
        %11254 = vmatpush2.msra.mxu0 0.0
        %11255 = vmatprep.subr.mxu0 0.0
        %11256 = vmatpush2.msra.mxu0 0.0
        %11257 = vmatprep.subr.mxu0 0.0
        %11258 = vmatpush2.msra.mxu0 0.0
        %11259 = vmatprep.subr.mxu0 0.0
        %11260 = vmatpush2.msra.mxu0 0.0
        %11261 = vmatprep.subr.mxu0 0.0
        %11262 = vmatpush2.msra.mxu0 0.0
        %11263 = vmatprep.mubr.f32.mxu0 0.0
        %11264 = vmatmul.mubr.f32.gmra.mxu0 %v11179
        %v11265 = vpop.f32.mrf.mxu0
        %v11266 = vadd.f32 %v11198, %v11265
        %v11267 = vpop.f32.mrf.mxu0
        %11268 = vdwg.mxu0
        %11269 = vst [vmem:[%s628] sm:$0x1] %v11266
        %s11270 = sand.u32 %s405, 1
        %s11271 = scalar_lea.sflag [#allocation6], %s11270
        %s11272 = sand.u32 %s405, 1
        %s11273 = scalar_lea.vmem [#allocation15], %s11272
        // Predicated region
        $region113: #{toy_network_forward.1} parent=87 // pred_check
          %p11274 = pneg %p415
        $region114: #{toy_network_forward.1} parent=87 // pred_check_branch
          %11276 = sbr.rel (%p11274) target = $region116
        $region115: #{toy_network_forward.1} parent=87 // pred_region
          %s11278 = ssub.s32 16, 16
          %11279 = vsyncadd %s11271, %s11278
          %s11280 = smul.addr %s35, 16
          %s11281 = scalar_lea.hbm %s17, %s11280
          %s11283 = sshll.u32 %s11273, 4
          %s11284 = int_to_ptr.vmem [resolvable:$true] %s11283
          %11286 = dma.vmem_to_hbm [thread:$0]  %s11284, 16, %s11281, %s11271
        $region116: #{toy_network_forward.1} parent=87 // pred_fallthru
          _
      $region88: #{toy_network_forward.1} parent=5 // pred_fallthru
        _
      %p11287 = scmp.le.s32.totalorder 2, %s30
      // Predicated region
      $region117: #{toy_network_forward.1} parent=5 // pred_check
        %p11288 = pneg %p11287
      $region118: #{toy_network_forward.1} parent=5 // pred_check_branch
        %11290 = sbr.rel (%p11288) target = $region120
      $region119: #{toy_network_forward.1} parent=5 // pred_region
        %s11291 = ssub.s32 %s30, 2
        // Predicated region
        $region121: #{toy_network_forward.1} parent=119 // pred_check
          %p11292 = pneg %p421
        $region122: #{toy_network_forward.1} parent=119 // pred_check_branch
          %11294 = sbr.rel (%p11292) target = $region124
        $region123: #{toy_network_forward.1} parent=119 // pred_region
          %s11295 = sand.u32 %s406, 1
          %s11296 = scalar_lea.sflag [#allocation6], %s11295
          %s11297 = sand.u32 %s406, 1
          %s11298 = scalar_lea.vmem [#allocation15], %s11297
          %11299 = dma.done %s11296, 16
        $region124: #{toy_network_forward.1} parent=119 // pred_fallthru
          _
      $region120: #{toy_network_forward.1} parent=5 // pred_fallthru
        _
    $region6: #{toy_network_forward.1} parent=1 // loop_footer
      %s34 = sadd.s32 1, %s30
    $region7: #{toy_network_forward.1} parent=1 // loop_footer_branch
      %29 = sbr.rel target = $region3
    $region8: #{toy_network_forward.1} parent=1 // loop_exit
      _
    %11300 = vsyncpa [#allocation5], 1
    %s11301 = scalar_lea.sflag [#allocation5], 1
    %11302 = vsyncpa %s11301, 1
    %11303 = vsyncpa [#allocation8], 1
    %11304 = vsyncpa [#allocation11], 1
    %11305 = vsyncpa [#allocation14], 1
    %11306 = vsyncpa [#allocation6], 1
    %s11307 = scalar_lea.sflag [#allocation6], 1
    %11308 = vsyncpa %s11307, 1

</llo_original>
